<compile_context>
chip_gen: v7x
topology: tpu7x:2x2x1
jax: 0.10.0
libtpu: 0.0.40
codegen_flags: <defaults>
</compile_context>

<pallas_src>
import numpy as np
import jax
import jax.numpy as jnp
from jax.experimental import pallas as pl
from jax.experimental.pallas import tpu as pltpu


def _round_up(v, m):
    return -(-v // m) * m


def _make_conv_kernel(taps, cin, mw_pad, has_bias):
    """Fused shift-conv kernel.

    taps: static list of (phase_index, lane_offset) per filter tap.
    Builds the tap-stacked (T*Cin, Mw) bf16 RHS once in VMEM scratch, does a
    single (Cout, T*Cin) @ (T*Cin, Mw) MXU matmul with f32 accumulation,
    optionally adds a fused bias, and emits per-channel masked sum / sum-sq
    so the following BatchNorm needs no HBM reduction pass.
    """

    def kernel(x_ref, w_ref, mask_ref, *rest):
        # x_ref: (1, n_ph, Cin, Lp) bf16     w_ref: (Cout, T*Cin) bf16
        # mask_ref: (1, Mw) f32 valid-lane mask
        # o_ref: (1, Cout, Mw) f32           stats_ref: (1, 2, Cout, 1) f32
        # rhs_ref: (T*Cin, Mw) bf16 scratch
        if has_bias:
            b_ref, o_ref, stats_ref, rhs_ref = rest
        else:
            o_ref, stats_ref, rhs_ref = rest

        # Stack all taps once (static lane offsets), then one deep matmul.
        for t, (ph, off) in enumerate(taps):
            rhs_ref[t * cin:(t + 1) * cin, :] = x_ref[0, ph, :, off:off + mw_pad]
        acc = jnp.dot(w_ref[...], rhs_ref[...],
                      preferred_element_type=jnp.float32)
        if has_bias:
            acc = acc + b_ref[...]
        o_ref[0] = acc

        # Per-channel BN partial statistics over the valid output lanes only
        # (excludes wide-layout garbage columns and the 128-lane padding).
        masked = acc * mask_ref[...]
        stats_ref[0, 0] = jnp.sum(masked, axis=1, keepdims=True)
        stats_ref[0, 1] = jnp.sum(masked * masked, axis=1, keepdims=True)

    return kernel


def conv2d(x, w, b=None, stride=1, padding=0, pad_mode="zero"):
    """2D conv in NCHW via a fused Pallas shift-conv kernel.

    x: (N, Cin, H, W) f32;  w: PyTorch layout (Cout, Cin, kh, kw);  b: (Cout,)
    or None (bias omitted — safe when a BatchNorm follows).
    Returns (out, stats): out is (N, Cout, Ho, Wo) f32, stats is
    (N, 2, Cout, 1) f32 per-batch [sum, sum_sq] over valid output positions.
    """
    nb, cin, _, _ = x.shape
    cout, cin_w, kh, kw = w.shape
    assert cin == cin_w
    if padding > 0:
        mode = "reflect" if pad_mode == "reflect" else "constant"
        x = jnp.pad(x, ((0, 0), (0, 0), (padding, padding), (padding, padding)),
                    mode=mode)
    hp, wp = x.shape[2], x.shape[3]
    ho = (hp - kh) // stride + 1
    wo = (wp - kw) // stride + 1
    s = stride

    # Pad spatial dims to multiples of the stride (extra zeros never read for
    # valid outputs), then space-to-depth split into s*s phases so the kernel
    # only needs stride-1 shifted slices.
    hp2, wp2 = _round_up(hp, s), _round_up(wp, s)
    if (hp2, wp2) != (hp, wp):
        x = jnp.pad(x, ((0, 0), (0, 0), (0, hp2 - hp), (0, wp2 - wp)))
    hq, wq = hp2 // s, wp2 // s
    n_ph = s * s
    if s == 1:
        xph = x[:, None]                                        # (N,1,Cin,Hq,Wq)
    else:
        xph = x.reshape(nb, cin, hq, s, wq, s)
        xph = jnp.transpose(xph, (0, 3, 5, 1, 2, 4)).reshape(nb, n_ph, cin, hq, wq)

    mw = ho * wq                                                # "wide" output width
    mw_pad = _round_up(mw, 128)                                 # lane-dense stores
    taps = []
    for di in range(kh):
        for dj in range(kw):
            taps.append(((di % s) * s + (dj % s), (di // s) * wq + (dj // s)))
    lp = hq * wq
    pad_tail = max(0, max(off for _, off in taps) + mw_pad - lp)
    xf = xph.reshape(nb, n_ph, cin, lp)
    if pad_tail:
        xf = jnp.pad(xf, ((0, 0), (0, 0), (0, 0), (0, pad_tail)))
    lp += pad_tail
    xf = xf.astype(jnp.bfloat16)                                # bf16 at MXU boundary

    # Flat (Cout, T*Cin) weights: tap-major (di, dj) order matching `taps`.
    kk = kh * kw
    w_flat = jnp.transpose(w, (0, 2, 3, 1)).reshape(cout, kk * cin)
    w_flat = w_flat.astype(jnp.bfloat16)

    # Compile-time valid-lane mask for the BN statistics.
    lane = np.arange(mw_pad)
    mask_np = ((lane < mw) & ((lane % wq) < wo)).astype(np.float32)
    mask = jnp.asarray(mask_np).reshape(1, mw_pad)

    has_bias = b is not None
    kernel = _make_conv_kernel(tuple(taps), cin, mw_pad, has_bias)

    operands = [xf, w_flat, mask]
    in_specs = [
        pl.BlockSpec((1, n_ph, cin, lp), lambda n: (n, 0, 0, 0)),
        pl.BlockSpec((cout, kk * cin), lambda n: (0, 0)),
        pl.BlockSpec((1, mw_pad), lambda n: (0, 0)),
    ]
    if has_bias:
        operands.append(b.reshape(cout, 1).astype(jnp.float32))
        in_specs.append(pl.BlockSpec((cout, 1), lambda n: (0, 0)))

    flops = 2 * nb * cout * (kk * cin) * mw_pad
    bytes_accessed = (xf.size * 2 + w_flat.size * 2 + mask.size * 4
                      + nb * cout * mw_pad * 4 + nb * 2 * cout * 4
                      + (cout * 4 if has_bias else 0))

    out_wide, stats = pl.pallas_call(
        kernel,
        out_shape=(jax.ShapeDtypeStruct((nb, cout, mw_pad), jnp.float32),
                   jax.ShapeDtypeStruct((nb, 2, cout, 1), jnp.float32)),
        grid=(nb,),
        in_specs=in_specs,
        out_specs=(pl.BlockSpec((1, cout, mw_pad), lambda n: (n, 0, 0)),
                   pl.BlockSpec((1, 2, cout, 1), lambda n: (n, 0, 0, 0))),
        scratch_shapes=[pltpu.VMEM((kk * cin, mw_pad), jnp.bfloat16)],
        compiler_params=pltpu.CompilerParams(
            dimension_semantics=("parallel",),
            vmem_limit_bytes=32 * 1024 * 1024,
        ),
        cost_estimate=pl.CostEstimate(
            flops=flops, transcendentals=0, bytes_accessed=bytes_accessed),
    )(*operands)

    # Drop the "wide" garbage columns -> NCHW output.
    # TODO(synk): keep the wide layout flowing into the next layer and fold
    # this crop into the next conv's padding step; add halo tiling of the
    # flattened spatial axis for images too large for one per-batch block.
    out = out_wide[:, :, :mw].reshape(nb, cout, ho, wq)[:, :, :, :wo]
    return out, stats


def bn_act(x, stats, slope=None, relu=False, eps=1e-5):
    """nn.BatchNorm2d (training mode, gamma=1/beta=0) + optional activation.

    Uses the per-channel sums emitted by the conv kernel, so only a single
    fused elementwise pass touches the conv output.
    """
    count = x.shape[0] * x.shape[2] * x.shape[3]
    s = jnp.sum(stats[:, 0, :, 0], axis=0)
    ss = jnp.sum(stats[:, 1, :, 0], axis=0)
    mean = s / count
    var = jnp.maximum(ss / count - mean * mean, 0.0)      # biased batch variance
    scale = jax.lax.rsqrt(var + eps)
    y = (x - mean[None, :, None, None]) * scale[None, :, None, None]
    if relu:
        return jnp.maximum(y, 0.0)
    if slope is not None:
        return jnp.where(y >= 0, y, slope * y)
    return y


def upsample2x(x):
    # nn.Upsample(scale_factor=2), default mode='nearest', NCHW layout.
    # TODO(synk): fold into the following conv as 4 output phases of a 3x3
    # conv on the un-upsampled input (removes two full-tensor HBM copies).
    return jnp.repeat(jnp.repeat(x, 2, axis=2), 2, axis=3)


def conv_params(key, cin, cout, k):
    kw_key, kb_key = jax.random.split(key)
    bound = 1.0 / (cin * k * k) ** 0.5
    w = jax.random.uniform(kw_key, (cout, cin, k, k), jnp.float32, -bound, bound)
    b = jax.random.uniform(kb_key, (cout,), jnp.float32, -bound, bound)
    return w, b


class HighGeneratorPallas:
    """Pallas port of HighGenerator (stride=1 path, BatchNorm, no dropout)."""

    def __init__(self, input_nc, output_nc, ngf=8, n_blocks=2, n_downsampling=2,
                 key=None):
        self.input_nc = input_nc
        self.output_nc = output_nc
        self.ngf = ngf
        self.in_out_ratio = output_nc // input_nc
        key = jax.random.PRNGKey(42) if key is None else key
        keys = iter(jax.random.split(key, 64))

        self.conv0 = conv_params(next(keys), input_nc, ngf, 7)
        self.down = []
        for i in range(n_downsampling):
            mult = 2 ** i
            self.down.append(conv_params(next(keys), ngf * mult, ngf * mult * 2, 3))
        dim = ngf * (2 ** n_downsampling)
        self.blocks = []
        for _ in range(n_blocks):
            self.blocks.append(
                (conv_params(next(keys), dim, dim, 3),
                 conv_params(next(keys), dim, dim, 3))
            )
        self.up = []
        for i in range(n_downsampling):
            mult = 2 ** (n_downsampling - i)
            self.up.append(conv_params(next(keys), ngf * mult, ngf * mult // 2, 3))
        self.conv_out = conv_params(next(keys), ngf, output_nc, 7)

    def __call__(self, inputs, reference):
        if not isinstance(reference, (list, tuple)):
            reference = [reference]
        sub_bands = len(inputs)
        inp = jnp.concatenate(inputs, axis=1)                       # NCHW
        C = self.in_out_ratio * inp.shape[1] // sub_bands
        x = jnp.concatenate([inp] + list(reference), axis=1)        # stride==1 path

        # Biases are omitted for every conv followed by BatchNorm: with batch
        # statistics (training-mode forward) the per-channel bias is cancelled
        # exactly, so the PyTorch forward output is unchanged.
        w, _ = self.conv0
        y, st = conv2d(x, w, None, padding=3, pad_mode="reflect")
        x = bn_act(y, st, slope=0.3)
        for (w, _) in self.down:
            y, st = conv2d(x, w, None, stride=2, padding=1)
            x = bn_act(y, st, slope=0.3)
        for (w1, _), (w2, _) in self.blocks:
            y, st = conv2d(x, w1, None, padding=1, pad_mode="reflect")
            y = bn_act(y, st, relu=True)
            y, st = conv2d(y, w2, None, padding=1, pad_mode="reflect")
            y = bn_act(y, st)                                       # no activation
            x = x + y
        for (w, _) in self.up:
            x = upsample2x(x)
            y, st = conv2d(x, w, None, padding=1)
            x = bn_act(y, st, slope=0.3)
        w, b = self.conv_out
        x, _ = conv2d(x, w, b, padding=3, pad_mode="reflect")       # bias kept here

        rep = self.output_nc // inp.shape[1]
        if rep != 1:
            x = x + jnp.concatenate([inp] * rep, axis=1)
        else:
            x = x + inp
        return [x[:, ix * C:(ix + 1) * C] for ix in range(sub_bands)]


if __name__ == "__main__":
    key = jax.random.PRNGKey(0)
    k1, k2, k3, kp = jax.random.split(key, 4)
    B, band_c, H, W = 2, 2, 16, 16
    band0 = jax.random.normal(k1, (B, band_c, H, W), jnp.float32)
    band1 = jax.random.normal(k2, (B, band_c, H, W), jnp.float32)
    reference = jax.random.normal(k3, (B, 4, H, W), jnp.float32)

    # cat(input bands) has 4 channels, reference 4 -> model input_nc = 8.
    # output_nc = 8 -> rep = 2, in_out_ratio = 1, per-band slice width C = 2.
    gen = HighGeneratorPallas(input_nc=8, output_nc=8, ngf=8,
                              n_blocks=2, n_downsampling=2, key=kp)

    fwd = jax.jit(lambda b0, b1, ref: gen([b0, b1], ref))
    outs = fwd(band0, band1, reference)
    outs = [jax.block_until_ready(o) for o in outs]
    assert len(outs) == 2
    assert all(o.shape == (B, 2, H, W) for o in outs)
    assert all(jnp.all(jnp.isfinite(o)) for o in outs)
    print("KERNEL_OK")
</pallas_src>

<mosaic_0001>
module attributes {stable_mosaic.version = 11 : i64} {
  func.func @kernel(%arg0: i32, %arg1: memref<1x1x8x522xbf16, #tpu.memory_space<vmem>>, %arg2: memref<8x392xbf16, #tpu.memory_space<vmem>>, %arg3: memref<1x384xf32, #tpu.memory_space<vmem>>, %arg4: memref<1x8x384xf32, #tpu.memory_space<vmem>>, %arg5: memref<1x2x8x1xf32, #tpu.memory_space<vmem>>, %arg6: memref<392x384xbf16, #tpu.memory_space<vmem>>) attributes {dimension_semantics = [#tpu.dimension_semantics<parallel>], iteration_bounds = array<i64: 2>, scalar_prefetch = 0 : i64, scratch_operands = 1 : i64, tpu.core_type = #tpu.core_type<tc>, window_params = [{transform_indices = @transform_0, window_bounds = array<i64: 1, 1, 8, 522>}, {pipeline_mode = #tpu.pipeline_mode<synchronous>, transform_indices = @transform_1, window_bounds = array<i64: 8, 392>}, {pipeline_mode = #tpu.pipeline_mode<synchronous>, transform_indices = @transform_2, window_bounds = array<i64: 1, 384>}, {transform_indices = @transform_3, window_bounds = array<i64: 1, 8, 384>}, {transform_indices = @transform_4, window_bounds = array<i64: 1, 2, 8, 1>}]} {
    %c0 = arith.constant 0 : index
    %c0_0 = arith.constant 0 : index
    %c0_1 = arith.constant 0 : index
    %c0_2 = arith.constant 0 : index
    %0 = vector.load %arg1[%c0, %c0_0, %c0_1, %c0_2] : memref<1x1x8x522xbf16, #tpu.memory_space<vmem>>, vector<1x1x8x384xbf16>
    %1 = vector.shape_cast %0 : vector<1x1x8x384xbf16> to vector<8x384xbf16>
    %c0_3 = arith.constant 0 : index
    %c0_4 = arith.constant 0 : index
    %2 = vector.load %arg6[%c0_3, %c0_4] : memref<392x384xbf16, #tpu.memory_space<vmem>>, vector<8x384xbf16>
    tpu.vector_store %arg6[%c0_3, %c0_4], %1 {strides = array<i32>} : memref<392x384xbf16, #tpu.memory_space<vmem>>, vector<8x384xbf16>,
    %c0_5 = arith.constant 0 : index
    %c0_6 = arith.constant 0 : index
    %c0_7 = arith.constant 0 : index
    %c1 = arith.constant 1 : index
    %3 = vector.load %arg1[%c0_5, %c0_6, %c0_7, %c1] : memref<1x1x8x522xbf16, #tpu.memory_space<vmem>>, vector<1x1x8x384xbf16>
    %4 = vector.shape_cast %3 : vector<1x1x8x384xbf16> to vector<8x384xbf16>
    %c8 = arith.constant 8 : index
    %c0_8 = arith.constant 0 : index
    %5 = vector.load %arg6[%c8, %c0_8] : memref<392x384xbf16, #tpu.memory_space<vmem>>, vector<8x384xbf16>
    tpu.vector_store %arg6[%c8, %c0_8], %4 {strides = array<i32>} : memref<392x384xbf16, #tpu.memory_space<vmem>>, vector<8x384xbf16>,
    %c0_9 = arith.constant 0 : index
    %c0_10 = arith.constant 0 : index
    %c0_11 = arith.constant 0 : index
    %c2 = arith.constant 2 : index
    %6 = vector.load %arg1[%c0_9, %c0_10, %c0_11, %c2] : memref<1x1x8x522xbf16, #tpu.memory_space<vmem>>, vector<1x1x8x384xbf16>
    %7 = vector.shape_cast %6 : vector<1x1x8x384xbf16> to vector<8x384xbf16>
    %c16 = arith.constant 16 : index
    %c0_12 = arith.constant 0 : index
    %8 = vector.load %arg6[%c16, %c0_12] : memref<392x384xbf16, #tpu.memory_space<vmem>>, vector<8x384xbf16>
    tpu.vector_store %arg6[%c16, %c0_12], %7 {strides = array<i32>} : memref<392x384xbf16, #tpu.memory_space<vmem>>, vector<8x384xbf16>,
    %c0_13 = arith.constant 0 : index
    %c0_14 = arith.constant 0 : index
    %c0_15 = arith.constant 0 : index
    %c3 = arith.constant 3 : index
    %9 = vector.load %arg1[%c0_13, %c0_14, %c0_15, %c3] : memref<1x1x8x522xbf16, #tpu.memory_space<vmem>>, vector<1x1x8x384xbf16>
    %10 = vector.shape_cast %9 : vector<1x1x8x384xbf16> to vector<8x384xbf16>
    %c24 = arith.constant 24 : index
    %c0_16 = arith.constant 0 : index
    %11 = vector.load %arg6[%c24, %c0_16] : memref<392x384xbf16, #tpu.memory_space<vmem>>, vector<8x384xbf16>
    tpu.vector_store %arg6[%c24, %c0_16], %10 {strides = array<i32>} : memref<392x384xbf16, #tpu.memory_space<vmem>>, vector<8x384xbf16>,
    %c0_17 = arith.constant 0 : index
    %c0_18 = arith.constant 0 : index
    %c0_19 = arith.constant 0 : index
    %c4 = arith.constant 4 : index
    %12 = vector.load %arg1[%c0_17, %c0_18, %c0_19, %c4] : memref<1x1x8x522xbf16, #tpu.memory_space<vmem>>, vector<1x1x8x384xbf16>
    %13 = vector.shape_cast %12 : vector<1x1x8x384xbf16> to vector<8x384xbf16>
    %c32 = arith.constant 32 : index
    %c0_20 = arith.constant 0 : index
    %14 = vector.load %arg6[%c32, %c0_20] : memref<392x384xbf16, #tpu.memory_space<vmem>>, vector<8x384xbf16>
    tpu.vector_store %arg6[%c32, %c0_20], %13 {strides = array<i32>} : memref<392x384xbf16, #tpu.memory_space<vmem>>, vector<8x384xbf16>,
    %c0_21 = arith.constant 0 : index
    %c0_22 = arith.constant 0 : index
    %c0_23 = arith.constant 0 : index
    %c5 = arith.constant 5 : index
    %15 = vector.load %arg1[%c0_21, %c0_22, %c0_23, %c5] : memref<1x1x8x522xbf16, #tpu.memory_space<vmem>>, vector<1x1x8x384xbf16>
    %16 = vector.shape_cast %15 : vector<1x1x8x384xbf16> to vector<8x384xbf16>
    %c40 = arith.constant 40 : index
    %c0_24 = arith.constant 0 : index
    %17 = vector.load %arg6[%c40, %c0_24] : memref<392x384xbf16, #tpu.memory_space<vmem>>, vector<8x384xbf16>
    tpu.vector_store %arg6[%c40, %c0_24], %16 {strides = array<i32>} : memref<392x384xbf16, #tpu.memory_space<vmem>>, vector<8x384xbf16>,
    %c0_25 = arith.constant 0 : index
    %c0_26 = arith.constant 0 : index
    %c0_27 = arith.constant 0 : index
    %c6 = arith.constant 6 : index
    %18 = vector.load %arg1[%c0_25, %c0_26, %c0_27, %c6] : memref<1x1x8x522xbf16, #tpu.memory_space<vmem>>, vector<1x1x8x384xbf16>
    %19 = vector.shape_cast %18 : vector<1x1x8x384xbf16> to vector<8x384xbf16>
    %c48 = arith.constant 48 : index
    %c0_28 = arith.constant 0 : index
    %20 = vector.load %arg6[%c48, %c0_28] : memref<392x384xbf16, #tpu.memory_space<vmem>>, vector<8x384xbf16>
    tpu.vector_store %arg6[%c48, %c0_28], %19 {strides = array<i32>} : memref<392x384xbf16, #tpu.memory_space<vmem>>, vector<8x384xbf16>,
    %c0_29 = arith.constant 0 : index
    %c0_30 = arith.constant 0 : index
    %c0_31 = arith.constant 0 : index
    %c22 = arith.constant 22 : index
    %21 = vector.load %arg1[%c0_29, %c0_30, %c0_31, %c22] : memref<1x1x8x522xbf16, #tpu.memory_space<vmem>>, vector<1x1x8x384xbf16>
    %22 = vector.shape_cast %21 : vector<1x1x8x384xbf16> to vector<8x384xbf16>
    %c56 = arith.constant 56 : index
    %c0_32 = arith.constant 0 : index
    %23 = vector.load %arg6[%c56, %c0_32] : memref<392x384xbf16, #tpu.memory_space<vmem>>, vector<8x384xbf16>
    tpu.vector_store %arg6[%c56, %c0_32], %22 {strides = array<i32>} : memref<392x384xbf16, #tpu.memory_space<vmem>>, vector<8x384xbf16>,
    %c0_33 = arith.constant 0 : index
    %c0_34 = arith.constant 0 : index
    %c0_35 = arith.constant 0 : index
    %c23 = arith.constant 23 : index
    %24 = vector.load %arg1[%c0_33, %c0_34, %c0_35, %c23] : memref<1x1x8x522xbf16, #tpu.memory_space<vmem>>, vector<1x1x8x384xbf16>
    %25 = vector.shape_cast %24 : vector<1x1x8x384xbf16> to vector<8x384xbf16>
    %c64 = arith.constant 64 : index
    %c0_36 = arith.constant 0 : index
    %26 = vector.load %arg6[%c64, %c0_36] : memref<392x384xbf16, #tpu.memory_space<vmem>>, vector<8x384xbf16>
    tpu.vector_store %arg6[%c64, %c0_36], %25 {strides = array<i32>} : memref<392x384xbf16, #tpu.memory_space<vmem>>, vector<8x384xbf16>,
    %c0_37 = arith.constant 0 : index
    %c0_38 = arith.constant 0 : index
    %c0_39 = arith.constant 0 : index
    %c24_40 = arith.constant 24 : index
    %27 = vector.load %arg1[%c0_37, %c0_38, %c0_39, %c24_40] : memref<1x1x8x522xbf16, #tpu.memory_space<vmem>>, vector<1x1x8x384xbf16>
    %28 = vector.shape_cast %27 : vector<1x1x8x384xbf16> to vector<8x384xbf16>
    %c72 = arith.constant 72 : index
    %c0_41 = arith.constant 0 : index
    %29 = vector.load %arg6[%c72, %c0_41] : memref<392x384xbf16, #tpu.memory_space<vmem>>, vector<8x384xbf16>
    tpu.vector_store %arg6[%c72, %c0_41], %28 {strides = array<i32>} : memref<392x384xbf16, #tpu.memory_space<vmem>>, vector<8x384xbf16>,
    %c0_42 = arith.constant 0 : index
    %c0_43 = arith.constant 0 : index
    %c0_44 = arith.constant 0 : index
    %c25 = arith.constant 25 : index
    %30 = vector.load %arg1[%c0_42, %c0_43, %c0_44, %c25] : memref<1x1x8x522xbf16, #tpu.memory_space<vmem>>, vector<1x1x8x384xbf16>
    %31 = vector.shape_cast %30 : vector<1x1x8x384xbf16> to vector<8x384xbf16>
    %c80 = arith.constant 80 : index
    %c0_45 = arith.constant 0 : index
    %32 = vector.load %arg6[%c80, %c0_45] : memref<392x384xbf16, #tpu.memory_space<vmem>>, vector<8x384xbf16>
    tpu.vector_store %arg6[%c80, %c0_45], %31 {strides = array<i32>} : memref<392x384xbf16, #tpu.memory_space<vmem>>, vector<8x384xbf16>,
    %c0_46 = arith.constant 0 : index
    %c0_47 = arith.constant 0 : index
    %c0_48 = arith.constant 0 : index
    %c26 = arith.constant 26 : index
    %33 = vector.load %arg1[%c0_46, %c0_47, %c0_48, %c26] : memref<1x1x8x522xbf16, #tpu.memory_space<vmem>>, vector<1x1x8x384xbf16>
    %34 = vector.shape_cast %33 : vector<1x1x8x384xbf16> to vector<8x384xbf16>
    %c88 = arith.constant 88 : index
    %c0_49 = arith.constant 0 : index
    %35 = vector.load %arg6[%c88, %c0_49] : memref<392x384xbf16, #tpu.memory_space<vmem>>, vector<8x384xbf16>
    tpu.vector_store %arg6[%c88, %c0_49], %34 {strides = array<i32>} : memref<392x384xbf16, #tpu.memory_space<vmem>>, vector<8x384xbf16>,
    %c0_50 = arith.constant 0 : index
    %c0_51 = arith.constant 0 : index
    %c0_52 = arith.constant 0 : index
    %c27 = arith.constant 27 : index
    %36 = vector.load %arg1[%c0_50, %c0_51, %c0_52, %c27] : memref<1x1x8x522xbf16, #tpu.memory_space<vmem>>, vector<1x1x8x384xbf16>
    %37 = vector.shape_cast %36 : vector<1x1x8x384xbf16> to vector<8x384xbf16>
    %c96 = arith.constant 96 : index
    %c0_53 = arith.constant 0 : index
    %38 = vector.load %arg6[%c96, %c0_53] : memref<392x384xbf16, #tpu.memory_space<vmem>>, vector<8x384xbf16>
    tpu.vector_store %arg6[%c96, %c0_53], %37 {strides = array<i32>} : memref<392x384xbf16, #tpu.memory_space<vmem>>, vector<8x384xbf16>,
    %c0_54 = arith.constant 0 : index
    %c0_55 = arith.constant 0 : index
    %c0_56 = arith.constant 0 : index
    %c28 = arith.constant 28 : index
    %39 = vector.load %arg1[%c0_54, %c0_55, %c0_56, %c28] : memref<1x1x8x522xbf16, #tpu.memory_space<vmem>>, vector<1x1x8x384xbf16>
    %40 = vector.shape_cast %39 : vector<1x1x8x384xbf16> to vector<8x384xbf16>
    %c104 = arith.constant 104 : index
    %c0_57 = arith.constant 0 : index
    %41 = vector.load %arg6[%c104, %c0_57] : memref<392x384xbf16, #tpu.memory_space<vmem>>, vector<8x384xbf16>
    tpu.vector_store %arg6[%c104, %c0_57], %40 {strides = array<i32>} : memref<392x384xbf16, #tpu.memory_space<vmem>>, vector<8x384xbf16>,
    %c0_58 = arith.constant 0 : index
    %c0_59 = arith.constant 0 : index
    %c0_60 = arith.constant 0 : index
    %c44 = arith.constant 44 : index
    %42 = vector.load %arg1[%c0_58, %c0_59, %c0_60, %c44] : memref<1x1x8x522xbf16, #tpu.memory_space<vmem>>, vector<1x1x8x384xbf16>
    %43 = vector.shape_cast %42 : vector<1x1x8x384xbf16> to vector<8x384xbf16>
    %c112 = arith.constant 112 : index
    %c0_61 = arith.constant 0 : index
    %44 = vector.load %arg6[%c112, %c0_61] : memref<392x384xbf16, #tpu.memory_space<vmem>>, vector<8x384xbf16>
    tpu.vector_store %arg6[%c112, %c0_61], %43 {strides = array<i32>} : memref<392x384xbf16, #tpu.memory_space<vmem>>, vector<8x384xbf16>,
    %c0_62 = arith.constant 0 : index
    %c0_63 = arith.constant 0 : index
    %c0_64 = arith.constant 0 : index
    %c45 = arith.constant 45 : index
    %45 = vector.load %arg1[%c0_62, %c0_63, %c0_64, %c45] : memref<1x1x8x522xbf16, #tpu.memory_space<vmem>>, vector<1x1x8x384xbf16>
    %46 = vector.shape_cast %45 : vector<1x1x8x384xbf16> to vector<8x384xbf16>
    %c120 = arith.constant 120 : index
    %c0_65 = arith.constant 0 : index
    %47 = vector.load %arg6[%c120, %c0_65] : memref<392x384xbf16, #tpu.memory_space<vmem>>, vector<8x384xbf16>
    tpu.vector_store %arg6[%c120, %c0_65], %46 {strides = array<i32>} : memref<392x384xbf16, #tpu.memory_space<vmem>>, vector<8x384xbf16>,
    %c0_66 = arith.constant 0 : index
    %c0_67 = arith.constant 0 : index
    %c0_68 = arith.constant 0 : index
    %c46 = arith.constant 46 : index
    %48 = vector.load %arg1[%c0_66, %c0_67, %c0_68, %c46] : memref<1x1x8x522xbf16, #tpu.memory_space<vmem>>, vector<1x1x8x384xbf16>
    %49 = vector.shape_cast %48 : vector<1x1x8x384xbf16> to vector<8x384xbf16>
    %c128 = arith.constant 128 : index
    %c0_69 = arith.constant 0 : index
    %50 = vector.load %arg6[%c128, %c0_69] : memref<392x384xbf16, #tpu.memory_space<vmem>>, vector<8x384xbf16>
    tpu.vector_store %arg6[%c128, %c0_69], %49 {strides = array<i32>} : memref<392x384xbf16, #tpu.memory_space<vmem>>, vector<8x384xbf16>,
    %c0_70 = arith.constant 0 : index
    %c0_71 = arith.constant 0 : index
    %c0_72 = arith.constant 0 : index
    %c47 = arith.constant 47 : index
    %51 = vector.load %arg1[%c0_70, %c0_71, %c0_72, %c47] : memref<1x1x8x522xbf16, #tpu.memory_space<vmem>>, vector<1x1x8x384xbf16>
    %52 = vector.shape_cast %51 : vector<1x1x8x384xbf16> to vector<8x384xbf16>
    %c136 = arith.constant 136 : index
    %c0_73 = arith.constant 0 : index
    %53 = vector.load %arg6[%c136, %c0_73] : memref<392x384xbf16, #tpu.memory_space<vmem>>, vector<8x384xbf16>
    tpu.vector_store %arg6[%c136, %c0_73], %52 {strides = array<i32>} : memref<392x384xbf16, #tpu.memory_space<vmem>>, vector<8x384xbf16>,
    %c0_74 = arith.constant 0 : index
    %c0_75 = arith.constant 0 : index
    %c0_76 = arith.constant 0 : index
    %c48_77 = arith.constant 48 : index
    %54 = vector.load %arg1[%c0_74, %c0_75, %c0_76, %c48_77] : memref<1x1x8x522xbf16, #tpu.memory_space<vmem>>, vector<1x1x8x384xbf16>
    %55 = vector.shape_cast %54 : vector<1x1x8x384xbf16> to vector<8x384xbf16>
    %c144 = arith.constant 144 : index
    %c0_78 = arith.constant 0 : index
    %56 = vector.load %arg6[%c144, %c0_78] : memref<392x384xbf16, #tpu.memory_space<vmem>>, vector<8x384xbf16>
    tpu.vector_store %arg6[%c144, %c0_78], %55 {strides = array<i32>} : memref<392x384xbf16, #tpu.memory_space<vmem>>, vector<8x384xbf16>,
    %c0_79 = arith.constant 0 : index
    %c0_80 = arith.constant 0 : index
    %c0_81 = arith.constant 0 : index
    %c49 = arith.constant 49 : index
    %57 = vector.load %arg1[%c0_79, %c0_80, %c0_81, %c49] : memref<1x1x8x522xbf16, #tpu.memory_space<vmem>>, vector<1x1x8x384xbf16>
    %58 = vector.shape_cast %57 : vector<1x1x8x384xbf16> to vector<8x384xbf16>
    %c152 = arith.constant 152 : index
    %c0_82 = arith.constant 0 : index
    %59 = vector.load %arg6[%c152, %c0_82] : memref<392x384xbf16, #tpu.memory_space<vmem>>, vector<8x384xbf16>
    tpu.vector_store %arg6[%c152, %c0_82], %58 {strides = array<i32>} : memref<392x384xbf16, #tpu.memory_space<vmem>>, vector<8x384xbf16>,
    %c0_83 = arith.constant 0 : index
    %c0_84 = arith.constant 0 : index
    %c0_85 = arith.constant 0 : index
    %c50 = arith.constant 50 : index
    %60 = vector.load %arg1[%c0_83, %c0_84, %c0_85, %c50] : memref<1x1x8x522xbf16, #tpu.memory_space<vmem>>, vector<1x1x8x384xbf16>
    %61 = vector.shape_cast %60 : vector<1x1x8x384xbf16> to vector<8x384xbf16>
    %c160 = arith.constant 160 : index
    %c0_86 = arith.constant 0 : index
    %62 = vector.load %arg6[%c160, %c0_86] : memref<392x384xbf16, #tpu.memory_space<vmem>>, vector<8x384xbf16>
    tpu.vector_store %arg6[%c160, %c0_86], %61 {strides = array<i32>} : memref<392x384xbf16, #tpu.memory_space<vmem>>, vector<8x384xbf16>,
    %c0_87 = arith.constant 0 : index
    %c0_88 = arith.constant 0 : index
    %c0_89 = arith.constant 0 : index
    %c66 = arith.constant 66 : index
    %63 = vector.load %arg1[%c0_87, %c0_88, %c0_89, %c66] : memref<1x1x8x522xbf16, #tpu.memory_space<vmem>>, vector<1x1x8x384xbf16>
    %64 = vector.shape_cast %63 : vector<1x1x8x384xbf16> to vector<8x384xbf16>
    %c168 = arith.constant 168 : index
    %c0_90 = arith.constant 0 : index
    %65 = vector.load %arg6[%c168, %c0_90] : memref<392x384xbf16, #tpu.memory_space<vmem>>, vector<8x384xbf16>
    tpu.vector_store %arg6[%c168, %c0_90], %64 {strides = array<i32>} : memref<392x384xbf16, #tpu.memory_space<vmem>>, vector<8x384xbf16>,
    %c0_91 = arith.constant 0 : index
    %c0_92 = arith.constant 0 : index
    %c0_93 = arith.constant 0 : index
    %c67 = arith.constant 67 : index
    %66 = vector.load %arg1[%c0_91, %c0_92, %c0_93, %c67] : memref<1x1x8x522xbf16, #tpu.memory_space<vmem>>, vector<1x1x8x384xbf16>
    %67 = vector.shape_cast %66 : vector<1x1x8x384xbf16> to vector<8x384xbf16>
    %c176 = arith.constant 176 : index
    %c0_94 = arith.constant 0 : index
    %68 = vector.load %arg6[%c176, %c0_94] : memref<392x384xbf16, #tpu.memory_space<vmem>>, vector<8x384xbf16>
    tpu.vector_store %arg6[%c176, %c0_94], %67 {strides = array<i32>} : memref<392x384xbf16, #tpu.memory_space<vmem>>, vector<8x384xbf16>,
    %c0_95 = arith.constant 0 : index
    %c0_96 = arith.constant 0 : index
    %c0_97 = arith.constant 0 : index
    %c68 = arith.constant 68 : index
    %69 = vector.load %arg1[%c0_95, %c0_96, %c0_97, %c68] : memref<1x1x8x522xbf16, #tpu.memory_space<vmem>>, vector<1x1x8x384xbf16>
    %70 = vector.shape_cast %69 : vector<1x1x8x384xbf16> to vector<8x384xbf16>
    %c184 = arith.constant 184 : index
    %c0_98 = arith.constant 0 : index
    %71 = vector.load %arg6[%c184, %c0_98] : memref<392x384xbf16, #tpu.memory_space<vmem>>, vector<8x384xbf16>
    tpu.vector_store %arg6[%c184, %c0_98], %70 {strides = array<i32>} : memref<392x384xbf16, #tpu.memory_space<vmem>>, vector<8x384xbf16>,
    %c0_99 = arith.constant 0 : index
    %c0_100 = arith.constant 0 : index
    %c0_101 = arith.constant 0 : index
    %c69 = arith.constant 69 : index
    %72 = vector.load %arg1[%c0_99, %c0_100, %c0_101, %c69] : memref<1x1x8x522xbf16, #tpu.memory_space<vmem>>, vector<1x1x8x384xbf16>
    %73 = vector.shape_cast %72 : vector<1x1x8x384xbf16> to vector<8x384xbf16>
    %c192 = arith.constant 192 : index
    %c0_102 = arith.constant 0 : index
    %74 = vector.load %arg6[%c192, %c0_102] : memref<392x384xbf16, #tpu.memory_space<vmem>>, vector<8x384xbf16>
    tpu.vector_store %arg6[%c192, %c0_102], %73 {strides = array<i32>} : memref<392x384xbf16, #tpu.memory_space<vmem>>, vector<8x384xbf16>,
    %c0_103 = arith.constant 0 : index
    %c0_104 = arith.constant 0 : index
    %c0_105 = arith.constant 0 : index
    %c70 = arith.constant 70 : index
    %75 = vector.load %arg1[%c0_103, %c0_104, %c0_105, %c70] : memref<1x1x8x522xbf16, #tpu.memory_space<vmem>>, vector<1x1x8x384xbf16>
    %76 = vector.shape_cast %75 : vector<1x1x8x384xbf16> to vector<8x384xbf16>
    %c200 = arith.constant 200 : index
    %c0_106 = arith.constant 0 : index
    %77 = vector.load %arg6[%c200, %c0_106] : memref<392x384xbf16, #tpu.memory_space<vmem>>, vector<8x384xbf16>
    tpu.vector_store %arg6[%c200, %c0_106], %76 {strides = array<i32>} : memref<392x384xbf16, #tpu.memory_space<vmem>>, vector<8x384xbf16>,
    %c0_107 = arith.constant 0 : index
    %c0_108 = arith.constant 0 : index
    %c0_109 = arith.constant 0 : index
    %c71 = arith.constant 71 : index
    %78 = vector.load %arg1[%c0_107, %c0_108, %c0_109, %c71] : memref<1x1x8x522xbf16, #tpu.memory_space<vmem>>, vector<1x1x8x384xbf16>
    %79 = vector.shape_cast %78 : vector<1x1x8x384xbf16> to vector<8x384xbf16>
    %c208 = arith.constant 208 : index
    %c0_110 = arith.constant 0 : index
    %80 = vector.load %arg6[%c208, %c0_110] : memref<392x384xbf16, #tpu.memory_space<vmem>>, vector<8x384xbf16>
    tpu.vector_store %arg6[%c208, %c0_110], %79 {strides = array<i32>} : memref<392x384xbf16, #tpu.memory_space<vmem>>, vector<8x384xbf16>,
    %c0_111 = arith.constant 0 : index
    %c0_112 = arith.constant 0 : index
    %c0_113 = arith.constant 0 : index
    %c72_114 = arith.constant 72 : index
    %81 = vector.load %arg1[%c0_111, %c0_112, %c0_113, %c72_114] : memref<1x1x8x522xbf16, #tpu.memory_space<vmem>>, vector<1x1x8x384xbf16>
    %82 = vector.shape_cast %81 : vector<1x1x8x384xbf16> to vector<8x384xbf16>
    %c216 = arith.constant 216 : index
    %c0_115 = arith.constant 0 : index
    %83 = vector.load %arg6[%c216, %c0_115] : memref<392x384xbf16, #tpu.memory_space<vmem>>, vector<8x384xbf16>
    tpu.vector_store %arg6[%c216, %c0_115], %82 {strides = array<i32>} : memref<392x384xbf16, #tpu.memory_space<vmem>>, vector<8x384xbf16>,
    %c0_116 = arith.constant 0 : index
    %c0_117 = arith.constant 0 : index
    %c0_118 = arith.constant 0 : index
    %c88_119 = arith.constant 88 : index
    %84 = vector.load %arg1[%c0_116, %c0_117, %c0_118, %c88_119] : memref<1x1x8x522xbf16, #tpu.memory_space<vmem>>, vector<1x1x8x384xbf16>
    %85 = vector.shape_cast %84 : vector<1x1x8x384xbf16> to vector<8x384xbf16>
    %c224 = arith.constant 224 : index
    %c0_120 = arith.constant 0 : index
    %86 = vector.load %arg6[%c224, %c0_120] : memref<392x384xbf16, #tpu.memory_space<vmem>>, vector<8x384xbf16>
    tpu.vector_store %arg6[%c224, %c0_120], %85 {strides = array<i32>} : memref<392x384xbf16, #tpu.memory_space<vmem>>, vector<8x384xbf16>,
    %c0_121 = arith.constant 0 : index
    %c0_122 = arith.constant 0 : index
    %c0_123 = arith.constant 0 : index
    %c89 = arith.constant 89 : index
    %87 = vector.load %arg1[%c0_121, %c0_122, %c0_123, %c89] : memref<1x1x8x522xbf16, #tpu.memory_space<vmem>>, vector<1x1x8x384xbf16>
    %88 = vector.shape_cast %87 : vector<1x1x8x384xbf16> to vector<8x384xbf16>
    %c232 = arith.constant 232 : index
    %c0_124 = arith.constant 0 : index
    %89 = vector.load %arg6[%c232, %c0_124] : memref<392x384xbf16, #tpu.memory_space<vmem>>, vector<8x384xbf16>
    tpu.vector_store %arg6[%c232, %c0_124], %88 {strides = array<i32>} : memref<392x384xbf16, #tpu.memory_space<vmem>>, vector<8x384xbf16>,
    %c0_125 = arith.constant 0 : index
    %c0_126 = arith.constant 0 : index
    %c0_127 = arith.constant 0 : index
    %c90 = arith.constant 90 : index
    %90 = vector.load %arg1[%c0_125, %c0_126, %c0_127, %c90] : memref<1x1x8x522xbf16, #tpu.memory_space<vmem>>, vector<1x1x8x384xbf16>
    %91 = vector.shape_cast %90 : vector<1x1x8x384xbf16> to vector<8x384xbf16>
    %c240 = arith.constant 240 : index
    %c0_128 = arith.constant 0 : index
    %92 = vector.load %arg6[%c240, %c0_128] : memref<392x384xbf16, #tpu.memory_space<vmem>>, vector<8x384xbf16>
    tpu.vector_store %arg6[%c240, %c0_128], %91 {strides = array<i32>} : memref<392x384xbf16, #tpu.memory_space<vmem>>, vector<8x384xbf16>,
    %c0_129 = arith.constant 0 : index
    %c0_130 = arith.constant 0 : index
    %c0_131 = arith.constant 0 : index
    %c91 = arith.constant 91 : index
    %93 = vector.load %arg1[%c0_129, %c0_130, %c0_131, %c91] : memref<1x1x8x522xbf16, #tpu.memory_space<vmem>>, vector<1x1x8x384xbf16>
    %94 = vector.shape_cast %93 : vector<1x1x8x384xbf16> to vector<8x384xbf16>
    %c248 = arith.constant 248 : index
    %c0_132 = arith.constant 0 : index
    %95 = vector.load %arg6[%c248, %c0_132] : memref<392x384xbf16, #tpu.memory_space<vmem>>, vector<8x384xbf16>
    tpu.vector_store %arg6[%c248, %c0_132], %94 {strides = array<i32>} : memref<392x384xbf16, #tpu.memory_space<vmem>>, vector<8x384xbf16>,
    %c0_133 = arith.constant 0 : index
    %c0_134 = arith.constant 0 : index
    %c0_135 = arith.constant 0 : index
    %c92 = arith.constant 92 : index
    %96 = vector.load %arg1[%c0_133, %c0_134, %c0_135, %c92] : memref<1x1x8x522xbf16, #tpu.memory_space<vmem>>, vector<1x1x8x384xbf16>
    %97 = vector.shape_cast %96 : vector<1x1x8x384xbf16> to vector<8x384xbf16>
    %c256 = arith.constant 256 : index
    %c0_136 = arith.constant 0 : index
    %98 = vector.load %arg6[%c256, %c0_136] : memref<392x384xbf16, #tpu.memory_space<vmem>>, vector<8x384xbf16>
    tpu.vector_store %arg6[%c256, %c0_136], %97 {strides = array<i32>} : memref<392x384xbf16, #tpu.memory_space<vmem>>, vector<8x384xbf16>,
    %c0_137 = arith.constant 0 : index
    %c0_138 = arith.constant 0 : index
    %c0_139 = arith.constant 0 : index
    %c93 = arith.constant 93 : index
    %99 = vector.load %arg1[%c0_137, %c0_138, %c0_139, %c93] : memref<1x1x8x522xbf16, #tpu.memory_space<vmem>>, vector<1x1x8x384xbf16>
    %100 = vector.shape_cast %99 : vector<1x1x8x384xbf16> to vector<8x384xbf16>
    %c264 = arith.constant 264 : index
    %c0_140 = arith.constant 0 : index
    %101 = vector.load %arg6[%c264, %c0_140] : memref<392x384xbf16, #tpu.memory_space<vmem>>, vector<8x384xbf16>
    tpu.vector_store %arg6[%c264, %c0_140], %100 {strides = array<i32>} : memref<392x384xbf16, #tpu.memory_space<vmem>>, vector<8x384xbf16>,
    %c0_141 = arith.constant 0 : index
    %c0_142 = arith.constant 0 : index
    %c0_143 = arith.constant 0 : index
    %c94 = arith.constant 94 : index
    %102 = vector.load %arg1[%c0_141, %c0_142, %c0_143, %c94] : memref<1x1x8x522xbf16, #tpu.memory_space<vmem>>, vector<1x1x8x384xbf16>
    %103 = vector.shape_cast %102 : vector<1x1x8x384xbf16> to vector<8x384xbf16>
    %c272 = arith.constant 272 : index
    %c0_144 = arith.constant 0 : index
    %104 = vector.load %arg6[%c272, %c0_144] : memref<392x384xbf16, #tpu.memory_space<vmem>>, vector<8x384xbf16>
    tpu.vector_store %arg6[%c272, %c0_144], %103 {strides = array<i32>} : memref<392x384xbf16, #tpu.memory_space<vmem>>, vector<8x384xbf16>,
    %c0_145 = arith.constant 0 : index
    %c0_146 = arith.constant 0 : index
    %c0_147 = arith.constant 0 : index
    %c110 = arith.constant 110 : index
    %105 = vector.load %arg1[%c0_145, %c0_146, %c0_147, %c110] : memref<1x1x8x522xbf16, #tpu.memory_space<vmem>>, vector<1x1x8x384xbf16>
    %106 = vector.shape_cast %105 : vector<1x1x8x384xbf16> to vector<8x384xbf16>
    %c280 = arith.constant 280 : index
    %c0_148 = arith.constant 0 : index
    %107 = vector.load %arg6[%c280, %c0_148] : memref<392x384xbf16, #tpu.memory_space<vmem>>, vector<8x384xbf16>
    tpu.vector_store %arg6[%c280, %c0_148], %106 {strides = array<i32>} : memref<392x384xbf16, #tpu.memory_space<vmem>>, vector<8x384xbf16>,
    %c0_149 = arith.constant 0 : index
    %c0_150 = arith.constant 0 : index
    %c0_151 = arith.constant 0 : index
    %c111 = arith.constant 111 : index
    %108 = vector.load %arg1[%c0_149, %c0_150, %c0_151, %c111] : memref<1x1x8x522xbf16, #tpu.memory_space<vmem>>, vector<1x1x8x384xbf16>
    %109 = vector.shape_cast %108 : vector<1x1x8x384xbf16> to vector<8x384xbf16>
    %c288 = arith.constant 288 : index
    %c0_152 = arith.constant 0 : index
    %110 = vector.load %arg6[%c288, %c0_152] : memref<392x384xbf16, #tpu.memory_space<vmem>>, vector<8x384xbf16>
    tpu.vector_store %arg6[%c288, %c0_152], %109 {strides = array<i32>} : memref<392x384xbf16, #tpu.memory_space<vmem>>, vector<8x384xbf16>,
    %c0_153 = arith.constant 0 : index
    %c0_154 = arith.constant 0 : index
    %c0_155 = arith.constant 0 : index
    %c112_156 = arith.constant 112 : index
    %111 = vector.load %arg1[%c0_153, %c0_154, %c0_155, %c112_156] : memref<1x1x8x522xbf16, #tpu.memory_space<vmem>>, vector<1x1x8x384xbf16>
    %112 = vector.shape_cast %111 : vector<1x1x8x384xbf16> to vector<8x384xbf16>
    %c296 = arith.constant 296 : index
    %c0_157 = arith.constant 0 : index
    %113 = vector.load %arg6[%c296, %c0_157] : memref<392x384xbf16, #tpu.memory_space<vmem>>, vector<8x384xbf16>
    tpu.vector_store %arg6[%c296, %c0_157], %112 {strides = array<i32>} : memref<392x384xbf16, #tpu.memory_space<vmem>>, vector<8x384xbf16>,
    %c0_158 = arith.constant 0 : index
    %c0_159 = arith.constant 0 : index
    %c0_160 = arith.constant 0 : index
    %c113 = arith.constant 113 : index
    %114 = vector.load %arg1[%c0_158, %c0_159, %c0_160, %c113] : memref<1x1x8x522xbf16, #tpu.memory_space<vmem>>, vector<1x1x8x384xbf16>
    %115 = vector.shape_cast %114 : vector<1x1x8x384xbf16> to vector<8x384xbf16>
    %c304 = arith.constant 304 : index
    %c0_161 = arith.constant 0 : index
    %116 = vector.load %arg6[%c304, %c0_161] : memref<392x384xbf16, #tpu.memory_space<vmem>>, vector<8x384xbf16>
    tpu.vector_store %arg6[%c304, %c0_161], %115 {strides = array<i32>} : memref<392x384xbf16, #tpu.memory_space<vmem>>, vector<8x384xbf16>,
    %c0_162 = arith.constant 0 : index
    %c0_163 = arith.constant 0 : index
    %c0_164 = arith.constant 0 : index
    %c114 = arith.constant 114 : index
    %117 = vector.load %arg1[%c0_162, %c0_163, %c0_164, %c114] : memref<1x1x8x522xbf16, #tpu.memory_space<vmem>>, vector<1x1x8x384xbf16>
    %118 = vector.shape_cast %117 : vector<1x1x8x384xbf16> to vector<8x384xbf16>
    %c312 = arith.constant 312 : index
    %c0_165 = arith.constant 0 : index
    %119 = vector.load %arg6[%c312, %c0_165] : memref<392x384xbf16, #tpu.memory_space<vmem>>, vector<8x384xbf16>
    tpu.vector_store %arg6[%c312, %c0_165], %118 {strides = array<i32>} : memref<392x384xbf16, #tpu.memory_space<vmem>>, vector<8x384xbf16>,
    %c0_166 = arith.constant 0 : index
    %c0_167 = arith.constant 0 : index
    %c0_168 = arith.constant 0 : index
    %c115 = arith.constant 115 : index
    %120 = vector.load %arg1[%c0_166, %c0_167, %c0_168, %c115] : memref<1x1x8x522xbf16, #tpu.memory_space<vmem>>, vector<1x1x8x384xbf16>
    %121 = vector.shape_cast %120 : vector<1x1x8x384xbf16> to vector<8x384xbf16>
    %c320 = arith.constant 320 : index
    %c0_169 = arith.constant 0 : index
    %122 = vector.load %arg6[%c320, %c0_169] : memref<392x384xbf16, #tpu.memory_space<vmem>>, vector<8x384xbf16>
    tpu.vector_store %arg6[%c320, %c0_169], %121 {strides = array<i32>} : memref<392x384xbf16, #tpu.memory_space<vmem>>, vector<8x384xbf16>,
    %c0_170 = arith.constant 0 : index
    %c0_171 = arith.constant 0 : index
    %c0_172 = arith.constant 0 : index
    %c116 = arith.constant 116 : index
    %123 = vector.load %arg1[%c0_170, %c0_171, %c0_172, %c116] : memref<1x1x8x522xbf16, #tpu.memory_space<vmem>>, vector<1x1x8x384xbf16>
    %124 = vector.shape_cast %123 : vector<1x1x8x384xbf16> to vector<8x384xbf16>
    %c328 = arith.constant 328 : index
    %c0_173 = arith.constant 0 : index
    %125 = vector.load %arg6[%c328, %c0_173] : memref<392x384xbf16, #tpu.memory_space<vmem>>, vector<8x384xbf16>
    tpu.vector_store %arg6[%c328, %c0_173], %124 {strides = array<i32>} : memref<392x384xbf16, #tpu.memory_space<vmem>>, vector<8x384xbf16>,
    %c0_174 = arith.constant 0 : index
    %c0_175 = arith.constant 0 : index
    %c0_176 = arith.constant 0 : index
    %c132 = arith.constant 132 : index
    %126 = vector.load %arg1[%c0_174, %c0_175, %c0_176, %c132] : memref<1x1x8x522xbf16, #tpu.memory_space<vmem>>, vector<1x1x8x384xbf16>
    %127 = vector.shape_cast %126 : vector<1x1x8x384xbf16> to vector<8x384xbf16>
    %c336 = arith.constant 336 : index
    %c0_177 = arith.constant 0 : index
    %128 = vector.load %arg6[%c336, %c0_177] : memref<392x384xbf16, #tpu.memory_space<vmem>>, vector<8x384xbf16>
    tpu.vector_store %arg6[%c336, %c0_177], %127 {strides = array<i32>} : memref<392x384xbf16, #tpu.memory_space<vmem>>, vector<8x384xbf16>,
    %c0_178 = arith.constant 0 : index
    %c0_179 = arith.constant 0 : index
    %c0_180 = arith.constant 0 : index
    %c133 = arith.constant 133 : index
    %129 = vector.load %arg1[%c0_178, %c0_179, %c0_180, %c133] : memref<1x1x8x522xbf16, #tpu.memory_space<vmem>>, vector<1x1x8x384xbf16>
    %130 = vector.shape_cast %129 : vector<1x1x8x384xbf16> to vector<8x384xbf16>
    %c344 = arith.constant 344 : index
    %c0_181 = arith.constant 0 : index
    %131 = vector.load %arg6[%c344, %c0_181] : memref<392x384xbf16, #tpu.memory_space<vmem>>, vector<8x384xbf16>
    tpu.vector_store %arg6[%c344, %c0_181], %130 {strides = array<i32>} : memref<392x384xbf16, #tpu.memory_space<vmem>>, vector<8x384xbf16>,
    %c0_182 = arith.constant 0 : index
    %c0_183 = arith.constant 0 : index
    %c0_184 = arith.constant 0 : index
    %c134 = arith.constant 134 : index
    %132 = vector.load %arg1[%c0_182, %c0_183, %c0_184, %c134] : memref<1x1x8x522xbf16, #tpu.memory_space<vmem>>, vector<1x1x8x384xbf16>
    %133 = vector.shape_cast %132 : vector<1x1x8x384xbf16> to vector<8x384xbf16>
    %c352 = arith.constant 352 : index
    %c0_185 = arith.constant 0 : index
    %134 = vector.load %arg6[%c352, %c0_185] : memref<392x384xbf16, #tpu.memory_space<vmem>>, vector<8x384xbf16>
    tpu.vector_store %arg6[%c352, %c0_185], %133 {strides = array<i32>} : memref<392x384xbf16, #tpu.memory_space<vmem>>, vector<8x384xbf16>,
    %c0_186 = arith.constant 0 : index
    %c0_187 = arith.constant 0 : index
    %c0_188 = arith.constant 0 : index
    %c135 = arith.constant 135 : index
    %135 = vector.load %arg1[%c0_186, %c0_187, %c0_188, %c135] : memref<1x1x8x522xbf16, #tpu.memory_space<vmem>>, vector<1x1x8x384xbf16>
    %136 = vector.shape_cast %135 : vector<1x1x8x384xbf16> to vector<8x384xbf16>
    %c360 = arith.constant 360 : index
    %c0_189 = arith.constant 0 : index
    %137 = vector.load %arg6[%c360, %c0_189] : memref<392x384xbf16, #tpu.memory_space<vmem>>, vector<8x384xbf16>
    tpu.vector_store %arg6[%c360, %c0_189], %136 {strides = array<i32>} : memref<392x384xbf16, #tpu.memory_space<vmem>>, vector<8x384xbf16>,
    %c0_190 = arith.constant 0 : index
    %c0_191 = arith.constant 0 : index
    %c0_192 = arith.constant 0 : index
    %c136_193 = arith.constant 136 : index
    %138 = vector.load %arg1[%c0_190, %c0_191, %c0_192, %c136_193] : memref<1x1x8x522xbf16, #tpu.memory_space<vmem>>, vector<1x1x8x384xbf16>
    %139 = vector.shape_cast %138 : vector<1x1x8x384xbf16> to vector<8x384xbf16>
    %c368 = arith.constant 368 : index
    %c0_194 = arith.constant 0 : index
    %140 = vector.load %arg6[%c368, %c0_194] : memref<392x384xbf16, #tpu.memory_space<vmem>>, vector<8x384xbf16>
    tpu.vector_store %arg6[%c368, %c0_194], %139 {strides = array<i32>} : memref<392x384xbf16, #tpu.memory_space<vmem>>, vector<8x384xbf16>,
    %c0_195 = arith.constant 0 : index
    %c0_196 = arith.constant 0 : index
    %c0_197 = arith.constant 0 : index
    %c137 = arith.constant 137 : index
    %141 = vector.load %arg1[%c0_195, %c0_196, %c0_197, %c137] : memref<1x1x8x522xbf16, #tpu.memory_space<vmem>>, vector<1x1x8x384xbf16>
    %142 = vector.shape_cast %141 : vector<1x1x8x384xbf16> to vector<8x384xbf16>
    %c376 = arith.constant 376 : index
    %c0_198 = arith.constant 0 : index
    %143 = vector.load %arg6[%c376, %c0_198] : memref<392x384xbf16, #tpu.memory_space<vmem>>, vector<8x384xbf16>
    tpu.vector_store %arg6[%c376, %c0_198], %142 {strides = array<i32>} : memref<392x384xbf16, #tpu.memory_space<vmem>>, vector<8x384xbf16>,
    %c0_199 = arith.constant 0 : index
    %c0_200 = arith.constant 0 : index
    %c0_201 = arith.constant 0 : index
    %c138 = arith.constant 138 : index
    %144 = vector.load %arg1[%c0_199, %c0_200, %c0_201, %c138] : memref<1x1x8x522xbf16, #tpu.memory_space<vmem>>, vector<1x1x8x384xbf16>
    %145 = vector.shape_cast %144 : vector<1x1x8x384xbf16> to vector<8x384xbf16>
    %c384 = arith.constant 384 : index
    %c0_202 = arith.constant 0 : index
    %146 = vector.load %arg6[%c384, %c0_202] : memref<392x384xbf16, #tpu.memory_space<vmem>>, vector<8x384xbf16>
    tpu.vector_store %arg6[%c384, %c0_202], %145 {strides = array<i32>} : memref<392x384xbf16, #tpu.memory_space<vmem>>, vector<8x384xbf16>,
    %c0_203 = arith.constant 0 : index
    %c0_204 = arith.constant 0 : index
    %147 = vector.load %arg2[%c0_203, %c0_204] : memref<8x392xbf16, #tpu.memory_space<vmem>>, vector<8x392xbf16>
    %c0_205 = arith.constant 0 : index
    %c0_206 = arith.constant 0 : index
    %148 = vector.load %arg6[%c0_205, %c0_206] : memref<392x384xbf16, #tpu.memory_space<vmem>>, vector<392x384xbf16>
    %cst = arith.constant dense<0.000000e+00> : vector<8x384xf32>
    %149 = tpu.matmul %147, %148, %cst {dimension_numbers = #tpu.dot_dimension_numbers<[1], [0], [0], [1], [0, 0, 1, 1], [], []>} : vector<8x392xbf16>, vector<392x384xbf16>, vector<8x384xf32> -> vector<8x384xf32>
    %c0_207 = arith.constant 0 : index
    %c0_208 = arith.constant 0 : index
    %c0_209 = arith.constant 0 : index
    %150 = vector.load %arg4[%c0_207, %c0_208, %c0_209] : memref<1x8x384xf32, #tpu.memory_space<vmem>>, vector<1x8x384xf32>
    %151 = vector.shape_cast %150 : vector<1x8x384xf32> to vector<8x384xf32>
    %152 = vector.shape_cast %149 : vector<8x384xf32> to vector<1x8x384xf32>
    tpu.vector_store %arg4[%c0_207, %c0_208, %c0_209], %152 {strides = array<i32>} : memref<1x8x384xf32, #tpu.memory_space<vmem>>, vector<1x8x384xf32>,
    %c0_210 = arith.constant 0 : index
    %c0_211 = arith.constant 0 : index
    %153 = vector.load %arg3[%c0_210, %c0_211] : memref<1x384xf32, #tpu.memory_space<vmem>>, vector<1x384xf32>
    %154 = vector.broadcast %153 : vector<1x384xf32> to vector<8x384xf32>
    %155 = arith.mulf %149, %154 : vector<8x384xf32>
    %cst_212 = arith.constant dense<0.000000e+00> : vector<8xf32>
    %156 = vector.multi_reduction <add>, %155, %cst_212 [1] : vector<8x384xf32> to vector<8xf32>
    %157 = vector.shape_cast %156 : vector<8xf32> to vector<8x1xf32>
    %c0_213 = arith.constant 0 : index
    %c0_214 = arith.constant 0 : index
    %c0_215 = arith.constant 0 : index
    %c0_216 = arith.constant 0 : index
    %158 = vector.load %arg5[%c0_213, %c0_214, %c0_215, %c0_216] : memref<1x2x8x1xf32, #tpu.memory_space<vmem>>, vector<1x1x8x1xf32>
    %159 = vector.shape_cast %158 : vector<1x1x8x1xf32> to vector<8x1xf32>
    %160 = vector.shape_cast %157 : vector<8x1xf32> to vector<1x1x8x1xf32>
    tpu.vector_store %arg5[%c0_213, %c0_214, %c0_215, %c0_216], %160 {strides = array<i32>} : memref<1x2x8x1xf32, #tpu.memory_space<vmem>>, vector<1x1x8x1xf32>,
    %161 = arith.mulf %155, %155 : vector<8x384xf32>
    %cst_217 = arith.constant dense<0.000000e+00> : vector<8xf32>
    %162 = vector.multi_reduction <add>, %161, %cst_217 [1] : vector<8x384xf32> to vector<8xf32>
    %163 = vector.shape_cast %162 : vector<8xf32> to vector<8x1xf32>
    %c0_218 = arith.constant 0 : index
    %c1_219 = arith.constant 1 : index
    %c0_220 = arith.constant 0 : index
    %c0_221 = arith.constant 0 : index
    %164 = vector.load %arg5[%c0_218, %c1_219, %c0_220, %c0_221] : memref<1x2x8x1xf32, #tpu.memory_space<vmem>>, vector<1x1x8x1xf32>
    %165 = vector.shape_cast %164 : vector<1x1x8x1xf32> to vector<8x1xf32>
    %166 = vector.shape_cast %163 : vector<8x1xf32> to vector<1x1x8x1xf32>
    tpu.vector_store %arg5[%c0_218, %c1_219, %c0_220, %c0_221], %166 {strides = array<i32>} : memref<1x2x8x1xf32, #tpu.memory_space<vmem>>, vector<1x1x8x1xf32>,
    return
  }
  func.func @transform_0(%arg0: i32) -> (i32, i32, i32, i32) {
    %c0_i32 = arith.constant 0 : i32
    %c0_i32_0 = arith.constant 0 : i32
    %c0_i32_1 = arith.constant 0 : i32
    %c0_i32_2 = arith.constant 0 : i32
    return %arg0, %c0_i32, %c0_i32_0, %c0_i32_1 : i32, i32, i32, i32
  }
  func.func @transform_1(%arg0: i32) -> (i32, i32) {
    %c0_i32 = arith.constant 0 : i32
    %c0_i32_0 = arith.constant 0 : i32
    %c0_i32_1 = arith.constant 0 : i32
    return %c0_i32, %c0_i32_0 : i32, i32
  }
  func.func @transform_2(%arg0: i32) -> (i32, i32) {
    %c0_i32 = arith.constant 0 : i32
    %c0_i32_0 = arith.constant 0 : i32
    %c0_i32_1 = arith.constant 0 : i32
    return %c0_i32, %c0_i32_0 : i32, i32
  }
  func.func @transform_3(%arg0: i32) -> (i32, i32, i32) {
    %c0_i32 = arith.constant 0 : i32
    %c0_i32_0 = arith.constant 0 : i32
    %c0_i32_1 = arith.constant 0 : i32
    return %arg0, %c0_i32, %c0_i32_0 : i32, i32, i32
  }
  func.func @transform_4(%arg0: i32) -> (i32, i32, i32, i32) {
    %c0_i32 = arith.constant 0 : i32
    %c0_i32_0 = arith.constant 0 : i32
    %c0_i32_1 = arith.constant 0 : i32
    %c0_i32_2 = arith.constant 0 : i32
    return %arg0, %c0_i32, %c0_i32_0, %c0_i32_1 : i32, i32, i32, i32
  }
}

module attributes {stable_mosaic.version = 11 : i64} {
  func.func @kernel(%arg0: i32, %arg1: memref<1x4x8x138xbf16, #tpu.memory_space<vmem>>, %arg2: memref<16x72xbf16, #tpu.memory_space<vmem>>, %arg3: memref<1x128xf32, #tpu.memory_space<vmem>>, %arg4: memref<1x16x128xf32, #tpu.memory_space<vmem>>, %arg5: memref<1x2x16x1xf32, #tpu.memory_space<vmem>>, %arg6: memref<72x128xbf16, #tpu.memory_space<vmem>>) attributes {dimension_semantics = [#tpu.dimension_semantics<parallel>], iteration_bounds = array<i64: 2>, scalar_prefetch = 0 : i64, scratch_operands = 1 : i64, tpu.core_type = #tpu.core_type<tc>, window_params = [{transform_indices = @transform_0, window_bounds = array<i64: 1, 4, 8, 138>}, {pipeline_mode = #tpu.pipeline_mode<synchronous>, transform_indices = @transform_1, window_bounds = array<i64: 16, 72>}, {pipeline_mode = #tpu.pipeline_mode<synchronous>, transform_indices = @transform_2, window_bounds = array<i64: 1, 128>}, {transform_indices = @transform_3, window_bounds = array<i64: 1, 16, 128>}, {transform_indices = @transform_4, window_bounds = array<i64: 1, 2, 16, 1>}]} {
    %c0 = arith.constant 0 : index
    %c0_0 = arith.constant 0 : index
    %c0_1 = arith.constant 0 : index
    %c0_2 = arith.constant 0 : index
    %0 = vector.load %arg1[%c0, %c0_0, %c0_1, %c0_2] : memref<1x4x8x138xbf16, #tpu.memory_space<vmem>>, vector<1x1x8x128xbf16>
    %1 = vector.shape_cast %0 : vector<1x1x8x128xbf16> to vector<8x128xbf16>
    %c0_3 = arith.constant 0 : index
    %c0_4 = arith.constant 0 : index
    %2 = vector.load %arg6[%c0_3, %c0_4] : memref<72x128xbf16, #tpu.memory_space<vmem>>, vector<8x128xbf16>
    tpu.vector_store %arg6[%c0_3, %c0_4], %1 {strides = array<i32>} : memref<72x128xbf16, #tpu.memory_space<vmem>>, vector<8x128xbf16>,
    %c0_5 = arith.constant 0 : index
    %c1 = arith.constant 1 : index
    %c0_6 = arith.constant 0 : index
    %c0_7 = arith.constant 0 : index
    %3 = vector.load %arg1[%c0_5, %c1, %c0_6, %c0_7] : memref<1x4x8x138xbf16, #tpu.memory_space<vmem>>, vector<1x1x8x128xbf16>
    %4 = vector.shape_cast %3 : vector<1x1x8x128xbf16> to vector<8x128xbf16>
    %c8 = arith.constant 8 : index
    %c0_8 = arith.constant 0 : index
    %5 = vector.load %arg6[%c8, %c0_8] : memref<72x128xbf16, #tpu.memory_space<vmem>>, vector<8x128xbf16>
    tpu.vector_store %arg6[%c8, %c0_8], %4 {strides = array<i32>} : memref<72x128xbf16, #tpu.memory_space<vmem>>, vector<8x128xbf16>,
    %c0_9 = arith.constant 0 : index
    %c0_10 = arith.constant 0 : index
    %c0_11 = arith.constant 0 : index
    %c1_12 = arith.constant 1 : index
    %6 = vector.load %arg1[%c0_9, %c0_10, %c0_11, %c1_12] : memref<1x4x8x138xbf16, #tpu.memory_space<vmem>>, vector<1x1x8x128xbf16>
    %7 = vector.shape_cast %6 : vector<1x1x8x128xbf16> to vector<8x128xbf16>
    %c16 = arith.constant 16 : index
    %c0_13 = arith.constant 0 : index
    %8 = vector.load %arg6[%c16, %c0_13] : memref<72x128xbf16, #tpu.memory_space<vmem>>, vector<8x128xbf16>
    tpu.vector_store %arg6[%c16, %c0_13], %7 {strides = array<i32>} : memref<72x128xbf16, #tpu.memory_space<vmem>>, vector<8x128xbf16>,
    %c0_14 = arith.constant 0 : index
    %c2 = arith.constant 2 : index
    %c0_15 = arith.constant 0 : index
    %c0_16 = arith.constant 0 : index
    %9 = vector.load %arg1[%c0_14, %c2, %c0_15, %c0_16] : memref<1x4x8x138xbf16, #tpu.memory_space<vmem>>, vector<1x1x8x128xbf16>
    %10 = vector.shape_cast %9 : vector<1x1x8x128xbf16> to vector<8x128xbf16>
    %c24 = arith.constant 24 : index
    %c0_17 = arith.constant 0 : index
    %11 = vector.load %arg6[%c24, %c0_17] : memref<72x128xbf16, #tpu.memory_space<vmem>>, vector<8x128xbf16>
    tpu.vector_store %arg6[%c24, %c0_17], %10 {strides = array<i32>} : memref<72x128xbf16, #tpu.memory_space<vmem>>, vector<8x128xbf16>,
    %c0_18 = arith.constant 0 : index
    %c3 = arith.constant 3 : index
    %c0_19 = arith.constant 0 : index
    %c0_20 = arith.constant 0 : index
    %12 = vector.load %arg1[%c0_18, %c3, %c0_19, %c0_20] : memref<1x4x8x138xbf16, #tpu.memory_space<vmem>>, vector<1x1x8x128xbf16>
    %13 = vector.shape_cast %12 : vector<1x1x8x128xbf16> to vector<8x128xbf16>
    %c32 = arith.constant 32 : index
    %c0_21 = arith.constant 0 : index
    %14 = vector.load %arg6[%c32, %c0_21] : memref<72x128xbf16, #tpu.memory_space<vmem>>, vector<8x128xbf16>
    tpu.vector_store %arg6[%c32, %c0_21], %13 {strides = array<i32>} : memref<72x128xbf16, #tpu.memory_space<vmem>>, vector<8x128xbf16>,
    %c0_22 = arith.constant 0 : index
    %c2_23 = arith.constant 2 : index
    %c0_24 = arith.constant 0 : index
    %c1_25 = arith.constant 1 : index
    %15 = vector.load %arg1[%c0_22, %c2_23, %c0_24, %c1_25] : memref<1x4x8x138xbf16, #tpu.memory_space<vmem>>, vector<1x1x8x128xbf16>
    %16 = vector.shape_cast %15 : vector<1x1x8x128xbf16> to vector<8x128xbf16>
    %c40 = arith.constant 40 : index
    %c0_26 = arith.constant 0 : index
    %17 = vector.load %arg6[%c40, %c0_26] : memref<72x128xbf16, #tpu.memory_space<vmem>>, vector<8x128xbf16>
    tpu.vector_store %arg6[%c40, %c0_26], %16 {strides = array<i32>} : memref<72x128xbf16, #tpu.memory_space<vmem>>, vector<8x128xbf16>,
    %c0_27 = arith.constant 0 : index
    %c0_28 = arith.constant 0 : index
    %c0_29 = arith.constant 0 : index
    %c9 = arith.constant 9 : index
    %18 = vector.load %arg1[%c0_27, %c0_28, %c0_29, %c9] : memref<1x4x8x138xbf16, #tpu.memory_space<vmem>>, vector<1x1x8x128xbf16>
    %19 = vector.shape_cast %18 : vector<1x1x8x128xbf16> to vector<8x128xbf16>
    %c48 = arith.constant 48 : index
    %c0_30 = arith.constant 0 : index
    %20 = vector.load %arg6[%c48, %c0_30] : memref<72x128xbf16, #tpu.memory_space<vmem>>, vector<8x128xbf16>
    tpu.vector_store %arg6[%c48, %c0_30], %19 {strides = array<i32>} : memref<72x128xbf16, #tpu.memory_space<vmem>>, vector<8x128xbf16>,
    %c0_31 = arith.constant 0 : index
    %c1_32 = arith.constant 1 : index
    %c0_33 = arith.constant 0 : index
    %c9_34 = arith.constant 9 : index
    %21 = vector.load %arg1[%c0_31, %c1_32, %c0_33, %c9_34] : memref<1x4x8x138xbf16, #tpu.memory_space<vmem>>, vector<1x1x8x128xbf16>
    %22 = vector.shape_cast %21 : vector<1x1x8x128xbf16> to vector<8x128xbf16>
    %c56 = arith.constant 56 : index
    %c0_35 = arith.constant 0 : index
    %23 = vector.load %arg6[%c56, %c0_35] : memref<72x128xbf16, #tpu.memory_space<vmem>>, vector<8x128xbf16>
    tpu.vector_store %arg6[%c56, %c0_35], %22 {strides = array<i32>} : memref<72x128xbf16, #tpu.memory_space<vmem>>, vector<8x128xbf16>,
    %c0_36 = arith.constant 0 : index
    %c0_37 = arith.constant 0 : index
    %c0_38 = arith.constant 0 : index
    %c10 = arith.constant 10 : index
    %24 = vector.load %arg1[%c0_36, %c0_37, %c0_38, %c10] : memref<1x4x8x138xbf16, #tpu.memory_space<vmem>>, vector<1x1x8x128xbf16>
    %25 = vector.shape_cast %24 : vector<1x1x8x128xbf16> to vector<8x128xbf16>
    %c64 = arith.constant 64 : index
    %c0_39 = arith.constant 0 : index
    %26 = vector.load %arg6[%c64, %c0_39] : memref<72x128xbf16, #tpu.memory_space<vmem>>, vector<8x128xbf16>
    tpu.vector_store %arg6[%c64, %c0_39], %25 {strides = array<i32>} : memref<72x128xbf16, #tpu.memory_space<vmem>>, vector<8x128xbf16>,
    %c0_40 = arith.constant 0 : index
    %c0_41 = arith.constant 0 : index
    %27 = vector.load %arg2[%c0_40, %c0_41] : memref<16x72xbf16, #tpu.memory_space<vmem>>, vector<16x72xbf16>
    %c0_42 = arith.constant 0 : index
    %c0_43 = arith.constant 0 : index
    %28 = vector.load %arg6[%c0_42, %c0_43] : memref<72x128xbf16, #tpu.memory_space<vmem>>, vector<72x128xbf16>
    %cst = arith.constant dense<0.000000e+00> : vector<16x128xf32>
    %29 = tpu.matmul %27, %28, %cst {dimension_numbers = #tpu.dot_dimension_numbers<[1], [0], [0], [1], [0, 0, 1, 1], [], []>} : vector<16x72xbf16>, vector<72x128xbf16>, vector<16x128xf32> -> vector<16x128xf32>
    %c0_44 = arith.constant 0 : index
    %c0_45 = arith.constant 0 : index
    %c0_46 = arith.constant 0 : index
    %30 = vector.load %arg4[%c0_44, %c0_45, %c0_46] : memref<1x16x128xf32, #tpu.memory_space<vmem>>, vector<1x16x128xf32>
    %31 = vector.shape_cast %30 : vector<1x16x128xf32> to vector<16x128xf32>
    %32 = vector.shape_cast %29 : vector<16x128xf32> to vector<1x16x128xf32>
    tpu.vector_store %arg4[%c0_44, %c0_45, %c0_46], %32 {strides = array<i32>} : memref<1x16x128xf32, #tpu.memory_space<vmem>>, vector<1x16x128xf32>,
    %c0_47 = arith.constant 0 : index
    %c0_48 = arith.constant 0 : index
    %33 = vector.load %arg3[%c0_47, %c0_48] : memref<1x128xf32, #tpu.memory_space<vmem>>, vector<1x128xf32>
    %34 = vector.broadcast %33 : vector<1x128xf32> to vector<16x128xf32>
    %35 = arith.mulf %29, %34 : vector<16x128xf32>
    %cst_49 = arith.constant dense<0.000000e+00> : vector<16xf32>
    %36 = vector.multi_reduction <add>, %35, %cst_49 [1] : vector<16x128xf32> to vector<16xf32>
    %37 = vector.shape_cast %36 : vector<16xf32> to vector<16x1xf32>
    %c0_50 = arith.constant 0 : index
    %c0_51 = arith.constant 0 : index
    %c0_52 = arith.constant 0 : index
    %c0_53 = arith.constant 0 : index
    %38 = vector.load %arg5[%c0_50, %c0_51, %c0_52, %c0_53] : memref<1x2x16x1xf32, #tpu.memory_space<vmem>>, vector<1x1x16x1xf32>
    %39 = vector.shape_cast %38 : vector<1x1x16x1xf32> to vector<16x1xf32>
    %40 = vector.shape_cast %37 : vector<16x1xf32> to vector<1x1x16x1xf32>
    tpu.vector_store %arg5[%c0_50, %c0_51, %c0_52, %c0_53], %40 {strides = array<i32>} : memref<1x2x16x1xf32, #tpu.memory_space<vmem>>, vector<1x1x16x1xf32>,
    %41 = arith.mulf %35, %35 : vector<16x128xf32>
    %cst_54 = arith.constant dense<0.000000e+00> : vector<16xf32>
    %42 = vector.multi_reduction <add>, %41, %cst_54 [1] : vector<16x128xf32> to vector<16xf32>
    %43 = vector.shape_cast %42 : vector<16xf32> to vector<16x1xf32>
    %c0_55 = arith.constant 0 : index
    %c1_56 = arith.constant 1 : index
    %c0_57 = arith.constant 0 : index
    %c0_58 = arith.constant 0 : index
    %44 = vector.load %arg5[%c0_55, %c1_56, %c0_57, %c0_58] : memref<1x2x16x1xf32, #tpu.memory_space<vmem>>, vector<1x1x16x1xf32>
    %45 = vector.shape_cast %44 : vector<1x1x16x1xf32> to vector<16x1xf32>
    %46 = vector.shape_cast %43 : vector<16x1xf32> to vector<1x1x16x1xf32>
    tpu.vector_store %arg5[%c0_55, %c1_56, %c0_57, %c0_58], %46 {strides = array<i32>} : memref<1x2x16x1xf32, #tpu.memory_space<vmem>>, vector<1x1x16x1xf32>,
    return
  }
  func.func @transform_0(%arg0: i32) -> (i32, i32, i32, i32) {
    %c0_i32 = arith.constant 0 : i32
    %c0_i32_0 = arith.constant 0 : i32
    %c0_i32_1 = arith.constant 0 : i32
    %c0_i32_2 = arith.constant 0 : i32
    return %arg0, %c0_i32, %c0_i32_0, %c0_i32_1 : i32, i32, i32, i32
  }
  func.func @transform_1(%arg0: i32) -> (i32, i32) {
    %c0_i32 = arith.constant 0 : i32
    %c0_i32_0 = arith.constant 0 : i32
    %c0_i32_1 = arith.constant 0 : i32
    return %c0_i32, %c0_i32_0 : i32, i32
  }
  func.func @transform_2(%arg0: i32) -> (i32, i32) {
    %c0_i32 = arith.constant 0 : i32
    %c0_i32_0 = arith.constant 0 : i32
    %c0_i32_1 = arith.constant 0 : i32
    return %c0_i32, %c0_i32_0 : i32, i32
  }
  func.func @transform_3(%arg0: i32) -> (i32, i32, i32) {
    %c0_i32 = arith.constant 0 : i32
    %c0_i32_0 = arith.constant 0 : i32
    %c0_i32_1 = arith.constant 0 : i32
    return %arg0, %c0_i32, %c0_i32_0 : i32, i32, i32
  }
  func.func @transform_4(%arg0: i32) -> (i32, i32, i32, i32) {
    %c0_i32 = arith.constant 0 : i32
    %c0_i32_0 = arith.constant 0 : i32
    %c0_i32_1 = arith.constant 0 : i32
    %c0_i32_2 = arith.constant 0 : i32
    return %arg0, %c0_i32, %c0_i32_0, %c0_i32_1 : i32, i32, i32, i32
  }
}

module attributes {stable_mosaic.version = 11 : i64} {
  func.func @kernel(%arg0: i32, %arg1: memref<1x4x16x134xbf16, #tpu.memory_space<vmem>>, %arg2: memref<32x144xbf16, #tpu.memory_space<vmem>>, %arg3: memref<1x128xf32, #tpu.memory_space<vmem>>, %arg4: memref<1x32x128xf32, #tpu.memory_space<vmem>>, %arg5: memref<1x2x32x1xf32, #tpu.memory_space<vmem>>, %arg6: memref<144x128xbf16, #tpu.memory_space<vmem>>) attributes {dimension_semantics = [#tpu.dimension_semantics<parallel>], iteration_bounds = array<i64: 2>, scalar_prefetch = 0 : i64, scratch_operands = 1 : i64, tpu.core_type = #tpu.core_type<tc>, window_params = [{transform_indices = @transform_0, window_bounds = array<i64: 1, 4, 16, 134>}, {pipeline_mode = #tpu.pipeline_mode<synchronous>, transform_indices = @transform_1, window_bounds = array<i64: 32, 144>}, {pipeline_mode = #tpu.pipeline_mode<synchronous>, transform_indices = @transform_2, window_bounds = array<i64: 1, 128>}, {transform_indices = @transform_3, window_bounds = array<i64: 1, 32, 128>}, {transform_indices = @transform_4, window_bounds = array<i64: 1, 2, 32, 1>}]} {
    %c0 = arith.constant 0 : index
    %c0_0 = arith.constant 0 : index
    %c0_1 = arith.constant 0 : index
    %c0_2 = arith.constant 0 : index
    %0 = vector.load %arg1[%c0, %c0_0, %c0_1, %c0_2] : memref<1x4x16x134xbf16, #tpu.memory_space<vmem>>, vector<1x1x16x128xbf16>
    %1 = vector.shape_cast %0 : vector<1x1x16x128xbf16> to vector<16x128xbf16>
    %c0_3 = arith.constant 0 : index
    %c0_4 = arith.constant 0 : index
    %2 = vector.load %arg6[%c0_3, %c0_4] : memref<144x128xbf16, #tpu.memory_space<vmem>>, vector<16x128xbf16>
    tpu.vector_store %arg6[%c0_3, %c0_4], %1 {strides = array<i32>} : memref<144x128xbf16, #tpu.memory_space<vmem>>, vector<16x128xbf16>,
    %c0_5 = arith.constant 0 : index
    %c1 = arith.constant 1 : index
    %c0_6 = arith.constant 0 : index
    %c0_7 = arith.constant 0 : index
    %3 = vector.load %arg1[%c0_5, %c1, %c0_6, %c0_7] : memref<1x4x16x134xbf16, #tpu.memory_space<vmem>>, vector<1x1x16x128xbf16>
    %4 = vector.shape_cast %3 : vector<1x1x16x128xbf16> to vector<16x128xbf16>
    %c16 = arith.constant 16 : index
    %c0_8 = arith.constant 0 : index
    %5 = vector.load %arg6[%c16, %c0_8] : memref<144x128xbf16, #tpu.memory_space<vmem>>, vector<16x128xbf16>
    tpu.vector_store %arg6[%c16, %c0_8], %4 {strides = array<i32>} : memref<144x128xbf16, #tpu.memory_space<vmem>>, vector<16x128xbf16>,
    %c0_9 = arith.constant 0 : index
    %c0_10 = arith.constant 0 : index
    %c0_11 = arith.constant 0 : index
    %c1_12 = arith.constant 1 : index
    %6 = vector.load %arg1[%c0_9, %c0_10, %c0_11, %c1_12] : memref<1x4x16x134xbf16, #tpu.memory_space<vmem>>, vector<1x1x16x128xbf16>
    %7 = vector.shape_cast %6 : vector<1x1x16x128xbf16> to vector<16x128xbf16>
    %c32 = arith.constant 32 : index
    %c0_13 = arith.constant 0 : index
    %8 = vector.load %arg6[%c32, %c0_13] : memref<144x128xbf16, #tpu.memory_space<vmem>>, vector<16x128xbf16>
    tpu.vector_store %arg6[%c32, %c0_13], %7 {strides = array<i32>} : memref<144x128xbf16, #tpu.memory_space<vmem>>, vector<16x128xbf16>,
    %c0_14 = arith.constant 0 : index
    %c2 = arith.constant 2 : index
    %c0_15 = arith.constant 0 : index
    %c0_16 = arith.constant 0 : index
    %9 = vector.load %arg1[%c0_14, %c2, %c0_15, %c0_16] : memref<1x4x16x134xbf16, #tpu.memory_space<vmem>>, vector<1x1x16x128xbf16>
    %10 = vector.shape_cast %9 : vector<1x1x16x128xbf16> to vector<16x128xbf16>
    %c48 = arith.constant 48 : index
    %c0_17 = arith.constant 0 : index
    %11 = vector.load %arg6[%c48, %c0_17] : memref<144x128xbf16, #tpu.memory_space<vmem>>, vector<16x128xbf16>
    tpu.vector_store %arg6[%c48, %c0_17], %10 {strides = array<i32>} : memref<144x128xbf16, #tpu.memory_space<vmem>>, vector<16x128xbf16>,
    %c0_18 = arith.constant 0 : index
    %c3 = arith.constant 3 : index
    %c0_19 = arith.constant 0 : index
    %c0_20 = arith.constant 0 : index
    %12 = vector.load %arg1[%c0_18, %c3, %c0_19, %c0_20] : memref<1x4x16x134xbf16, #tpu.memory_space<vmem>>, vector<1x1x16x128xbf16>
    %13 = vector.shape_cast %12 : vector<1x1x16x128xbf16> to vector<16x128xbf16>
    %c64 = arith.constant 64 : index
    %c0_21 = arith.constant 0 : index
    %14 = vector.load %arg6[%c64, %c0_21] : memref<144x128xbf16, #tpu.memory_space<vmem>>, vector<16x128xbf16>
    tpu.vector_store %arg6[%c64, %c0_21], %13 {strides = array<i32>} : memref<144x128xbf16, #tpu.memory_space<vmem>>, vector<16x128xbf16>,
    %c0_22 = arith.constant 0 : index
    %c2_23 = arith.constant 2 : index
    %c0_24 = arith.constant 0 : index
    %c1_25 = arith.constant 1 : index
    %15 = vector.load %arg1[%c0_22, %c2_23, %c0_24, %c1_25] : memref<1x4x16x134xbf16, #tpu.memory_space<vmem>>, vector<1x1x16x128xbf16>
    %16 = vector.shape_cast %15 : vector<1x1x16x128xbf16> to vector<16x128xbf16>
    %c80 = arith.constant 80 : index
    %c0_26 = arith.constant 0 : index
    %17 = vector.load %arg6[%c80, %c0_26] : memref<144x128xbf16, #tpu.memory_space<vmem>>, vector<16x128xbf16>
    tpu.vector_store %arg6[%c80, %c0_26], %16 {strides = array<i32>} : memref<144x128xbf16, #tpu.memory_space<vmem>>, vector<16x128xbf16>,
    %c0_27 = arith.constant 0 : index
    %c0_28 = arith.constant 0 : index
    %c0_29 = arith.constant 0 : index
    %c5 = arith.constant 5 : index
    %18 = vector.load %arg1[%c0_27, %c0_28, %c0_29, %c5] : memref<1x4x16x134xbf16, #tpu.memory_space<vmem>>, vector<1x1x16x128xbf16>
    %19 = vector.shape_cast %18 : vector<1x1x16x128xbf16> to vector<16x128xbf16>
    %c96 = arith.constant 96 : index
    %c0_30 = arith.constant 0 : index
    %20 = vector.load %arg6[%c96, %c0_30] : memref<144x128xbf16, #tpu.memory_space<vmem>>, vector<16x128xbf16>
    tpu.vector_store %arg6[%c96, %c0_30], %19 {strides = array<i32>} : memref<144x128xbf16, #tpu.memory_space<vmem>>, vector<16x128xbf16>,
    %c0_31 = arith.constant 0 : index
    %c1_32 = arith.constant 1 : index
    %c0_33 = arith.constant 0 : index
    %c5_34 = arith.constant 5 : index
    %21 = vector.load %arg1[%c0_31, %c1_32, %c0_33, %c5_34] : memref<1x4x16x134xbf16, #tpu.memory_space<vmem>>, vector<1x1x16x128xbf16>
    %22 = vector.shape_cast %21 : vector<1x1x16x128xbf16> to vector<16x128xbf16>
    %c112 = arith.constant 112 : index
    %c0_35 = arith.constant 0 : index
    %23 = vector.load %arg6[%c112, %c0_35] : memref<144x128xbf16, #tpu.memory_space<vmem>>, vector<16x128xbf16>
    tpu.vector_store %arg6[%c112, %c0_35], %22 {strides = array<i32>} : memref<144x128xbf16, #tpu.memory_space<vmem>>, vector<16x128xbf16>,
    %c0_36 = arith.constant 0 : index
    %c0_37 = arith.constant 0 : index
    %c0_38 = arith.constant 0 : index
    %c6 = arith.constant 6 : index
    %24 = vector.load %arg1[%c0_36, %c0_37, %c0_38, %c6] : memref<1x4x16x134xbf16, #tpu.memory_space<vmem>>, vector<1x1x16x128xbf16>
    %25 = vector.shape_cast %24 : vector<1x1x16x128xbf16> to vector<16x128xbf16>
    %c128 = arith.constant 128 : index
    %c0_39 = arith.constant 0 : index
    %26 = vector.load %arg6[%c128, %c0_39] : memref<144x128xbf16, #tpu.memory_space<vmem>>, vector<16x128xbf16>
    tpu.vector_store %arg6[%c128, %c0_39], %25 {strides = array<i32>} : memref<144x128xbf16, #tpu.memory_space<vmem>>, vector<16x128xbf16>,
    %c0_40 = arith.constant 0 : index
    %c0_41 = arith.constant 0 : index
    %27 = vector.load %arg2[%c0_40, %c0_41] : memref<32x144xbf16, #tpu.memory_space<vmem>>, vector<32x144xbf16>
    %c0_42 = arith.constant 0 : index
    %c0_43 = arith.constant 0 : index
    %28 = vector.load %arg6[%c0_42, %c0_43] : memref<144x128xbf16, #tpu.memory_space<vmem>>, vector<144x128xbf16>
    %cst = arith.constant dense<0.000000e+00> : vector<32x128xf32>
    %29 = tpu.matmul %27, %28, %cst {dimension_numbers = #tpu.dot_dimension_numbers<[1], [0], [0], [1], [0, 0, 1, 1], [], []>} : vector<32x144xbf16>, vector<144x128xbf16>, vector<32x128xf32> -> vector<32x128xf32>
    %c0_44 = arith.constant 0 : index
    %c0_45 = arith.constant 0 : index
    %c0_46 = arith.constant 0 : index
    %30 = vector.load %arg4[%c0_44, %c0_45, %c0_46] : memref<1x32x128xf32, #tpu.memory_space<vmem>>, vector<1x32x128xf32>
    %31 = vector.shape_cast %30 : vector<1x32x128xf32> to vector<32x128xf32>
    %32 = vector.shape_cast %29 : vector<32x128xf32> to vector<1x32x128xf32>
    tpu.vector_store %arg4[%c0_44, %c0_45, %c0_46], %32 {strides = array<i32>} : memref<1x32x128xf32, #tpu.memory_space<vmem>>, vector<1x32x128xf32>,
    %c0_47 = arith.constant 0 : index
    %c0_48 = arith.constant 0 : index
    %33 = vector.load %arg3[%c0_47, %c0_48] : memref<1x128xf32, #tpu.memory_space<vmem>>, vector<1x128xf32>
    %34 = vector.broadcast %33 : vector<1x128xf32> to vector<32x128xf32>
    %35 = arith.mulf %29, %34 : vector<32x128xf32>
    %cst_49 = arith.constant dense<0.000000e+00> : vector<32xf32>
    %36 = vector.multi_reduction <add>, %35, %cst_49 [1] : vector<32x128xf32> to vector<32xf32>
    %37 = vector.shape_cast %36 : vector<32xf32> to vector<32x1xf32>
    %c0_50 = arith.constant 0 : index
    %c0_51 = arith.constant 0 : index
    %c0_52 = arith.constant 0 : index
    %c0_53 = arith.constant 0 : index
    %38 = vector.load %arg5[%c0_50, %c0_51, %c0_52, %c0_53] : memref<1x2x32x1xf32, #tpu.memory_space<vmem>>, vector<1x1x32x1xf32>
    %39 = vector.shape_cast %38 : vector<1x1x32x1xf32> to vector<32x1xf32>
    %40 = vector.shape_cast %37 : vector<32x1xf32> to vector<1x1x32x1xf32>
    tpu.vector_store %arg5[%c0_50, %c0_51, %c0_52, %c0_53], %40 {strides = array<i32>} : memref<1x2x32x1xf32, #tpu.memory_space<vmem>>, vector<1x1x32x1xf32>,
    %41 = arith.mulf %35, %35 : vector<32x128xf32>
    %cst_54 = arith.constant dense<0.000000e+00> : vector<32xf32>
    %42 = vector.multi_reduction <add>, %41, %cst_54 [1] : vector<32x128xf32> to vector<32xf32>
    %43 = vector.shape_cast %42 : vector<32xf32> to vector<32x1xf32>
    %c0_55 = arith.constant 0 : index
    %c1_56 = arith.constant 1 : index
    %c0_57 = arith.constant 0 : index
    %c0_58 = arith.constant 0 : index
    %44 = vector.load %arg5[%c0_55, %c1_56, %c0_57, %c0_58] : memref<1x2x32x1xf32, #tpu.memory_space<vmem>>, vector<1x1x32x1xf32>
    %45 = vector.shape_cast %44 : vector<1x1x32x1xf32> to vector<32x1xf32>
    %46 = vector.shape_cast %43 : vector<32x1xf32> to vector<1x1x32x1xf32>
    tpu.vector_store %arg5[%c0_55, %c1_56, %c0_57, %c0_58], %46 {strides = array<i32>} : memref<1x2x32x1xf32, #tpu.memory_space<vmem>>, vector<1x1x32x1xf32>,
    return
  }
  func.func @transform_0(%arg0: i32) -> (i32, i32, i32, i32) {
    %c0_i32 = arith.constant 0 : i32
    %c0_i32_0 = arith.constant 0 : i32
    %c0_i32_1 = arith.constant 0 : i32
    %c0_i32_2 = arith.constant 0 : i32
    return %arg0, %c0_i32, %c0_i32_0, %c0_i32_1 : i32, i32, i32, i32
  }
  func.func @transform_1(%arg0: i32) -> (i32, i32) {
    %c0_i32 = arith.constant 0 : i32
    %c0_i32_0 = arith.constant 0 : i32
    %c0_i32_1 = arith.constant 0 : i32
    return %c0_i32, %c0_i32_0 : i32, i32
  }
  func.func @transform_2(%arg0: i32) -> (i32, i32) {
    %c0_i32 = arith.constant 0 : i32
    %c0_i32_0 = arith.constant 0 : i32
    %c0_i32_1 = arith.constant 0 : i32
    return %c0_i32, %c0_i32_0 : i32, i32
  }
  func.func @transform_3(%arg0: i32) -> (i32, i32, i32) {
    %c0_i32 = arith.constant 0 : i32
    %c0_i32_0 = arith.constant 0 : i32
    %c0_i32_1 = arith.constant 0 : i32
    return %arg0, %c0_i32, %c0_i32_0 : i32, i32, i32
  }
  func.func @transform_4(%arg0: i32) -> (i32, i32, i32, i32) {
    %c0_i32 = arith.constant 0 : i32
    %c0_i32_0 = arith.constant 0 : i32
    %c0_i32_1 = arith.constant 0 : i32
    %c0_i32_2 = arith.constant 0 : i32
    return %arg0, %c0_i32, %c0_i32_0, %c0_i32_1 : i32, i32, i32, i32
  }
}

module attributes {stable_mosaic.version = 11 : i64} {
  func.func @kernel(%arg0: i32, %arg1: memref<1x1x32x142xbf16, #tpu.memory_space<vmem>>, %arg2: memref<32x288xbf16, #tpu.memory_space<vmem>>, %arg3: memref<1x128xf32, #tpu.memory_space<vmem>>, %arg4: memref<1x32x128xf32, #tpu.memory_space<vmem>>, %arg5: memref<1x2x32x1xf32, #tpu.memory_space<vmem>>, %arg6: memref<288x128xbf16, #tpu.memory_space<vmem>>) attributes {dimension_semantics = [#tpu.dimension_semantics<parallel>], iteration_bounds = array<i64: 2>, scalar_prefetch = 0 : i64, scratch_operands = 1 : i64, tpu.core_type = #tpu.core_type<tc>, window_params = [{transform_indices = @transform_0, window_bounds = array<i64: 1, 1, 32, 142>}, {pipeline_mode = #tpu.pipeline_mode<synchronous>, transform_indices = @transform_1, window_bounds = array<i64: 32, 288>}, {pipeline_mode = #tpu.pipeline_mode<synchronous>, transform_indices = @transform_2, window_bounds = array<i64: 1, 128>}, {transform_indices = @transform_3, window_bounds = array<i64: 1, 32, 128>}, {transform_indices = @transform_4, window_bounds = array<i64: 1, 2, 32, 1>}]} {
    %c0 = arith.constant 0 : index
    %c0_0 = arith.constant 0 : index
    %c0_1 = arith.constant 0 : index
    %c0_2 = arith.constant 0 : index
    %0 = vector.load %arg1[%c0, %c0_0, %c0_1, %c0_2] : memref<1x1x32x142xbf16, #tpu.memory_space<vmem>>, vector<1x1x32x128xbf16>
    %1 = vector.shape_cast %0 : vector<1x1x32x128xbf16> to vector<32x128xbf16>
    %c0_3 = arith.constant 0 : index
    %c0_4 = arith.constant 0 : index
    %2 = vector.load %arg6[%c0_3, %c0_4] : memref<288x128xbf16, #tpu.memory_space<vmem>>, vector<32x128xbf16>
    tpu.vector_store %arg6[%c0_3, %c0_4], %1 {strides = array<i32>} : memref<288x128xbf16, #tpu.memory_space<vmem>>, vector<32x128xbf16>,
    %c0_5 = arith.constant 0 : index
    %c0_6 = arith.constant 0 : index
    %c0_7 = arith.constant 0 : index
    %c1 = arith.constant 1 : index
    %3 = vector.load %arg1[%c0_5, %c0_6, %c0_7, %c1] : memref<1x1x32x142xbf16, #tpu.memory_space<vmem>>, vector<1x1x32x128xbf16>
    %4 = vector.shape_cast %3 : vector<1x1x32x128xbf16> to vector<32x128xbf16>
    %c32 = arith.constant 32 : index
    %c0_8 = arith.constant 0 : index
    %5 = vector.load %arg6[%c32, %c0_8] : memref<288x128xbf16, #tpu.memory_space<vmem>>, vector<32x128xbf16>
    tpu.vector_store %arg6[%c32, %c0_8], %4 {strides = array<i32>} : memref<288x128xbf16, #tpu.memory_space<vmem>>, vector<32x128xbf16>,
    %c0_9 = arith.constant 0 : index
    %c0_10 = arith.constant 0 : index
    %c0_11 = arith.constant 0 : index
    %c2 = arith.constant 2 : index
    %6 = vector.load %arg1[%c0_9, %c0_10, %c0_11, %c2] : memref<1x1x32x142xbf16, #tpu.memory_space<vmem>>, vector<1x1x32x128xbf16>
    %7 = vector.shape_cast %6 : vector<1x1x32x128xbf16> to vector<32x128xbf16>
    %c64 = arith.constant 64 : index
    %c0_12 = arith.constant 0 : index
    %8 = vector.load %arg6[%c64, %c0_12] : memref<288x128xbf16, #tpu.memory_space<vmem>>, vector<32x128xbf16>
    tpu.vector_store %arg6[%c64, %c0_12], %7 {strides = array<i32>} : memref<288x128xbf16, #tpu.memory_space<vmem>>, vector<32x128xbf16>,
    %c0_13 = arith.constant 0 : index
    %c0_14 = arith.constant 0 : index
    %c0_15 = arith.constant 0 : index
    %c6 = arith.constant 6 : index
    %9 = vector.load %arg1[%c0_13, %c0_14, %c0_15, %c6] : memref<1x1x32x142xbf16, #tpu.memory_space<vmem>>, vector<1x1x32x128xbf16>
    %10 = vector.shape_cast %9 : vector<1x1x32x128xbf16> to vector<32x128xbf16>
    %c96 = arith.constant 96 : index
    %c0_16 = arith.constant 0 : index
    %11 = vector.load %arg6[%c96, %c0_16] : memref<288x128xbf16, #tpu.memory_space<vmem>>, vector<32x128xbf16>
    tpu.vector_store %arg6[%c96, %c0_16], %10 {strides = array<i32>} : memref<288x128xbf16, #tpu.memory_space<vmem>>, vector<32x128xbf16>,
    %c0_17 = arith.constant 0 : index
    %c0_18 = arith.constant 0 : index
    %c0_19 = arith.constant 0 : index
    %c7 = arith.constant 7 : index
    %12 = vector.load %arg1[%c0_17, %c0_18, %c0_19, %c7] : memref<1x1x32x142xbf16, #tpu.memory_space<vmem>>, vector<1x1x32x128xbf16>
    %13 = vector.shape_cast %12 : vector<1x1x32x128xbf16> to vector<32x128xbf16>
    %c128 = arith.constant 128 : index
    %c0_20 = arith.constant 0 : index
    %14 = vector.load %arg6[%c128, %c0_20] : memref<288x128xbf16, #tpu.memory_space<vmem>>, vector<32x128xbf16>
    tpu.vector_store %arg6[%c128, %c0_20], %13 {strides = array<i32>} : memref<288x128xbf16, #tpu.memory_space<vmem>>, vector<32x128xbf16>,
    %c0_21 = arith.constant 0 : index
    %c0_22 = arith.constant 0 : index
    %c0_23 = arith.constant 0 : index
    %c8 = arith.constant 8 : index
    %15 = vector.load %arg1[%c0_21, %c0_22, %c0_23, %c8] : memref<1x1x32x142xbf16, #tpu.memory_space<vmem>>, vector<1x1x32x128xbf16>
    %16 = vector.shape_cast %15 : vector<1x1x32x128xbf16> to vector<32x128xbf16>
    %c160 = arith.constant 160 : index
    %c0_24 = arith.constant 0 : index
    %17 = vector.load %arg6[%c160, %c0_24] : memref<288x128xbf16, #tpu.memory_space<vmem>>, vector<32x128xbf16>
    tpu.vector_store %arg6[%c160, %c0_24], %16 {strides = array<i32>} : memref<288x128xbf16, #tpu.memory_space<vmem>>, vector<32x128xbf16>,
    %c0_25 = arith.constant 0 : index
    %c0_26 = arith.constant 0 : index
    %c0_27 = arith.constant 0 : index
    %c12 = arith.constant 12 : index
    %18 = vector.load %arg1[%c0_25, %c0_26, %c0_27, %c12] : memref<1x1x32x142xbf16, #tpu.memory_space<vmem>>, vector<1x1x32x128xbf16>
    %19 = vector.shape_cast %18 : vector<1x1x32x128xbf16> to vector<32x128xbf16>
    %c192 = arith.constant 192 : index
    %c0_28 = arith.constant 0 : index
    %20 = vector.load %arg6[%c192, %c0_28] : memref<288x128xbf16, #tpu.memory_space<vmem>>, vector<32x128xbf16>
    tpu.vector_store %arg6[%c192, %c0_28], %19 {strides = array<i32>} : memref<288x128xbf16, #tpu.memory_space<vmem>>, vector<32x128xbf16>,
    %c0_29 = arith.constant 0 : index
    %c0_30 = arith.constant 0 : index
    %c0_31 = arith.constant 0 : index
    %c13 = arith.constant 13 : index
    %21 = vector.load %arg1[%c0_29, %c0_30, %c0_31, %c13] : memref<1x1x32x142xbf16, #tpu.memory_space<vmem>>, vector<1x1x32x128xbf16>
    %22 = vector.shape_cast %21 : vector<1x1x32x128xbf16> to vector<32x128xbf16>
    %c224 = arith.constant 224 : index
    %c0_32 = arith.constant 0 : index
    %23 = vector.load %arg6[%c224, %c0_32] : memref<288x128xbf16, #tpu.memory_space<vmem>>, vector<32x128xbf16>
    tpu.vector_store %arg6[%c224, %c0_32], %22 {strides = array<i32>} : memref<288x128xbf16, #tpu.memory_space<vmem>>, vector<32x128xbf16>,
    %c0_33 = arith.constant 0 : index
    %c0_34 = arith.constant 0 : index
    %c0_35 = arith.constant 0 : index
    %c14 = arith.constant 14 : index
    %24 = vector.load %arg1[%c0_33, %c0_34, %c0_35, %c14] : memref<1x1x32x142xbf16, #tpu.memory_space<vmem>>, vector<1x1x32x128xbf16>
    %25 = vector.shape_cast %24 : vector<1x1x32x128xbf16> to vector<32x128xbf16>
    %c256 = arith.constant 256 : index
    %c0_36 = arith.constant 0 : index
    %26 = vector.load %arg6[%c256, %c0_36] : memref<288x128xbf16, #tpu.memory_space<vmem>>, vector<32x128xbf16>
    tpu.vector_store %arg6[%c256, %c0_36], %25 {strides = array<i32>} : memref<288x128xbf16, #tpu.memory_space<vmem>>, vector<32x128xbf16>,
    %c0_37 = arith.constant 0 : index
    %c0_38 = arith.constant 0 : index
    %27 = vector.load %arg2[%c0_37, %c0_38] : memref<32x288xbf16, #tpu.memory_space<vmem>>, vector<32x288xbf16>
    %c0_39 = arith.constant 0 : index
    %c0_40 = arith.constant 0 : index
    %28 = vector.load %arg6[%c0_39, %c0_40] : memref<288x128xbf16, #tpu.memory_space<vmem>>, vector<288x128xbf16>
    %cst = arith.constant dense<0.000000e+00> : vector<32x128xf32>
    %29 = tpu.matmul %27, %28, %cst {dimension_numbers = #tpu.dot_dimension_numbers<[1], [0], [0], [1], [0, 0, 1, 1], [], []>} : vector<32x288xbf16>, vector<288x128xbf16>, vector<32x128xf32> -> vector<32x128xf32>
    %c0_41 = arith.constant 0 : index
    %c0_42 = arith.constant 0 : index
    %c0_43 = arith.constant 0 : index
    %30 = vector.load %arg4[%c0_41, %c0_42, %c0_43] : memref<1x32x128xf32, #tpu.memory_space<vmem>>, vector<1x32x128xf32>
    %31 = vector.shape_cast %30 : vector<1x32x128xf32> to vector<32x128xf32>
    %32 = vector.shape_cast %29 : vector<32x128xf32> to vector<1x32x128xf32>
    tpu.vector_store %arg4[%c0_41, %c0_42, %c0_43], %32 {strides = array<i32>} : memref<1x32x128xf32, #tpu.memory_space<vmem>>, vector<1x32x128xf32>,
    %c0_44 = arith.constant 0 : index
    %c0_45 = arith.constant 0 : index
    %33 = vector.load %arg3[%c0_44, %c0_45] : memref<1x128xf32, #tpu.memory_space<vmem>>, vector<1x128xf32>
    %34 = vector.broadcast %33 : vector<1x128xf32> to vector<32x128xf32>
    %35 = arith.mulf %29, %34 : vector<32x128xf32>
    %cst_46 = arith.constant dense<0.000000e+00> : vector<32xf32>
    %36 = vector.multi_reduction <add>, %35, %cst_46 [1] : vector<32x128xf32> to vector<32xf32>
    %37 = vector.shape_cast %36 : vector<32xf32> to vector<32x1xf32>
    %c0_47 = arith.constant 0 : index
    %c0_48 = arith.constant 0 : index
    %c0_49 = arith.constant 0 : index
    %c0_50 = arith.constant 0 : index
    %38 = vector.load %arg5[%c0_47, %c0_48, %c0_49, %c0_50] : memref<1x2x32x1xf32, #tpu.memory_space<vmem>>, vector<1x1x32x1xf32>
    %39 = vector.shape_cast %38 : vector<1x1x32x1xf32> to vector<32x1xf32>
    %40 = vector.shape_cast %37 : vector<32x1xf32> to vector<1x1x32x1xf32>
    tpu.vector_store %arg5[%c0_47, %c0_48, %c0_49, %c0_50], %40 {strides = array<i32>} : memref<1x2x32x1xf32, #tpu.memory_space<vmem>>, vector<1x1x32x1xf32>,
    %41 = arith.mulf %35, %35 : vector<32x128xf32>
    %cst_51 = arith.constant dense<0.000000e+00> : vector<32xf32>
    %42 = vector.multi_reduction <add>, %41, %cst_51 [1] : vector<32x128xf32> to vector<32xf32>
    %43 = vector.shape_cast %42 : vector<32xf32> to vector<32x1xf32>
    %c0_52 = arith.constant 0 : index
    %c1_53 = arith.constant 1 : index
    %c0_54 = arith.constant 0 : index
    %c0_55 = arith.constant 0 : index
    %44 = vector.load %arg5[%c0_52, %c1_53, %c0_54, %c0_55] : memref<1x2x32x1xf32, #tpu.memory_space<vmem>>, vector<1x1x32x1xf32>
    %45 = vector.shape_cast %44 : vector<1x1x32x1xf32> to vector<32x1xf32>
    %46 = vector.shape_cast %43 : vector<32x1xf32> to vector<1x1x32x1xf32>
    tpu.vector_store %arg5[%c0_52, %c1_53, %c0_54, %c0_55], %46 {strides = array<i32>} : memref<1x2x32x1xf32, #tpu.memory_space<vmem>>, vector<1x1x32x1xf32>,
    return
  }
  func.func @transform_0(%arg0: i32) -> (i32, i32, i32, i32) {
    %c0_i32 = arith.constant 0 : i32
    %c0_i32_0 = arith.constant 0 : i32
    %c0_i32_1 = arith.constant 0 : i32
    %c0_i32_2 = arith.constant 0 : i32
    return %arg0, %c0_i32, %c0_i32_0, %c0_i32_1 : i32, i32, i32, i32
  }
  func.func @transform_1(%arg0: i32) -> (i32, i32) {
    %c0_i32 = arith.constant 0 : i32
    %c0_i32_0 = arith.constant 0 : i32
    %c0_i32_1 = arith.constant 0 : i32
    return %c0_i32, %c0_i32_0 : i32, i32
  }
  func.func @transform_2(%arg0: i32) -> (i32, i32) {
    %c0_i32 = arith.constant 0 : i32
    %c0_i32_0 = arith.constant 0 : i32
    %c0_i32_1 = arith.constant 0 : i32
    return %c0_i32, %c0_i32_0 : i32, i32
  }
  func.func @transform_3(%arg0: i32) -> (i32, i32, i32) {
    %c0_i32 = arith.constant 0 : i32
    %c0_i32_0 = arith.constant 0 : i32
    %c0_i32_1 = arith.constant 0 : i32
    return %arg0, %c0_i32, %c0_i32_0 : i32, i32, i32
  }
  func.func @transform_4(%arg0: i32) -> (i32, i32, i32, i32) {
    %c0_i32 = arith.constant 0 : i32
    %c0_i32_0 = arith.constant 0 : i32
    %c0_i32_1 = arith.constant 0 : i32
    %c0_i32_2 = arith.constant 0 : i32
    return %arg0, %c0_i32, %c0_i32_0, %c0_i32_1 : i32, i32, i32, i32
  }
}

module attributes {stable_mosaic.version = 11 : i64} {
  func.func @kernel(%arg0: i32, %arg1: memref<1x1x32x150xbf16, #tpu.memory_space<vmem>>, %arg2: memref<16x288xbf16, #tpu.memory_space<vmem>>, %arg3: memref<1x128xf32, #tpu.memory_space<vmem>>, %arg4: memref<1x16x128xf32, #tpu.memory_space<vmem>>, %arg5: memref<1x2x16x1xf32, #tpu.memory_space<vmem>>, %arg6: memref<288x128xbf16, #tpu.memory_space<vmem>>) attributes {dimension_semantics = [#tpu.dimension_semantics<parallel>], iteration_bounds = array<i64: 2>, scalar_prefetch = 0 : i64, scratch_operands = 1 : i64, tpu.core_type = #tpu.core_type<tc>, window_params = [{transform_indices = @transform_0, window_bounds = array<i64: 1, 1, 32, 150>}, {pipeline_mode = #tpu.pipeline_mode<synchronous>, transform_indices = @transform_1, window_bounds = array<i64: 16, 288>}, {pipeline_mode = #tpu.pipeline_mode<synchronous>, transform_indices = @transform_2, window_bounds = array<i64: 1, 128>}, {transform_indices = @transform_3, window_bounds = array<i64: 1, 16, 128>}, {transform_indices = @transform_4, window_bounds = array<i64: 1, 2, 16, 1>}]} {
    %c0 = arith.constant 0 : index
    %c0_0 = arith.constant 0 : index
    %c0_1 = arith.constant 0 : index
    %c0_2 = arith.constant 0 : index
    %0 = vector.load %arg1[%c0, %c0_0, %c0_1, %c0_2] : memref<1x1x32x150xbf16, #tpu.memory_space<vmem>>, vector<1x1x32x128xbf16>
    %1 = vector.shape_cast %0 : vector<1x1x32x128xbf16> to vector<32x128xbf16>
    %c0_3 = arith.constant 0 : index
    %c0_4 = arith.constant 0 : index
    %2 = vector.load %arg6[%c0_3, %c0_4] : memref<288x128xbf16, #tpu.memory_space<vmem>>, vector<32x128xbf16>
    tpu.vector_store %arg6[%c0_3, %c0_4], %1 {strides = array<i32>} : memref<288x128xbf16, #tpu.memory_space<vmem>>, vector<32x128xbf16>,
    %c0_5 = arith.constant 0 : index
    %c0_6 = arith.constant 0 : index
    %c0_7 = arith.constant 0 : index
    %c1 = arith.constant 1 : index
    %3 = vector.load %arg1[%c0_5, %c0_6, %c0_7, %c1] : memref<1x1x32x150xbf16, #tpu.memory_space<vmem>>, vector<1x1x32x128xbf16>
    %4 = vector.shape_cast %3 : vector<1x1x32x128xbf16> to vector<32x128xbf16>
    %c32 = arith.constant 32 : index
    %c0_8 = arith.constant 0 : index
    %5 = vector.load %arg6[%c32, %c0_8] : memref<288x128xbf16, #tpu.memory_space<vmem>>, vector<32x128xbf16>
    tpu.vector_store %arg6[%c32, %c0_8], %4 {strides = array<i32>} : memref<288x128xbf16, #tpu.memory_space<vmem>>, vector<32x128xbf16>,
    %c0_9 = arith.constant 0 : index
    %c0_10 = arith.constant 0 : index
    %c0_11 = arith.constant 0 : index
    %c2 = arith.constant 2 : index
    %6 = vector.load %arg1[%c0_9, %c0_10, %c0_11, %c2] : memref<1x1x32x150xbf16, #tpu.memory_space<vmem>>, vector<1x1x32x128xbf16>
    %7 = vector.shape_cast %6 : vector<1x1x32x128xbf16> to vector<32x128xbf16>
    %c64 = arith.constant 64 : index
    %c0_12 = arith.constant 0 : index
    %8 = vector.load %arg6[%c64, %c0_12] : memref<288x128xbf16, #tpu.memory_space<vmem>>, vector<32x128xbf16>
    tpu.vector_store %arg6[%c64, %c0_12], %7 {strides = array<i32>} : memref<288x128xbf16, #tpu.memory_space<vmem>>, vector<32x128xbf16>,
    %c0_13 = arith.constant 0 : index
    %c0_14 = arith.constant 0 : index
    %c0_15 = arith.constant 0 : index
    %c10 = arith.constant 10 : index
    %9 = vector.load %arg1[%c0_13, %c0_14, %c0_15, %c10] : memref<1x1x32x150xbf16, #tpu.memory_space<vmem>>, vector<1x1x32x128xbf16>
    %10 = vector.shape_cast %9 : vector<1x1x32x128xbf16> to vector<32x128xbf16>
    %c96 = arith.constant 96 : index
    %c0_16 = arith.constant 0 : index
    %11 = vector.load %arg6[%c96, %c0_16] : memref<288x128xbf16, #tpu.memory_space<vmem>>, vector<32x128xbf16>
    tpu.vector_store %arg6[%c96, %c0_16], %10 {strides = array<i32>} : memref<288x128xbf16, #tpu.memory_space<vmem>>, vector<32x128xbf16>,
    %c0_17 = arith.constant 0 : index
    %c0_18 = arith.constant 0 : index
    %c0_19 = arith.constant 0 : index
    %c11 = arith.constant 11 : index
    %12 = vector.load %arg1[%c0_17, %c0_18, %c0_19, %c11] : memref<1x1x32x150xbf16, #tpu.memory_space<vmem>>, vector<1x1x32x128xbf16>
    %13 = vector.shape_cast %12 : vector<1x1x32x128xbf16> to vector<32x128xbf16>
    %c128 = arith.constant 128 : index
    %c0_20 = arith.constant 0 : index
    %14 = vector.load %arg6[%c128, %c0_20] : memref<288x128xbf16, #tpu.memory_space<vmem>>, vector<32x128xbf16>
    tpu.vector_store %arg6[%c128, %c0_20], %13 {strides = array<i32>} : memref<288x128xbf16, #tpu.memory_space<vmem>>, vector<32x128xbf16>,
    %c0_21 = arith.constant 0 : index
    %c0_22 = arith.constant 0 : index
    %c0_23 = arith.constant 0 : index
    %c12 = arith.constant 12 : index
    %15 = vector.load %arg1[%c0_21, %c0_22, %c0_23, %c12] : memref<1x1x32x150xbf16, #tpu.memory_space<vmem>>, vector<1x1x32x128xbf16>
    %16 = vector.shape_cast %15 : vector<1x1x32x128xbf16> to vector<32x128xbf16>
    %c160 = arith.constant 160 : index
    %c0_24 = arith.constant 0 : index
    %17 = vector.load %arg6[%c160, %c0_24] : memref<288x128xbf16, #tpu.memory_space<vmem>>, vector<32x128xbf16>
    tpu.vector_store %arg6[%c160, %c0_24], %16 {strides = array<i32>} : memref<288x128xbf16, #tpu.memory_space<vmem>>, vector<32x128xbf16>,
    %c0_25 = arith.constant 0 : index
    %c0_26 = arith.constant 0 : index
    %c0_27 = arith.constant 0 : index
    %c20 = arith.constant 20 : index
    %18 = vector.load %arg1[%c0_25, %c0_26, %c0_27, %c20] : memref<1x1x32x150xbf16, #tpu.memory_space<vmem>>, vector<1x1x32x128xbf16>
    %19 = vector.shape_cast %18 : vector<1x1x32x128xbf16> to vector<32x128xbf16>
    %c192 = arith.constant 192 : index
    %c0_28 = arith.constant 0 : index
    %20 = vector.load %arg6[%c192, %c0_28] : memref<288x128xbf16, #tpu.memory_space<vmem>>, vector<32x128xbf16>
    tpu.vector_store %arg6[%c192, %c0_28], %19 {strides = array<i32>} : memref<288x128xbf16, #tpu.memory_space<vmem>>, vector<32x128xbf16>,
    %c0_29 = arith.constant 0 : index
    %c0_30 = arith.constant 0 : index
    %c0_31 = arith.constant 0 : index
    %c21 = arith.constant 21 : index
    %21 = vector.load %arg1[%c0_29, %c0_30, %c0_31, %c21] : memref<1x1x32x150xbf16, #tpu.memory_space<vmem>>, vector<1x1x32x128xbf16>
    %22 = vector.shape_cast %21 : vector<1x1x32x128xbf16> to vector<32x128xbf16>
    %c224 = arith.constant 224 : index
    %c0_32 = arith.constant 0 : index
    %23 = vector.load %arg6[%c224, %c0_32] : memref<288x128xbf16, #tpu.memory_space<vmem>>, vector<32x128xbf16>
    tpu.vector_store %arg6[%c224, %c0_32], %22 {strides = array<i32>} : memref<288x128xbf16, #tpu.memory_space<vmem>>, vector<32x128xbf16>,
    %c0_33 = arith.constant 0 : index
    %c0_34 = arith.constant 0 : index
    %c0_35 = arith.constant 0 : index
    %c22 = arith.constant 22 : index
    %24 = vector.load %arg1[%c0_33, %c0_34, %c0_35, %c22] : memref<1x1x32x150xbf16, #tpu.memory_space<vmem>>, vector<1x1x32x128xbf16>
    %25 = vector.shape_cast %24 : vector<1x1x32x128xbf16> to vector<32x128xbf16>
    %c256 = arith.constant 256 : index
    %c0_36 = arith.constant 0 : index
    %26 = vector.load %arg6[%c256, %c0_36] : memref<288x128xbf16, #tpu.memory_space<vmem>>, vector<32x128xbf16>
    tpu.vector_store %arg6[%c256, %c0_36], %25 {strides = array<i32>} : memref<288x128xbf16, #tpu.memory_space<vmem>>, vector<32x128xbf16>,
    %c0_37 = arith.constant 0 : index
    %c0_38 = arith.constant 0 : index
    %27 = vector.load %arg2[%c0_37, %c0_38] : memref<16x288xbf16, #tpu.memory_space<vmem>>, vector<16x288xbf16>
    %c0_39 = arith.constant 0 : index
    %c0_40 = arith.constant 0 : index
    %28 = vector.load %arg6[%c0_39, %c0_40] : memref<288x128xbf16, #tpu.memory_space<vmem>>, vector<288x128xbf16>
    %cst = arith.constant dense<0.000000e+00> : vector<16x128xf32>
    %29 = tpu.matmul %27, %28, %cst {dimension_numbers = #tpu.dot_dimension_numbers<[1], [0], [0], [1], [0, 0, 1, 1], [], []>} : vector<16x288xbf16>, vector<288x128xbf16>, vector<16x128xf32> -> vector<16x128xf32>
    %c0_41 = arith.constant 0 : index
    %c0_42 = arith.constant 0 : index
    %c0_43 = arith.constant 0 : index
    %30 = vector.load %arg4[%c0_41, %c0_42, %c0_43] : memref<1x16x128xf32, #tpu.memory_space<vmem>>, vector<1x16x128xf32>
    %31 = vector.shape_cast %30 : vector<1x16x128xf32> to vector<16x128xf32>
    %32 = vector.shape_cast %29 : vector<16x128xf32> to vector<1x16x128xf32>
    tpu.vector_store %arg4[%c0_41, %c0_42, %c0_43], %32 {strides = array<i32>} : memref<1x16x128xf32, #tpu.memory_space<vmem>>, vector<1x16x128xf32>,
    %c0_44 = arith.constant 0 : index
    %c0_45 = arith.constant 0 : index
    %33 = vector.load %arg3[%c0_44, %c0_45] : memref<1x128xf32, #tpu.memory_space<vmem>>, vector<1x128xf32>
    %34 = vector.broadcast %33 : vector<1x128xf32> to vector<16x128xf32>
    %35 = arith.mulf %29, %34 : vector<16x128xf32>
    %cst_46 = arith.constant dense<0.000000e+00> : vector<16xf32>
    %36 = vector.multi_reduction <add>, %35, %cst_46 [1] : vector<16x128xf32> to vector<16xf32>
    %37 = vector.shape_cast %36 : vector<16xf32> to vector<16x1xf32>
    %c0_47 = arith.constant 0 : index
    %c0_48 = arith.constant 0 : index
    %c0_49 = arith.constant 0 : index
    %c0_50 = arith.constant 0 : index
    %38 = vector.load %arg5[%c0_47, %c0_48, %c0_49, %c0_50] : memref<1x2x16x1xf32, #tpu.memory_space<vmem>>, vector<1x1x16x1xf32>
    %39 = vector.shape_cast %38 : vector<1x1x16x1xf32> to vector<16x1xf32>
    %40 = vector.shape_cast %37 : vector<16x1xf32> to vector<1x1x16x1xf32>
    tpu.vector_store %arg5[%c0_47, %c0_48, %c0_49, %c0_50], %40 {strides = array<i32>} : memref<1x2x16x1xf32, #tpu.memory_space<vmem>>, vector<1x1x16x1xf32>,
    %41 = arith.mulf %35, %35 : vector<16x128xf32>
    %cst_51 = arith.constant dense<0.000000e+00> : vector<16xf32>
    %42 = vector.multi_reduction <add>, %41, %cst_51 [1] : vector<16x128xf32> to vector<16xf32>
    %43 = vector.shape_cast %42 : vector<16xf32> to vector<16x1xf32>
    %c0_52 = arith.constant 0 : index
    %c1_53 = arith.constant 1 : index
    %c0_54 = arith.constant 0 : index
    %c0_55 = arith.constant 0 : index
    %44 = vector.load %arg5[%c0_52, %c1_53, %c0_54, %c0_55] : memref<1x2x16x1xf32, #tpu.memory_space<vmem>>, vector<1x1x16x1xf32>
    %45 = vector.shape_cast %44 : vector<1x1x16x1xf32> to vector<16x1xf32>
    %46 = vector.shape_cast %43 : vector<16x1xf32> to vector<1x1x16x1xf32>
    tpu.vector_store %arg5[%c0_52, %c1_53, %c0_54, %c0_55], %46 {strides = array<i32>} : memref<1x2x16x1xf32, #tpu.memory_space<vmem>>, vector<1x1x16x1xf32>,
    return
  }
  func.func @transform_0(%arg0: i32) -> (i32, i32, i32, i32) {
    %c0_i32 = arith.constant 0 : i32
    %c0_i32_0 = arith.constant 0 : i32
    %c0_i32_1 = arith.constant 0 : i32
    %c0_i32_2 = arith.constant 0 : i32
    return %arg0, %c0_i32, %c0_i32_0, %c0_i32_1 : i32, i32, i32, i32
  }
  func.func @transform_1(%arg0: i32) -> (i32, i32) {
    %c0_i32 = arith.constant 0 : i32
    %c0_i32_0 = arith.constant 0 : i32
    %c0_i32_1 = arith.constant 0 : i32
    return %c0_i32, %c0_i32_0 : i32, i32
  }
  func.func @transform_2(%arg0: i32) -> (i32, i32) {
    %c0_i32 = arith.constant 0 : i32
    %c0_i32_0 = arith.constant 0 : i32
    %c0_i32_1 = arith.constant 0 : i32
    return %c0_i32, %c0_i32_0 : i32, i32
  }
  func.func @transform_3(%arg0: i32) -> (i32, i32, i32) {
    %c0_i32 = arith.constant 0 : i32
    %c0_i32_0 = arith.constant 0 : i32
    %c0_i32_1 = arith.constant 0 : i32
    return %arg0, %c0_i32, %c0_i32_0 : i32, i32, i32
  }
  func.func @transform_4(%arg0: i32) -> (i32, i32, i32, i32) {
    %c0_i32 = arith.constant 0 : i32
    %c0_i32_0 = arith.constant 0 : i32
    %c0_i32_1 = arith.constant 0 : i32
    %c0_i32_2 = arith.constant 0 : i32
    return %arg0, %c0_i32, %c0_i32_0, %c0_i32_1 : i32, i32, i32, i32
  }
}

module attributes {stable_mosaic.version = 11 : i64} {
  func.func @kernel(%arg0: i32, %arg1: memref<1x1x16x422xbf16, #tpu.memory_space<vmem>>, %arg2: memref<8x144xbf16, #tpu.memory_space<vmem>>, %arg3: memref<1x384xf32, #tpu.memory_space<vmem>>, %arg4: memref<1x8x384xf32, #tpu.memory_space<vmem>>, %arg5: memref<1x2x8x1xf32, #tpu.memory_space<vmem>>, %arg6: memref<144x384xbf16, #tpu.memory_space<vmem>>) attributes {dimension_semantics = [#tpu.dimension_semantics<parallel>], iteration_bounds = array<i64: 2>, scalar_prefetch = 0 : i64, scratch_operands = 1 : i64, tpu.core_type = #tpu.core_type<tc>, window_params = [{transform_indices = @transform_0, window_bounds = array<i64: 1, 1, 16, 422>}, {pipeline_mode = #tpu.pipeline_mode<synchronous>, transform_indices = @transform_1, window_bounds = array<i64: 8, 144>}, {pipeline_mode = #tpu.pipeline_mode<synchronous>, transform_indices = @transform_2, window_bounds = array<i64: 1, 384>}, {transform_indices = @transform_3, window_bounds = array<i64: 1, 8, 384>}, {transform_indices = @transform_4, window_bounds = array<i64: 1, 2, 8, 1>}]} {
    %c0 = arith.constant 0 : index
    %c0_0 = arith.constant 0 : index
    %c0_1 = arith.constant 0 : index
    %c0_2 = arith.constant 0 : index
    %0 = vector.load %arg1[%c0, %c0_0, %c0_1, %c0_2] : memref<1x1x16x422xbf16, #tpu.memory_space<vmem>>, vector<1x1x16x384xbf16>
    %1 = vector.shape_cast %0 : vector<1x1x16x384xbf16> to vector<16x384xbf16>
    %c0_3 = arith.constant 0 : index
    %c0_4 = arith.constant 0 : index
    %2 = vector.load %arg6[%c0_3, %c0_4] : memref<144x384xbf16, #tpu.memory_space<vmem>>, vector<16x384xbf16>
    tpu.vector_store %arg6[%c0_3, %c0_4], %1 {strides = array<i32>} : memref<144x384xbf16, #tpu.memory_space<vmem>>, vector<16x384xbf16>,
    %c0_5 = arith.constant 0 : index
    %c0_6 = arith.constant 0 : index
    %c0_7 = arith.constant 0 : index
    %c1 = arith.constant 1 : index
    %3 = vector.load %arg1[%c0_5, %c0_6, %c0_7, %c1] : memref<1x1x16x422xbf16, #tpu.memory_space<vmem>>, vector<1x1x16x384xbf16>
    %4 = vector.shape_cast %3 : vector<1x1x16x384xbf16> to vector<16x384xbf16>
    %c16 = arith.constant 16 : index
    %c0_8 = arith.constant 0 : index
    %5 = vector.load %arg6[%c16, %c0_8] : memref<144x384xbf16, #tpu.memory_space<vmem>>, vector<16x384xbf16>
    tpu.vector_store %arg6[%c16, %c0_8], %4 {strides = array<i32>} : memref<144x384xbf16, #tpu.memory_space<vmem>>, vector<16x384xbf16>,
    %c0_9 = arith.constant 0 : index
    %c0_10 = arith.constant 0 : index
    %c0_11 = arith.constant 0 : index
    %c2 = arith.constant 2 : index
    %6 = vector.load %arg1[%c0_9, %c0_10, %c0_11, %c2] : memref<1x1x16x422xbf16, #tpu.memory_space<vmem>>, vector<1x1x16x384xbf16>
    %7 = vector.shape_cast %6 : vector<1x1x16x384xbf16> to vector<16x384xbf16>
    %c32 = arith.constant 32 : index
    %c0_12 = arith.constant 0 : index
    %8 = vector.load %arg6[%c32, %c0_12] : memref<144x384xbf16, #tpu.memory_space<vmem>>, vector<16x384xbf16>
    tpu.vector_store %arg6[%c32, %c0_12], %7 {strides = array<i32>} : memref<144x384xbf16, #tpu.memory_space<vmem>>, vector<16x384xbf16>,
    %c0_13 = arith.constant 0 : index
    %c0_14 = arith.constant 0 : index
    %c0_15 = arith.constant 0 : index
    %c18 = arith.constant 18 : index
    %9 = vector.load %arg1[%c0_13, %c0_14, %c0_15, %c18] : memref<1x1x16x422xbf16, #tpu.memory_space<vmem>>, vector<1x1x16x384xbf16>
    %10 = vector.shape_cast %9 : vector<1x1x16x384xbf16> to vector<16x384xbf16>
    %c48 = arith.constant 48 : index
    %c0_16 = arith.constant 0 : index
    %11 = vector.load %arg6[%c48, %c0_16] : memref<144x384xbf16, #tpu.memory_space<vmem>>, vector<16x384xbf16>
    tpu.vector_store %arg6[%c48, %c0_16], %10 {strides = array<i32>} : memref<144x384xbf16, #tpu.memory_space<vmem>>, vector<16x384xbf16>,
    %c0_17 = arith.constant 0 : index
    %c0_18 = arith.constant 0 : index
    %c0_19 = arith.constant 0 : index
    %c19 = arith.constant 19 : index
    %12 = vector.load %arg1[%c0_17, %c0_18, %c0_19, %c19] : memref<1x1x16x422xbf16, #tpu.memory_space<vmem>>, vector<1x1x16x384xbf16>
    %13 = vector.shape_cast %12 : vector<1x1x16x384xbf16> to vector<16x384xbf16>
    %c64 = arith.constant 64 : index
    %c0_20 = arith.constant 0 : index
    %14 = vector.load %arg6[%c64, %c0_20] : memref<144x384xbf16, #tpu.memory_space<vmem>>, vector<16x384xbf16>
    tpu.vector_store %arg6[%c64, %c0_20], %13 {strides = array<i32>} : memref<144x384xbf16, #tpu.memory_space<vmem>>, vector<16x384xbf16>,
    %c0_21 = arith.constant 0 : index
    %c0_22 = arith.constant 0 : index
    %c0_23 = arith.constant 0 : index
    %c20 = arith.constant 20 : index
    %15 = vector.load %arg1[%c0_21, %c0_22, %c0_23, %c20] : memref<1x1x16x422xbf16, #tpu.memory_space<vmem>>, vector<1x1x16x384xbf16>
    %16 = vector.shape_cast %15 : vector<1x1x16x384xbf16> to vector<16x384xbf16>
    %c80 = arith.constant 80 : index
    %c0_24 = arith.constant 0 : index
    %17 = vector.load %arg6[%c80, %c0_24] : memref<144x384xbf16, #tpu.memory_space<vmem>>, vector<16x384xbf16>
    tpu.vector_store %arg6[%c80, %c0_24], %16 {strides = array<i32>} : memref<144x384xbf16, #tpu.memory_space<vmem>>, vector<16x384xbf16>,
    %c0_25 = arith.constant 0 : index
    %c0_26 = arith.constant 0 : index
    %c0_27 = arith.constant 0 : index
    %c36 = arith.constant 36 : index
    %18 = vector.load %arg1[%c0_25, %c0_26, %c0_27, %c36] : memref<1x1x16x422xbf16, #tpu.memory_space<vmem>>, vector<1x1x16x384xbf16>
    %19 = vector.shape_cast %18 : vector<1x1x16x384xbf16> to vector<16x384xbf16>
    %c96 = arith.constant 96 : index
    %c0_28 = arith.constant 0 : index
    %20 = vector.load %arg6[%c96, %c0_28] : memref<144x384xbf16, #tpu.memory_space<vmem>>, vector<16x384xbf16>
    tpu.vector_store %arg6[%c96, %c0_28], %19 {strides = array<i32>} : memref<144x384xbf16, #tpu.memory_space<vmem>>, vector<16x384xbf16>,
    %c0_29 = arith.constant 0 : index
    %c0_30 = arith.constant 0 : index
    %c0_31 = arith.constant 0 : index
    %c37 = arith.constant 37 : index
    %21 = vector.load %arg1[%c0_29, %c0_30, %c0_31, %c37] : memref<1x1x16x422xbf16, #tpu.memory_space<vmem>>, vector<1x1x16x384xbf16>
    %22 = vector.shape_cast %21 : vector<1x1x16x384xbf16> to vector<16x384xbf16>
    %c112 = arith.constant 112 : index
    %c0_32 = arith.constant 0 : index
    %23 = vector.load %arg6[%c112, %c0_32] : memref<144x384xbf16, #tpu.memory_space<vmem>>, vector<16x384xbf16>
    tpu.vector_store %arg6[%c112, %c0_32], %22 {strides = array<i32>} : memref<144x384xbf16, #tpu.memory_space<vmem>>, vector<16x384xbf16>,
    %c0_33 = arith.constant 0 : index
    %c0_34 = arith.constant 0 : index
    %c0_35 = arith.constant 0 : index
    %c38 = arith.constant 38 : index
    %24 = vector.load %arg1[%c0_33, %c0_34, %c0_35, %c38] : memref<1x1x16x422xbf16, #tpu.memory_space<vmem>>, vector<1x1x16x384xbf16>
    %25 = vector.shape_cast %24 : vector<1x1x16x384xbf16> to vector<16x384xbf16>
    %c128 = arith.constant 128 : index
    %c0_36 = arith.constant 0 : index
    %26 = vector.load %arg6[%c128, %c0_36] : memref<144x384xbf16, #tpu.memory_space<vmem>>, vector<16x384xbf16>
    tpu.vector_store %arg6[%c128, %c0_36], %25 {strides = array<i32>} : memref<144x384xbf16, #tpu.memory_space<vmem>>, vector<16x384xbf16>,
    %c0_37 = arith.constant 0 : index
    %c0_38 = arith.constant 0 : index
    %27 = vector.load %arg2[%c0_37, %c0_38] : memref<8x144xbf16, #tpu.memory_space<vmem>>, vector<8x144xbf16>
    %c0_39 = arith.constant 0 : index
    %c0_40 = arith.constant 0 : index
    %28 = vector.load %arg6[%c0_39, %c0_40] : memref<144x384xbf16, #tpu.memory_space<vmem>>, vector<144x384xbf16>
    %cst = arith.constant dense<0.000000e+00> : vector<8x384xf32>
    %29 = tpu.matmul %27, %28, %cst {dimension_numbers = #tpu.dot_dimension_numbers<[1], [0], [0], [1], [0, 0, 1, 1], [], []>} : vector<8x144xbf16>, vector<144x384xbf16>, vector<8x384xf32> -> vector<8x384xf32>
    %c0_41 = arith.constant 0 : index
    %c0_42 = arith.constant 0 : index
    %c0_43 = arith.constant 0 : index
    %30 = vector.load %arg4[%c0_41, %c0_42, %c0_43] : memref<1x8x384xf32, #tpu.memory_space<vmem>>, vector<1x8x384xf32>
    %31 = vector.shape_cast %30 : vector<1x8x384xf32> to vector<8x384xf32>
    %32 = vector.shape_cast %29 : vector<8x384xf32> to vector<1x8x384xf32>
    tpu.vector_store %arg4[%c0_41, %c0_42, %c0_43], %32 {strides = array<i32>} : memref<1x8x384xf32, #tpu.memory_space<vmem>>, vector<1x8x384xf32>,
    %c0_44 = arith.constant 0 : index
    %c0_45 = arith.constant 0 : index
    %33 = vector.load %arg3[%c0_44, %c0_45] : memref<1x384xf32, #tpu.memory_space<vmem>>, vector<1x384xf32>
    %34 = vector.broadcast %33 : vector<1x384xf32> to vector<8x384xf32>
    %35 = arith.mulf %29, %34 : vector<8x384xf32>
    %cst_46 = arith.constant dense<0.000000e+00> : vector<8xf32>
    %36 = vector.multi_reduction <add>, %35, %cst_46 [1] : vector<8x384xf32> to vector<8xf32>
    %37 = vector.shape_cast %36 : vector<8xf32> to vector<8x1xf32>
    %c0_47 = arith.constant 0 : index
    %c0_48 = arith.constant 0 : index
    %c0_49 = arith.constant 0 : index
    %c0_50 = arith.constant 0 : index
    %38 = vector.load %arg5[%c0_47, %c0_48, %c0_49, %c0_50] : memref<1x2x8x1xf32, #tpu.memory_space<vmem>>, vector<1x1x8x1xf32>
    %39 = vector.shape_cast %38 : vector<1x1x8x1xf32> to vector<8x1xf32>
    %40 = vector.shape_cast %37 : vector<8x1xf32> to vector<1x1x8x1xf32>
    tpu.vector_store %arg5[%c0_47, %c0_48, %c0_49, %c0_50], %40 {strides = array<i32>} : memref<1x2x8x1xf32, #tpu.memory_space<vmem>>, vector<1x1x8x1xf32>,
    %41 = arith.mulf %35, %35 : vector<8x384xf32>
    %cst_51 = arith.constant dense<0.000000e+00> : vector<8xf32>
    %42 = vector.multi_reduction <add>, %41, %cst_51 [1] : vector<8x384xf32> to vector<8xf32>
    %43 = vector.shape_cast %42 : vector<8xf32> to vector<8x1xf32>
    %c0_52 = arith.constant 0 : index
    %c1_53 = arith.constant 1 : index
    %c0_54 = arith.constant 0 : index
    %c0_55 = arith.constant 0 : index
    %44 = vector.load %arg5[%c0_52, %c1_53, %c0_54, %c0_55] : memref<1x2x8x1xf32, #tpu.memory_space<vmem>>, vector<1x1x8x1xf32>
    %45 = vector.shape_cast %44 : vector<1x1x8x1xf32> to vector<8x1xf32>
    %46 = vector.shape_cast %43 : vector<8x1xf32> to vector<1x1x8x1xf32>
    tpu.vector_store %arg5[%c0_52, %c1_53, %c0_54, %c0_55], %46 {strides = array<i32>} : memref<1x2x8x1xf32, #tpu.memory_space<vmem>>, vector<1x1x8x1xf32>,
    return
  }
  func.func @transform_0(%arg0: i32) -> (i32, i32, i32, i32) {
    %c0_i32 = arith.constant 0 : i32
    %c0_i32_0 = arith.constant 0 : i32
    %c0_i32_1 = arith.constant 0 : i32
    %c0_i32_2 = arith.constant 0 : i32
    return %arg0, %c0_i32, %c0_i32_0, %c0_i32_1 : i32, i32, i32, i32
  }
  func.func @transform_1(%arg0: i32) -> (i32, i32) {
    %c0_i32 = arith.constant 0 : i32
    %c0_i32_0 = arith.constant 0 : i32
    %c0_i32_1 = arith.constant 0 : i32
    return %c0_i32, %c0_i32_0 : i32, i32
  }
  func.func @transform_2(%arg0: i32) -> (i32, i32) {
    %c0_i32 = arith.constant 0 : i32
    %c0_i32_0 = arith.constant 0 : i32
    %c0_i32_1 = arith.constant 0 : i32
    return %c0_i32, %c0_i32_0 : i32, i32
  }
  func.func @transform_3(%arg0: i32) -> (i32, i32, i32) {
    %c0_i32 = arith.constant 0 : i32
    %c0_i32_0 = arith.constant 0 : i32
    %c0_i32_1 = arith.constant 0 : i32
    return %arg0, %c0_i32, %c0_i32_0 : i32, i32, i32
  }
  func.func @transform_4(%arg0: i32) -> (i32, i32, i32, i32) {
    %c0_i32 = arith.constant 0 : i32
    %c0_i32_0 = arith.constant 0 : i32
    %c0_i32_1 = arith.constant 0 : i32
    %c0_i32_2 = arith.constant 0 : i32
    return %arg0, %c0_i32, %c0_i32_0, %c0_i32_1 : i32, i32, i32, i32
  }
}

module attributes {stable_mosaic.version = 11 : i64} {
  func.func @kernel(%arg0: i32, %arg1: memref<1x1x8x522xbf16, #tpu.memory_space<vmem>>, %arg2: memref<8x392xbf16, #tpu.memory_space<vmem>>, %arg3: memref<1x384xf32, #tpu.memory_space<vmem>>, %arg4: memref<8x1xf32, #tpu.memory_space<vmem>>, %arg5: memref<1x8x384xf32, #tpu.memory_space<vmem>>, %arg6: memref<1x2x8x1xf32, #tpu.memory_space<vmem>>, %arg7: memref<392x384xbf16, #tpu.memory_space<vmem>>) attributes {dimension_semantics = [#tpu.dimension_semantics<parallel>], iteration_bounds = array<i64: 2>, scalar_prefetch = 0 : i64, scratch_operands = 1 : i64, tpu.core_type = #tpu.core_type<tc>, window_params = [{transform_indices = @transform_0, window_bounds = array<i64: 1, 1, 8, 522>}, {pipeline_mode = #tpu.pipeline_mode<synchronous>, transform_indices = @transform_1, window_bounds = array<i64: 8, 392>}, {pipeline_mode = #tpu.pipeline_mode<synchronous>, transform_indices = @transform_2, window_bounds = array<i64: 1, 384>}, {pipeline_mode = #tpu.pipeline_mode<synchronous>, transform_indices = @transform_3, window_bounds = array<i64: 8, 1>}, {transform_indices = @transform_4, window_bounds = array<i64: 1, 8, 384>}, {transform_indices = @transform_5, window_bounds = array<i64: 1, 2, 8, 1>}]} {
    %c0 = arith.constant 0 : index
    %c0_0 = arith.constant 0 : index
    %c0_1 = arith.constant 0 : index
    %c0_2 = arith.constant 0 : index
    %0 = vector.load %arg1[%c0, %c0_0, %c0_1, %c0_2] : memref<1x1x8x522xbf16, #tpu.memory_space<vmem>>, vector<1x1x8x384xbf16>
    %1 = vector.shape_cast %0 : vector<1x1x8x384xbf16> to vector<8x384xbf16>
    %c0_3 = arith.constant 0 : index
    %c0_4 = arith.constant 0 : index
    %2 = vector.load %arg7[%c0_3, %c0_4] : memref<392x384xbf16, #tpu.memory_space<vmem>>, vector<8x384xbf16>
    tpu.vector_store %arg7[%c0_3, %c0_4], %1 {strides = array<i32>} : memref<392x384xbf16, #tpu.memory_space<vmem>>, vector<8x384xbf16>,
    %c0_5 = arith.constant 0 : index
    %c0_6 = arith.constant 0 : index
    %c0_7 = arith.constant 0 : index
    %c1 = arith.constant 1 : index
    %3 = vector.load %arg1[%c0_5, %c0_6, %c0_7, %c1] : memref<1x1x8x522xbf16, #tpu.memory_space<vmem>>, vector<1x1x8x384xbf16>
    %4 = vector.shape_cast %3 : vector<1x1x8x384xbf16> to vector<8x384xbf16>
    %c8 = arith.constant 8 : index
    %c0_8 = arith.constant 0 : index
    %5 = vector.load %arg7[%c8, %c0_8] : memref<392x384xbf16, #tpu.memory_space<vmem>>, vector<8x384xbf16>
    tpu.vector_store %arg7[%c8, %c0_8], %4 {strides = array<i32>} : memref<392x384xbf16, #tpu.memory_space<vmem>>, vector<8x384xbf16>,
    %c0_9 = arith.constant 0 : index
    %c0_10 = arith.constant 0 : index
    %c0_11 = arith.constant 0 : index
    %c2 = arith.constant 2 : index
    %6 = vector.load %arg1[%c0_9, %c0_10, %c0_11, %c2] : memref<1x1x8x522xbf16, #tpu.memory_space<vmem>>, vector<1x1x8x384xbf16>
    %7 = vector.shape_cast %6 : vector<1x1x8x384xbf16> to vector<8x384xbf16>
    %c16 = arith.constant 16 : index
    %c0_12 = arith.constant 0 : index
    %8 = vector.load %arg7[%c16, %c0_12] : memref<392x384xbf16, #tpu.memory_space<vmem>>, vector<8x384xbf16>
    tpu.vector_store %arg7[%c16, %c0_12], %7 {strides = array<i32>} : memref<392x384xbf16, #tpu.memory_space<vmem>>, vector<8x384xbf16>,
    %c0_13 = arith.constant 0 : index
    %c0_14 = arith.constant 0 : index
    %c0_15 = arith.constant 0 : index
    %c3 = arith.constant 3 : index
    %9 = vector.load %arg1[%c0_13, %c0_14, %c0_15, %c3] : memref<1x1x8x522xbf16, #tpu.memory_space<vmem>>, vector<1x1x8x384xbf16>
    %10 = vector.shape_cast %9 : vector<1x1x8x384xbf16> to vector<8x384xbf16>
    %c24 = arith.constant 24 : index
    %c0_16 = arith.constant 0 : index
    %11 = vector.load %arg7[%c24, %c0_16] : memref<392x384xbf16, #tpu.memory_space<vmem>>, vector<8x384xbf16>
    tpu.vector_store %arg7[%c24, %c0_16], %10 {strides = array<i32>} : memref<392x384xbf16, #tpu.memory_space<vmem>>, vector<8x384xbf16>,
    %c0_17 = arith.constant 0 : index
    %c0_18 = arith.constant 0 : index
    %c0_19 = arith.constant 0 : index
    %c4 = arith.constant 4 : index
    %12 = vector.load %arg1[%c0_17, %c0_18, %c0_19, %c4] : memref<1x1x8x522xbf16, #tpu.memory_space<vmem>>, vector<1x1x8x384xbf16>
    %13 = vector.shape_cast %12 : vector<1x1x8x384xbf16> to vector<8x384xbf16>
    %c32 = arith.constant 32 : index
    %c0_20 = arith.constant 0 : index
    %14 = vector.load %arg7[%c32, %c0_20] : memref<392x384xbf16, #tpu.memory_space<vmem>>, vector<8x384xbf16>
    tpu.vector_store %arg7[%c32, %c0_20], %13 {strides = array<i32>} : memref<392x384xbf16, #tpu.memory_space<vmem>>, vector<8x384xbf16>,
    %c0_21 = arith.constant 0 : index
    %c0_22 = arith.constant 0 : index
    %c0_23 = arith.constant 0 : index
    %c5 = arith.constant 5 : index
    %15 = vector.load %arg1[%c0_21, %c0_22, %c0_23, %c5] : memref<1x1x8x522xbf16, #tpu.memory_space<vmem>>, vector<1x1x8x384xbf16>
    %16 = vector.shape_cast %15 : vector<1x1x8x384xbf16> to vector<8x384xbf16>
    %c40 = arith.constant 40 : index
    %c0_24 = arith.constant 0 : index
    %17 = vector.load %arg7[%c40, %c0_24] : memref<392x384xbf16, #tpu.memory_space<vmem>>, vector<8x384xbf16>
    tpu.vector_store %arg7[%c40, %c0_24], %16 {strides = array<i32>} : memref<392x384xbf16, #tpu.memory_space<vmem>>, vector<8x384xbf16>,
    %c0_25 = arith.constant 0 : index
    %c0_26 = arith.constant 0 : index
    %c0_27 = arith.constant 0 : index
    %c6 = arith.constant 6 : index
    %18 = vector.load %arg1[%c0_25, %c0_26, %c0_27, %c6] : memref<1x1x8x522xbf16, #tpu.memory_space<vmem>>, vector<1x1x8x384xbf16>
    %19 = vector.shape_cast %18 : vector<1x1x8x384xbf16> to vector<8x384xbf16>
    %c48 = arith.constant 48 : index
    %c0_28 = arith.constant 0 : index
    %20 = vector.load %arg7[%c48, %c0_28] : memref<392x384xbf16, #tpu.memory_space<vmem>>, vector<8x384xbf16>
    tpu.vector_store %arg7[%c48, %c0_28], %19 {strides = array<i32>} : memref<392x384xbf16, #tpu.memory_space<vmem>>, vector<8x384xbf16>,
    %c0_29 = arith.constant 0 : index
    %c0_30 = arith.constant 0 : index
    %c0_31 = arith.constant 0 : index
    %c22 = arith.constant 22 : index
    %21 = vector.load %arg1[%c0_29, %c0_30, %c0_31, %c22] : memref<1x1x8x522xbf16, #tpu.memory_space<vmem>>, vector<1x1x8x384xbf16>
    %22 = vector.shape_cast %21 : vector<1x1x8x384xbf16> to vector<8x384xbf16>
    %c56 = arith.constant 56 : index
    %c0_32 = arith.constant 0 : index
    %23 = vector.load %arg7[%c56, %c0_32] : memref<392x384xbf16, #tpu.memory_space<vmem>>, vector<8x384xbf16>
    tpu.vector_store %arg7[%c56, %c0_32], %22 {strides = array<i32>} : memref<392x384xbf16, #tpu.memory_space<vmem>>, vector<8x384xbf16>,
    %c0_33 = arith.constant 0 : index
    %c0_34 = arith.constant 0 : index
    %c0_35 = arith.constant 0 : index
    %c23 = arith.constant 23 : index
    %24 = vector.load %arg1[%c0_33, %c0_34, %c0_35, %c23] : memref<1x1x8x522xbf16, #tpu.memory_space<vmem>>, vector<1x1x8x384xbf16>
    %25 = vector.shape_cast %24 : vector<1x1x8x384xbf16> to vector<8x384xbf16>
    %c64 = arith.constant 64 : index
    %c0_36 = arith.constant 0 : index
    %26 = vector.load %arg7[%c64, %c0_36] : memref<392x384xbf16, #tpu.memory_space<vmem>>, vector<8x384xbf16>
    tpu.vector_store %arg7[%c64, %c0_36], %25 {strides = array<i32>} : memref<392x384xbf16, #tpu.memory_space<vmem>>, vector<8x384xbf16>,
    %c0_37 = arith.constant 0 : index
    %c0_38 = arith.constant 0 : index
    %c0_39 = arith.constant 0 : index
    %c24_40 = arith.constant 24 : index
    %27 = vector.load %arg1[%c0_37, %c0_38, %c0_39, %c24_40] : memref<1x1x8x522xbf16, #tpu.memory_space<vmem>>, vector<1x1x8x384xbf16>
    %28 = vector.shape_cast %27 : vector<1x1x8x384xbf16> to vector<8x384xbf16>
    %c72 = arith.constant 72 : index
    %c0_41 = arith.constant 0 : index
    %29 = vector.load %arg7[%c72, %c0_41] : memref<392x384xbf16, #tpu.memory_space<vmem>>, vector<8x384xbf16>
    tpu.vector_store %arg7[%c72, %c0_41], %28 {strides = array<i32>} : memref<392x384xbf16, #tpu.memory_space<vmem>>, vector<8x384xbf16>,
    %c0_42 = arith.constant 0 : index
    %c0_43 = arith.constant 0 : index
    %c0_44 = arith.constant 0 : index
    %c25 = arith.constant 25 : index
    %30 = vector.load %arg1[%c0_42, %c0_43, %c0_44, %c25] : memref<1x1x8x522xbf16, #tpu.memory_space<vmem>>, vector<1x1x8x384xbf16>
    %31 = vector.shape_cast %30 : vector<1x1x8x384xbf16> to vector<8x384xbf16>
    %c80 = arith.constant 80 : index
    %c0_45 = arith.constant 0 : index
    %32 = vector.load %arg7[%c80, %c0_45] : memref<392x384xbf16, #tpu.memory_space<vmem>>, vector<8x384xbf16>
    tpu.vector_store %arg7[%c80, %c0_45], %31 {strides = array<i32>} : memref<392x384xbf16, #tpu.memory_space<vmem>>, vector<8x384xbf16>,
    %c0_46 = arith.constant 0 : index
    %c0_47 = arith.constant 0 : index
    %c0_48 = arith.constant 0 : index
    %c26 = arith.constant 26 : index
    %33 = vector.load %arg1[%c0_46, %c0_47, %c0_48, %c26] : memref<1x1x8x522xbf16, #tpu.memory_space<vmem>>, vector<1x1x8x384xbf16>
    %34 = vector.shape_cast %33 : vector<1x1x8x384xbf16> to vector<8x384xbf16>
    %c88 = arith.constant 88 : index
    %c0_49 = arith.constant 0 : index
    %35 = vector.load %arg7[%c88, %c0_49] : memref<392x384xbf16, #tpu.memory_space<vmem>>, vector<8x384xbf16>
    tpu.vector_store %arg7[%c88, %c0_49], %34 {strides = array<i32>} : memref<392x384xbf16, #tpu.memory_space<vmem>>, vector<8x384xbf16>,
    %c0_50 = arith.constant 0 : index
    %c0_51 = arith.constant 0 : index
    %c0_52 = arith.constant 0 : index
    %c27 = arith.constant 27 : index
    %36 = vector.load %arg1[%c0_50, %c0_51, %c0_52, %c27] : memref<1x1x8x522xbf16, #tpu.memory_space<vmem>>, vector<1x1x8x384xbf16>
    %37 = vector.shape_cast %36 : vector<1x1x8x384xbf16> to vector<8x384xbf16>
    %c96 = arith.constant 96 : index
    %c0_53 = arith.constant 0 : index
    %38 = vector.load %arg7[%c96, %c0_53] : memref<392x384xbf16, #tpu.memory_space<vmem>>, vector<8x384xbf16>
    tpu.vector_store %arg7[%c96, %c0_53], %37 {strides = array<i32>} : memref<392x384xbf16, #tpu.memory_space<vmem>>, vector<8x384xbf16>,
    %c0_54 = arith.constant 0 : index
    %c0_55 = arith.constant 0 : index
    %c0_56 = arith.constant 0 : index
    %c28 = arith.constant 28 : index
    %39 = vector.load %arg1[%c0_54, %c0_55, %c0_56, %c28] : memref<1x1x8x522xbf16, #tpu.memory_space<vmem>>, vector<1x1x8x384xbf16>
    %40 = vector.shape_cast %39 : vector<1x1x8x384xbf16> to vector<8x384xbf16>
    %c104 = arith.constant 104 : index
    %c0_57 = arith.constant 0 : index
    %41 = vector.load %arg7[%c104, %c0_57] : memref<392x384xbf16, #tpu.memory_space<vmem>>, vector<8x384xbf16>
    tpu.vector_store %arg7[%c104, %c0_57], %40 {strides = array<i32>} : memref<392x384xbf16, #tpu.memory_space<vmem>>, vector<8x384xbf16>,
    %c0_58 = arith.constant 0 : index
    %c0_59 = arith.constant 0 : index
    %c0_60 = arith.constant 0 : index
    %c44 = arith.constant 44 : index
    %42 = vector.load %arg1[%c0_58, %c0_59, %c0_60, %c44] : memref<1x1x8x522xbf16, #tpu.memory_space<vmem>>, vector<1x1x8x384xbf16>
    %43 = vector.shape_cast %42 : vector<1x1x8x384xbf16> to vector<8x384xbf16>
    %c112 = arith.constant 112 : index
    %c0_61 = arith.constant 0 : index
    %44 = vector.load %arg7[%c112, %c0_61] : memref<392x384xbf16, #tpu.memory_space<vmem>>, vector<8x384xbf16>
    tpu.vector_store %arg7[%c112, %c0_61], %43 {strides = array<i32>} : memref<392x384xbf16, #tpu.memory_space<vmem>>, vector<8x384xbf16>,
    %c0_62 = arith.constant 0 : index
    %c0_63 = arith.constant 0 : index
    %c0_64 = arith.constant 0 : index
    %c45 = arith.constant 45 : index
    %45 = vector.load %arg1[%c0_62, %c0_63, %c0_64, %c45] : memref<1x1x8x522xbf16, #tpu.memory_space<vmem>>, vector<1x1x8x384xbf16>
    %46 = vector.shape_cast %45 : vector<1x1x8x384xbf16> to vector<8x384xbf16>
    %c120 = arith.constant 120 : index
    %c0_65 = arith.constant 0 : index
    %47 = vector.load %arg7[%c120, %c0_65] : memref<392x384xbf16, #tpu.memory_space<vmem>>, vector<8x384xbf16>
    tpu.vector_store %arg7[%c120, %c0_65], %46 {strides = array<i32>} : memref<392x384xbf16, #tpu.memory_space<vmem>>, vector<8x384xbf16>,
    %c0_66 = arith.constant 0 : index
    %c0_67 = arith.constant 0 : index
    %c0_68 = arith.constant 0 : index
    %c46 = arith.constant 46 : index
    %48 = vector.load %arg1[%c0_66, %c0_67, %c0_68, %c46] : memref<1x1x8x522xbf16, #tpu.memory_space<vmem>>, vector<1x1x8x384xbf16>
    %49 = vector.shape_cast %48 : vector<1x1x8x384xbf16> to vector<8x384xbf16>
    %c128 = arith.constant 128 : index
    %c0_69 = arith.constant 0 : index
    %50 = vector.load %arg7[%c128, %c0_69] : memref<392x384xbf16, #tpu.memory_space<vmem>>, vector<8x384xbf16>
    tpu.vector_store %arg7[%c128, %c0_69], %49 {strides = array<i32>} : memref<392x384xbf16, #tpu.memory_space<vmem>>, vector<8x384xbf16>,
    %c0_70 = arith.constant 0 : index
    %c0_71 = arith.constant 0 : index
    %c0_72 = arith.constant 0 : index
    %c47 = arith.constant 47 : index
    %51 = vector.load %arg1[%c0_70, %c0_71, %c0_72, %c47] : memref<1x1x8x522xbf16, #tpu.memory_space<vmem>>, vector<1x1x8x384xbf16>
    %52 = vector.shape_cast %51 : vector<1x1x8x384xbf16> to vector<8x384xbf16>
    %c136 = arith.constant 136 : index
    %c0_73 = arith.constant 0 : index
    %53 = vector.load %arg7[%c136, %c0_73] : memref<392x384xbf16, #tpu.memory_space<vmem>>, vector<8x384xbf16>
    tpu.vector_store %arg7[%c136, %c0_73], %52 {strides = array<i32>} : memref<392x384xbf16, #tpu.memory_space<vmem>>, vector<8x384xbf16>,
    %c0_74 = arith.constant 0 : index
    %c0_75 = arith.constant 0 : index
    %c0_76 = arith.constant 0 : index
    %c48_77 = arith.constant 48 : index
    %54 = vector.load %arg1[%c0_74, %c0_75, %c0_76, %c48_77] : memref<1x1x8x522xbf16, #tpu.memory_space<vmem>>, vector<1x1x8x384xbf16>
    %55 = vector.shape_cast %54 : vector<1x1x8x384xbf16> to vector<8x384xbf16>
    %c144 = arith.constant 144 : index
    %c0_78 = arith.constant 0 : index
    %56 = vector.load %arg7[%c144, %c0_78] : memref<392x384xbf16, #tpu.memory_space<vmem>>, vector<8x384xbf16>
    tpu.vector_store %arg7[%c144, %c0_78], %55 {strides = array<i32>} : memref<392x384xbf16, #tpu.memory_space<vmem>>, vector<8x384xbf16>,
    %c0_79 = arith.constant 0 : index
    %c0_80 = arith.constant 0 : index
    %c0_81 = arith.constant 0 : index
    %c49 = arith.constant 49 : index
    %57 = vector.load %arg1[%c0_79, %c0_80, %c0_81, %c49] : memref<1x1x8x522xbf16, #tpu.memory_space<vmem>>, vector<1x1x8x384xbf16>
    %58 = vector.shape_cast %57 : vector<1x1x8x384xbf16> to vector<8x384xbf16>
    %c152 = arith.constant 152 : index
    %c0_82 = arith.constant 0 : index
    %59 = vector.load %arg7[%c152, %c0_82] : memref<392x384xbf16, #tpu.memory_space<vmem>>, vector<8x384xbf16>
    tpu.vector_store %arg7[%c152, %c0_82], %58 {strides = array<i32>} : memref<392x384xbf16, #tpu.memory_space<vmem>>, vector<8x384xbf16>,
    %c0_83 = arith.constant 0 : index
    %c0_84 = arith.constant 0 : index
    %c0_85 = arith.constant 0 : index
    %c50 = arith.constant 50 : index
    %60 = vector.load %arg1[%c0_83, %c0_84, %c0_85, %c50] : memref<1x1x8x522xbf16, #tpu.memory_space<vmem>>, vector<1x1x8x384xbf16>
    %61 = vector.shape_cast %60 : vector<1x1x8x384xbf16> to vector<8x384xbf16>
    %c160 = arith.constant 160 : index
    %c0_86 = arith.constant 0 : index
    %62 = vector.load %arg7[%c160, %c0_86] : memref<392x384xbf16, #tpu.memory_space<vmem>>, vector<8x384xbf16>
    tpu.vector_store %arg7[%c160, %c0_86], %61 {strides = array<i32>} : memref<392x384xbf16, #tpu.memory_space<vmem>>, vector<8x384xbf16>,
    %c0_87 = arith.constant 0 : index
    %c0_88 = arith.constant 0 : index
    %c0_89 = arith.constant 0 : index
    %c66 = arith.constant 66 : index
    %63 = vector.load %arg1[%c0_87, %c0_88, %c0_89, %c66] : memref<1x1x8x522xbf16, #tpu.memory_space<vmem>>, vector<1x1x8x384xbf16>
    %64 = vector.shape_cast %63 : vector<1x1x8x384xbf16> to vector<8x384xbf16>
    %c168 = arith.constant 168 : index
    %c0_90 = arith.constant 0 : index
    %65 = vector.load %arg7[%c168, %c0_90] : memref<392x384xbf16, #tpu.memory_space<vmem>>, vector<8x384xbf16>
    tpu.vector_store %arg7[%c168, %c0_90], %64 {strides = array<i32>} : memref<392x384xbf16, #tpu.memory_space<vmem>>, vector<8x384xbf16>,
    %c0_91 = arith.constant 0 : index
    %c0_92 = arith.constant 0 : index
    %c0_93 = arith.constant 0 : index
    %c67 = arith.constant 67 : index
    %66 = vector.load %arg1[%c0_91, %c0_92, %c0_93, %c67] : memref<1x1x8x522xbf16, #tpu.memory_space<vmem>>, vector<1x1x8x384xbf16>
    %67 = vector.shape_cast %66 : vector<1x1x8x384xbf16> to vector<8x384xbf16>
    %c176 = arith.constant 176 : index
    %c0_94 = arith.constant 0 : index
    %68 = vector.load %arg7[%c176, %c0_94] : memref<392x384xbf16, #tpu.memory_space<vmem>>, vector<8x384xbf16>
    tpu.vector_store %arg7[%c176, %c0_94], %67 {strides = array<i32>} : memref<392x384xbf16, #tpu.memory_space<vmem>>, vector<8x384xbf16>,
    %c0_95 = arith.constant 0 : index
    %c0_96 = arith.constant 0 : index
    %c0_97 = arith.constant 0 : index
    %c68 = arith.constant 68 : index
    %69 = vector.load %arg1[%c0_95, %c0_96, %c0_97, %c68] : memref<1x1x8x522xbf16, #tpu.memory_space<vmem>>, vector<1x1x8x384xbf16>
    %70 = vector.shape_cast %69 : vector<1x1x8x384xbf16> to vector<8x384xbf16>
    %c184 = arith.constant 184 : index
    %c0_98 = arith.constant 0 : index
    %71 = vector.load %arg7[%c184, %c0_98] : memref<392x384xbf16, #tpu.memory_space<vmem>>, vector<8x384xbf16>
    tpu.vector_store %arg7[%c184, %c0_98], %70 {strides = array<i32>} : memref<392x384xbf16, #tpu.memory_space<vmem>>, vector<8x384xbf16>,
    %c0_99 = arith.constant 0 : index
    %c0_100 = arith.constant 0 : index
    %c0_101 = arith.constant 0 : index
    %c69 = arith.constant 69 : index
    %72 = vector.load %arg1[%c0_99, %c0_100, %c0_101, %c69] : memref<1x1x8x522xbf16, #tpu.memory_space<vmem>>, vector<1x1x8x384xbf16>
    %73 = vector.shape_cast %72 : vector<1x1x8x384xbf16> to vector<8x384xbf16>
    %c192 = arith.constant 192 : index
    %c0_102 = arith.constant 0 : index
    %74 = vector.load %arg7[%c192, %c0_102] : memref<392x384xbf16, #tpu.memory_space<vmem>>, vector<8x384xbf16>
    tpu.vector_store %arg7[%c192, %c0_102], %73 {strides = array<i32>} : memref<392x384xbf16, #tpu.memory_space<vmem>>, vector<8x384xbf16>,
    %c0_103 = arith.constant 0 : index
    %c0_104 = arith.constant 0 : index
    %c0_105 = arith.constant 0 : index
    %c70 = arith.constant 70 : index
    %75 = vector.load %arg1[%c0_103, %c0_104, %c0_105, %c70] : memref<1x1x8x522xbf16, #tpu.memory_space<vmem>>, vector<1x1x8x384xbf16>
    %76 = vector.shape_cast %75 : vector<1x1x8x384xbf16> to vector<8x384xbf16>
    %c200 = arith.constant 200 : index
    %c0_106 = arith.constant 0 : index
    %77 = vector.load %arg7[%c200, %c0_106] : memref<392x384xbf16, #tpu.memory_space<vmem>>, vector<8x384xbf16>
    tpu.vector_store %arg7[%c200, %c0_106], %76 {strides = array<i32>} : memref<392x384xbf16, #tpu.memory_space<vmem>>, vector<8x384xbf16>,
    %c0_107 = arith.constant 0 : index
    %c0_108 = arith.constant 0 : index
    %c0_109 = arith.constant 0 : index
    %c71 = arith.constant 71 : index
    %78 = vector.load %arg1[%c0_107, %c0_108, %c0_109, %c71] : memref<1x1x8x522xbf16, #tpu.memory_space<vmem>>, vector<1x1x8x384xbf16>
    %79 = vector.shape_cast %78 : vector<1x1x8x384xbf16> to vector<8x384xbf16>
    %c208 = arith.constant 208 : index
    %c0_110 = arith.constant 0 : index
    %80 = vector.load %arg7[%c208, %c0_110] : memref<392x384xbf16, #tpu.memory_space<vmem>>, vector<8x384xbf16>
    tpu.vector_store %arg7[%c208, %c0_110], %79 {strides = array<i32>} : memref<392x384xbf16, #tpu.memory_space<vmem>>, vector<8x384xbf16>,
    %c0_111 = arith.constant 0 : index
    %c0_112 = arith.constant 0 : index
    %c0_113 = arith.constant 0 : index
    %c72_114 = arith.constant 72 : index
    %81 = vector.load %arg1[%c0_111, %c0_112, %c0_113, %c72_114] : memref<1x1x8x522xbf16, #tpu.memory_space<vmem>>, vector<1x1x8x384xbf16>
    %82 = vector.shape_cast %81 : vector<1x1x8x384xbf16> to vector<8x384xbf16>
    %c216 = arith.constant 216 : index
    %c0_115 = arith.constant 0 : index
    %83 = vector.load %arg7[%c216, %c0_115] : memref<392x384xbf16, #tpu.memory_space<vmem>>, vector<8x384xbf16>
    tpu.vector_store %arg7[%c216, %c0_115], %82 {strides = array<i32>} : memref<392x384xbf16, #tpu.memory_space<vmem>>, vector<8x384xbf16>,
    %c0_116 = arith.constant 0 : index
    %c0_117 = arith.constant 0 : index
    %c0_118 = arith.constant 0 : index
    %c88_119 = arith.constant 88 : index
    %84 = vector.load %arg1[%c0_116, %c0_117, %c0_118, %c88_119] : memref<1x1x8x522xbf16, #tpu.memory_space<vmem>>, vector<1x1x8x384xbf16>
    %85 = vector.shape_cast %84 : vector<1x1x8x384xbf16> to vector<8x384xbf16>
    %c224 = arith.constant 224 : index
    %c0_120 = arith.constant 0 : index
    %86 = vector.load %arg7[%c224, %c0_120] : memref<392x384xbf16, #tpu.memory_space<vmem>>, vector<8x384xbf16>
    tpu.vector_store %arg7[%c224, %c0_120], %85 {strides = array<i32>} : memref<392x384xbf16, #tpu.memory_space<vmem>>, vector<8x384xbf16>,
    %c0_121 = arith.constant 0 : index
    %c0_122 = arith.constant 0 : index
    %c0_123 = arith.constant 0 : index
    %c89 = arith.constant 89 : index
    %87 = vector.load %arg1[%c0_121, %c0_122, %c0_123, %c89] : memref<1x1x8x522xbf16, #tpu.memory_space<vmem>>, vector<1x1x8x384xbf16>
    %88 = vector.shape_cast %87 : vector<1x1x8x384xbf16> to vector<8x384xbf16>
    %c232 = arith.constant 232 : index
    %c0_124 = arith.constant 0 : index
    %89 = vector.load %arg7[%c232, %c0_124] : memref<392x384xbf16, #tpu.memory_space<vmem>>, vector<8x384xbf16>
    tpu.vector_store %arg7[%c232, %c0_124], %88 {strides = array<i32>} : memref<392x384xbf16, #tpu.memory_space<vmem>>, vector<8x384xbf16>,
    %c0_125 = arith.constant 0 : index
    %c0_126 = arith.constant 0 : index
    %c0_127 = arith.constant 0 : index
    %c90 = arith.constant 90 : index
    %90 = vector.load %arg1[%c0_125, %c0_126, %c0_127, %c90] : memref<1x1x8x522xbf16, #tpu.memory_space<vmem>>, vector<1x1x8x384xbf16>
    %91 = vector.shape_cast %90 : vector<1x1x8x384xbf16> to vector<8x384xbf16>
    %c240 = arith.constant 240 : index
    %c0_128 = arith.constant 0 : index
    %92 = vector.load %arg7[%c240, %c0_128] : memref<392x384xbf16, #tpu.memory_space<vmem>>, vector<8x384xbf16>
    tpu.vector_store %arg7[%c240, %c0_128], %91 {strides = array<i32>} : memref<392x384xbf16, #tpu.memory_space<vmem>>, vector<8x384xbf16>,
    %c0_129 = arith.constant 0 : index
    %c0_130 = arith.constant 0 : index
    %c0_131 = arith.constant 0 : index
    %c91 = arith.constant 91 : index
    %93 = vector.load %arg1[%c0_129, %c0_130, %c0_131, %c91] : memref<1x1x8x522xbf16, #tpu.memory_space<vmem>>, vector<1x1x8x384xbf16>
    %94 = vector.shape_cast %93 : vector<1x1x8x384xbf16> to vector<8x384xbf16>
    %c248 = arith.constant 248 : index
    %c0_132 = arith.constant 0 : index
    %95 = vector.load %arg7[%c248, %c0_132] : memref<392x384xbf16, #tpu.memory_space<vmem>>, vector<8x384xbf16>
    tpu.vector_store %arg7[%c248, %c0_132], %94 {strides = array<i32>} : memref<392x384xbf16, #tpu.memory_space<vmem>>, vector<8x384xbf16>,
    %c0_133 = arith.constant 0 : index
    %c0_134 = arith.constant 0 : index
    %c0_135 = arith.constant 0 : index
    %c92 = arith.constant 92 : index
    %96 = vector.load %arg1[%c0_133, %c0_134, %c0_135, %c92] : memref<1x1x8x522xbf16, #tpu.memory_space<vmem>>, vector<1x1x8x384xbf16>
    %97 = vector.shape_cast %96 : vector<1x1x8x384xbf16> to vector<8x384xbf16>
    %c256 = arith.constant 256 : index
    %c0_136 = arith.constant 0 : index
    %98 = vector.load %arg7[%c256, %c0_136] : memref<392x384xbf16, #tpu.memory_space<vmem>>, vector<8x384xbf16>
    tpu.vector_store %arg7[%c256, %c0_136], %97 {strides = array<i32>} : memref<392x384xbf16, #tpu.memory_space<vmem>>, vector<8x384xbf16>,
    %c0_137 = arith.constant 0 : index
    %c0_138 = arith.constant 0 : index
    %c0_139 = arith.constant 0 : index
    %c93 = arith.constant 93 : index
    %99 = vector.load %arg1[%c0_137, %c0_138, %c0_139, %c93] : memref<1x1x8x522xbf16, #tpu.memory_space<vmem>>, vector<1x1x8x384xbf16>
    %100 = vector.shape_cast %99 : vector<1x1x8x384xbf16> to vector<8x384xbf16>
    %c264 = arith.constant 264 : index
    %c0_140 = arith.constant 0 : index
    %101 = vector.load %arg7[%c264, %c0_140] : memref<392x384xbf16, #tpu.memory_space<vmem>>, vector<8x384xbf16>
    tpu.vector_store %arg7[%c264, %c0_140], %100 {strides = array<i32>} : memref<392x384xbf16, #tpu.memory_space<vmem>>, vector<8x384xbf16>,
    %c0_141 = arith.constant 0 : index
    %c0_142 = arith.constant 0 : index
    %c0_143 = arith.constant 0 : index
    %c94 = arith.constant 94 : index
    %102 = vector.load %arg1[%c0_141, %c0_142, %c0_143, %c94] : memref<1x1x8x522xbf16, #tpu.memory_space<vmem>>, vector<1x1x8x384xbf16>
    %103 = vector.shape_cast %102 : vector<1x1x8x384xbf16> to vector<8x384xbf16>
    %c272 = arith.constant 272 : index
    %c0_144 = arith.constant 0 : index
    %104 = vector.load %arg7[%c272, %c0_144] : memref<392x384xbf16, #tpu.memory_space<vmem>>, vector<8x384xbf16>
    tpu.vector_store %arg7[%c272, %c0_144], %103 {strides = array<i32>} : memref<392x384xbf16, #tpu.memory_space<vmem>>, vector<8x384xbf16>,
    %c0_145 = arith.constant 0 : index
    %c0_146 = arith.constant 0 : index
    %c0_147 = arith.constant 0 : index
    %c110 = arith.constant 110 : index
    %105 = vector.load %arg1[%c0_145, %c0_146, %c0_147, %c110] : memref<1x1x8x522xbf16, #tpu.memory_space<vmem>>, vector<1x1x8x384xbf16>
    %106 = vector.shape_cast %105 : vector<1x1x8x384xbf16> to vector<8x384xbf16>
    %c280 = arith.constant 280 : index
    %c0_148 = arith.constant 0 : index
    %107 = vector.load %arg7[%c280, %c0_148] : memref<392x384xbf16, #tpu.memory_space<vmem>>, vector<8x384xbf16>
    tpu.vector_store %arg7[%c280, %c0_148], %106 {strides = array<i32>} : memref<392x384xbf16, #tpu.memory_space<vmem>>, vector<8x384xbf16>,
    %c0_149 = arith.constant 0 : index
    %c0_150 = arith.constant 0 : index
    %c0_151 = arith.constant 0 : index
    %c111 = arith.constant 111 : index
    %108 = vector.load %arg1[%c0_149, %c0_150, %c0_151, %c111] : memref<1x1x8x522xbf16, #tpu.memory_space<vmem>>, vector<1x1x8x384xbf16>
    %109 = vector.shape_cast %108 : vector<1x1x8x384xbf16> to vector<8x384xbf16>
    %c288 = arith.constant 288 : index
    %c0_152 = arith.constant 0 : index
    %110 = vector.load %arg7[%c288, %c0_152] : memref<392x384xbf16, #tpu.memory_space<vmem>>, vector<8x384xbf16>
    tpu.vector_store %arg7[%c288, %c0_152], %109 {strides = array<i32>} : memref<392x384xbf16, #tpu.memory_space<vmem>>, vector<8x384xbf16>,
    %c0_153 = arith.constant 0 : index
    %c0_154 = arith.constant 0 : index
    %c0_155 = arith.constant 0 : index
    %c112_156 = arith.constant 112 : index
    %111 = vector.load %arg1[%c0_153, %c0_154, %c0_155, %c112_156] : memref<1x1x8x522xbf16, #tpu.memory_space<vmem>>, vector<1x1x8x384xbf16>
    %112 = vector.shape_cast %111 : vector<1x1x8x384xbf16> to vector<8x384xbf16>
    %c296 = arith.constant 296 : index
    %c0_157 = arith.constant 0 : index
    %113 = vector.load %arg7[%c296, %c0_157] : memref<392x384xbf16, #tpu.memory_space<vmem>>, vector<8x384xbf16>
    tpu.vector_store %arg7[%c296, %c0_157], %112 {strides = array<i32>} : memref<392x384xbf16, #tpu.memory_space<vmem>>, vector<8x384xbf16>,
    %c0_158 = arith.constant 0 : index
    %c0_159 = arith.constant 0 : index
    %c0_160 = arith.constant 0 : index
    %c113 = arith.constant 113 : index
    %114 = vector.load %arg1[%c0_158, %c0_159, %c0_160, %c113] : memref<1x1x8x522xbf16, #tpu.memory_space<vmem>>, vector<1x1x8x384xbf16>
    %115 = vector.shape_cast %114 : vector<1x1x8x384xbf16> to vector<8x384xbf16>
    %c304 = arith.constant 304 : index
    %c0_161 = arith.constant 0 : index
    %116 = vector.load %arg7[%c304, %c0_161] : memref<392x384xbf16, #tpu.memory_space<vmem>>, vector<8x384xbf16>
    tpu.vector_store %arg7[%c304, %c0_161], %115 {strides = array<i32>} : memref<392x384xbf16, #tpu.memory_space<vmem>>, vector<8x384xbf16>,
    %c0_162 = arith.constant 0 : index
    %c0_163 = arith.constant 0 : index
    %c0_164 = arith.constant 0 : index
    %c114 = arith.constant 114 : index
    %117 = vector.load %arg1[%c0_162, %c0_163, %c0_164, %c114] : memref<1x1x8x522xbf16, #tpu.memory_space<vmem>>, vector<1x1x8x384xbf16>
    %118 = vector.shape_cast %117 : vector<1x1x8x384xbf16> to vector<8x384xbf16>
    %c312 = arith.constant 312 : index
    %c0_165 = arith.constant 0 : index
    %119 = vector.load %arg7[%c312, %c0_165] : memref<392x384xbf16, #tpu.memory_space<vmem>>, vector<8x384xbf16>
    tpu.vector_store %arg7[%c312, %c0_165], %118 {strides = array<i32>} : memref<392x384xbf16, #tpu.memory_space<vmem>>, vector<8x384xbf16>,
    %c0_166 = arith.constant 0 : index
    %c0_167 = arith.constant 0 : index
    %c0_168 = arith.constant 0 : index
    %c115 = arith.constant 115 : index
    %120 = vector.load %arg1[%c0_166, %c0_167, %c0_168, %c115] : memref<1x1x8x522xbf16, #tpu.memory_space<vmem>>, vector<1x1x8x384xbf16>
    %121 = vector.shape_cast %120 : vector<1x1x8x384xbf16> to vector<8x384xbf16>
    %c320 = arith.constant 320 : index
    %c0_169 = arith.constant 0 : index
    %122 = vector.load %arg7[%c320, %c0_169] : memref<392x384xbf16, #tpu.memory_space<vmem>>, vector<8x384xbf16>
    tpu.vector_store %arg7[%c320, %c0_169], %121 {strides = array<i32>} : memref<392x384xbf16, #tpu.memory_space<vmem>>, vector<8x384xbf16>,
    %c0_170 = arith.constant 0 : index
    %c0_171 = arith.constant 0 : index
    %c0_172 = arith.constant 0 : index
    %c116 = arith.constant 116 : index
    %123 = vector.load %arg1[%c0_170, %c0_171, %c0_172, %c116] : memref<1x1x8x522xbf16, #tpu.memory_space<vmem>>, vector<1x1x8x384xbf16>
    %124 = vector.shape_cast %123 : vector<1x1x8x384xbf16> to vector<8x384xbf16>
    %c328 = arith.constant 328 : index
    %c0_173 = arith.constant 0 : index
    %125 = vector.load %arg7[%c328, %c0_173] : memref<392x384xbf16, #tpu.memory_space<vmem>>, vector<8x384xbf16>
    tpu.vector_store %arg7[%c328, %c0_173], %124 {strides = array<i32>} : memref<392x384xbf16, #tpu.memory_space<vmem>>, vector<8x384xbf16>,
    %c0_174 = arith.constant 0 : index
    %c0_175 = arith.constant 0 : index
    %c0_176 = arith.constant 0 : index
    %c132 = arith.constant 132 : index
    %126 = vector.load %arg1[%c0_174, %c0_175, %c0_176, %c132] : memref<1x1x8x522xbf16, #tpu.memory_space<vmem>>, vector<1x1x8x384xbf16>
    %127 = vector.shape_cast %126 : vector<1x1x8x384xbf16> to vector<8x384xbf16>
    %c336 = arith.constant 336 : index
    %c0_177 = arith.constant 0 : index
    %128 = vector.load %arg7[%c336, %c0_177] : memref<392x384xbf16, #tpu.memory_space<vmem>>, vector<8x384xbf16>
    tpu.vector_store %arg7[%c336, %c0_177], %127 {strides = array<i32>} : memref<392x384xbf16, #tpu.memory_space<vmem>>, vector<8x384xbf16>,
    %c0_178 = arith.constant 0 : index
    %c0_179 = arith.constant 0 : index
    %c0_180 = arith.constant 0 : index
    %c133 = arith.constant 133 : index
    %129 = vector.load %arg1[%c0_178, %c0_179, %c0_180, %c133] : memref<1x1x8x522xbf16, #tpu.memory_space<vmem>>, vector<1x1x8x384xbf16>
    %130 = vector.shape_cast %129 : vector<1x1x8x384xbf16> to vector<8x384xbf16>
    %c344 = arith.constant 344 : index
    %c0_181 = arith.constant 0 : index
    %131 = vector.load %arg7[%c344, %c0_181] : memref<392x384xbf16, #tpu.memory_space<vmem>>, vector<8x384xbf16>
    tpu.vector_store %arg7[%c344, %c0_181], %130 {strides = array<i32>} : memref<392x384xbf16, #tpu.memory_space<vmem>>, vector<8x384xbf16>,
    %c0_182 = arith.constant 0 : index
    %c0_183 = arith.constant 0 : index
    %c0_184 = arith.constant 0 : index
    %c134 = arith.constant 134 : index
    %132 = vector.load %arg1[%c0_182, %c0_183, %c0_184, %c134] : memref<1x1x8x522xbf16, #tpu.memory_space<vmem>>, vector<1x1x8x384xbf16>
    %133 = vector.shape_cast %132 : vector<1x1x8x384xbf16> to vector<8x384xbf16>
    %c352 = arith.constant 352 : index
    %c0_185 = arith.constant 0 : index
    %134 = vector.load %arg7[%c352, %c0_185] : memref<392x384xbf16, #tpu.memory_space<vmem>>, vector<8x384xbf16>
    tpu.vector_store %arg7[%c352, %c0_185], %133 {strides = array<i32>} : memref<392x384xbf16, #tpu.memory_space<vmem>>, vector<8x384xbf16>,
    %c0_186 = arith.constant 0 : index
    %c0_187 = arith.constant 0 : index
    %c0_188 = arith.constant 0 : index
    %c135 = arith.constant 135 : index
    %135 = vector.load %arg1[%c0_186, %c0_187, %c0_188, %c135] : memref<1x1x8x522xbf16, #tpu.memory_space<vmem>>, vector<1x1x8x384xbf16>
    %136 = vector.shape_cast %135 : vector<1x1x8x384xbf16> to vector<8x384xbf16>
    %c360 = arith.constant 360 : index
    %c0_189 = arith.constant 0 : index
    %137 = vector.load %arg7[%c360, %c0_189] : memref<392x384xbf16, #tpu.memory_space<vmem>>, vector<8x384xbf16>
    tpu.vector_store %arg7[%c360, %c0_189], %136 {strides = array<i32>} : memref<392x384xbf16, #tpu.memory_space<vmem>>, vector<8x384xbf16>,
    %c0_190 = arith.constant 0 : index
    %c0_191 = arith.constant 0 : index
    %c0_192 = arith.constant 0 : index
    %c136_193 = arith.constant 136 : index
    %138 = vector.load %arg1[%c0_190, %c0_191, %c0_192, %c136_193] : memref<1x1x8x522xbf16, #tpu.memory_space<vmem>>, vector<1x1x8x384xbf16>
    %139 = vector.shape_cast %138 : vector<1x1x8x384xbf16> to vector<8x384xbf16>
    %c368 = arith.constant 368 : index
    %c0_194 = arith.constant 0 : index
    %140 = vector.load %arg7[%c368, %c0_194] : memref<392x384xbf16, #tpu.memory_space<vmem>>, vector<8x384xbf16>
    tpu.vector_store %arg7[%c368, %c0_194], %139 {strides = array<i32>} : memref<392x384xbf16, #tpu.memory_space<vmem>>, vector<8x384xbf16>,
    %c0_195 = arith.constant 0 : index
    %c0_196 = arith.constant 0 : index
    %c0_197 = arith.constant 0 : index
    %c137 = arith.constant 137 : index
    %141 = vector.load %arg1[%c0_195, %c0_196, %c0_197, %c137] : memref<1x1x8x522xbf16, #tpu.memory_space<vmem>>, vector<1x1x8x384xbf16>
    %142 = vector.shape_cast %141 : vector<1x1x8x384xbf16> to vector<8x384xbf16>
    %c376 = arith.constant 376 : index
    %c0_198 = arith.constant 0 : index
    %143 = vector.load %arg7[%c376, %c0_198] : memref<392x384xbf16, #tpu.memory_space<vmem>>, vector<8x384xbf16>
    tpu.vector_store %arg7[%c376, %c0_198], %142 {strides = array<i32>} : memref<392x384xbf16, #tpu.memory_space<vmem>>, vector<8x384xbf16>,
    %c0_199 = arith.constant 0 : index
    %c0_200 = arith.constant 0 : index
    %c0_201 = arith.constant 0 : index
    %c138 = arith.constant 138 : index
    %144 = vector.load %arg1[%c0_199, %c0_200, %c0_201, %c138] : memref<1x1x8x522xbf16, #tpu.memory_space<vmem>>, vector<1x1x8x384xbf16>
    %145 = vector.shape_cast %144 : vector<1x1x8x384xbf16> to vector<8x384xbf16>
    %c384 = arith.constant 384 : index
    %c0_202 = arith.constant 0 : index
    %146 = vector.load %arg7[%c384, %c0_202] : memref<392x384xbf16, #tpu.memory_space<vmem>>, vector<8x384xbf16>
    tpu.vector_store %arg7[%c384, %c0_202], %145 {strides = array<i32>} : memref<392x384xbf16, #tpu.memory_space<vmem>>, vector<8x384xbf16>,
    %c0_203 = arith.constant 0 : index
    %c0_204 = arith.constant 0 : index
    %147 = vector.load %arg2[%c0_203, %c0_204] : memref<8x392xbf16, #tpu.memory_space<vmem>>, vector<8x392xbf16>
    %c0_205 = arith.constant 0 : index
    %c0_206 = arith.constant 0 : index
    %148 = vector.load %arg7[%c0_205, %c0_206] : memref<392x384xbf16, #tpu.memory_space<vmem>>, vector<392x384xbf16>
    %cst = arith.constant dense<0.000000e+00> : vector<8x384xf32>
    %149 = tpu.matmul %147, %148, %cst {dimension_numbers = #tpu.dot_dimension_numbers<[1], [0], [0], [1], [0, 0, 1, 1], [], []>} : vector<8x392xbf16>, vector<392x384xbf16>, vector<8x384xf32> -> vector<8x384xf32>
    %c0_207 = arith.constant 0 : index
    %c0_208 = arith.constant 0 : index
    %150 = vector.load %arg4[%c0_207, %c0_208] : memref<8x1xf32, #tpu.memory_space<vmem>>, vector<8x1xf32>
    %151 = vector.broadcast %150 : vector<8x1xf32> to vector<8x384xf32>
    %152 = arith.addf %149, %151 : vector<8x384xf32>
    %c0_209 = arith.constant 0 : index
    %c0_210 = arith.constant 0 : index
    %c0_211 = arith.constant 0 : index
    %153 = vector.load %arg5[%c0_209, %c0_210, %c0_211] : memref<1x8x384xf32, #tpu.memory_space<vmem>>, vector<1x8x384xf32>
    %154 = vector.shape_cast %153 : vector<1x8x384xf32> to vector<8x384xf32>
    %155 = vector.shape_cast %152 : vector<8x384xf32> to vector<1x8x384xf32>
    tpu.vector_store %arg5[%c0_209, %c0_210, %c0_211], %155 {strides = array<i32>} : memref<1x8x384xf32, #tpu.memory_space<vmem>>, vector<1x8x384xf32>,
    %c0_212 = arith.constant 0 : index
    %c0_213 = arith.constant 0 : index
    %156 = vector.load %arg3[%c0_212, %c0_213] : memref<1x384xf32, #tpu.memory_space<vmem>>, vector<1x384xf32>
    %157 = vector.broadcast %156 : vector<1x384xf32> to vector<8x384xf32>
    %158 = arith.mulf %152, %157 : vector<8x384xf32>
    %cst_214 = arith.constant dense<0.000000e+00> : vector<8xf32>
    %159 = vector.multi_reduction <add>, %158, %cst_214 [1] : vector<8x384xf32> to vector<8xf32>
    %160 = vector.shape_cast %159 : vector<8xf32> to vector<8x1xf32>
    %c0_215 = arith.constant 0 : index
    %c0_216 = arith.constant 0 : index
    %c0_217 = arith.constant 0 : index
    %c0_218 = arith.constant 0 : index
    %161 = vector.load %arg6[%c0_215, %c0_216, %c0_217, %c0_218] : memref<1x2x8x1xf32, #tpu.memory_space<vmem>>, vector<1x1x8x1xf32>
    %162 = vector.shape_cast %161 : vector<1x1x8x1xf32> to vector<8x1xf32>
    %163 = vector.shape_cast %160 : vector<8x1xf32> to vector<1x1x8x1xf32>
    tpu.vector_store %arg6[%c0_215, %c0_216, %c0_217, %c0_218], %163 {strides = array<i32>} : memref<1x2x8x1xf32, #tpu.memory_space<vmem>>, vector<1x1x8x1xf32>,
    %164 = arith.mulf %158, %158 : vector<8x384xf32>
    %cst_219 = arith.constant dense<0.000000e+00> : vector<8xf32>
    %165 = vector.multi_reduction <add>, %164, %cst_219 [1] : vector<8x384xf32> to vector<8xf32>
    %166 = vector.shape_cast %165 : vector<8xf32> to vector<8x1xf32>
    %c0_220 = arith.constant 0 : index
    %c1_221 = arith.constant 1 : index
    %c0_222 = arith.constant 0 : index
    %c0_223 = arith.constant 0 : index
    %167 = vector.load %arg6[%c0_220, %c1_221, %c0_222, %c0_223] : memref<1x2x8x1xf32, #tpu.memory_space<vmem>>, vector<1x1x8x1xf32>
    %168 = vector.shape_cast %167 : vector<1x1x8x1xf32> to vector<8x1xf32>
    %169 = vector.shape_cast %166 : vector<8x1xf32> to vector<1x1x8x1xf32>
    tpu.vector_store %arg6[%c0_220, %c1_221, %c0_222, %c0_223], %169 {strides = array<i32>} : memref<1x2x8x1xf32, #tpu.memory_space<vmem>>, vector<1x1x8x1xf32>,
    return
  }
  func.func @transform_0(%arg0: i32) -> (i32, i32, i32, i32) {
    %c0_i32 = arith.constant 0 : i32
    %c0_i32_0 = arith.constant 0 : i32
    %c0_i32_1 = arith.constant 0 : i32
    %c0_i32_2 = arith.constant 0 : i32
    return %arg0, %c0_i32, %c0_i32_0, %c0_i32_1 : i32, i32, i32, i32
  }
  func.func @transform_1(%arg0: i32) -> (i32, i32) {
    %c0_i32 = arith.constant 0 : i32
    %c0_i32_0 = arith.constant 0 : i32
    %c0_i32_1 = arith.constant 0 : i32
    return %c0_i32, %c0_i32_0 : i32, i32
  }
  func.func @transform_2(%arg0: i32) -> (i32, i32) {
    %c0_i32 = arith.constant 0 : i32
    %c0_i32_0 = arith.constant 0 : i32
    %c0_i32_1 = arith.constant 0 : i32
    return %c0_i32, %c0_i32_0 : i32, i32
  }
  func.func @transform_3(%arg0: i32) -> (i32, i32) {
    %c0_i32 = arith.constant 0 : i32
    %c0_i32_0 = arith.constant 0 : i32
    %c0_i32_1 = arith.constant 0 : i32
    return %c0_i32, %c0_i32_0 : i32, i32
  }
  func.func @transform_4(%arg0: i32) -> (i32, i32, i32) {
    %c0_i32 = arith.constant 0 : i32
    %c0_i32_0 = arith.constant 0 : i32
    %c0_i32_1 = arith.constant 0 : i32
    return %arg0, %c0_i32, %c0_i32_0 : i32, i32, i32
  }
  func.func @transform_5(%arg0: i32) -> (i32, i32, i32, i32) {
    %c0_i32 = arith.constant 0 : i32
    %c0_i32_0 = arith.constant 0 : i32
    %c0_i32_1 = arith.constant 0 : i32
    %c0_i32_2 = arith.constant 0 : i32
    return %arg0, %c0_i32, %c0_i32_0, %c0_i32_1 : i32, i32, i32, i32
  }
}

</mosaic_0001>

<llo_original>
// kernel: _lambda_.10
$region0: #{_lambda_.10}
  #allocation0 [shape = 'u32[]', space=smem, size = 0x4, offset = 0x4, fixed_abs, tag = 'smem constant byte address 0x4 - core index']
  #allocation1 [shape = 'u32[144,128]{1,0:T(1,128)}', space=vmem, size = 0x12000, scoped, tag = 'internal scratch']
  #allocation2 [shape = 'bf16[392,384]{1,0:T(8,128)(2,1)}', space=vmem, size = 0x49800, scoped, tag = 'scratch operand']
  %s0 = inlined_call_operand.vmem [shape: bf16[2,1,8,522], index: 0, kind: input, shape index: {}]
  %s1 = inlined_call_operand.vmem [shape: bf16[8,392], index: 1, kind: input, shape index: {}]
  %s2 = inlined_call_operand.vmem [shape: f32[1,384], index: 2, kind: input, shape index: {}]
  %s3 = inlined_call_operand.vmem [shape: f32[2,8,384], index: 3, kind: output, shape index: {0}]
  %s4 = inlined_call_operand.vmem [shape: f32[2,2,8,1], index: 4, kind: output, shape index: {1}]
  %5 = xla_tuple %s3, %s4
  %s6 = sld [smem:[#allocation0]]
  $region53: #{_lambda_.10} parent=0
    _
  %s8 = ssub.s32 1, %s6
  %s9 = scalar_select 0, %s8, %s6
  loop: start=0, step=1, limit=4
  $region2: #{_lambda_.10} parent=0 // loop_pre_header
    _
  $region3: #{_lambda_.10} parent=0 // loop_header
    %s11 = sphi 0, %s15
    %p12 = scmp.ge.s32.totalorder %s11, 4
    %s21 = sphi 0, %s23
    %s24 = sphi 0, %s21
    %s25 = sphi 0, %s24
    %s41 = sphi 0, %s25
    %s45 = sphi 0, %s45
    %s47 = sphi 0, %s45
    %s48 = sphi 0, %s47
    %s62 = sphi 0, %s48
    %s66 = sphi 0, %s66
    %s68 = sphi 0, %s66
    %s69 = sphi 0, %s68
    %s83 = sphi 0, %s69
    %s89 = sphi 0, %s91
    %s92 = sphi 0, %s89
    %s93 = sphi 0, %s92
    %s109 = sphi 0, %s93
    %s115 = sphi 0, %s117
    %s118 = sphi 0, %s115
    %s119 = sphi 0, %s118
    %s135 = sphi 0, %s119
  $region4: #{_lambda_.10} parent=0 // loop_header_branch
    %14 = sbr.rel (%p12) target = $region8
  $region5: #{_lambda_.10} parent=0 // loop_body
    %s16 = ssub.s32 %s11, 1
    %s17 = ssub.s32 %s11, 2
    %s18 = sadd.s32 %s11, 1
    %s19 = ssub.s32 %s11, %s18
    %p20 = scmp.eq.s32.totalorder %s19, 0
    %s22 = sadd.s32 %s21, 1
    %s23 = scalar_select %p20, %s21, %s22
    %p26 = pneg %p20
    %p27 = scmp.eq.s32.totalorder %s11, 1
    %p28 = por %p26, %p27
    %p29 = scmp.ne.s32.totalorder %s21, %s24
    %p30 = scmp.eq.s32.totalorder %s11, 0
    %p31 = por %p29, %p30
    %p32 = scmp.ne.s32.totalorder %s21, %s24
    %p33 = scmp.eq.s32.totalorder %s16, 1
    %p34 = por %p32, %p33
    %p35 = scmp.ne.s32.totalorder %s24, %s25
    %p36 = scmp.eq.s32.totalorder %s16, 0
    %p37 = por %p35, %p36
    %p38 = scmp.ne.s32.totalorder %s24, %s25
    %p39 = scmp.eq.s32.totalorder %s17, 1
    %p40 = por %p38, %p39
    %p42 = scmp.ne.s32.totalorder %s25, %s41
    %p43 = scmp.eq.s32.totalorder %s17, 0
    %p44 = por %p42, %p43
    %s46 = sadd.s32 %s45, 1
    %p49 = scmp.eq.s32.totalorder %s11, 1
    %p50 = scmp.ne.s32.totalorder %s45, %s47
    %p51 = scmp.eq.s32.totalorder %s11, 0
    %p52 = por %p50, %p51
    %p53 = scmp.ne.s32.totalorder %s45, %s47
    %p54 = scmp.eq.s32.totalorder %s16, 1
    %p55 = por %p53, %p54
    %p56 = scmp.ne.s32.totalorder %s47, %s48
    %p57 = scmp.eq.s32.totalorder %s16, 0
    %p58 = por %p56, %p57
    %p59 = scmp.ne.s32.totalorder %s47, %s48
    %p60 = scmp.eq.s32.totalorder %s17, 1
    %p61 = por %p59, %p60
    %p63 = scmp.ne.s32.totalorder %s48, %s62
    %p64 = scmp.eq.s32.totalorder %s17, 0
    %p65 = por %p63, %p64
    %s67 = sadd.s32 %s66, 1
    %p70 = scmp.eq.s32.totalorder %s11, 1
    %p71 = scmp.ne.s32.totalorder %s66, %s68
    %p72 = scmp.eq.s32.totalorder %s11, 0
    %p73 = por %p71, %p72
    %p74 = scmp.ne.s32.totalorder %s66, %s68
    %p75 = scmp.eq.s32.totalorder %s16, 1
    %p76 = por %p74, %p75
    %p77 = scmp.ne.s32.totalorder %s68, %s69
    %p78 = scmp.eq.s32.totalorder %s16, 0
    %p79 = por %p77, %p78
    %p80 = scmp.ne.s32.totalorder %s68, %s69
    %p81 = scmp.eq.s32.totalorder %s17, 1
    %p82 = por %p80, %p81
    %p84 = scmp.ne.s32.totalorder %s69, %s83
    %p85 = scmp.eq.s32.totalorder %s17, 0
    %p86 = por %p84, %p85
    %s87 = ssub.s32 %s11, %s18
    %p88 = scmp.eq.s32.totalorder %s87, 0
    %s90 = sadd.s32 %s89, 1
    %s91 = scalar_select %p88, %s89, %s90
    %p94 = pneg %p88
    %p95 = scmp.eq.s32.totalorder %s11, 1
    %p96 = por %p94, %p95
    %p97 = scmp.ne.s32.totalorder %s89, %s92
    %p98 = scmp.eq.s32.totalorder %s11, 0
    %p99 = por %p97, %p98
    %p100 = scmp.ne.s32.totalorder %s89, %s92
    %p101 = scmp.eq.s32.totalorder %s16, 1
    %p102 = por %p100, %p101
    %p103 = scmp.ne.s32.totalorder %s92, %s93
    %p104 = scmp.eq.s32.totalorder %s16, 0
    %p105 = por %p103, %p104
    %p106 = scmp.ne.s32.totalorder %s92, %s93
    %p107 = scmp.eq.s32.totalorder %s17, 1
    %p108 = por %p106, %p107
    %p110 = scmp.ne.s32.totalorder %s93, %s109
    %p111 = scmp.eq.s32.totalorder %s17, 0
    %p112 = por %p110, %p111
    %s113 = ssub.s32 %s11, %s18
    %p114 = scmp.eq.s32.totalorder %s113, 0
    %s116 = sadd.s32 %s115, 1
    %s117 = scalar_select %p114, %s115, %s116
    %p120 = pneg %p114
    %p121 = scmp.eq.s32.totalorder %s11, 1
    %p122 = por %p120, %p121
    %p123 = scmp.ne.s32.totalorder %s115, %s118
    %p124 = scmp.eq.s32.totalorder %s11, 0
    %p125 = por %p123, %p124
    %p126 = scmp.ne.s32.totalorder %s115, %s118
    %p127 = scmp.eq.s32.totalorder %s16, 1
    %p128 = por %p126, %p127
    %p129 = scmp.ne.s32.totalorder %s118, %s119
    %p130 = scmp.eq.s32.totalorder %s16, 0
    %p131 = por %p129, %p130
    %p132 = scmp.ne.s32.totalorder %s118, %s119
    %p133 = scmp.eq.s32.totalorder %s17, 1
    %p134 = por %p132, %p133
    %p136 = scmp.ne.s32.totalorder %s119, %s135
    %p137 = scmp.eq.s32.totalorder %s17, 0
    %p138 = por %p136, %p137
    %p139 = scmp.le.s32.totalorder 1, %s11
    %p140 = scmp.lt.s32.totalorder %s11, 3
    %p141 = pnand %p139, %p140
    %p142 = pneg %p141
    // Predicated region
    $region9: #{_lambda_.10} parent=5 // pred_check
      _
    $region10: #{_lambda_.10} parent=5 // pred_check_branch
      %144 = sbr.rel (%p141) target = $region12
    $region11: #{_lambda_.10} parent=5 // pred_region
      %s145 = ssub.s32 %s11, 1
      // Predicated region
      $region13: #{_lambda_.10} parent=11 // pred_check
        %p146 = pneg %p58
      $region14: #{_lambda_.10} parent=11 // pred_check_branch
        %148 = sbr.rel (%p146) target = $region16
      $region15: #{_lambda_.10} parent=11 // pred_region
        _
      $region16: #{_lambda_.10} parent=11 // pred_fallthru
        _
      // Predicated region
      $region17: #{_lambda_.10} parent=11 // pred_check
        %p149 = pneg %p79
      $region18: #{_lambda_.10} parent=11 // pred_check_branch
        %151 = sbr.rel (%p149) target = $region20
      $region19: #{_lambda_.10} parent=11 // pred_region
        _
      $region20: #{_lambda_.10} parent=11 // pred_fallthru
        _
    $region12: #{_lambda_.10} parent=5 // pred_fallthru
      _
    %p152 = scmp.lt.s32.totalorder %s11, 2
    // Predicated region
    $region21: #{_lambda_.10} parent=5 // pred_check
      %p153 = pneg %p152
    $region22: #{_lambda_.10} parent=5 // pred_check_branch
      %155 = sbr.rel (%p153) target = $region24
    $region23: #{_lambda_.10} parent=5 // pred_region
      // Predicated region
      $region25: #{_lambda_.10} parent=23 // pred_check
        %p156 = pneg %p31
      $region26: #{_lambda_.10} parent=23 // pred_check_branch
        %158 = sbr.rel (%p156) target = $region28
      $region27: #{_lambda_.10} parent=23 // pred_region
        %p159 = scmp.lt.s32.totalorder %s11, 1
        %s160 = scalar_select %p159, %s11, 1
        %s161 = smul.addr %s160, 5
        %s162 = smul.addr %s161, 4
        %s163 = scalar_lea.vmem %s0, %s162
      $region28: #{_lambda_.10} parent=23 // pred_fallthru
        _
    $region24: #{_lambda_.10} parent=5 // pred_fallthru
      _
    %p164 = scmp.le.s32.totalorder 1, %s11
    %p165 = scmp.lt.s32.totalorder %s11, 3
    %p166 = pnand %p164, %p165
    %p167 = pneg %p166
    // Predicated region
    $region29: #{_lambda_.10} parent=5 // pred_check
      _
    $region30: #{_lambda_.10} parent=5 // pred_check_branch
      %169 = sbr.rel (%p166) target = $region32
    $region31: #{_lambda_.10} parent=5 // pred_region
      %s170 = ssub.s32 %s11, 1
      %p171 = scmp.lt.s32.totalorder %s16, 1
      %s172 = scalar_select %p171, %s16, 1
      %s173 = smul.addr %s172, 5
      %s174 = smul.addr %s173, 4
      %s175 = scalar_lea.vmem %s0, %s174
      %p176 = pneg %p37
      %p177 = pneg %p34
      %p178 = pneg %p58
      %p179 = pneg %p55
      %p180 = pneg %p79
      %p181 = pneg %p76
      %p182 = pneg %p105
      %p183 = pneg %p102
      %p184 = scmp.lt.s32.totalorder %s16, 1
      %s185 = scalar_select %p184, %s16, 1
      %s186 = smul.addr %s185, 3
      %s187 = smul.addr %s186, 8
      %s188 = scalar_lea.vmem %s3, %s187
      %p189 = pneg %p131
      %p190 = pneg %p128
      %p191 = scmp.lt.s32.totalorder %s16, 1
      %s192 = scalar_select %p191, %s16, 1
      %s193 = smul.addr %s192, 2
      %s194 = smul.addr %s193, 8
      %s195 = scalar_lea.vmem %s4, %s194
      %p196 = scmp.lt.s32.totalorder %s16, 1
      %s197 = scalar_select %p196, %s16, 1
      %s198 = smul.addr %s197, 5
      %s199 = smul.addr %s198, 4
      %s200 = scalar_lea.vmem %s0, %s199
      %p201 = scmp.lt.s32.totalorder %s16, 1
      %s202 = scalar_select %p201, %s16, 1
      %s203 = smul.addr %s202, 3
      %s204 = smul.addr %s203, 8
      %s205 = scalar_lea.vmem %s3, %s204
      %p206 = scmp.lt.s32.totalorder %s16, 1
      %s207 = scalar_select %p206, %s16, 1
      %s208 = smul.addr %s207, 2
      %s209 = smul.addr %s208, 8
      %s210 = scalar_lea.vmem %s4, %s209
      %v212 = vld [vmem:[%s200] sm:$0xff]
      %v213 = vld [vmem:[%s200 + $0x8] sm:$0xf]
      %214 = vst [vmem:[#allocation2] sm:$0xff] %v212
      %215 = vst [vmem:[#allocation2 + $0x8] sm:$0xf] %v213
      %v216 = vld [vmem:[%s200] sm:$0xff]
      %v217 = vld [vmem:[%s200 + $0x8] sm:$0xff]
      %220 = vrot.lane.b32.xlu0 %v216, 127
      %v221 = vpop.permute.xlu0 %220
      %222 = vrot.lane.b32.xlu0 %v217, 127
      %v223 = vpop.permute.xlu0 %222
      %v224 = vrot.slane %v221, 4
      %v225 = vrot.slane %v223, 4
      %vm226 = vcmask 1043456
      %v227 = vsel %vm226, %v224, %v225
      %vm228 = vcmask 1039360
      %v229 = vsel %vm228, %v221, %v227
      %v230 = vsel %vm228, %v223, %v225
      %233 = vst [vmem:[#allocation2 + $0xc] sm:$0xff] %v229
      %234 = vst [vmem:[#allocation2 + $0x14] sm:$0xf] %v230
      %v235 = vld [vmem:[%s200] sm:$0xff]
      %v236 = vld [vmem:[%s200 + $0x8] sm:$0xff]
      %239 = vrot.lane.b32.xlu0 %v235, 126
      %v240 = vpop.permute.xlu0 %239
      %241 = vrot.lane.b32.xlu0 %v236, 126
      %v242 = vpop.permute.xlu0 %241
      %v243 = vrot.slane %v240, 4
      %v244 = vrot.slane %v242, 4
      %v245 = vsel %vm226, %v243, %v244
      %vm246 = vcmask 1031168
      %v247 = vsel %vm246, %v240, %v245
      %v248 = vsel %vm246, %v242, %v244
      %251 = vst [vmem:[#allocation2 + $0x18] sm:$0xff] %v247
      %252 = vst [vmem:[#allocation2 + $0x20] sm:$0xf] %v248
      %v253 = vld [vmem:[%s200] sm:$0xff]
      %v254 = vld [vmem:[%s200 + $0x8] sm:$0xff]
      %257 = vrot.lane.b32.xlu0 %v253, 125
      %v258 = vpop.permute.xlu0 %257
      %259 = vrot.lane.b32.xlu0 %v254, 125
      %v260 = vpop.permute.xlu0 %259
      %v261 = vrot.slane %v258, 4
      %v262 = vrot.slane %v260, 4
      %v263 = vsel %vm226, %v261, %v262
      %vm264 = vcmask 1022976
      %v265 = vsel %vm264, %v258, %v263
      %v266 = vsel %vm264, %v260, %v262
      %269 = vst [vmem:[#allocation2 + $0x24] sm:$0xff] %v265
      %270 = vst [vmem:[#allocation2 + $0x2c] sm:$0xf] %v266
      %v271 = vld [vmem:[%s200] sm:$0xff]
      %v272 = vld [vmem:[%s200 + $0x8] sm:$0xff]
      %275 = vrot.lane.b32.xlu0 %v271, 124
      %v276 = vpop.permute.xlu0 %275
      %277 = vrot.lane.b32.xlu0 %v272, 124
      %v278 = vpop.permute.xlu0 %277
      %v279 = vrot.slane %v276, 4
      %v280 = vrot.slane %v278, 4
      %v281 = vsel %vm226, %v279, %v280
      %vm282 = vcmask 1014784
      %v283 = vsel %vm282, %v276, %v281
      %v284 = vsel %vm282, %v278, %v280
      %287 = vst [vmem:[#allocation2 + $0x30] sm:$0xff] %v283
      %288 = vst [vmem:[#allocation2 + $0x38] sm:$0xf] %v284
      %v289 = vld [vmem:[%s200] sm:$0xff]
      %v290 = vld [vmem:[%s200 + $0x8] sm:$0xff]
      %293 = vrot.lane.b32.xlu0 %v289, 123
      %v294 = vpop.permute.xlu0 %293
      %295 = vrot.lane.b32.xlu0 %v290, 123
      %v296 = vpop.permute.xlu0 %295
      %v297 = vrot.slane %v294, 4
      %v298 = vrot.slane %v296, 4
      %v299 = vsel %vm226, %v297, %v298
      %vm300 = vcmask 1006592
      %v301 = vsel %vm300, %v294, %v299
      %v302 = vsel %vm300, %v296, %v298
      %305 = vst [vmem:[#allocation2 + $0x3c] sm:$0xff] %v301
      %306 = vst [vmem:[#allocation2 + $0x44] sm:$0xf] %v302
      %v307 = vld [vmem:[%s200] sm:$0xff]
      %v308 = vld [vmem:[%s200 + $0x8] sm:$0xff]
      %311 = vrot.lane.b32.xlu0 %v307, 122
      %v312 = vpop.permute.xlu0 %311
      %313 = vrot.lane.b32.xlu0 %v308, 122
      %v314 = vpop.permute.xlu0 %313
      %v315 = vrot.slane %v312, 4
      %v316 = vrot.slane %v314, 4
      %v317 = vsel %vm226, %v315, %v316
      %vm318 = vcmask 998400
      %v319 = vsel %vm318, %v312, %v317
      %v320 = vsel %vm318, %v314, %v316
      %323 = vst [vmem:[#allocation2 + $0x48] sm:$0xff] %v319
      %324 = vst [vmem:[#allocation2 + $0x50] sm:$0xf] %v320
      %v325 = vld [vmem:[%s200] sm:$0xff]
      %v326 = vld [vmem:[%s200 + $0x8] sm:$0xff]
      %329 = vrot.lane.b32.xlu0 %v325, 106
      %v330 = vpop.permute.xlu0 %329
      %331 = vrot.lane.b32.xlu0 %v326, 106
      %v332 = vpop.permute.xlu0 %331
      %v333 = vrot.slane %v330, 4
      %v334 = vrot.slane %v332, 4
      %v335 = vsel %vm226, %v333, %v334
      %vm336 = vcmask 867328
      %v337 = vsel %vm336, %v330, %v335
      %v338 = vsel %vm336, %v332, %v334
      %341 = vst [vmem:[#allocation2 + $0x54] sm:$0xff] %v337
      %342 = vst [vmem:[#allocation2 + $0x5c] sm:$0xf] %v338
      %v343 = vld [vmem:[%s200] sm:$0xff]
      %v344 = vld [vmem:[%s200 + $0x8] sm:$0xff]
      %347 = vrot.lane.b32.xlu0 %v343, 105
      %v348 = vpop.permute.xlu0 %347
      %349 = vrot.lane.b32.xlu0 %v344, 105
      %v350 = vpop.permute.xlu0 %349
      %v351 = vrot.slane %v348, 4
      %v352 = vrot.slane %v350, 4
      %v353 = vsel %vm226, %v351, %v352
      %vm354 = vcmask 859136
      %v355 = vsel %vm354, %v348, %v353
      %v356 = vsel %vm354, %v350, %v352
      %359 = vst [vmem:[#allocation2 + $0x60] sm:$0xff] %v355
      %360 = vst [vmem:[#allocation2 + $0x68] sm:$0xf] %v356
      %v361 = vld [vmem:[%s200] sm:$0xff]
      %v362 = vld [vmem:[%s200 + $0x8] sm:$0xff]
      %365 = vrot.lane.b32.xlu0 %v361, 104
      %v366 = vpop.permute.xlu0 %365
      %367 = vrot.lane.b32.xlu0 %v362, 104
      %v368 = vpop.permute.xlu0 %367
      %v369 = vrot.slane %v366, 4
      %v370 = vrot.slane %v368, 4
      %v371 = vsel %vm226, %v369, %v370
      %vm372 = vcmask 850944
      %v373 = vsel %vm372, %v366, %v371
      %v374 = vsel %vm372, %v368, %v370
      %377 = vst [vmem:[#allocation2 + $0x6c] sm:$0xff] %v373
      %378 = vst [vmem:[#allocation2 + $0x74] sm:$0xf] %v374
      %v379 = vld [vmem:[%s200] sm:$0xff]
      %v380 = vld [vmem:[%s200 + $0x8] sm:$0xff]
      %383 = vrot.lane.b32.xlu0 %v379, 103
      %v384 = vpop.permute.xlu0 %383
      %385 = vrot.lane.b32.xlu0 %v380, 103
      %v386 = vpop.permute.xlu0 %385
      %v387 = vrot.slane %v384, 4
      %v388 = vrot.slane %v386, 4
      %v389 = vsel %vm226, %v387, %v388
      %vm390 = vcmask 842752
      %v391 = vsel %vm390, %v384, %v389
      %v392 = vsel %vm390, %v386, %v388
      %395 = vst [vmem:[#allocation2 + $0x78] sm:$0xff] %v391
      %396 = vst [vmem:[#allocation2 + $0x80] sm:$0xf] %v392
      %v397 = vld [vmem:[%s200] sm:$0xff]
      %v398 = vld [vmem:[%s200 + $0x8] sm:$0xff]
      %401 = vrot.lane.b32.xlu0 %v397, 102
      %v402 = vpop.permute.xlu0 %401
      %403 = vrot.lane.b32.xlu0 %v398, 102
      %v404 = vpop.permute.xlu0 %403
      %v405 = vrot.slane %v402, 4
      %v406 = vrot.slane %v404, 4
      %v407 = vsel %vm226, %v405, %v406
      %vm408 = vcmask 834560
      %v409 = vsel %vm408, %v402, %v407
      %v410 = vsel %vm408, %v404, %v406
      %413 = vst [vmem:[#allocation2 + $0x84] sm:$0xff] %v409
      %414 = vst [vmem:[#allocation2 + $0x8c] sm:$0xf] %v410
      %v415 = vld [vmem:[%s200] sm:$0xff]
      %v416 = vld [vmem:[%s200 + $0x8] sm:$0xff]
      %419 = vrot.lane.b32.xlu0 %v415, 101
      %v420 = vpop.permute.xlu0 %419
      %421 = vrot.lane.b32.xlu0 %v416, 101
      %v422 = vpop.permute.xlu0 %421
      %v423 = vrot.slane %v420, 4
      %v424 = vrot.slane %v422, 4
      %v425 = vsel %vm226, %v423, %v424
      %vm426 = vcmask 826368
      %v427 = vsel %vm426, %v420, %v425
      %v428 = vsel %vm426, %v422, %v424
      %431 = vst [vmem:[#allocation2 + $0x90] sm:$0xff] %v427
      %432 = vst [vmem:[#allocation2 + $0x98] sm:$0xf] %v428
      %v433 = vld [vmem:[%s200] sm:$0xff]
      %v434 = vld [vmem:[%s200 + $0x8] sm:$0xff]
      %437 = vrot.lane.b32.xlu0 %v433, 100
      %v438 = vpop.permute.xlu0 %437
      %439 = vrot.lane.b32.xlu0 %v434, 100
      %v440 = vpop.permute.xlu0 %439
      %v441 = vrot.slane %v438, 4
      %v442 = vrot.slane %v440, 4
      %v443 = vsel %vm226, %v441, %v442
      %vm444 = vcmask 818176
      %v445 = vsel %vm444, %v438, %v443
      %v446 = vsel %vm444, %v440, %v442
      %449 = vst [vmem:[#allocation2 + $0x9c] sm:$0xff] %v445
      %450 = vst [vmem:[#allocation2 + $0xa4] sm:$0xf] %v446
      %v451 = vld [vmem:[%s200] sm:$0xff]
      %v452 = vld [vmem:[%s200 + $0x8] sm:$0xff]
      %455 = vrot.lane.b32.xlu0 %v451, 84
      %v456 = vpop.permute.xlu0 %455
      %457 = vrot.lane.b32.xlu0 %v452, 84
      %v458 = vpop.permute.xlu0 %457
      %v459 = vrot.slane %v456, 4
      %v460 = vrot.slane %v458, 4
      %v461 = vsel %vm226, %v459, %v460
      %vm462 = vcmask 687104
      %v463 = vsel %vm462, %v456, %v461
      %v464 = vsel %vm462, %v458, %v460
      %467 = vst [vmem:[#allocation2 + $0xa8] sm:$0xff] %v463
      %468 = vst [vmem:[#allocation2 + $0xb0] sm:$0xf] %v464
      %v469 = vld [vmem:[%s200] sm:$0xff]
      %v470 = vld [vmem:[%s200 + $0x8] sm:$0xff]
      %473 = vrot.lane.b32.xlu0 %v469, 83
      %v474 = vpop.permute.xlu0 %473
      %475 = vrot.lane.b32.xlu0 %v470, 83
      %v476 = vpop.permute.xlu0 %475
      %v477 = vrot.slane %v474, 4
      %v478 = vrot.slane %v476, 4
      %v479 = vsel %vm226, %v477, %v478
      %vm480 = vcmask 678912
      %v481 = vsel %vm480, %v474, %v479
      %v482 = vsel %vm480, %v476, %v478
      %485 = vst [vmem:[#allocation2 + $0xb4] sm:$0xff] %v481
      %486 = vst [vmem:[#allocation2 + $0xbc] sm:$0xf] %v482
      %v487 = vld [vmem:[%s200] sm:$0xff]
      %v488 = vld [vmem:[%s200 + $0x8] sm:$0xff]
      %491 = vrot.lane.b32.xlu0 %v487, 82
      %v492 = vpop.permute.xlu0 %491
      %493 = vrot.lane.b32.xlu0 %v488, 82
      %v494 = vpop.permute.xlu0 %493
      %v495 = vrot.slane %v492, 4
      %v496 = vrot.slane %v494, 4
      %v497 = vsel %vm226, %v495, %v496
      %vm498 = vcmask 670720
      %v499 = vsel %vm498, %v492, %v497
      %v500 = vsel %vm498, %v494, %v496
      %503 = vst [vmem:[#allocation2 + $0xc0] sm:$0xff] %v499
      %504 = vst [vmem:[#allocation2 + $0xc8] sm:$0xf] %v500
      %v505 = vld [vmem:[%s200] sm:$0xff]
      %v506 = vld [vmem:[%s200 + $0x8] sm:$0xff]
      %509 = vrot.lane.b32.xlu0 %v505, 81
      %v510 = vpop.permute.xlu0 %509
      %511 = vrot.lane.b32.xlu0 %v506, 81
      %v512 = vpop.permute.xlu0 %511
      %v513 = vrot.slane %v510, 4
      %v514 = vrot.slane %v512, 4
      %v515 = vsel %vm226, %v513, %v514
      %vm516 = vcmask 662528
      %v517 = vsel %vm516, %v510, %v515
      %v518 = vsel %vm516, %v512, %v514
      %521 = vst [vmem:[#allocation2 + $0xcc] sm:$0xff] %v517
      %522 = vst [vmem:[#allocation2 + $0xd4] sm:$0xf] %v518
      %v523 = vld [vmem:[%s200] sm:$0xff]
      %v524 = vld [vmem:[%s200 + $0x8] sm:$0xff]
      %527 = vrot.lane.b32.xlu0 %v523, 80
      %v528 = vpop.permute.xlu0 %527
      %529 = vrot.lane.b32.xlu0 %v524, 80
      %v530 = vpop.permute.xlu0 %529
      %v531 = vrot.slane %v528, 4
      %v532 = vrot.slane %v530, 4
      %v533 = vsel %vm226, %v531, %v532
      %vm534 = vcmask 654336
      %v535 = vsel %vm534, %v528, %v533
      %v536 = vsel %vm534, %v530, %v532
      %539 = vst [vmem:[#allocation2 + $0xd8] sm:$0xff] %v535
      %540 = vst [vmem:[#allocation2 + $0xe0] sm:$0xf] %v536
      %v541 = vld [vmem:[%s200] sm:$0xff]
      %v542 = vld [vmem:[%s200 + $0x8] sm:$0xff]
      %545 = vrot.lane.b32.xlu0 %v541, 79
      %v546 = vpop.permute.xlu0 %545
      %547 = vrot.lane.b32.xlu0 %v542, 79
      %v548 = vpop.permute.xlu0 %547
      %v549 = vrot.slane %v546, 4
      %v550 = vrot.slane %v548, 4
      %v551 = vsel %vm226, %v549, %v550
      %vm552 = vcmask 646144
      %v553 = vsel %vm552, %v546, %v551
      %v554 = vsel %vm552, %v548, %v550
      %557 = vst [vmem:[#allocation2 + $0xe4] sm:$0xff] %v553
      %558 = vst [vmem:[#allocation2 + $0xec] sm:$0xf] %v554
      %v559 = vld [vmem:[%s200] sm:$0xff]
      %v560 = vld [vmem:[%s200 + $0x8] sm:$0xff]
      %563 = vrot.lane.b32.xlu0 %v559, 78
      %v564 = vpop.permute.xlu0 %563
      %565 = vrot.lane.b32.xlu0 %v560, 78
      %v566 = vpop.permute.xlu0 %565
      %v567 = vrot.slane %v564, 4
      %v568 = vrot.slane %v566, 4
      %v569 = vsel %vm226, %v567, %v568
      %vm570 = vcmask 637952
      %v571 = vsel %vm570, %v564, %v569
      %v572 = vsel %vm570, %v566, %v568
      %575 = vst [vmem:[#allocation2 + $0xf0] sm:$0xff] %v571
      %576 = vst [vmem:[#allocation2 + $0xf8] sm:$0xf] %v572
      %v577 = vld [vmem:[%s200] sm:$0xff]
      %v578 = vld [vmem:[%s200 + $0x8] sm:$0xff]
      %581 = vrot.lane.b32.xlu0 %v577, 62
      %v582 = vpop.permute.xlu0 %581
      %583 = vrot.lane.b32.xlu0 %v578, 62
      %v584 = vpop.permute.xlu0 %583
      %v585 = vrot.slane %v582, 4
      %v586 = vrot.slane %v584, 4
      %v587 = vsel %vm226, %v585, %v586
      %vm588 = vcmask 506880
      %v589 = vsel %vm588, %v582, %v587
      %v590 = vsel %vm588, %v584, %v586
      %593 = vst [vmem:[#allocation2 + $0xfc] sm:$0xff] %v589
      %594 = vst [vmem:[#allocation2 + $0x104] sm:$0xf] %v590
      %v595 = vld [vmem:[%s200] sm:$0xff]
      %v596 = vld [vmem:[%s200 + $0x8] sm:$0xff]
      %599 = vrot.lane.b32.xlu0 %v595, 61
      %v600 = vpop.permute.xlu0 %599
      %601 = vrot.lane.b32.xlu0 %v596, 61
      %v602 = vpop.permute.xlu0 %601
      %v603 = vrot.slane %v600, 4
      %v604 = vrot.slane %v602, 4
      %v605 = vsel %vm226, %v603, %v604
      %vm606 = vcmask 498688
      %v607 = vsel %vm606, %v600, %v605
      %v608 = vsel %vm606, %v602, %v604
      %611 = vst [vmem:[#allocation2 + $0x108] sm:$0xff] %v607
      %612 = vst [vmem:[#allocation2 + $0x110] sm:$0xf] %v608
      %v613 = vld [vmem:[%s200] sm:$0xff]
      %v614 = vld [vmem:[%s200 + $0x8] sm:$0xff]
      %617 = vrot.lane.b32.xlu0 %v613, 60
      %v618 = vpop.permute.xlu0 %617
      %619 = vrot.lane.b32.xlu0 %v614, 60
      %v620 = vpop.permute.xlu0 %619
      %v621 = vrot.slane %v618, 4
      %v622 = vrot.slane %v620, 4
      %v623 = vsel %vm226, %v621, %v622
      %vm624 = vcmask 490496
      %v625 = vsel %vm624, %v618, %v623
      %v626 = vsel %vm624, %v620, %v622
      %629 = vst [vmem:[#allocation2 + $0x114] sm:$0xff] %v625
      %630 = vst [vmem:[#allocation2 + $0x11c] sm:$0xf] %v626
      %v631 = vld [vmem:[%s200] sm:$0xff]
      %v632 = vld [vmem:[%s200 + $0x8] sm:$0xff]
      %635 = vrot.lane.b32.xlu0 %v631, 59
      %v636 = vpop.permute.xlu0 %635
      %637 = vrot.lane.b32.xlu0 %v632, 59
      %v638 = vpop.permute.xlu0 %637
      %v639 = vrot.slane %v636, 4
      %v640 = vrot.slane %v638, 4
      %v641 = vsel %vm226, %v639, %v640
      %vm642 = vcmask 482304
      %v643 = vsel %vm642, %v636, %v641
      %v644 = vsel %vm642, %v638, %v640
      %647 = vst [vmem:[#allocation2 + $0x120] sm:$0xff] %v643
      %648 = vst [vmem:[#allocation2 + $0x128] sm:$0xf] %v644
      %v649 = vld [vmem:[%s200] sm:$0xff]
      %v650 = vld [vmem:[%s200 + $0x8] sm:$0xff]
      %653 = vrot.lane.b32.xlu0 %v649, 58
      %v654 = vpop.permute.xlu0 %653
      %655 = vrot.lane.b32.xlu0 %v650, 58
      %v656 = vpop.permute.xlu0 %655
      %v657 = vrot.slane %v654, 4
      %v658 = vrot.slane %v656, 4
      %v659 = vsel %vm226, %v657, %v658
      %vm660 = vcmask 474112
      %v661 = vsel %vm660, %v654, %v659
      %v662 = vsel %vm660, %v656, %v658
      %665 = vst [vmem:[#allocation2 + $0x12c] sm:$0xff] %v661
      %666 = vst [vmem:[#allocation2 + $0x134] sm:$0xf] %v662
      %v667 = vld [vmem:[%s200] sm:$0xff]
      %v668 = vld [vmem:[%s200 + $0x8] sm:$0xff]
      %671 = vrot.lane.b32.xlu0 %v667, 57
      %v672 = vpop.permute.xlu0 %671
      %673 = vrot.lane.b32.xlu0 %v668, 57
      %v674 = vpop.permute.xlu0 %673
      %v675 = vrot.slane %v672, 4
      %v676 = vrot.slane %v674, 4
      %v677 = vsel %vm226, %v675, %v676
      %vm678 = vcmask 465920
      %v679 = vsel %vm678, %v672, %v677
      %v680 = vsel %vm678, %v674, %v676
      %683 = vst [vmem:[#allocation2 + $0x138] sm:$0xff] %v679
      %684 = vst [vmem:[#allocation2 + $0x140] sm:$0xf] %v680
      %v685 = vld [vmem:[%s200] sm:$0xff]
      %v686 = vld [vmem:[%s200 + $0x8] sm:$0xff]
      %689 = vrot.lane.b32.xlu0 %v685, 56
      %v690 = vpop.permute.xlu0 %689
      %691 = vrot.lane.b32.xlu0 %v686, 56
      %v692 = vpop.permute.xlu0 %691
      %v693 = vrot.slane %v690, 4
      %v694 = vrot.slane %v692, 4
      %v695 = vsel %vm226, %v693, %v694
      %vm696 = vcmask 457728
      %v697 = vsel %vm696, %v690, %v695
      %v698 = vsel %vm696, %v692, %v694
      %701 = vst [vmem:[#allocation2 + $0x144] sm:$0xff] %v697
      %702 = vst [vmem:[#allocation2 + $0x14c] sm:$0xf] %v698
      %v703 = vld [vmem:[%s200] sm:$0xff]
      %v704 = vld [vmem:[%s200 + $0x8] sm:$0xff]
      %707 = vrot.lane.b32.xlu0 %v703, 40
      %v708 = vpop.permute.xlu0 %707
      %709 = vrot.lane.b32.xlu0 %v704, 40
      %v710 = vpop.permute.xlu0 %709
      %v711 = vrot.slane %v708, 4
      %v712 = vrot.slane %v710, 4
      %v713 = vsel %vm226, %v711, %v712
      %vm714 = vcmask 326656
      %v715 = vsel %vm714, %v708, %v713
      %v716 = vsel %vm714, %v710, %v712
      %719 = vst [vmem:[#allocation2 + $0x150] sm:$0xff] %v715
      %720 = vst [vmem:[#allocation2 + $0x158] sm:$0xf] %v716
      %v721 = vld [vmem:[%s200] sm:$0xff]
      %v722 = vld [vmem:[%s200 + $0x8] sm:$0xff]
      %725 = vrot.lane.b32.xlu0 %v721, 39
      %v726 = vpop.permute.xlu0 %725
      %727 = vrot.lane.b32.xlu0 %v722, 39
      %v728 = vpop.permute.xlu0 %727
      %v729 = vrot.slane %v726, 4
      %v730 = vrot.slane %v728, 4
      %v731 = vsel %vm226, %v729, %v730
      %vm732 = vcmask 318464
      %v733 = vsel %vm732, %v726, %v731
      %v734 = vsel %vm732, %v728, %v730
      %737 = vst [vmem:[#allocation2 + $0x15c] sm:$0xff] %v733
      %738 = vst [vmem:[#allocation2 + $0x164] sm:$0xf] %v734
      %v739 = vld [vmem:[%s200] sm:$0xff]
      %v740 = vld [vmem:[%s200 + $0x8] sm:$0xff]
      %743 = vrot.lane.b32.xlu0 %v739, 38
      %v744 = vpop.permute.xlu0 %743
      %745 = vrot.lane.b32.xlu0 %v740, 38
      %v746 = vpop.permute.xlu0 %745
      %v747 = vrot.slane %v744, 4
      %v748 = vrot.slane %v746, 4
      %v749 = vsel %vm226, %v747, %v748
      %vm750 = vcmask 310272
      %v751 = vsel %vm750, %v744, %v749
      %v752 = vsel %vm750, %v746, %v748
      %755 = vst [vmem:[#allocation2 + $0x168] sm:$0xff] %v751
      %756 = vst [vmem:[#allocation2 + $0x170] sm:$0xf] %v752
      %v757 = vld [vmem:[%s200] sm:$0xff]
      %v758 = vld [vmem:[%s200 + $0x8] sm:$0xff]
      %761 = vrot.lane.b32.xlu0 %v757, 37
      %v762 = vpop.permute.xlu0 %761
      %763 = vrot.lane.b32.xlu0 %v758, 37
      %v764 = vpop.permute.xlu0 %763
      %v765 = vrot.slane %v762, 4
      %v766 = vrot.slane %v764, 4
      %v767 = vsel %vm226, %v765, %v766
      %vm768 = vcmask 302080
      %v769 = vsel %vm768, %v762, %v767
      %v770 = vsel %vm768, %v764, %v766
      %773 = vst [vmem:[#allocation2 + $0x174] sm:$0xff] %v769
      %774 = vst [vmem:[#allocation2 + $0x17c] sm:$0xf] %v770
      %v775 = vld [vmem:[%s200] sm:$0xff]
      %v776 = vld [vmem:[%s200 + $0x8] sm:$0xff]
      %779 = vrot.lane.b32.xlu0 %v775, 36
      %v780 = vpop.permute.xlu0 %779
      %781 = vrot.lane.b32.xlu0 %v776, 36
      %v782 = vpop.permute.xlu0 %781
      %v783 = vrot.slane %v780, 4
      %v784 = vrot.slane %v782, 4
      %v785 = vsel %vm226, %v783, %v784
      %vm786 = vcmask 293888
      %v787 = vsel %vm786, %v780, %v785
      %v788 = vsel %vm786, %v782, %v784
      %791 = vst [vmem:[#allocation2 + $0x180] sm:$0xff] %v787
      %792 = vst [vmem:[#allocation2 + $0x188] sm:$0xf] %v788
      %v793 = vld [vmem:[%s200] sm:$0xff]
      %v794 = vld [vmem:[%s200 + $0x8] sm:$0xff]
      %797 = vrot.lane.b32.xlu0 %v793, 35
      %v798 = vpop.permute.xlu0 %797
      %799 = vrot.lane.b32.xlu0 %v794, 35
      %v800 = vpop.permute.xlu0 %799
      %v801 = vrot.slane %v798, 4
      %v802 = vrot.slane %v800, 4
      %v803 = vsel %vm226, %v801, %v802
      %vm804 = vcmask 285696
      %v805 = vsel %vm804, %v798, %v803
      %v806 = vsel %vm804, %v800, %v802
      %809 = vst [vmem:[#allocation2 + $0x18c] sm:$0xff] %v805
      %810 = vst [vmem:[#allocation2 + $0x194] sm:$0xf] %v806
      %v811 = vld [vmem:[%s200] sm:$0xff]
      %v812 = vld [vmem:[%s200 + $0x8] sm:$0xff]
      %815 = vrot.lane.b32.xlu0 %v811, 34
      %v816 = vpop.permute.xlu0 %815
      %817 = vrot.lane.b32.xlu0 %v812, 34
      %v818 = vpop.permute.xlu0 %817
      %v819 = vrot.slane %v816, 4
      %v820 = vrot.slane %v818, 4
      %v821 = vsel %vm226, %v819, %v820
      %vm822 = vcmask 277504
      %v823 = vsel %vm822, %v816, %v821
      %v824 = vsel %vm822, %v818, %v820
      %827 = vst [vmem:[#allocation2 + $0x198] sm:$0xff] %v823
      %828 = vst [vmem:[#allocation2 + $0x1a0] sm:$0xf] %v824
      %v829 = vld [vmem:[%s200] sm:$0xff]
      %v830 = vld [vmem:[%s200 + $0x8] sm:$0xff]
      %833 = vrot.lane.b32.xlu0 %v829, 18
      %v834 = vpop.permute.xlu0 %833
      %835 = vrot.lane.b32.xlu0 %v830, 18
      %v836 = vpop.permute.xlu0 %835
      %v837 = vrot.slane %v834, 4
      %v838 = vrot.slane %v836, 4
      %v839 = vsel %vm226, %v837, %v838
      %vm840 = vcmask 146432
      %v841 = vsel %vm840, %v834, %v839
      %v842 = vsel %vm840, %v836, %v838
      %845 = vst [vmem:[#allocation2 + $0x1a4] sm:$0xff] %v841
      %846 = vst [vmem:[#allocation2 + $0x1ac] sm:$0xf] %v842
      %v847 = vld [vmem:[%s200] sm:$0xff]
      %v848 = vld [vmem:[%s200 + $0x8] sm:$0xff]
      %851 = vrot.lane.b32.xlu0 %v847, 17
      %v852 = vpop.permute.xlu0 %851
      %853 = vrot.lane.b32.xlu0 %v848, 17
      %v854 = vpop.permute.xlu0 %853
      %v855 = vrot.slane %v852, 4
      %v856 = vrot.slane %v854, 4
      %v857 = vsel %vm226, %v855, %v856
      %vm858 = vcmask 138240
      %v859 = vsel %vm858, %v852, %v857
      %v860 = vsel %vm858, %v854, %v856
      %863 = vst [vmem:[#allocation2 + $0x1b0] sm:$0xff] %v859
      %864 = vst [vmem:[#allocation2 + $0x1b8] sm:$0xf] %v860
      %v865 = vld [vmem:[%s200] sm:$0xff]
      %v866 = vld [vmem:[%s200 + $0x8] sm:$0xff]
      %869 = vrot.lane.b32.xlu0 %v865, 16
      %v870 = vpop.permute.xlu0 %869
      %871 = vrot.lane.b32.xlu0 %v866, 16
      %v872 = vpop.permute.xlu0 %871
      %v873 = vrot.slane %v870, 4
      %v874 = vrot.slane %v872, 4
      %v875 = vsel %vm226, %v873, %v874
      %vm876 = vcmask 130048
      %v877 = vsel %vm876, %v870, %v875
      %v878 = vsel %vm876, %v872, %v874
      %881 = vst [vmem:[#allocation2 + $0x1bc] sm:$0xff] %v877
      %882 = vst [vmem:[#allocation2 + $0x1c4] sm:$0xf] %v878
      %v883 = vld [vmem:[%s200] sm:$0xff]
      %v884 = vld [vmem:[%s200 + $0x8] sm:$0xff]
      %887 = vrot.lane.b32.xlu0 %v883, 15
      %v888 = vpop.permute.xlu0 %887
      %889 = vrot.lane.b32.xlu0 %v884, 15
      %v890 = vpop.permute.xlu0 %889
      %v891 = vrot.slane %v888, 4
      %v892 = vrot.slane %v890, 4
      %v893 = vsel %vm226, %v891, %v892
      %vm894 = vcmask 121856
      %v895 = vsel %vm894, %v888, %v893
      %v896 = vsel %vm894, %v890, %v892
      %899 = vst [vmem:[#allocation2 + $0x1c8] sm:$0xff] %v895
      %900 = vst [vmem:[#allocation2 + $0x1d0] sm:$0xf] %v896
      %v901 = vld [vmem:[%s200] sm:$0xff]
      %v902 = vld [vmem:[%s200 + $0x8] sm:$0xff]
      %905 = vrot.lane.b32.xlu0 %v901, 14
      %v906 = vpop.permute.xlu0 %905
      %907 = vrot.lane.b32.xlu0 %v902, 14
      %v908 = vpop.permute.xlu0 %907
      %v909 = vrot.slane %v906, 4
      %v910 = vrot.slane %v908, 4
      %v911 = vsel %vm226, %v909, %v910
      %vm912 = vcmask 113664
      %v913 = vsel %vm912, %v906, %v911
      %v914 = vsel %vm912, %v908, %v910
      %917 = vst [vmem:[#allocation2 + $0x1d4] sm:$0xff] %v913
      %918 = vst [vmem:[#allocation2 + $0x1dc] sm:$0xf] %v914
      %v919 = vld [vmem:[%s200] sm:$0xff]
      %v920 = vld [vmem:[%s200 + $0x8] sm:$0xff]
      %923 = vrot.lane.b32.xlu0 %v919, 13
      %v924 = vpop.permute.xlu0 %923
      %925 = vrot.lane.b32.xlu0 %v920, 13
      %v926 = vpop.permute.xlu0 %925
      %v927 = vrot.slane %v924, 4
      %v928 = vrot.slane %v926, 4
      %v929 = vsel %vm226, %v927, %v928
      %vm930 = vcmask 105472
      %v931 = vsel %vm930, %v924, %v929
      %v932 = vsel %vm930, %v926, %v928
      %935 = vst [vmem:[#allocation2 + $0x1e0] sm:$0xff] %v931
      %936 = vst [vmem:[#allocation2 + $0x1e8] sm:$0xf] %v932
      %v937 = vld [vmem:[%s200] sm:$0xff]
      %v938 = vld [vmem:[%s200 + $0x8] sm:$0xff]
      %941 = vrot.lane.b32.xlu0 %v937, 12
      %v942 = vpop.permute.xlu0 %941
      %943 = vrot.lane.b32.xlu0 %v938, 12
      %v944 = vpop.permute.xlu0 %943
      %v945 = vrot.slane %v942, 4
      %v946 = vrot.slane %v944, 4
      %v947 = vsel %vm226, %v945, %v946
      %vm948 = vcmask 97280
      %v949 = vsel %vm948, %v942, %v947
      %v950 = vsel %vm948, %v944, %v946
      %953 = vst [vmem:[#allocation2 + $0x1ec] sm:$0xff] %v949
      %954 = vst [vmem:[#allocation2 + $0x1f4] sm:$0xf] %v950
      %v955 = vld [vmem:[%s200 + $0x4] sm:$0xff]
      %v956 = vld [vmem:[%s200 + $0xc] sm:$0xff]
      %959 = vrot.lane.b32.xlu0 %v955, 124
      %v960 = vpop.permute.xlu0 %959
      %961 = vrot.lane.b32.xlu0 %v956, 124
      %v962 = vpop.permute.xlu0 %961
      %v963 = vrot.slane %v960, 4
      %v964 = vrot.slane %v962, 4
      %v965 = vsel %vm226, %v963, %v964
      %v966 = vsel %vm282, %v960, %v965
      %v967 = vsel %vm282, %v962, %v964
      %970 = vst [vmem:[#allocation2 + $0x1f8] sm:$0xff] %v966
      %971 = vst [vmem:[#allocation2 + $0x200] sm:$0xf] %v967
      %v972 = vld [vmem:[%s200 + $0x4] sm:$0xff]
      %v973 = vld [vmem:[%s200 + $0xc] sm:$0xff]
      %976 = vrot.lane.b32.xlu0 %v972, 123
      %v977 = vpop.permute.xlu0 %976
      %978 = vrot.lane.b32.xlu0 %v973, 123
      %v979 = vpop.permute.xlu0 %978
      %v980 = vrot.slane %v977, 4
      %v981 = vrot.slane %v979, 4
      %v982 = vsel %vm226, %v980, %v981
      %v983 = vsel %vm300, %v977, %v982
      %v984 = vsel %vm300, %v979, %v981
      %987 = vst [vmem:[#allocation2 + $0x204] sm:$0xff] %v983
      %988 = vst [vmem:[#allocation2 + $0x20c] sm:$0xf] %v984
      %v989 = vld [vmem:[%s200 + $0x4] sm:$0xff]
      %v990 = vld [vmem:[%s200 + $0xc] sm:$0xff]
      %993 = vrot.lane.b32.xlu0 %v989, 122
      %v994 = vpop.permute.xlu0 %993
      %995 = vrot.lane.b32.xlu0 %v990, 122
      %v996 = vpop.permute.xlu0 %995
      %v997 = vrot.slane %v994, 4
      %v998 = vrot.slane %v996, 4
      %v999 = vsel %vm226, %v997, %v998
      %v1000 = vsel %vm318, %v994, %v999
      %v1001 = vsel %vm318, %v996, %v998
      %1004 = vst [vmem:[#allocation2 + $0x210] sm:$0xff] %v1000
      %1005 = vst [vmem:[#allocation2 + $0x218] sm:$0xf] %v1001
      %v1006 = vld [vmem:[%s200 + $0x4] sm:$0xff]
      %v1007 = vld [vmem:[%s200 + $0xc] sm:$0xff]
      %1010 = vrot.lane.b32.xlu0 %v1006, 121
      %v1011 = vpop.permute.xlu0 %1010
      %1012 = vrot.lane.b32.xlu0 %v1007, 121
      %v1013 = vpop.permute.xlu0 %1012
      %v1014 = vrot.slane %v1011, 4
      %v1015 = vrot.slane %v1013, 4
      %v1016 = vsel %vm226, %v1014, %v1015
      %vm1017 = vcmask 990208
      %v1018 = vsel %vm1017, %v1011, %v1016
      %v1019 = vsel %vm1017, %v1013, %v1015
      %1022 = vst [vmem:[#allocation2 + $0x21c] sm:$0xff] %v1018
      %1023 = vst [vmem:[#allocation2 + $0x224] sm:$0xf] %v1019
      %v1024 = vld [vmem:[%s200 + $0x4] sm:$0xff]
      %v1025 = vld [vmem:[%s200 + $0xc] sm:$0xff]
      %1028 = vrot.lane.b32.xlu0 %v1024, 120
      %v1029 = vpop.permute.xlu0 %1028
      %1030 = vrot.lane.b32.xlu0 %v1025, 120
      %v1031 = vpop.permute.xlu0 %1030
      %v1032 = vrot.slane %v1029, 4
      %v1033 = vrot.slane %v1031, 4
      %v1034 = vsel %vm226, %v1032, %v1033
      %vm1035 = vcmask 982016
      %v1036 = vsel %vm1035, %v1029, %v1034
      %v1037 = vsel %vm1035, %v1031, %v1033
      %1040 = vst [vmem:[#allocation2 + $0x228] sm:$0xff] %v1036
      %1041 = vst [vmem:[#allocation2 + $0x230] sm:$0xf] %v1037
      %v1042 = vld [vmem:[%s200 + $0x4] sm:$0xff]
      %v1043 = vld [vmem:[%s200 + $0xc] sm:$0xff]
      %1046 = vrot.lane.b32.xlu0 %v1042, 119
      %v1047 = vpop.permute.xlu0 %1046
      %1048 = vrot.lane.b32.xlu0 %v1043, 119
      %v1049 = vpop.permute.xlu0 %1048
      %v1050 = vrot.slane %v1047, 4
      %v1051 = vrot.slane %v1049, 4
      %v1052 = vsel %vm226, %v1050, %v1051
      %vm1053 = vcmask 973824
      %v1054 = vsel %vm1053, %v1047, %v1052
      %v1055 = vsel %vm1053, %v1049, %v1051
      %1058 = vst [vmem:[#allocation2 + $0x234] sm:$0xff] %v1054
      %1059 = vst [vmem:[#allocation2 + $0x23c] sm:$0xf] %v1055
      %v1060 = vld [vmem:[%s200 + $0x4] sm:$0xff]
      %v1061 = vld [vmem:[%s200 + $0xc] sm:$0xff]
      %1064 = vrot.lane.b32.xlu0 %v1060, 118
      %v1065 = vpop.permute.xlu0 %1064
      %1066 = vrot.lane.b32.xlu0 %v1061, 118
      %v1067 = vpop.permute.xlu0 %1066
      %v1068 = vrot.slane %v1065, 4
      %v1069 = vrot.slane %v1067, 4
      %v1070 = vsel %vm226, %v1068, %v1069
      %vm1071 = vcmask 965632
      %v1072 = vsel %vm1071, %v1065, %v1070
      %v1073 = vsel %vm1071, %v1067, %v1069
      %1076 = vst [vmem:[#allocation2 + $0x240] sm:$0xff] %v1072
      %1077 = vst [vmem:[#allocation2 + $0x248] sm:$0xf] %v1073
      %v1078 = vld [vmem:[%s1] sm:$0xff]
      %v1079 = vld [vmem:[%s1 + $0x8] sm:$0xff]
      %v1080 = vld [vmem:[#allocation2] sm:$0xff]
      %v1081 = vld [vmem:[#allocation2 + $0x8] sm:$0xf]
      %v1082 = vld [vmem:[#allocation2 + $0xc] sm:$0xff]
      %v1083 = vld [vmem:[#allocation2 + $0x14] sm:$0xf]
      %v1084 = vld [vmem:[#allocation2 + $0x18] sm:$0xff]
      %v1085 = vld [vmem:[#allocation2 + $0x20] sm:$0xf]
      %v1086 = vld [vmem:[#allocation2 + $0x24] sm:$0xff]
      %v1087 = vld [vmem:[#allocation2 + $0x2c] sm:$0xf]
      %v1088 = vld [vmem:[#allocation2 + $0x30] sm:$0xff]
      %v1089 = vld [vmem:[#allocation2 + $0x38] sm:$0xf]
      %v1090 = vld [vmem:[#allocation2 + $0x3c] sm:$0xff]
      %v1091 = vld [vmem:[#allocation2 + $0x44] sm:$0xf]
      %v1092 = vld [vmem:[#allocation2 + $0x48] sm:$0xff]
      %v1093 = vld [vmem:[#allocation2 + $0x50] sm:$0xf]
      %v1094 = vld [vmem:[#allocation2 + $0x54] sm:$0xff]
      %v1095 = vld [vmem:[#allocation2 + $0x5c] sm:$0xf]
      %v1096 = vld [vmem:[#allocation2 + $0x60] sm:$0xff]
      %v1097 = vld [vmem:[#allocation2 + $0x68] sm:$0xf]
      %v1098 = vld [vmem:[#allocation2 + $0x6c] sm:$0xff]
      %v1099 = vld [vmem:[#allocation2 + $0x74] sm:$0xf]
      %v1100 = vld [vmem:[#allocation2 + $0x78] sm:$0xff]
      %v1101 = vld [vmem:[#allocation2 + $0x80] sm:$0xf]
      %v1102 = vld [vmem:[#allocation2 + $0x84] sm:$0xff]
      %v1103 = vld [vmem:[#allocation2 + $0x8c] sm:$0xf]
      %v1104 = vld [vmem:[#allocation2 + $0x90] sm:$0xff]
      %v1105 = vld [vmem:[#allocation2 + $0x98] sm:$0xf]
      %v1106 = vld [vmem:[#allocation2 + $0x9c] sm:$0xff]
      %v1107 = vld [vmem:[#allocation2 + $0xa4] sm:$0xf]
      %v1108 = vld [vmem:[#allocation2 + $0xa8] sm:$0xff]
      %v1109 = vld [vmem:[#allocation2 + $0xb0] sm:$0xf]
      %v1110 = vld [vmem:[#allocation2 + $0xb4] sm:$0xff]
      %v1111 = vld [vmem:[#allocation2 + $0xbc] sm:$0xf]
      %v1112 = vld [vmem:[#allocation2 + $0xc0] sm:$0xff]
      %v1113 = vld [vmem:[#allocation2 + $0xc8] sm:$0xf]
      %v1114 = vld [vmem:[#allocation2 + $0xcc] sm:$0xff]
      %v1115 = vld [vmem:[#allocation2 + $0xd4] sm:$0xf]
      %v1116 = vld [vmem:[#allocation2 + $0xd8] sm:$0xff]
      %v1117 = vld [vmem:[#allocation2 + $0xe0] sm:$0xf]
      %v1118 = vld [vmem:[#allocation2 + $0xe4] sm:$0xff]
      %v1119 = vld [vmem:[#allocation2 + $0xec] sm:$0xf]
      %v1120 = vld [vmem:[#allocation2 + $0xf0] sm:$0xff]
      %v1121 = vld [vmem:[#allocation2 + $0xf8] sm:$0xf]
      %v1122 = vld [vmem:[#allocation2 + $0xfc] sm:$0xff]
      %v1123 = vld [vmem:[#allocation2 + $0x104] sm:$0xf]
      %v1124 = vld [vmem:[#allocation2 + $0x108] sm:$0xff]
      %v1125 = vld [vmem:[#allocation2 + $0x110] sm:$0xf]
      %v1126 = vld [vmem:[#allocation2 + $0x114] sm:$0xff]
      %v1127 = vld [vmem:[#allocation2 + $0x11c] sm:$0xf]
      %v1128 = vld [vmem:[#allocation2 + $0x120] sm:$0xff]
      %v1129 = vld [vmem:[#allocation2 + $0x128] sm:$0xf]
      %v1130 = vld [vmem:[#allocation2 + $0x12c] sm:$0xff]
      %v1131 = vld [vmem:[#allocation2 + $0x134] sm:$0xf]
      %v1132 = vld [vmem:[#allocation2 + $0x138] sm:$0xff]
      %v1133 = vld [vmem:[#allocation2 + $0x140] sm:$0xf]
      %v1134 = vld [vmem:[#allocation2 + $0x144] sm:$0xff]
      %v1135 = vld [vmem:[#allocation2 + $0x14c] sm:$0xf]
      %v1136 = vld [vmem:[#allocation2 + $0x150] sm:$0xff]
      %v1137 = vld [vmem:[#allocation2 + $0x158] sm:$0xf]
      %v1138 = vld [vmem:[#allocation2 + $0x15c] sm:$0xff]
      %v1139 = vld [vmem:[#allocation2 + $0x164] sm:$0xf]
      %v1140 = vld [vmem:[#allocation2 + $0x168] sm:$0xff]
      %v1141 = vld [vmem:[#allocation2 + $0x170] sm:$0xf]
      %v1142 = vld [vmem:[#allocation2 + $0x174] sm:$0xff]
      %v1143 = vld [vmem:[#allocation2 + $0x17c] sm:$0xf]
      %v1144 = vld [vmem:[#allocation2 + $0x180] sm:$0xff]
      %v1145 = vld [vmem:[#allocation2 + $0x188] sm:$0xf]
      %v1146 = vld [vmem:[#allocation2 + $0x18c] sm:$0xff]
      %v1147 = vld [vmem:[#allocation2 + $0x194] sm:$0xf]
      %v1148 = vld [vmem:[#allocation2 + $0x198] sm:$0xff]
      %v1149 = vld [vmem:[#allocation2 + $0x1a0] sm:$0xf]
      %v1150 = vld [vmem:[#allocation2 + $0x1a4] sm:$0xff]
      %v1151 = vld [vmem:[#allocation2 + $0x1ac] sm:$0xf]
      %v1152 = vld [vmem:[#allocation2 + $0x1b0] sm:$0xff]
      %v1153 = vld [vmem:[#allocation2 + $0x1b8] sm:$0xf]
      %v1154 = vld [vmem:[#allocation2 + $0x1bc] sm:$0xff]
      %v1155 = vld [vmem:[#allocation2 + $0x1c4] sm:$0xf]
      %v1156 = vld [vmem:[#allocation2 + $0x1c8] sm:$0xff]
      %v1157 = vld [vmem:[#allocation2 + $0x1d0] sm:$0xf]
      %v1158 = vld [vmem:[#allocation2 + $0x1d4] sm:$0xff]
      %v1159 = vld [vmem:[#allocation2 + $0x1dc] sm:$0xf]
      %v1160 = vld [vmem:[#allocation2 + $0x1e0] sm:$0xff]
      %v1161 = vld [vmem:[#allocation2 + $0x1e8] sm:$0xf]
      %v1162 = vld [vmem:[#allocation2 + $0x1ec] sm:$0xff]
      %v1163 = vld [vmem:[#allocation2 + $0x1f4] sm:$0xf]
      %v1164 = vld [vmem:[#allocation2 + $0x1f8] sm:$0xff]
      %v1165 = vld [vmem:[#allocation2 + $0x200] sm:$0xf]
      %v1166 = vld [vmem:[#allocation2 + $0x204] sm:$0xff]
      %v1167 = vld [vmem:[#allocation2 + $0x20c] sm:$0xf]
      %v1168 = vld [vmem:[#allocation2 + $0x210] sm:$0xff]
      %v1169 = vld [vmem:[#allocation2 + $0x218] sm:$0xf]
      %v1170 = vld [vmem:[#allocation2 + $0x21c] sm:$0xff]
      %v1171 = vld [vmem:[#allocation2 + $0x224] sm:$0xf]
      %v1172 = vld [vmem:[#allocation2 + $0x228] sm:$0xff]
      %v1173 = vld [vmem:[#allocation2 + $0x230] sm:$0xf]
      %v1174 = vld [vmem:[#allocation2 + $0x234] sm:$0xff]
      %v1175 = vld [vmem:[#allocation2 + $0x23c] sm:$0xf]
      %v1176 = vld [vmem:[#allocation2 + $0x240] sm:$0xff]
      %v1177 = vld [vmem:[#allocation2 + $0x248] sm:$0xf]
      %v1180 = vunpack.c.l.b16 %v1078
      %v1181 = vunpack.c.h.b16 %v1078
      %v1182 = vunpack.c.l.b16 %v1079
      %v1183 = vunpack.c.h.b16 %v1079
      %v1184 = vpack.c.b16 %v1180, %v1180
      %v1185 = vpack.c.b16 %v1181, %v1181
      %v1186 = vpack.c.b16 %v1182, %v1182
      %v1187 = vpack.c.b16 %v1183, %v1183
      %v1289 = vunpack.c.l.b16 %v1080
      %v1290 = vunpack.c.h.b16 %v1080
      %v1291 = vunpack.c.l.b16 %v1081
      %v1292 = vunpack.c.l.b16 %v1082
      %v1293 = vunpack.c.h.b16 %v1082
      %v1294 = vunpack.c.l.b16 %v1083
      %v1295 = vunpack.c.l.b16 %v1084
      %v1296 = vunpack.c.h.b16 %v1084
      %v1297 = vunpack.c.l.b16 %v1085
      %v1298 = vunpack.c.l.b16 %v1086
      %v1299 = vunpack.c.h.b16 %v1086
      %v1300 = vunpack.c.l.b16 %v1087
      %v1301 = vunpack.c.l.b16 %v1088
      %v1302 = vunpack.c.h.b16 %v1088
      %v1303 = vunpack.c.l.b16 %v1089
      %v1304 = vunpack.c.l.b16 %v1090
      %v1305 = vunpack.c.h.b16 %v1090
      %v1306 = vunpack.c.l.b16 %v1091
      %v1307 = vunpack.c.l.b16 %v1092
      %v1308 = vunpack.c.h.b16 %v1092
      %v1309 = vunpack.c.l.b16 %v1093
      %v1310 = vunpack.c.l.b16 %v1094
      %v1311 = vunpack.c.h.b16 %v1094
      %v1312 = vunpack.c.l.b16 %v1095
      %v1313 = vunpack.c.l.b16 %v1096
      %v1314 = vunpack.c.h.b16 %v1096
      %v1315 = vunpack.c.l.b16 %v1097
      %v1316 = vunpack.c.l.b16 %v1098
      %v1317 = vunpack.c.h.b16 %v1098
      %v1318 = vunpack.c.l.b16 %v1099
      %v1319 = vunpack.c.l.b16 %v1100
      %v1320 = vunpack.c.h.b16 %v1100
      %v1321 = vunpack.c.l.b16 %v1101
      %v1322 = vunpack.c.l.b16 %v1102
      %v1323 = vunpack.c.h.b16 %v1102
      %v1324 = vunpack.c.l.b16 %v1103
      %v1325 = vunpack.c.l.b16 %v1104
      %v1326 = vunpack.c.h.b16 %v1104
      %v1327 = vunpack.c.l.b16 %v1105
      %v1328 = vunpack.c.l.b16 %v1106
      %v1329 = vunpack.c.h.b16 %v1106
      %v1330 = vunpack.c.l.b16 %v1107
      %v1331 = vunpack.c.l.b16 %v1108
      %v1332 = vunpack.c.h.b16 %v1108
      %v1333 = vunpack.c.l.b16 %v1109
      %v1334 = vunpack.c.l.b16 %v1110
      %v1335 = vunpack.c.h.b16 %v1110
      %v1336 = vunpack.c.l.b16 %v1111
      %v1337 = vunpack.c.l.b16 %v1112
      %v1338 = vunpack.c.h.b16 %v1112
      %v1339 = vunpack.c.l.b16 %v1113
      %v1340 = vunpack.c.l.b16 %v1114
      %v1341 = vunpack.c.h.b16 %v1114
      %v1342 = vunpack.c.l.b16 %v1115
      %v1343 = vunpack.c.l.b16 %v1116
      %v1344 = vunpack.c.h.b16 %v1116
      %v1345 = vunpack.c.l.b16 %v1117
      %v1346 = vunpack.c.l.b16 %v1118
      %v1347 = vunpack.c.h.b16 %v1118
      %v1348 = vunpack.c.l.b16 %v1119
      %v1349 = vunpack.c.l.b16 %v1120
      %v1350 = vunpack.c.h.b16 %v1120
      %v1351 = vunpack.c.l.b16 %v1121
      %v1352 = vunpack.c.l.b16 %v1122
      %v1353 = vunpack.c.h.b16 %v1122
      %v1354 = vunpack.c.l.b16 %v1123
      %v1355 = vunpack.c.l.b16 %v1124
      %v1356 = vunpack.c.h.b16 %v1124
      %v1357 = vunpack.c.l.b16 %v1125
      %v1358 = vunpack.c.l.b16 %v1126
      %v1359 = vunpack.c.h.b16 %v1126
      %v1360 = vunpack.c.l.b16 %v1127
      %v1361 = vunpack.c.l.b16 %v1128
      %v1362 = vunpack.c.h.b16 %v1128
      %v1363 = vunpack.c.l.b16 %v1129
      %v1364 = vunpack.c.l.b16 %v1130
      %v1365 = vunpack.c.h.b16 %v1130
      %v1366 = vunpack.c.l.b16 %v1131
      %v1367 = vunpack.c.l.b16 %v1132
      %v1368 = vunpack.c.h.b16 %v1132
      %v1369 = vunpack.c.l.b16 %v1133
      %v1370 = vunpack.c.l.b16 %v1134
      %v1371 = vunpack.c.h.b16 %v1134
      %v1372 = vunpack.c.l.b16 %v1135
      %v1373 = vunpack.c.l.b16 %v1136
      %v1374 = vunpack.c.h.b16 %v1136
      %v1375 = vunpack.c.l.b16 %v1137
      %v1376 = vunpack.c.l.b16 %v1138
      %v1377 = vunpack.c.h.b16 %v1138
      %v1378 = vunpack.c.l.b16 %v1139
      %v1379 = vunpack.c.l.b16 %v1140
      %v1380 = vunpack.c.h.b16 %v1140
      %v1381 = vunpack.c.l.b16 %v1141
      %v1382 = vunpack.c.l.b16 %v1142
      %v1383 = vunpack.c.h.b16 %v1142
      %v1384 = vunpack.c.l.b16 %v1143
      %v1385 = vunpack.c.l.b16 %v1144
      %v1386 = vunpack.c.h.b16 %v1144
      %v1387 = vunpack.c.l.b16 %v1145
      %v1388 = vunpack.c.l.b16 %v1146
      %v1389 = vunpack.c.h.b16 %v1146
      %v1390 = vunpack.c.l.b16 %v1147
      %v1391 = vunpack.c.l.b16 %v1148
      %v1392 = vunpack.c.h.b16 %v1148
      %v1393 = vunpack.c.l.b16 %v1149
      %v1394 = vunpack.c.l.b16 %v1150
      %v1395 = vunpack.c.h.b16 %v1150
      %v1396 = vunpack.c.l.b16 %v1151
      %v1397 = vunpack.c.l.b16 %v1152
      %v1398 = vunpack.c.h.b16 %v1152
      %v1399 = vunpack.c.l.b16 %v1153
      %v1400 = vunpack.c.l.b16 %v1154
      %v1401 = vunpack.c.h.b16 %v1154
      %v1402 = vunpack.c.l.b16 %v1155
      %v1403 = vunpack.c.l.b16 %v1156
      %v1404 = vunpack.c.h.b16 %v1156
      %v1405 = vunpack.c.l.b16 %v1157
      %v1406 = vunpack.c.l.b16 %v1158
      %v1407 = vunpack.c.h.b16 %v1158
      %v1408 = vunpack.c.l.b16 %v1159
      %v1409 = vunpack.c.l.b16 %v1160
      %v1410 = vunpack.c.h.b16 %v1160
      %v1411 = vunpack.c.l.b16 %v1161
      %v1412 = vunpack.c.l.b16 %v1162
      %v1413 = vunpack.c.h.b16 %v1162
      %v1414 = vunpack.c.l.b16 %v1163
      %v1415 = vunpack.c.l.b16 %v1164
      %v1416 = vunpack.c.h.b16 %v1164
      %v1417 = vunpack.c.l.b16 %v1165
      %v1418 = vunpack.c.l.b16 %v1166
      %v1419 = vunpack.c.h.b16 %v1166
      %v1420 = vunpack.c.l.b16 %v1167
      %v1421 = vunpack.c.l.b16 %v1168
      %v1422 = vunpack.c.h.b16 %v1168
      %v1423 = vunpack.c.l.b16 %v1169
      %v1424 = vunpack.c.l.b16 %v1170
      %v1425 = vunpack.c.h.b16 %v1170
      %v1426 = vunpack.c.l.b16 %v1171
      %v1427 = vunpack.c.l.b16 %v1172
      %v1428 = vunpack.c.h.b16 %v1172
      %v1429 = vunpack.c.l.b16 %v1173
      %v1430 = vunpack.c.l.b16 %v1174
      %v1431 = vunpack.c.h.b16 %v1174
      %v1432 = vunpack.c.l.b16 %v1175
      %v1433 = vunpack.c.l.b16 %v1176
      %v1434 = vunpack.c.h.b16 %v1176
      %v1435 = vunpack.c.l.b16 %v1177
      %v1436 = vpack.c.b16 %v1292, %v1289
      %v1437 = vpack.c.b16 %v1293, %v1290
      %v1438 = vpack.c.b16 %v1294, %v1291
      %v1439 = vpack.c.b16 %v1298, %v1295
      %v1440 = vpack.c.b16 %v1299, %v1296
      %v1441 = vpack.c.b16 %v1300, %v1297
      %v1442 = vpack.c.b16 %v1304, %v1301
      %v1443 = vpack.c.b16 %v1305, %v1302
      %v1444 = vpack.c.b16 %v1306, %v1303
      %v1445 = vpack.c.b16 %v1310, %v1307
      %v1446 = vpack.c.b16 %v1311, %v1308
      %v1447 = vpack.c.b16 %v1312, %v1309
      %v1448 = vpack.c.b16 %v1316, %v1313
      %v1449 = vpack.c.b16 %v1317, %v1314
      %v1450 = vpack.c.b16 %v1318, %v1315
      %v1451 = vpack.c.b16 %v1322, %v1319
      %v1452 = vpack.c.b16 %v1323, %v1320
      %v1453 = vpack.c.b16 %v1324, %v1321
      %v1454 = vpack.c.b16 %v1328, %v1325
      %v1455 = vpack.c.b16 %v1329, %v1326
      %v1456 = vpack.c.b16 %v1330, %v1327
      %v1457 = vpack.c.b16 %v1334, %v1331
      %v1458 = vpack.c.b16 %v1335, %v1332
      %v1459 = vpack.c.b16 %v1336, %v1333
      %v1460 = vpack.c.b16 %v1340, %v1337
      %v1461 = vpack.c.b16 %v1341, %v1338
      %v1462 = vpack.c.b16 %v1342, %v1339
      %v1463 = vpack.c.b16 %v1346, %v1343
      %v1464 = vpack.c.b16 %v1347, %v1344
      %v1465 = vpack.c.b16 %v1348, %v1345
      %v1466 = vpack.c.b16 %v1352, %v1349
      %v1467 = vpack.c.b16 %v1353, %v1350
      %v1468 = vpack.c.b16 %v1354, %v1351
      %v1469 = vpack.c.b16 %v1358, %v1355
      %v1470 = vpack.c.b16 %v1359, %v1356
      %v1471 = vpack.c.b16 %v1360, %v1357
      %v1472 = vpack.c.b16 %v1364, %v1361
      %v1473 = vpack.c.b16 %v1365, %v1362
      %v1474 = vpack.c.b16 %v1366, %v1363
      %v1475 = vpack.c.b16 %v1370, %v1367
      %v1476 = vpack.c.b16 %v1371, %v1368
      %v1477 = vpack.c.b16 %v1372, %v1369
      %v1478 = vpack.c.b16 %v1376, %v1373
      %v1479 = vpack.c.b16 %v1377, %v1374
      %v1480 = vpack.c.b16 %v1378, %v1375
      %v1481 = vpack.c.b16 %v1382, %v1379
      %v1482 = vpack.c.b16 %v1383, %v1380
      %v1483 = vpack.c.b16 %v1384, %v1381
      %v1484 = vpack.c.b16 %v1388, %v1385
      %v1485 = vpack.c.b16 %v1389, %v1386
      %v1486 = vpack.c.b16 %v1390, %v1387
      %v1487 = vpack.c.b16 %v1394, %v1391
      %v1488 = vpack.c.b16 %v1395, %v1392
      %v1489 = vpack.c.b16 %v1396, %v1393
      %v1490 = vpack.c.b16 %v1400, %v1397
      %v1491 = vpack.c.b16 %v1401, %v1398
      %v1492 = vpack.c.b16 %v1402, %v1399
      %v1493 = vpack.c.b16 %v1406, %v1403
      %v1494 = vpack.c.b16 %v1407, %v1404
      %v1495 = vpack.c.b16 %v1408, %v1405
      %v1496 = vpack.c.b16 %v1412, %v1409
      %v1497 = vpack.c.b16 %v1413, %v1410
      %v1498 = vpack.c.b16 %v1414, %v1411
      %v1499 = vpack.c.b16 %v1418, %v1415
      %v1500 = vpack.c.b16 %v1419, %v1416
      %v1501 = vpack.c.b16 %v1420, %v1417
      %v1502 = vpack.c.b16 %v1424, %v1421
      %v1503 = vpack.c.b16 %v1425, %v1422
      %v1504 = vpack.c.b16 %v1426, %v1423
      %v1505 = vpack.c.b16 %v1430, %v1427
      %v1506 = vpack.c.b16 %v1431, %v1428
      %v1507 = vpack.c.b16 %v1432, %v1429
      %v1508 = vpack.c.b16 %v1433, %v1433
      %v1509 = vpack.c.b16 %v1434, %v1434
      %v1510 = vpack.c.b16 %v1435, %v1435
      %vm1583 = vcmask 64512
      %v1585 = vsel %vm1583, %v1187, 0
      %vm1587 = vcmask 1043456
      %v1589 = vsel %vm1587, %v1508, 0
      %v1592 = vsel %vm1587, %v1509, 0
      %v1595 = vsel %vm1587, %v1510, 0
      %1597 = vmatprep.subr.bf16.mxu0 %v1437
      %1598 = vmatpush1.bf16.msra.mxu0 %v1436
      %1599 = vmatprep.subr.bf16.mxu0 %v1440
      %1600 = vmatpush1.bf16.msra.mxu0 %v1439
      %1601 = vmatprep.subr.bf16.mxu0 %v1443
      %1602 = vmatpush1.bf16.msra.mxu0 %v1442
      %1603 = vmatprep.subr.bf16.mxu0 %v1446
      %1604 = vmatpush1.bf16.msra.mxu0 %v1445
      %1605 = vmatprep.subr.bf16.mxu0 %v1449
      %1606 = vmatpush1.bf16.msra.mxu0 %v1448
      %1607 = vmatprep.subr.bf16.mxu0 %v1452
      %1608 = vmatpush1.bf16.msra.mxu0 %v1451
      %1609 = vmatprep.subr.bf16.mxu0 %v1455
      %1610 = vmatpush1.bf16.msra.mxu0 %v1454
      %1611 = vmatprep.subr.bf16.mxu0 %v1458
      %1612 = vmatpush1.bf16.msra.mxu0 %v1457
      %1613 = vmatprep.subr.bf16.mxu0 %v1461
      %1614 = vmatpush1.bf16.msra.mxu0 %v1460
      %1615 = vmatprep.subr.bf16.mxu0 %v1464
      %1616 = vmatpush1.bf16.msra.mxu0 %v1463
      %1617 = vmatprep.subr.bf16.mxu0 %v1467
      %1618 = vmatpush1.bf16.msra.mxu0 %v1466
      %1619 = vmatprep.subr.bf16.mxu0 %v1470
      %1620 = vmatpush1.bf16.msra.mxu0 %v1469
      %1621 = vmatprep.subr.bf16.mxu0 %v1473
      %1622 = vmatpush1.bf16.msra.mxu0 %v1472
      %1623 = vmatprep.subr.bf16.mxu0 %v1476
      %1624 = vmatpush1.bf16.msra.mxu0 %v1475
      %1625 = vmatprep.subr.bf16.mxu0 %v1479
      %1626 = vmatpush1.bf16.msra.mxu0 %v1478
      %1627 = vmatprep.subr.bf16.mxu0 %v1482
      %1628 = vmatpush1.bf16.msra.mxu0 %v1481
      %1629 = vmatprep.mubr.bf16.mxu0 %v1185
      %1630 = vmatmul.mubr.bf16.gmra.mrb[0].mxu0 %v1184
      %v1631 = vpop.f32.mrb[0].mxu0
      %v1632 = vadd.f32 0.0, %v1631
      %v1633 = vpop.f32.mrb[0].mxu0
      %v1634 = vadd.f32 0.0, %v1633
      %v1635 = vpop.f32.mrb[0].mxu0
      %v1636 = vpop.f32.mrb[0].mxu0
      %1637 = vdwg.mxu0
      %1638 = vmatprep.subr.bf16.mxu0 %v1485
      %1639 = vmatpush1.bf16.msra.mxu0 %v1484
      %1640 = vmatprep.subr.bf16.mxu0 %v1488
      %1641 = vmatpush1.bf16.msra.mxu0 %v1487
      %1642 = vmatprep.subr.bf16.mxu0 %v1491
      %1643 = vmatpush1.bf16.msra.mxu0 %v1490
      %1644 = vmatprep.subr.bf16.mxu0 %v1494
      %1645 = vmatpush1.bf16.msra.mxu0 %v1493
      %1646 = vmatprep.subr.bf16.mxu0 %v1497
      %1647 = vmatpush1.bf16.msra.mxu0 %v1496
      %1648 = vmatprep.subr.bf16.mxu0 %v1500
      %1649 = vmatpush1.bf16.msra.mxu0 %v1499
      %1650 = vmatprep.subr.bf16.mxu0 %v1503
      %1651 = vmatpush1.bf16.msra.mxu0 %v1502
      %1652 = vmatprep.subr.bf16.mxu0 %v1506
      %1653 = vmatpush1.bf16.msra.mxu0 %v1505
      %1654 = vmatprep.subr.bf16.mxu0 %v1592
      %1655 = vmatpush1.bf16.msra.mxu0 %v1589
      %1656 = vmatprep.subr.bf16.mxu0 0
      %1657 = vmatpush1.bf16.msra.mxu0 0
      %1658 = vmatprep.subr.bf16.mxu0 0
      %1659 = vmatpush1.bf16.msra.mxu0 0
      %1660 = vmatprep.subr.bf16.mxu0 0
      %1661 = vmatpush1.bf16.msra.mxu0 0
      %1662 = vmatprep.subr.bf16.mxu0 0
      %1663 = vmatpush1.bf16.msra.mxu0 0
      %1664 = vmatprep.subr.bf16.mxu0 0
      %1665 = vmatpush1.bf16.msra.mxu0 0
      %1666 = vmatprep.subr.bf16.mxu0 0
      %1667 = vmatpush1.bf16.msra.mxu0 0
      %1668 = vmatprep.subr.bf16.mxu0 0
      %1669 = vmatpush1.bf16.msra.mxu0 0
      %1670 = vmatprep.mubr.bf16.mxu0 %v1585
      %1671 = vmatmul.mubr.bf16.gmra.mrb[0].mxu0 %v1186
      %v1672 = vpop.f32.mrb[0].mxu0
      %v1673 = vadd.f32 %v1632, %v1672
      %v1674 = vpop.f32.mrb[0].mxu0
      %v1675 = vadd.f32 %v1634, %v1674
      %v1676 = vpop.f32.mrb[0].mxu0
      %v1677 = vpop.f32.mrb[0].mxu0
      %1678 = vdwg.mxu0
      %1679 = vmatprep.subr.bf16.mxu0 0
      %1680 = vmatpush1.bf16.msra.mxu0 %v1438
      %1681 = vmatprep.subr.bf16.mxu0 0
      %1682 = vmatpush1.bf16.msra.mxu0 %v1441
      %1683 = vmatprep.subr.bf16.mxu0 0
      %1684 = vmatpush1.bf16.msra.mxu0 %v1444
      %1685 = vmatprep.subr.bf16.mxu0 0
      %1686 = vmatpush1.bf16.msra.mxu0 %v1447
      %1687 = vmatprep.subr.bf16.mxu0 0
      %1688 = vmatpush1.bf16.msra.mxu0 %v1450
      %1689 = vmatprep.subr.bf16.mxu0 0
      %1690 = vmatpush1.bf16.msra.mxu0 %v1453
      %1691 = vmatprep.subr.bf16.mxu0 0
      %1692 = vmatpush1.bf16.msra.mxu0 %v1456
      %1693 = vmatprep.subr.bf16.mxu0 0
      %1694 = vmatpush1.bf16.msra.mxu0 %v1459
      %1695 = vmatprep.subr.bf16.mxu0 0
      %1696 = vmatpush1.bf16.msra.mxu0 %v1462
      %1697 = vmatprep.subr.bf16.mxu0 0
      %1698 = vmatpush1.bf16.msra.mxu0 %v1465
      %1699 = vmatprep.subr.bf16.mxu0 0
      %1700 = vmatpush1.bf16.msra.mxu0 %v1468
      %1701 = vmatprep.subr.bf16.mxu0 0
      %1702 = vmatpush1.bf16.msra.mxu0 %v1471
      %1703 = vmatprep.subr.bf16.mxu0 0
      %1704 = vmatpush1.bf16.msra.mxu0 %v1474
      %1705 = vmatprep.subr.bf16.mxu0 0
      %1706 = vmatpush1.bf16.msra.mxu0 %v1477
      %1707 = vmatprep.subr.bf16.mxu0 0
      %1708 = vmatpush1.bf16.msra.mxu0 %v1480
      %1709 = vmatprep.subr.bf16.mxu0 0
      %1710 = vmatpush1.bf16.msra.mxu0 %v1483
      %1711 = vmatprep.mubr.bf16.mxu0 %v1185
      %1712 = vmatmul.mubr.bf16.gmra.mrb[0].mxu0 %v1184
      %v1713 = vpop.f32.mrb[0].mxu0
      %v1714 = vadd.f32 0.0, %v1713
      %v1715 = vpop.f32.mrb[0].mxu0
      %v1716 = vpop.f32.mrb[0].mxu0
      %v1717 = vpop.f32.mrb[0].mxu0
      %1718 = vdwg.mxu0
      %1719 = vmatprep.subr.bf16.mxu0 0
      %1720 = vmatpush1.bf16.msra.mxu0 %v1486
      %1721 = vmatprep.subr.bf16.mxu0 0
      %1722 = vmatpush1.bf16.msra.mxu0 %v1489
      %1723 = vmatprep.subr.bf16.mxu0 0
      %1724 = vmatpush1.bf16.msra.mxu0 %v1492
      %1725 = vmatprep.subr.bf16.mxu0 0
      %1726 = vmatpush1.bf16.msra.mxu0 %v1495
      %1727 = vmatprep.subr.bf16.mxu0 0
      %1728 = vmatpush1.bf16.msra.mxu0 %v1498
      %1729 = vmatprep.subr.bf16.mxu0 0
      %1730 = vmatpush1.bf16.msra.mxu0 %v1501
      %1731 = vmatprep.subr.bf16.mxu0 0
      %1732 = vmatpush1.bf16.msra.mxu0 %v1504
      %1733 = vmatprep.subr.bf16.mxu0 0
      %1734 = vmatpush1.bf16.msra.mxu0 %v1507
      %1735 = vmatprep.subr.bf16.mxu0 0
      %1736 = vmatpush1.bf16.msra.mxu0 %v1595
      %1737 = vmatprep.subr.bf16.mxu0 0
      %1738 = vmatpush1.bf16.msra.mxu0 0
      %1739 = vmatprep.subr.bf16.mxu0 0
      %1740 = vmatpush1.bf16.msra.mxu0 0
      %1741 = vmatprep.subr.bf16.mxu0 0
      %1742 = vmatpush1.bf16.msra.mxu0 0
      %1743 = vmatprep.subr.bf16.mxu0 0
      %1744 = vmatpush1.bf16.msra.mxu0 0
      %1745 = vmatprep.subr.bf16.mxu0 0
      %1746 = vmatpush1.bf16.msra.mxu0 0
      %1747 = vmatprep.subr.bf16.mxu0 0
      %1748 = vmatpush1.bf16.msra.mxu0 0
      %1749 = vmatprep.subr.bf16.mxu0 0
      %1750 = vmatpush1.bf16.msra.mxu0 0
      %1751 = vmatprep.mubr.bf16.mxu0 %v1585
      %1752 = vmatmul.mubr.bf16.gmra.mrb[0].mxu0 %v1186
      %v1753 = vpop.f32.mrb[0].mxu0
      %v1754 = vadd.f32 %v1714, %v1753
      %v1755 = vpop.f32.mrb[0].mxu0
      %v1756 = vpop.f32.mrb[0].mxu0
      %v1757 = vpop.f32.mrb[0].mxu0
      %1758 = vdwg.mxu0
      %1759 = vst [vmem:[%s205] sm:$0xff] %v1673
      %1760 = vst [vmem:[%s205 + $0x8] sm:$0xff] %v1675
      %1761 = vst [vmem:[%s205 + $0x10] sm:$0xff] %v1754
      %v1762 = vld [vmem:[%s2] sm:$0x7]
      %v1764 = vlaneseq
      %v1765 = vshrl.u32 %v1764, 7
      %v1766 = vsub.s32 0, %v1765
      %v1767 = vrot.slane %v1762, %v1766
      %v1768 = vlaneseq
      %v1769 = vshrl.u32 %v1768, 7
      %v1770 = vsub.s32 1, %v1769
      %v1771 = vrot.slane %v1762, %v1770
      %v1772 = vlaneseq
      %v1773 = vshrl.u32 %v1772, 7
      %v1774 = vsub.s32 2, %v1773
      %v1775 = vrot.slane %v1762, %v1774
      %v1779 = vmul.f32 %v1673, %v1767
      %v1780 = vmul.f32 %v1675, %v1771
      %v1781 = vmul.f32 %v1754, %v1775
      %v1782 = vadd.f32 %v1779, %v1780
      %v1783 = vadd.f32 %v1782, %v1781
      %1784 = vadd.xlane.f32.xlu0 %v1783
      %v1785 = vpop.xlane.xlu0 %1784
      %vm1786 = vcmask 7168
      %1787 = vst.msk [vmem:[%s210] sm:$0xff] %vm1786, %v1785
      %v1788 = vmul.f32 %v1779, %v1779
      %v1789 = vmul.f32 %v1780, %v1780
      %v1790 = vmul.f32 %v1781, %v1781
      %v1791 = vadd.f32 %v1788, %v1789
      %v1792 = vadd.f32 %v1791, %v1790
      %1793 = vadd.xlane.f32.xlu0 %v1792
      %v1794 = vpop.xlane.xlu0 %1793
      %s1795 = scalar_lea.vmem %s210, 8
      %1796 = vst.msk [vmem:[%s1795] sm:$0xff] %vm1786, %v1794
      %p1797 = scmp.lt.s32.totalorder %s16, 1
      %s1798 = scalar_select %p1797, %s16, 1
      %s1799 = smul.addr %s1798, 3
      %s1800 = smul.addr %s1799, 8
      %s1801 = scalar_lea.vmem %s3, %s1800
      %p1802 = scmp.lt.s32.totalorder %s16, 1
      %s1803 = scalar_select %p1802, %s16, 1
      %s1804 = smul.addr %s1803, 2
      %s1805 = smul.addr %s1804, 8
      %s1806 = scalar_lea.vmem %s4, %s1805
      // Predicated region
      $region33: #{_lambda_.10} parent=31 // pred_check
        %p1807 = pneg %p102
      $region34: #{_lambda_.10} parent=31 // pred_check_branch
        %1809 = sbr.rel (%p1807) target = $region36
      $region35: #{_lambda_.10} parent=31 // pred_region
        _
      $region36: #{_lambda_.10} parent=31 // pred_fallthru
        _
      // Predicated region
      $region37: #{_lambda_.10} parent=31 // pred_check
        %p1810 = pneg %p128
      $region38: #{_lambda_.10} parent=31 // pred_check_branch
        %1812 = sbr.rel (%p1810) target = $region40
      $region39: #{_lambda_.10} parent=31 // pred_region
        _
      $region40: #{_lambda_.10} parent=31 // pred_fallthru
        _
    $region32: #{_lambda_.10} parent=5 // pred_fallthru
      _
    %p1813 = scmp.le.s32.totalorder 2, %s11
    // Predicated region
    $region41: #{_lambda_.10} parent=5 // pred_check
      %p1814 = pneg %p1813
    $region42: #{_lambda_.10} parent=5 // pred_check_branch
      %1816 = sbr.rel (%p1814) target = $region44
    $region43: #{_lambda_.10} parent=5 // pred_region
      %s1817 = ssub.s32 %s11, 2
      // Predicated region
      $region45: #{_lambda_.10} parent=43 // pred_check
        %p1818 = pneg %p108
      $region46: #{_lambda_.10} parent=43 // pred_check_branch
        %1820 = sbr.rel (%p1818) target = $region48
      $region47: #{_lambda_.10} parent=43 // pred_region
        %p1821 = scmp.lt.s32.totalorder %s17, 1
        %s1822 = scalar_select %p1821, %s17, 1
        %s1823 = smul.addr %s1822, 3
        %s1824 = smul.addr %s1823, 8
        %s1825 = scalar_lea.vmem %s3, %s1824
      $region48: #{_lambda_.10} parent=43 // pred_fallthru
        _
      // Predicated region
      $region49: #{_lambda_.10} parent=43 // pred_check
        %p1826 = pneg %p134
      $region50: #{_lambda_.10} parent=43 // pred_check_branch
        %1828 = sbr.rel (%p1826) target = $region52
      $region51: #{_lambda_.10} parent=43 // pred_region
        %p1829 = scmp.lt.s32.totalorder %s17, 1
        %s1830 = scalar_select %p1829, %s17, 1
        %s1831 = smul.addr %s1830, 2
        %s1832 = smul.addr %s1831, 8
        %s1833 = scalar_lea.vmem %s4, %s1832
      $region52: #{_lambda_.10} parent=43 // pred_fallthru
        _
    $region44: #{_lambda_.10} parent=5 // pred_fallthru
      _
  $region6: #{_lambda_.10} parent=0 // loop_footer
    %s15 = sadd.s32 1, %s11
  $region7: #{_lambda_.10} parent=0 // loop_footer_branch
    %10 = sbr.rel target = $region3
  $region8: #{_lambda_.10} parent=0 // loop_exit
    _

// kernel: _lambda_.11
$region0: #{_lambda_.11}
  #allocation0 [shape = 'u32[]', space=smem, size = 0x4, offset = 0x4, fixed_abs, tag = 'smem constant byte address 0x4 - core index']
  #allocation1 [shape = 'u32[144,128]{1,0:T(1,128)}', space=vmem, size = 0x12000, scoped, tag = 'internal scratch']
  #allocation2 [shape = 'bf16[72,128]{1,0:T(8,128)(2,1)}', space=vmem, size = 0x4800, scoped, tag = 'scratch operand']
  %s0 = inlined_call_operand.vmem [shape: bf16[2,4,8,138], index: 0, kind: input, shape index: {}]
  %s1 = inlined_call_operand.vmem [shape: bf16[16,72], index: 1, kind: input, shape index: {}]
  %s2 = inlined_call_operand.vmem [shape: f32[1,128], index: 2, kind: input, shape index: {}]
  %s3 = inlined_call_operand.vmem [shape: f32[2,16,128], index: 3, kind: output, shape index: {0}]
  %s4 = inlined_call_operand.vmem [shape: f32[2,2,16,1], index: 4, kind: output, shape index: {1}]
  %5 = xla_tuple %s3, %s4
  %s6 = sld [smem:[#allocation0]]
  $region53: #{_lambda_.11} parent=0
    _
  %s8 = ssub.s32 1, %s6
  %s9 = scalar_select 0, %s8, %s6
  loop: start=0, step=1, limit=4
  $region2: #{_lambda_.11} parent=0 // loop_pre_header
    _
  $region3: #{_lambda_.11} parent=0 // loop_header
    %s11 = sphi 0, %s15
    %p12 = scmp.ge.s32.totalorder %s11, 4
    %s21 = sphi 0, %s23
    %s24 = sphi 0, %s21
    %s25 = sphi 0, %s24
    %s41 = sphi 0, %s25
    %s45 = sphi 0, %s45
    %s47 = sphi 0, %s45
    %s48 = sphi 0, %s47
    %s62 = sphi 0, %s48
    %s66 = sphi 0, %s66
    %s68 = sphi 0, %s66
    %s69 = sphi 0, %s68
    %s83 = sphi 0, %s69
    %s89 = sphi 0, %s91
    %s92 = sphi 0, %s89
    %s93 = sphi 0, %s92
    %s109 = sphi 0, %s93
    %s115 = sphi 0, %s117
    %s118 = sphi 0, %s115
    %s119 = sphi 0, %s118
    %s135 = sphi 0, %s119
  $region4: #{_lambda_.11} parent=0 // loop_header_branch
    %14 = sbr.rel (%p12) target = $region8
  $region5: #{_lambda_.11} parent=0 // loop_body
    %s16 = ssub.s32 %s11, 1
    %s17 = ssub.s32 %s11, 2
    %s18 = sadd.s32 %s11, 1
    %s19 = ssub.s32 %s11, %s18
    %p20 = scmp.eq.s32.totalorder %s19, 0
    %s22 = sadd.s32 %s21, 1
    %s23 = scalar_select %p20, %s21, %s22
    %p26 = pneg %p20
    %p27 = scmp.eq.s32.totalorder %s11, 1
    %p28 = por %p26, %p27
    %p29 = scmp.ne.s32.totalorder %s21, %s24
    %p30 = scmp.eq.s32.totalorder %s11, 0
    %p31 = por %p29, %p30
    %p32 = scmp.ne.s32.totalorder %s21, %s24
    %p33 = scmp.eq.s32.totalorder %s16, 1
    %p34 = por %p32, %p33
    %p35 = scmp.ne.s32.totalorder %s24, %s25
    %p36 = scmp.eq.s32.totalorder %s16, 0
    %p37 = por %p35, %p36
    %p38 = scmp.ne.s32.totalorder %s24, %s25
    %p39 = scmp.eq.s32.totalorder %s17, 1
    %p40 = por %p38, %p39
    %p42 = scmp.ne.s32.totalorder %s25, %s41
    %p43 = scmp.eq.s32.totalorder %s17, 0
    %p44 = por %p42, %p43
    %s46 = sadd.s32 %s45, 1
    %p49 = scmp.eq.s32.totalorder %s11, 1
    %p50 = scmp.ne.s32.totalorder %s45, %s47
    %p51 = scmp.eq.s32.totalorder %s11, 0
    %p52 = por %p50, %p51
    %p53 = scmp.ne.s32.totalorder %s45, %s47
    %p54 = scmp.eq.s32.totalorder %s16, 1
    %p55 = por %p53, %p54
    %p56 = scmp.ne.s32.totalorder %s47, %s48
    %p57 = scmp.eq.s32.totalorder %s16, 0
    %p58 = por %p56, %p57
    %p59 = scmp.ne.s32.totalorder %s47, %s48
    %p60 = scmp.eq.s32.totalorder %s17, 1
    %p61 = por %p59, %p60
    %p63 = scmp.ne.s32.totalorder %s48, %s62
    %p64 = scmp.eq.s32.totalorder %s17, 0
    %p65 = por %p63, %p64
    %s67 = sadd.s32 %s66, 1
    %p70 = scmp.eq.s32.totalorder %s11, 1
    %p71 = scmp.ne.s32.totalorder %s66, %s68
    %p72 = scmp.eq.s32.totalorder %s11, 0
    %p73 = por %p71, %p72
    %p74 = scmp.ne.s32.totalorder %s66, %s68
    %p75 = scmp.eq.s32.totalorder %s16, 1
    %p76 = por %p74, %p75
    %p77 = scmp.ne.s32.totalorder %s68, %s69
    %p78 = scmp.eq.s32.totalorder %s16, 0
    %p79 = por %p77, %p78
    %p80 = scmp.ne.s32.totalorder %s68, %s69
    %p81 = scmp.eq.s32.totalorder %s17, 1
    %p82 = por %p80, %p81
    %p84 = scmp.ne.s32.totalorder %s69, %s83
    %p85 = scmp.eq.s32.totalorder %s17, 0
    %p86 = por %p84, %p85
    %s87 = ssub.s32 %s11, %s18
    %p88 = scmp.eq.s32.totalorder %s87, 0
    %s90 = sadd.s32 %s89, 1
    %s91 = scalar_select %p88, %s89, %s90
    %p94 = pneg %p88
    %p95 = scmp.eq.s32.totalorder %s11, 1
    %p96 = por %p94, %p95
    %p97 = scmp.ne.s32.totalorder %s89, %s92
    %p98 = scmp.eq.s32.totalorder %s11, 0
    %p99 = por %p97, %p98
    %p100 = scmp.ne.s32.totalorder %s89, %s92
    %p101 = scmp.eq.s32.totalorder %s16, 1
    %p102 = por %p100, %p101
    %p103 = scmp.ne.s32.totalorder %s92, %s93
    %p104 = scmp.eq.s32.totalorder %s16, 0
    %p105 = por %p103, %p104
    %p106 = scmp.ne.s32.totalorder %s92, %s93
    %p107 = scmp.eq.s32.totalorder %s17, 1
    %p108 = por %p106, %p107
    %p110 = scmp.ne.s32.totalorder %s93, %s109
    %p111 = scmp.eq.s32.totalorder %s17, 0
    %p112 = por %p110, %p111
    %s113 = ssub.s32 %s11, %s18
    %p114 = scmp.eq.s32.totalorder %s113, 0
    %s116 = sadd.s32 %s115, 1
    %s117 = scalar_select %p114, %s115, %s116
    %p120 = pneg %p114
    %p121 = scmp.eq.s32.totalorder %s11, 1
    %p122 = por %p120, %p121
    %p123 = scmp.ne.s32.totalorder %s115, %s118
    %p124 = scmp.eq.s32.totalorder %s11, 0
    %p125 = por %p123, %p124
    %p126 = scmp.ne.s32.totalorder %s115, %s118
    %p127 = scmp.eq.s32.totalorder %s16, 1
    %p128 = por %p126, %p127
    %p129 = scmp.ne.s32.totalorder %s118, %s119
    %p130 = scmp.eq.s32.totalorder %s16, 0
    %p131 = por %p129, %p130
    %p132 = scmp.ne.s32.totalorder %s118, %s119
    %p133 = scmp.eq.s32.totalorder %s17, 1
    %p134 = por %p132, %p133
    %p136 = scmp.ne.s32.totalorder %s119, %s135
    %p137 = scmp.eq.s32.totalorder %s17, 0
    %p138 = por %p136, %p137
    %p139 = scmp.le.s32.totalorder 1, %s11
    %p140 = scmp.lt.s32.totalorder %s11, 3
    %p141 = pnand %p139, %p140
    %p142 = pneg %p141
    // Predicated region
    $region9: #{_lambda_.11} parent=5 // pred_check
      _
    $region10: #{_lambda_.11} parent=5 // pred_check_branch
      %144 = sbr.rel (%p141) target = $region12
    $region11: #{_lambda_.11} parent=5 // pred_region
      %s145 = ssub.s32 %s11, 1
      // Predicated region
      $region13: #{_lambda_.11} parent=11 // pred_check
        %p146 = pneg %p58
      $region14: #{_lambda_.11} parent=11 // pred_check_branch
        %148 = sbr.rel (%p146) target = $region16
      $region15: #{_lambda_.11} parent=11 // pred_region
        _
      $region16: #{_lambda_.11} parent=11 // pred_fallthru
        _
      // Predicated region
      $region17: #{_lambda_.11} parent=11 // pred_check
        %p149 = pneg %p79
      $region18: #{_lambda_.11} parent=11 // pred_check_branch
        %151 = sbr.rel (%p149) target = $region20
      $region19: #{_lambda_.11} parent=11 // pred_region
        _
      $region20: #{_lambda_.11} parent=11 // pred_fallthru
        _
    $region12: #{_lambda_.11} parent=5 // pred_fallthru
      _
    %p152 = scmp.lt.s32.totalorder %s11, 2
    // Predicated region
    $region21: #{_lambda_.11} parent=5 // pred_check
      %p153 = pneg %p152
    $region22: #{_lambda_.11} parent=5 // pred_check_branch
      %155 = sbr.rel (%p153) target = $region24
    $region23: #{_lambda_.11} parent=5 // pred_region
      // Predicated region
      $region25: #{_lambda_.11} parent=23 // pred_check
        %p156 = pneg %p31
      $region26: #{_lambda_.11} parent=23 // pred_check_branch
        %158 = sbr.rel (%p156) target = $region28
      $region27: #{_lambda_.11} parent=23 // pred_region
        %p159 = scmp.lt.s32.totalorder %s11, 1
        %s160 = scalar_select %p159, %s11, 1
        %s161 = smul.addr %s160, 8
        %s162 = smul.addr %s161, 4
        %s163 = scalar_lea.vmem %s0, %s162
      $region28: #{_lambda_.11} parent=23 // pred_fallthru
        _
    $region24: #{_lambda_.11} parent=5 // pred_fallthru
      _
    %p164 = scmp.le.s32.totalorder 1, %s11
    %p165 = scmp.lt.s32.totalorder %s11, 3
    %p166 = pnand %p164, %p165
    %p167 = pneg %p166
    // Predicated region
    $region29: #{_lambda_.11} parent=5 // pred_check
      _
    $region30: #{_lambda_.11} parent=5 // pred_check_branch
      %169 = sbr.rel (%p166) target = $region32
    $region31: #{_lambda_.11} parent=5 // pred_region
      %s170 = ssub.s32 %s11, 1
      %p171 = scmp.lt.s32.totalorder %s16, 1
      %s172 = scalar_select %p171, %s16, 1
      %s173 = smul.addr %s172, 8
      %s174 = smul.addr %s173, 4
      %s175 = scalar_lea.vmem %s0, %s174
      %p176 = pneg %p37
      %p177 = pneg %p34
      %p178 = pneg %p58
      %p179 = pneg %p55
      %p180 = pneg %p79
      %p181 = pneg %p76
      %p182 = pneg %p105
      %p183 = pneg %p102
      %p184 = scmp.lt.s32.totalorder %s16, 1
      %s185 = scalar_select %p184, %s16, 1
      %s186 = smul.addr %s185, 2
      %s187 = smul.addr %s186, 8
      %s188 = scalar_lea.vmem %s3, %s187
      %p189 = pneg %p131
      %p190 = pneg %p128
      %p191 = scmp.lt.s32.totalorder %s16, 1
      %s192 = scalar_select %p191, %s16, 1
      %s193 = smul.addr %s192, 4
      %s194 = smul.addr %s193, 8
      %s195 = scalar_lea.vmem %s4, %s194
      %p196 = scmp.lt.s32.totalorder %s16, 1
      %s197 = scalar_select %p196, %s16, 1
      %s198 = smul.addr %s197, 8
      %s199 = smul.addr %s198, 4
      %s200 = scalar_lea.vmem %s0, %s199
      %p201 = scmp.lt.s32.totalorder %s16, 1
      %s202 = scalar_select %p201, %s16, 1
      %s203 = smul.addr %s202, 2
      %s204 = smul.addr %s203, 8
      %s205 = scalar_lea.vmem %s3, %s204
      %p206 = scmp.lt.s32.totalorder %s16, 1
      %s207 = scalar_select %p206, %s16, 1
      %s208 = smul.addr %s207, 4
      %s209 = smul.addr %s208, 8
      %s210 = scalar_lea.vmem %s4, %s209
      %v212 = vld [vmem:[%s200] sm:$0xf]
      %213 = vst [vmem:[#allocation2] sm:$0xf] %v212
      %s214 = scalar_lea.vmem %s200, 8
      %v215 = vld [vmem:[%s214] sm:$0xf]
      %216 = vst [vmem:[#allocation2 + $0x4] sm:$0xf] %v215
      %v217 = vld [vmem:[%s200] sm:$0xff]
      %219 = vrot.lane.b32.xlu0 %v217, 127
      %v220 = vpop.permute.xlu0 %219
      %v221 = vrot.slane %v220, 4
      %vm222 = vcmask 1039360
      %v223 = vsel %vm222, %v220, %v221
      %225 = vst [vmem:[#allocation2 + $0x8] sm:$0xf] %v223
      %s226 = scalar_lea.vmem %s200, 16
      %v227 = vld [vmem:[%s226] sm:$0xf]
      %228 = vst [vmem:[#allocation2 + $0xc] sm:$0xf] %v227
      %s229 = scalar_lea.vmem %s200, 24
      %v230 = vld [vmem:[%s229] sm:$0xf]
      %231 = vst [vmem:[#allocation2 + $0x10] sm:$0xf] %v230
      %v232 = vld [vmem:[%s226] sm:$0xff]
      %234 = vrot.lane.b32.xlu0 %v232, 127
      %v235 = vpop.permute.xlu0 %234
      %v236 = vrot.slane %v235, 4
      %v237 = vsel %vm222, %v235, %v236
      %239 = vst [vmem:[#allocation2 + $0x14] sm:$0xf] %v237
      %v240 = vld [vmem:[%s200] sm:$0xff]
      %242 = vrot.lane.b32.xlu0 %v240, 119
      %v243 = vpop.permute.xlu0 %242
      %v244 = vrot.slane %v243, 4
      %vm245 = vcmask 973824
      %v246 = vsel %vm245, %v243, %v244
      %248 = vst [vmem:[#allocation2 + $0x18] sm:$0xf] %v246
      %v249 = vld [vmem:[%s214] sm:$0xff]
      %251 = vrot.lane.b32.xlu0 %v249, 119
      %v252 = vpop.permute.xlu0 %251
      %v253 = vrot.slane %v252, 4
      %v254 = vsel %vm245, %v252, %v253
      %256 = vst [vmem:[#allocation2 + $0x1c] sm:$0xf] %v254
      %v257 = vld [vmem:[%s200] sm:$0xff]
      %259 = vrot.lane.b32.xlu0 %v257, 118
      %v260 = vpop.permute.xlu0 %259
      %v261 = vrot.slane %v260, 4
      %vm262 = vcmask 965632
      %v263 = vsel %vm262, %v260, %v261
      %265 = vst [vmem:[#allocation2 + $0x20] sm:$0xf] %v263
      %v266 = vld [vmem:[%s1] sm:$0xf]
      %v267 = vld [vmem:[%s1 + $0x4] sm:$0xf]
      %v268 = vld [vmem:[#allocation2] sm:$0xf]
      %v269 = vld [vmem:[#allocation2 + $0x4] sm:$0xf]
      %v270 = vld [vmem:[#allocation2 + $0x8] sm:$0xf]
      %v271 = vld [vmem:[#allocation2 + $0xc] sm:$0xf]
      %v272 = vld [vmem:[#allocation2 + $0x10] sm:$0xf]
      %v273 = vld [vmem:[#allocation2 + $0x14] sm:$0xf]
      %v274 = vld [vmem:[#allocation2 + $0x18] sm:$0xf]
      %v275 = vld [vmem:[#allocation2 + $0x1c] sm:$0xf]
      %v276 = vld [vmem:[#allocation2 + $0x20] sm:$0xf]
      %v279 = vunpack.c.l.b16 %v266
      %v280 = vunpack.c.l.b16 %v267
      %v281 = vpack.c.b16 %v280, %v279
      %v291 = vunpack.c.l.b16 %v268
      %v292 = vunpack.c.l.b16 %v269
      %v293 = vunpack.c.l.b16 %v270
      %v294 = vunpack.c.l.b16 %v271
      %v295 = vunpack.c.l.b16 %v272
      %v296 = vunpack.c.l.b16 %v273
      %v297 = vunpack.c.l.b16 %v274
      %v298 = vunpack.c.l.b16 %v275
      %v299 = vunpack.c.l.b16 %v276
      %v300 = vpack.c.b16 %v292, %v291
      %v301 = vpack.c.b16 %v294, %v293
      %v302 = vpack.c.b16 %v296, %v295
      %v303 = vpack.c.b16 %v298, %v297
      %v304 = vpack.c.b16 %v299, %v299
      %vm309 = vcmask 588800
      %v311 = vsel %vm309, %v281, 0
      %vm313 = vcmask 1043456
      %v315 = vsel %vm313, %v304, 0
      %317 = vmatprep.subr.bf16.mxu0 0
      %318 = vmatpush1.bf16.msra.mxu0 %v300
      %319 = vmatprep.subr.bf16.mxu0 0
      %320 = vmatpush1.bf16.msra.mxu0 %v301
      %321 = vmatprep.subr.bf16.mxu0 0
      %322 = vmatpush1.bf16.msra.mxu0 %v302
      %323 = vmatprep.subr.bf16.mxu0 0
      %324 = vmatpush1.bf16.msra.mxu0 %v303
      %325 = vmatprep.subr.bf16.mxu0 0
      %326 = vmatpush1.bf16.msra.mxu0 %v315
      %327 = vmatprep.subr.bf16.mxu0 0
      %328 = vmatpush1.bf16.msra.mxu0 0
      %329 = vmatprep.subr.bf16.mxu0 0
      %330 = vmatpush1.bf16.msra.mxu0 0
      %331 = vmatprep.subr.bf16.mxu0 0
      %332 = vmatpush1.bf16.msra.mxu0 0
      %333 = vmatprep.subr.bf16.mxu0 0
      %334 = vmatpush1.bf16.msra.mxu0 0
      %335 = vmatprep.subr.bf16.mxu0 0
      %336 = vmatpush1.bf16.msra.mxu0 0
      %337 = vmatprep.subr.bf16.mxu0 0
      %338 = vmatpush1.bf16.msra.mxu0 0
      %339 = vmatprep.subr.bf16.mxu0 0
      %340 = vmatpush1.bf16.msra.mxu0 0
      %341 = vmatprep.subr.bf16.mxu0 0
      %342 = vmatpush1.bf16.msra.mxu0 0
      %343 = vmatprep.subr.bf16.mxu0 0
      %344 = vmatpush1.bf16.msra.mxu0 0
      %345 = vmatprep.subr.bf16.mxu0 0
      %346 = vmatpush1.bf16.msra.mxu0 0
      %347 = vmatprep.subr.bf16.mxu0 0
      %348 = vmatpush1.bf16.msra.mxu0 0
      %349 = vmatprep.mubr.bf16.mxu0 0
      %350 = vmatmul.mubr.bf16.gmra.mrb[0].mxu0 %v311
      %v351 = vpop.f32.mrb[0].mxu0
      %v352 = vadd.f32 0.0, %v351
      %v353 = vpop.f32.mrb[0].mxu0
      %v354 = vpop.f32.mrb[0].mxu0
      %v355 = vadd.f32 0.0, %v354
      %v356 = vpop.f32.mrb[0].mxu0
      %357 = vdwg.mxu0
      %358 = vst [vmem:[%s205] sm:$0xff] %v352
      %359 = vst [vmem:[%s205 + $0x8] sm:$0xff] %v355
      %v360 = vld [vmem:[%s2] sm:$0x1]
      %v362 = vlaneseq
      %v363 = vshrl.u32 %v362, 7
      %v364 = vsub.s32 0, %v363
      %v365 = vrot.slane %v360, %v364
      %v367 = vmul.f32 %v352, %v365
      %v368 = vmul.f32 %v355, %v365
      %369 = vadd.xlane.f32.xlu0 %v367
      %v370 = vpop.xlane.xlu0 %369
      %371 = vadd.xlane.f32.xlu0 %v368
      %v372 = vpop.xlane.xlu0 %371
      %vm373 = vcmask 7168
      %374 = vst.msk [vmem:[%s210] sm:$0xff] %vm373, %v370
      %375 = vst.msk [vmem:[%s210 + $0x8] sm:$0xff] %vm373, %v372
      %v376 = vmul.f32 %v367, %v367
      %v377 = vmul.f32 %v368, %v368
      %378 = vadd.xlane.f32.xlu0 %v376
      %v379 = vpop.xlane.xlu0 %378
      %380 = vadd.xlane.f32.xlu0 %v377
      %v381 = vpop.xlane.xlu0 %380
      %s382 = scalar_lea.vmem %s210, 16
      %383 = vst.msk [vmem:[%s382] sm:$0xff] %vm373, %v379
      %384 = vst.msk [vmem:[%s382 + $0x8] sm:$0xff] %vm373, %v381
      %p385 = scmp.lt.s32.totalorder %s16, 1
      %s386 = scalar_select %p385, %s16, 1
      %s387 = smul.addr %s386, 2
      %s388 = smul.addr %s387, 8
      %s389 = scalar_lea.vmem %s3, %s388
      %p390 = scmp.lt.s32.totalorder %s16, 1
      %s391 = scalar_select %p390, %s16, 1
      %s392 = smul.addr %s391, 4
      %s393 = smul.addr %s392, 8
      %s394 = scalar_lea.vmem %s4, %s393
      // Predicated region
      $region33: #{_lambda_.11} parent=31 // pred_check
        %p395 = pneg %p102
      $region34: #{_lambda_.11} parent=31 // pred_check_branch
        %397 = sbr.rel (%p395) target = $region36
      $region35: #{_lambda_.11} parent=31 // pred_region
        _
      $region36: #{_lambda_.11} parent=31 // pred_fallthru
        _
      // Predicated region
      $region37: #{_lambda_.11} parent=31 // pred_check
        %p398 = pneg %p128
      $region38: #{_lambda_.11} parent=31 // pred_check_branch
        %400 = sbr.rel (%p398) target = $region40
      $region39: #{_lambda_.11} parent=31 // pred_region
        _
      $region40: #{_lambda_.11} parent=31 // pred_fallthru
        _
    $region32: #{_lambda_.11} parent=5 // pred_fallthru
      _
    %p401 = scmp.le.s32.totalorder 2, %s11
    // Predicated region
    $region41: #{_lambda_.11} parent=5 // pred_check
      %p402 = pneg %p401
    $region42: #{_lambda_.11} parent=5 // pred_check_branch
      %404 = sbr.rel (%p402) target = $region44
    $region43: #{_lambda_.11} parent=5 // pred_region
      %s405 = ssub.s32 %s11, 2
      // Predicated region
      $region45: #{_lambda_.11} parent=43 // pred_check
        %p406 = pneg %p108
      $region46: #{_lambda_.11} parent=43 // pred_check_branch
        %408 = sbr.rel (%p406) target = $region48
      $region47: #{_lambda_.11} parent=43 // pred_region
        %p409 = scmp.lt.s32.totalorder %s17, 1
        %s410 = scalar_select %p409, %s17, 1
        %s411 = smul.addr %s410, 2
        %s412 = smul.addr %s411, 8
        %s413 = scalar_lea.vmem %s3, %s412
      $region48: #{_lambda_.11} parent=43 // pred_fallthru
        _
      // Predicated region
      $region49: #{_lambda_.11} parent=43 // pred_check
        %p414 = pneg %p134
      $region50: #{_lambda_.11} parent=43 // pred_check_branch
        %416 = sbr.rel (%p414) target = $region52
      $region51: #{_lambda_.11} parent=43 // pred_region
        %p417 = scmp.lt.s32.totalorder %s17, 1
        %s418 = scalar_select %p417, %s17, 1
        %s419 = smul.addr %s418, 4
        %s420 = smul.addr %s419, 8
        %s421 = scalar_lea.vmem %s4, %s420
      $region52: #{_lambda_.11} parent=43 // pred_fallthru
        _
    $region44: #{_lambda_.11} parent=5 // pred_fallthru
      _
  $region6: #{_lambda_.11} parent=0 // loop_footer
    %s15 = sadd.s32 1, %s11
  $region7: #{_lambda_.11} parent=0 // loop_footer_branch
    %10 = sbr.rel target = $region3
  $region8: #{_lambda_.11} parent=0 // loop_exit
    _

// kernel: _lambda_.12
$region0: #{_lambda_.12}
  #allocation0 [shape = 'u32[]', space=smem, size = 0x4, offset = 0x4, fixed_abs, tag = 'smem constant byte address 0x4 - core index']
  #allocation1 [shape = 'u32[144,128]{1,0:T(1,128)}', space=vmem, size = 0x12000, scoped, tag = 'internal scratch']
  #allocation2 [shape = 'bf16[144,128]{1,0:T(16,128)(2,1)}', space=vmem, size = 0x9000, scoped, tag = 'scratch operand']
  %s0 = inlined_call_operand.vmem [shape: bf16[2,4,16,134], index: 0, kind: input, shape index: {}]
  %s1 = inlined_call_operand.vmem [shape: bf16[32,144], index: 1, kind: input, shape index: {}]
  %s2 = inlined_call_operand.vmem [shape: f32[1,128], index: 2, kind: input, shape index: {}]
  %s3 = inlined_call_operand.vmem [shape: f32[2,32,128], index: 3, kind: output, shape index: {0}]
  %s4 = inlined_call_operand.vmem [shape: f32[2,2,32,1], index: 4, kind: output, shape index: {1}]
  %5 = xla_tuple %s3, %s4
  %s6 = sld [smem:[#allocation0]]
  $region53: #{_lambda_.12} parent=0
    _
  %s8 = ssub.s32 1, %s6
  %s9 = scalar_select 0, %s8, %s6
  loop: start=0, step=1, limit=4
  $region2: #{_lambda_.12} parent=0 // loop_pre_header
    _
  $region3: #{_lambda_.12} parent=0 // loop_header
    %s11 = sphi 0, %s15
    %p12 = scmp.ge.s32.totalorder %s11, 4
    %s21 = sphi 0, %s23
    %s24 = sphi 0, %s21
    %s25 = sphi 0, %s24
    %s41 = sphi 0, %s25
    %s45 = sphi 0, %s45
    %s47 = sphi 0, %s45
    %s48 = sphi 0, %s47
    %s62 = sphi 0, %s48
    %s66 = sphi 0, %s66
    %s68 = sphi 0, %s66
    %s69 = sphi 0, %s68
    %s83 = sphi 0, %s69
    %s89 = sphi 0, %s91
    %s92 = sphi 0, %s89
    %s93 = sphi 0, %s92
    %s109 = sphi 0, %s93
    %s115 = sphi 0, %s117
    %s118 = sphi 0, %s115
    %s119 = sphi 0, %s118
    %s135 = sphi 0, %s119
  $region4: #{_lambda_.12} parent=0 // loop_header_branch
    %14 = sbr.rel (%p12) target = $region8
  $region5: #{_lambda_.12} parent=0 // loop_body
    %s16 = ssub.s32 %s11, 1
    %s17 = ssub.s32 %s11, 2
    %s18 = sadd.s32 %s11, 1
    %s19 = ssub.s32 %s11, %s18
    %p20 = scmp.eq.s32.totalorder %s19, 0
    %s22 = sadd.s32 %s21, 1
    %s23 = scalar_select %p20, %s21, %s22
    %p26 = pneg %p20
    %p27 = scmp.eq.s32.totalorder %s11, 1
    %p28 = por %p26, %p27
    %p29 = scmp.ne.s32.totalorder %s21, %s24
    %p30 = scmp.eq.s32.totalorder %s11, 0
    %p31 = por %p29, %p30
    %p32 = scmp.ne.s32.totalorder %s21, %s24
    %p33 = scmp.eq.s32.totalorder %s16, 1
    %p34 = por %p32, %p33
    %p35 = scmp.ne.s32.totalorder %s24, %s25
    %p36 = scmp.eq.s32.totalorder %s16, 0
    %p37 = por %p35, %p36
    %p38 = scmp.ne.s32.totalorder %s24, %s25
    %p39 = scmp.eq.s32.totalorder %s17, 1
    %p40 = por %p38, %p39
    %p42 = scmp.ne.s32.totalorder %s25, %s41
    %p43 = scmp.eq.s32.totalorder %s17, 0
    %p44 = por %p42, %p43
    %s46 = sadd.s32 %s45, 1
    %p49 = scmp.eq.s32.totalorder %s11, 1
    %p50 = scmp.ne.s32.totalorder %s45, %s47
    %p51 = scmp.eq.s32.totalorder %s11, 0
    %p52 = por %p50, %p51
    %p53 = scmp.ne.s32.totalorder %s45, %s47
    %p54 = scmp.eq.s32.totalorder %s16, 1
    %p55 = por %p53, %p54
    %p56 = scmp.ne.s32.totalorder %s47, %s48
    %p57 = scmp.eq.s32.totalorder %s16, 0
    %p58 = por %p56, %p57
    %p59 = scmp.ne.s32.totalorder %s47, %s48
    %p60 = scmp.eq.s32.totalorder %s17, 1
    %p61 = por %p59, %p60
    %p63 = scmp.ne.s32.totalorder %s48, %s62
    %p64 = scmp.eq.s32.totalorder %s17, 0
    %p65 = por %p63, %p64
    %s67 = sadd.s32 %s66, 1
    %p70 = scmp.eq.s32.totalorder %s11, 1
    %p71 = scmp.ne.s32.totalorder %s66, %s68
    %p72 = scmp.eq.s32.totalorder %s11, 0
    %p73 = por %p71, %p72
    %p74 = scmp.ne.s32.totalorder %s66, %s68
    %p75 = scmp.eq.s32.totalorder %s16, 1
    %p76 = por %p74, %p75
    %p77 = scmp.ne.s32.totalorder %s68, %s69
    %p78 = scmp.eq.s32.totalorder %s16, 0
    %p79 = por %p77, %p78
    %p80 = scmp.ne.s32.totalorder %s68, %s69
    %p81 = scmp.eq.s32.totalorder %s17, 1
    %p82 = por %p80, %p81
    %p84 = scmp.ne.s32.totalorder %s69, %s83
    %p85 = scmp.eq.s32.totalorder %s17, 0
    %p86 = por %p84, %p85
    %s87 = ssub.s32 %s11, %s18
    %p88 = scmp.eq.s32.totalorder %s87, 0
    %s90 = sadd.s32 %s89, 1
    %s91 = scalar_select %p88, %s89, %s90
    %p94 = pneg %p88
    %p95 = scmp.eq.s32.totalorder %s11, 1
    %p96 = por %p94, %p95
    %p97 = scmp.ne.s32.totalorder %s89, %s92
    %p98 = scmp.eq.s32.totalorder %s11, 0
    %p99 = por %p97, %p98
    %p100 = scmp.ne.s32.totalorder %s89, %s92
    %p101 = scmp.eq.s32.totalorder %s16, 1
    %p102 = por %p100, %p101
    %p103 = scmp.ne.s32.totalorder %s92, %s93
    %p104 = scmp.eq.s32.totalorder %s16, 0
    %p105 = por %p103, %p104
    %p106 = scmp.ne.s32.totalorder %s92, %s93
    %p107 = scmp.eq.s32.totalorder %s17, 1
    %p108 = por %p106, %p107
    %p110 = scmp.ne.s32.totalorder %s93, %s109
    %p111 = scmp.eq.s32.totalorder %s17, 0
    %p112 = por %p110, %p111
    %s113 = ssub.s32 %s11, %s18
    %p114 = scmp.eq.s32.totalorder %s113, 0
    %s116 = sadd.s32 %s115, 1
    %s117 = scalar_select %p114, %s115, %s116
    %p120 = pneg %p114
    %p121 = scmp.eq.s32.totalorder %s11, 1
    %p122 = por %p120, %p121
    %p123 = scmp.ne.s32.totalorder %s115, %s118
    %p124 = scmp.eq.s32.totalorder %s11, 0
    %p125 = por %p123, %p124
    %p126 = scmp.ne.s32.totalorder %s115, %s118
    %p127 = scmp.eq.s32.totalorder %s16, 1
    %p128 = por %p126, %p127
    %p129 = scmp.ne.s32.totalorder %s118, %s119
    %p130 = scmp.eq.s32.totalorder %s16, 0
    %p131 = por %p129, %p130
    %p132 = scmp.ne.s32.totalorder %s118, %s119
    %p133 = scmp.eq.s32.totalorder %s17, 1
    %p134 = por %p132, %p133
    %p136 = scmp.ne.s32.totalorder %s119, %s135
    %p137 = scmp.eq.s32.totalorder %s17, 0
    %p138 = por %p136, %p137
    %p139 = scmp.le.s32.totalorder 1, %s11
    %p140 = scmp.lt.s32.totalorder %s11, 3
    %p141 = pnand %p139, %p140
    %p142 = pneg %p141
    // Predicated region
    $region9: #{_lambda_.12} parent=5 // pred_check
      _
    $region10: #{_lambda_.12} parent=5 // pred_check_branch
      %144 = sbr.rel (%p141) target = $region12
    $region11: #{_lambda_.12} parent=5 // pred_region
      %s145 = ssub.s32 %s11, 1
      // Predicated region
      $region13: #{_lambda_.12} parent=11 // pred_check
        %p146 = pneg %p58
      $region14: #{_lambda_.12} parent=11 // pred_check_branch
        %148 = sbr.rel (%p146) target = $region16
      $region15: #{_lambda_.12} parent=11 // pred_region
        _
      $region16: #{_lambda_.12} parent=11 // pred_fallthru
        _
      // Predicated region
      $region17: #{_lambda_.12} parent=11 // pred_check
        %p149 = pneg %p79
      $region18: #{_lambda_.12} parent=11 // pred_check_branch
        %151 = sbr.rel (%p149) target = $region20
      $region19: #{_lambda_.12} parent=11 // pred_region
        _
      $region20: #{_lambda_.12} parent=11 // pred_fallthru
        _
    $region12: #{_lambda_.12} parent=5 // pred_fallthru
      _
    %p152 = scmp.lt.s32.totalorder %s11, 2
    // Predicated region
    $region21: #{_lambda_.12} parent=5 // pred_check
      %p153 = pneg %p152
    $region22: #{_lambda_.12} parent=5 // pred_check_branch
      %155 = sbr.rel (%p153) target = $region24
    $region23: #{_lambda_.12} parent=5 // pred_region
      // Predicated region
      $region25: #{_lambda_.12} parent=23 // pred_check
        %p156 = pneg %p31
      $region26: #{_lambda_.12} parent=23 // pred_check_branch
        %158 = sbr.rel (%p156) target = $region28
      $region27: #{_lambda_.12} parent=23 // pred_region
        %p159 = scmp.lt.s32.totalorder %s11, 1
        %s160 = scalar_select %p159, %s11, 1
        %s161 = smul.addr %s160, 16
        %s162 = smul.addr %s161, 4
        %s163 = scalar_lea.vmem %s0, %s162
      $region28: #{_lambda_.12} parent=23 // pred_fallthru
        _
    $region24: #{_lambda_.12} parent=5 // pred_fallthru
      _
    %p164 = scmp.le.s32.totalorder 1, %s11
    %p165 = scmp.lt.s32.totalorder %s11, 3
    %p166 = pnand %p164, %p165
    %p167 = pneg %p166
    // Predicated region
    $region29: #{_lambda_.12} parent=5 // pred_check
      _
    $region30: #{_lambda_.12} parent=5 // pred_check_branch
      %169 = sbr.rel (%p166) target = $region32
    $region31: #{_lambda_.12} parent=5 // pred_region
      %s170 = ssub.s32 %s11, 1
      %p171 = scmp.lt.s32.totalorder %s16, 1
      %s172 = scalar_select %p171, %s16, 1
      %s173 = smul.addr %s172, 16
      %s174 = smul.addr %s173, 4
      %s175 = scalar_lea.vmem %s0, %s174
      %p176 = pneg %p37
      %p177 = pneg %p34
      %p178 = pneg %p58
      %p179 = pneg %p55
      %p180 = pneg %p79
      %p181 = pneg %p76
      %p182 = pneg %p105
      %p183 = pneg %p102
      %p184 = scmp.lt.s32.totalorder %s16, 1
      %s185 = scalar_select %p184, %s16, 1
      %s186 = smul.addr %s185, 4
      %s187 = smul.addr %s186, 8
      %s188 = scalar_lea.vmem %s3, %s187
      %p189 = pneg %p131
      %p190 = pneg %p128
      %p191 = scmp.lt.s32.totalorder %s16, 1
      %s192 = scalar_select %p191, %s16, 1
      %s193 = smul.addr %s192, 8
      %s194 = smul.addr %s193, 8
      %s195 = scalar_lea.vmem %s4, %s194
      %p196 = scmp.lt.s32.totalorder %s16, 1
      %s197 = scalar_select %p196, %s16, 1
      %s198 = smul.addr %s197, 16
      %s199 = smul.addr %s198, 4
      %s200 = scalar_lea.vmem %s0, %s199
      %p201 = scmp.lt.s32.totalorder %s16, 1
      %s202 = scalar_select %p201, %s16, 1
      %s203 = smul.addr %s202, 4
      %s204 = smul.addr %s203, 8
      %s205 = scalar_lea.vmem %s3, %s204
      %p206 = scmp.lt.s32.totalorder %s16, 1
      %s207 = scalar_select %p206, %s16, 1
      %s208 = smul.addr %s207, 8
      %s209 = smul.addr %s208, 8
      %s210 = scalar_lea.vmem %s4, %s209
      %v212 = vld [vmem:[%s200] sm:$0xf]
      %v213 = vld [vmem:[%s200 + $0x8] sm:$0xf]
      %v216 = vunpack.c.l.b16 %v212
      %v217 = vunpack.c.l.b16 %v213
      %v218 = vpack.c.b16 %v217, %v216
      %220 = vst [vmem:[#allocation2] sm:$0xff] %v218
      %s221 = scalar_lea.vmem %s200, 16
      %v222 = vld [vmem:[%s221] sm:$0xf]
      %v223 = vld [vmem:[%s221 + $0x8] sm:$0xf]
      %v226 = vunpack.c.l.b16 %v222
      %v227 = vunpack.c.l.b16 %v223
      %v228 = vpack.c.b16 %v227, %v226
      %230 = vst [vmem:[#allocation2 + $0x8] sm:$0xff] %v228
      %v231 = vld [vmem:[%s200] sm:$0xff]
      %v232 = vld [vmem:[%s200 + $0x8] sm:$0xff]
      %v235 = vunpack.c.l.b16 %v231
      %v236 = vunpack.c.h.b16 %v231
      %v237 = vunpack.c.l.b16 %v232
      %v238 = vunpack.c.h.b16 %v232
      %v239 = vpack.c.b16 %v237, %v235
      %v240 = vpack.c.b16 %v238, %v236
      %241 = vrot.lane.b32.xlu0 %v239, 127
      %v242 = vpop.permute.xlu0 %241
      %243 = vrot.lane.b32.xlu0 %v240, 127
      %v244 = vpop.permute.xlu0 %243
      %vm245 = vcmask 1039360
      %v246 = vsel %vm245, %v242, %v244
      %248 = vst [vmem:[#allocation2 + $0x10] sm:$0xff] %v246
      %s249 = scalar_lea.vmem %s200, 32
      %v250 = vld [vmem:[%s249] sm:$0xf]
      %v251 = vld [vmem:[%s249 + $0x8] sm:$0xf]
      %v254 = vunpack.c.l.b16 %v250
      %v255 = vunpack.c.l.b16 %v251
      %v256 = vpack.c.b16 %v255, %v254
      %258 = vst [vmem:[#allocation2 + $0x18] sm:$0xff] %v256
      %s259 = scalar_lea.vmem %s200, 48
      %v260 = vld [vmem:[%s259] sm:$0xf]
      %v261 = vld [vmem:[%s259 + $0x8] sm:$0xf]
      %v264 = vunpack.c.l.b16 %v260
      %v265 = vunpack.c.l.b16 %v261
      %v266 = vpack.c.b16 %v265, %v264
      %268 = vst [vmem:[#allocation2 + $0x20] sm:$0xff] %v266
      %v269 = vld [vmem:[%s249] sm:$0xff]
      %v270 = vld [vmem:[%s249 + $0x8] sm:$0xff]
      %v273 = vunpack.c.l.b16 %v269
      %v274 = vunpack.c.h.b16 %v269
      %v275 = vunpack.c.l.b16 %v270
      %v276 = vunpack.c.h.b16 %v270
      %v277 = vpack.c.b16 %v275, %v273
      %v278 = vpack.c.b16 %v276, %v274
      %279 = vrot.lane.b32.xlu0 %v277, 127
      %v280 = vpop.permute.xlu0 %279
      %281 = vrot.lane.b32.xlu0 %v278, 127
      %v282 = vpop.permute.xlu0 %281
      %v283 = vsel %vm245, %v280, %v282
      %285 = vst [vmem:[#allocation2 + $0x28] sm:$0xff] %v283
      %v286 = vld [vmem:[%s200] sm:$0xff]
      %v287 = vld [vmem:[%s200 + $0x8] sm:$0xff]
      %v290 = vunpack.c.l.b16 %v286
      %v291 = vunpack.c.h.b16 %v286
      %v292 = vunpack.c.l.b16 %v287
      %v293 = vunpack.c.h.b16 %v287
      %v294 = vpack.c.b16 %v292, %v290
      %v295 = vpack.c.b16 %v293, %v291
      %296 = vrot.lane.b32.xlu0 %v294, 123
      %v297 = vpop.permute.xlu0 %296
      %298 = vrot.lane.b32.xlu0 %v295, 123
      %v299 = vpop.permute.xlu0 %298
      %vm300 = vcmask 1006592
      %v301 = vsel %vm300, %v297, %v299
      %303 = vst [vmem:[#allocation2 + $0x30] sm:$0xff] %v301
      %v304 = vld [vmem:[%s221] sm:$0xff]
      %v305 = vld [vmem:[%s221 + $0x8] sm:$0xff]
      %v308 = vunpack.c.l.b16 %v304
      %v309 = vunpack.c.h.b16 %v304
      %v310 = vunpack.c.l.b16 %v305
      %v311 = vunpack.c.h.b16 %v305
      %v312 = vpack.c.b16 %v310, %v308
      %v313 = vpack.c.b16 %v311, %v309
      %314 = vrot.lane.b32.xlu0 %v312, 123
      %v315 = vpop.permute.xlu0 %314
      %316 = vrot.lane.b32.xlu0 %v313, 123
      %v317 = vpop.permute.xlu0 %316
      %v318 = vsel %vm300, %v315, %v317
      %320 = vst [vmem:[#allocation2 + $0x38] sm:$0xff] %v318
      %v321 = vld [vmem:[%s200] sm:$0xff]
      %v322 = vld [vmem:[%s200 + $0x8] sm:$0xff]
      %v325 = vunpack.c.l.b16 %v321
      %v326 = vunpack.c.h.b16 %v321
      %v327 = vunpack.c.l.b16 %v322
      %v328 = vunpack.c.h.b16 %v322
      %v329 = vpack.c.b16 %v327, %v325
      %v330 = vpack.c.b16 %v328, %v326
      %331 = vrot.lane.b32.xlu0 %v329, 122
      %v332 = vpop.permute.xlu0 %331
      %333 = vrot.lane.b32.xlu0 %v330, 122
      %v334 = vpop.permute.xlu0 %333
      %vm335 = vcmask 998400
      %v336 = vsel %vm335, %v332, %v334
      %338 = vst [vmem:[#allocation2 + $0x40] sm:$0xff] %v336
      %v339 = vld [vmem:[%s1] sm:$0xff]
      %v340 = vld [vmem:[%s1 + $0x8] sm:$0xff]
      %v341 = vld [vmem:[%s1 + $0x10] sm:$0xff]
      %v342 = vld [vmem:[%s1 + $0x18] sm:$0xff]
      %v343 = vld [vmem:[#allocation2] sm:$0xff]
      %v344 = vld [vmem:[#allocation2 + $0x8] sm:$0xff]
      %v345 = vld [vmem:[#allocation2 + $0x10] sm:$0xff]
      %v346 = vld [vmem:[#allocation2 + $0x18] sm:$0xff]
      %v347 = vld [vmem:[#allocation2 + $0x20] sm:$0xff]
      %v348 = vld [vmem:[#allocation2 + $0x28] sm:$0xff]
      %v349 = vld [vmem:[#allocation2 + $0x30] sm:$0xff]
      %v350 = vld [vmem:[#allocation2 + $0x38] sm:$0xff]
      %v351 = vld [vmem:[#allocation2 + $0x40] sm:$0xff]
      %v356 = vunpack.c.l.b16 %v339
      %v357 = vunpack.c.h.b16 %v339
      %v358 = vunpack.c.l.b16 %v340
      %v359 = vunpack.c.h.b16 %v340
      %v360 = vunpack.c.l.b16 %v341
      %v361 = vunpack.c.h.b16 %v341
      %v362 = vunpack.c.l.b16 %v342
      %v363 = vunpack.c.h.b16 %v342
      %v364 = vpack.c.b16 %v358, %v356
      %v365 = vpack.c.b16 %v359, %v357
      %v366 = vpack.c.b16 %v362, %v360
      %v367 = vpack.c.b16 %v363, %v361
      %vm370 = vcmask 130048
      %v372 = vsel %vm370, %v365, 0
      %v375 = vsel %vm370, %v367, 0
      %377 = vmatprep.subr.bf16.mxu0 0
      %378 = vmatpush1.bf16.msra.mxu0 %v343
      %379 = vmatprep.subr.bf16.mxu0 0
      %380 = vmatpush1.bf16.msra.mxu0 %v344
      %381 = vmatprep.subr.bf16.mxu0 0
      %382 = vmatpush1.bf16.msra.mxu0 %v345
      %383 = vmatprep.subr.bf16.mxu0 0
      %384 = vmatpush1.bf16.msra.mxu0 %v346
      %385 = vmatprep.subr.bf16.mxu0 0
      %386 = vmatpush1.bf16.msra.mxu0 %v347
      %387 = vmatprep.subr.bf16.mxu0 0
      %388 = vmatpush1.bf16.msra.mxu0 %v348
      %389 = vmatprep.subr.bf16.mxu0 0
      %390 = vmatpush1.bf16.msra.mxu0 %v349
      %391 = vmatprep.subr.bf16.mxu0 0
      %392 = vmatpush1.bf16.msra.mxu0 %v350
      %393 = vmatprep.subr.bf16.mxu0 0
      %394 = vmatpush1.bf16.msra.mxu0 %v351
      %395 = vmatprep.subr.bf16.mxu0 0
      %396 = vmatpush1.bf16.msra.mxu0 0
      %397 = vmatprep.subr.bf16.mxu0 0
      %398 = vmatpush1.bf16.msra.mxu0 0
      %399 = vmatprep.subr.bf16.mxu0 0
      %400 = vmatpush1.bf16.msra.mxu0 0
      %401 = vmatprep.subr.bf16.mxu0 0
      %402 = vmatpush1.bf16.msra.mxu0 0
      %403 = vmatprep.subr.bf16.mxu0 0
      %404 = vmatpush1.bf16.msra.mxu0 0
      %405 = vmatprep.subr.bf16.mxu0 0
      %406 = vmatpush1.bf16.msra.mxu0 0
      %407 = vmatprep.subr.bf16.mxu0 0
      %408 = vmatpush1.bf16.msra.mxu0 0
      %409 = vmatprep.mubr.bf16.mxu0 %v372
      %410 = vmatmul.mubr.bf16.gmra.mrb[0].mxu0 %v364
      %v411 = vpop.f32.mrb[0].mxu0
      %v412 = vadd.f32 0.0, %v411
      %v413 = vpop.f32.mrb[0].mxu0
      %v414 = vpop.f32.mrb[0].mxu0
      %v415 = vadd.f32 0.0, %v414
      %v416 = vpop.f32.mrb[0].mxu0
      %417 = vmatprep.mubr.bf16.mxu0 %v375
      %418 = vmatmul.mubr.bf16.gmra.mrb[0].mxu0 %v366
      %v419 = vpop.f32.mrb[0].mxu0
      %v420 = vadd.f32 0.0, %v419
      %v421 = vpop.f32.mrb[0].mxu0
      %v422 = vpop.f32.mrb[0].mxu0
      %v423 = vadd.f32 0.0, %v422
      %v424 = vpop.f32.mrb[0].mxu0
      %425 = vdwg.mxu0
      %426 = vst [vmem:[%s205] sm:$0xff] %v412
      %427 = vst [vmem:[%s205 + $0x8] sm:$0xff] %v415
      %428 = vst [vmem:[%s205 + $0x10] sm:$0xff] %v420
      %429 = vst [vmem:[%s205 + $0x18] sm:$0xff] %v423
      %v430 = vld [vmem:[%s2] sm:$0x1]
      %v432 = vlaneseq
      %v433 = vshrl.u32 %v432, 7
      %v434 = vsub.s32 0, %v433
      %v435 = vrot.slane %v430, %v434
      %v437 = vmul.f32 %v412, %v435
      %v438 = vmul.f32 %v415, %v435
      %v439 = vmul.f32 %v420, %v435
      %v440 = vmul.f32 %v423, %v435
      %441 = vadd.xlane.f32.xlu0 %v437
      %v442 = vpop.xlane.xlu0 %441
      %443 = vadd.xlane.f32.xlu0 %v438
      %v444 = vpop.xlane.xlu0 %443
      %445 = vadd.xlane.f32.xlu0 %v439
      %v446 = vpop.xlane.xlu0 %445
      %447 = vadd.xlane.f32.xlu0 %v440
      %v448 = vpop.xlane.xlu0 %447
      %vm449 = vcmask 7168
      %450 = vst.msk [vmem:[%s210] sm:$0xff] %vm449, %v442
      %451 = vst.msk [vmem:[%s210 + $0x8] sm:$0xff] %vm449, %v444
      %452 = vst.msk [vmem:[%s210 + $0x10] sm:$0xff] %vm449, %v446
      %453 = vst.msk [vmem:[%s210 + $0x18] sm:$0xff] %vm449, %v448
      %v454 = vmul.f32 %v437, %v437
      %v455 = vmul.f32 %v438, %v438
      %v456 = vmul.f32 %v439, %v439
      %v457 = vmul.f32 %v440, %v440
      %458 = vadd.xlane.f32.xlu0 %v454
      %v459 = vpop.xlane.xlu0 %458
      %460 = vadd.xlane.f32.xlu0 %v455
      %v461 = vpop.xlane.xlu0 %460
      %462 = vadd.xlane.f32.xlu0 %v456
      %v463 = vpop.xlane.xlu0 %462
      %464 = vadd.xlane.f32.xlu0 %v457
      %v465 = vpop.xlane.xlu0 %464
      %s466 = scalar_lea.vmem %s210, 32
      %467 = vst.msk [vmem:[%s466] sm:$0xff] %vm449, %v459
      %468 = vst.msk [vmem:[%s466 + $0x8] sm:$0xff] %vm449, %v461
      %469 = vst.msk [vmem:[%s466 + $0x10] sm:$0xff] %vm449, %v463
      %470 = vst.msk [vmem:[%s466 + $0x18] sm:$0xff] %vm449, %v465
      %p471 = scmp.lt.s32.totalorder %s16, 1
      %s472 = scalar_select %p471, %s16, 1
      %s473 = smul.addr %s472, 4
      %s474 = smul.addr %s473, 8
      %s475 = scalar_lea.vmem %s3, %s474
      %p476 = scmp.lt.s32.totalorder %s16, 1
      %s477 = scalar_select %p476, %s16, 1
      %s478 = smul.addr %s477, 8
      %s479 = smul.addr %s478, 8
      %s480 = scalar_lea.vmem %s4, %s479
      // Predicated region
      $region33: #{_lambda_.12} parent=31 // pred_check
        %p481 = pneg %p102
      $region34: #{_lambda_.12} parent=31 // pred_check_branch
        %483 = sbr.rel (%p481) target = $region36
      $region35: #{_lambda_.12} parent=31 // pred_region
        _
      $region36: #{_lambda_.12} parent=31 // pred_fallthru
        _
      // Predicated region
      $region37: #{_lambda_.12} parent=31 // pred_check
        %p484 = pneg %p128
      $region38: #{_lambda_.12} parent=31 // pred_check_branch
        %486 = sbr.rel (%p484) target = $region40
      $region39: #{_lambda_.12} parent=31 // pred_region
        _
      $region40: #{_lambda_.12} parent=31 // pred_fallthru
        _
    $region32: #{_lambda_.12} parent=5 // pred_fallthru
      _
    %p487 = scmp.le.s32.totalorder 2, %s11
    // Predicated region
    $region41: #{_lambda_.12} parent=5 // pred_check
      %p488 = pneg %p487
    $region42: #{_lambda_.12} parent=5 // pred_check_branch
      %490 = sbr.rel (%p488) target = $region44
    $region43: #{_lambda_.12} parent=5 // pred_region
      %s491 = ssub.s32 %s11, 2
      // Predicated region
      $region45: #{_lambda_.12} parent=43 // pred_check
        %p492 = pneg %p108
      $region46: #{_lambda_.12} parent=43 // pred_check_branch
        %494 = sbr.rel (%p492) target = $region48
      $region47: #{_lambda_.12} parent=43 // pred_region
        %p495 = scmp.lt.s32.totalorder %s17, 1
        %s496 = scalar_select %p495, %s17, 1
        %s497 = smul.addr %s496, 4
        %s498 = smul.addr %s497, 8
        %s499 = scalar_lea.vmem %s3, %s498
      $region48: #{_lambda_.12} parent=43 // pred_fallthru
        _
      // Predicated region
      $region49: #{_lambda_.12} parent=43 // pred_check
        %p500 = pneg %p134
      $region50: #{_lambda_.12} parent=43 // pred_check_branch
        %502 = sbr.rel (%p500) target = $region52
      $region51: #{_lambda_.12} parent=43 // pred_region
        %p503 = scmp.lt.s32.totalorder %s17, 1
        %s504 = scalar_select %p503, %s17, 1
        %s505 = smul.addr %s504, 8
        %s506 = smul.addr %s505, 8
        %s507 = scalar_lea.vmem %s4, %s506
      $region52: #{_lambda_.12} parent=43 // pred_fallthru
        _
    $region44: #{_lambda_.12} parent=5 // pred_fallthru
      _
  $region6: #{_lambda_.12} parent=0 // loop_footer
    %s15 = sadd.s32 1, %s11
  $region7: #{_lambda_.12} parent=0 // loop_footer_branch
    %10 = sbr.rel target = $region3
  $region8: #{_lambda_.12} parent=0 // loop_exit
    _

// kernel: _lambda_.13
$region0: #{_lambda_.13}
  #allocation0 [shape = 'u32[]', space=smem, size = 0x4, offset = 0x4, fixed_abs, tag = 'smem constant byte address 0x4 - core index']
  #allocation1 [shape = 'u32[144,128]{1,0:T(1,128)}', space=vmem, size = 0x12000, scoped, tag = 'internal scratch']
  #allocation2 [shape = 'bf16[288,128]{1,0:T(16,128)(2,1)}', space=vmem, size = 0x12000, scoped, tag = 'scratch operand']
  %s0 = inlined_call_operand.vmem [shape: bf16[2,1,32,142], index: 0, kind: input, shape index: {}]
  %s1 = inlined_call_operand.vmem [shape: bf16[32,288], index: 1, kind: input, shape index: {}]
  %s2 = inlined_call_operand.vmem [shape: f32[1,128], index: 2, kind: input, shape index: {}]
  %s3 = inlined_call_operand.vmem [shape: f32[2,32,128], index: 3, kind: output, shape index: {0}]
  %s4 = inlined_call_operand.vmem [shape: f32[2,2,32,1], index: 4, kind: output, shape index: {1}]
  %5 = xla_tuple %s3, %s4
  %s6 = sld [smem:[#allocation0]]
  $region53: #{_lambda_.13} parent=0
    _
  %s8 = ssub.s32 1, %s6
  %s9 = scalar_select 0, %s8, %s6
  loop: start=0, step=1, limit=4
  $region2: #{_lambda_.13} parent=0 // loop_pre_header
    _
  $region3: #{_lambda_.13} parent=0 // loop_header
    %s11 = sphi 0, %s15
    %p12 = scmp.ge.s32.totalorder %s11, 4
    %s21 = sphi 0, %s23
    %s24 = sphi 0, %s21
    %s25 = sphi 0, %s24
    %s41 = sphi 0, %s25
    %s45 = sphi 0, %s45
    %s47 = sphi 0, %s45
    %s48 = sphi 0, %s47
    %s62 = sphi 0, %s48
    %s66 = sphi 0, %s66
    %s68 = sphi 0, %s66
    %s69 = sphi 0, %s68
    %s83 = sphi 0, %s69
    %s89 = sphi 0, %s91
    %s92 = sphi 0, %s89
    %s93 = sphi 0, %s92
    %s109 = sphi 0, %s93
    %s115 = sphi 0, %s117
    %s118 = sphi 0, %s115
    %s119 = sphi 0, %s118
    %s135 = sphi 0, %s119
  $region4: #{_lambda_.13} parent=0 // loop_header_branch
    %14 = sbr.rel (%p12) target = $region8
  $region5: #{_lambda_.13} parent=0 // loop_body
    %s16 = ssub.s32 %s11, 1
    %s17 = ssub.s32 %s11, 2
    %s18 = sadd.s32 %s11, 1
    %s19 = ssub.s32 %s11, %s18
    %p20 = scmp.eq.s32.totalorder %s19, 0
    %s22 = sadd.s32 %s21, 1
    %s23 = scalar_select %p20, %s21, %s22
    %p26 = pneg %p20
    %p27 = scmp.eq.s32.totalorder %s11, 1
    %p28 = por %p26, %p27
    %p29 = scmp.ne.s32.totalorder %s21, %s24
    %p30 = scmp.eq.s32.totalorder %s11, 0
    %p31 = por %p29, %p30
    %p32 = scmp.ne.s32.totalorder %s21, %s24
    %p33 = scmp.eq.s32.totalorder %s16, 1
    %p34 = por %p32, %p33
    %p35 = scmp.ne.s32.totalorder %s24, %s25
    %p36 = scmp.eq.s32.totalorder %s16, 0
    %p37 = por %p35, %p36
    %p38 = scmp.ne.s32.totalorder %s24, %s25
    %p39 = scmp.eq.s32.totalorder %s17, 1
    %p40 = por %p38, %p39
    %p42 = scmp.ne.s32.totalorder %s25, %s41
    %p43 = scmp.eq.s32.totalorder %s17, 0
    %p44 = por %p42, %p43
    %s46 = sadd.s32 %s45, 1
    %p49 = scmp.eq.s32.totalorder %s11, 1
    %p50 = scmp.ne.s32.totalorder %s45, %s47
    %p51 = scmp.eq.s32.totalorder %s11, 0
    %p52 = por %p50, %p51
    %p53 = scmp.ne.s32.totalorder %s45, %s47
    %p54 = scmp.eq.s32.totalorder %s16, 1
    %p55 = por %p53, %p54
    %p56 = scmp.ne.s32.totalorder %s47, %s48
    %p57 = scmp.eq.s32.totalorder %s16, 0
    %p58 = por %p56, %p57
    %p59 = scmp.ne.s32.totalorder %s47, %s48
    %p60 = scmp.eq.s32.totalorder %s17, 1
    %p61 = por %p59, %p60
    %p63 = scmp.ne.s32.totalorder %s48, %s62
    %p64 = scmp.eq.s32.totalorder %s17, 0
    %p65 = por %p63, %p64
    %s67 = sadd.s32 %s66, 1
    %p70 = scmp.eq.s32.totalorder %s11, 1
    %p71 = scmp.ne.s32.totalorder %s66, %s68
    %p72 = scmp.eq.s32.totalorder %s11, 0
    %p73 = por %p71, %p72
    %p74 = scmp.ne.s32.totalorder %s66, %s68
    %p75 = scmp.eq.s32.totalorder %s16, 1
    %p76 = por %p74, %p75
    %p77 = scmp.ne.s32.totalorder %s68, %s69
    %p78 = scmp.eq.s32.totalorder %s16, 0
    %p79 = por %p77, %p78
    %p80 = scmp.ne.s32.totalorder %s68, %s69
    %p81 = scmp.eq.s32.totalorder %s17, 1
    %p82 = por %p80, %p81
    %p84 = scmp.ne.s32.totalorder %s69, %s83
    %p85 = scmp.eq.s32.totalorder %s17, 0
    %p86 = por %p84, %p85
    %s87 = ssub.s32 %s11, %s18
    %p88 = scmp.eq.s32.totalorder %s87, 0
    %s90 = sadd.s32 %s89, 1
    %s91 = scalar_select %p88, %s89, %s90
    %p94 = pneg %p88
    %p95 = scmp.eq.s32.totalorder %s11, 1
    %p96 = por %p94, %p95
    %p97 = scmp.ne.s32.totalorder %s89, %s92
    %p98 = scmp.eq.s32.totalorder %s11, 0
    %p99 = por %p97, %p98
    %p100 = scmp.ne.s32.totalorder %s89, %s92
    %p101 = scmp.eq.s32.totalorder %s16, 1
    %p102 = por %p100, %p101
    %p103 = scmp.ne.s32.totalorder %s92, %s93
    %p104 = scmp.eq.s32.totalorder %s16, 0
    %p105 = por %p103, %p104
    %p106 = scmp.ne.s32.totalorder %s92, %s93
    %p107 = scmp.eq.s32.totalorder %s17, 1
    %p108 = por %p106, %p107
    %p110 = scmp.ne.s32.totalorder %s93, %s109
    %p111 = scmp.eq.s32.totalorder %s17, 0
    %p112 = por %p110, %p111
    %s113 = ssub.s32 %s11, %s18
    %p114 = scmp.eq.s32.totalorder %s113, 0
    %s116 = sadd.s32 %s115, 1
    %s117 = scalar_select %p114, %s115, %s116
    %p120 = pneg %p114
    %p121 = scmp.eq.s32.totalorder %s11, 1
    %p122 = por %p120, %p121
    %p123 = scmp.ne.s32.totalorder %s115, %s118
    %p124 = scmp.eq.s32.totalorder %s11, 0
    %p125 = por %p123, %p124
    %p126 = scmp.ne.s32.totalorder %s115, %s118
    %p127 = scmp.eq.s32.totalorder %s16, 1
    %p128 = por %p126, %p127
    %p129 = scmp.ne.s32.totalorder %s118, %s119
    %p130 = scmp.eq.s32.totalorder %s16, 0
    %p131 = por %p129, %p130
    %p132 = scmp.ne.s32.totalorder %s118, %s119
    %p133 = scmp.eq.s32.totalorder %s17, 1
    %p134 = por %p132, %p133
    %p136 = scmp.ne.s32.totalorder %s119, %s135
    %p137 = scmp.eq.s32.totalorder %s17, 0
    %p138 = por %p136, %p137
    %p139 = scmp.le.s32.totalorder 1, %s11
    %p140 = scmp.lt.s32.totalorder %s11, 3
    %p141 = pnand %p139, %p140
    %p142 = pneg %p141
    // Predicated region
    $region9: #{_lambda_.13} parent=5 // pred_check
      _
    $region10: #{_lambda_.13} parent=5 // pred_check_branch
      %144 = sbr.rel (%p141) target = $region12
    $region11: #{_lambda_.13} parent=5 // pred_region
      %s145 = ssub.s32 %s11, 1
      // Predicated region
      $region13: #{_lambda_.13} parent=11 // pred_check
        %p146 = pneg %p58
      $region14: #{_lambda_.13} parent=11 // pred_check_branch
        %148 = sbr.rel (%p146) target = $region16
      $region15: #{_lambda_.13} parent=11 // pred_region
        _
      $region16: #{_lambda_.13} parent=11 // pred_fallthru
        _
      // Predicated region
      $region17: #{_lambda_.13} parent=11 // pred_check
        %p149 = pneg %p79
      $region18: #{_lambda_.13} parent=11 // pred_check_branch
        %151 = sbr.rel (%p149) target = $region20
      $region19: #{_lambda_.13} parent=11 // pred_region
        _
      $region20: #{_lambda_.13} parent=11 // pred_fallthru
        _
    $region12: #{_lambda_.13} parent=5 // pred_fallthru
      _
    %p152 = scmp.lt.s32.totalorder %s11, 2
    // Predicated region
    $region21: #{_lambda_.13} parent=5 // pred_check
      %p153 = pneg %p152
    $region22: #{_lambda_.13} parent=5 // pred_check_branch
      %155 = sbr.rel (%p153) target = $region24
    $region23: #{_lambda_.13} parent=5 // pred_region
      // Predicated region
      $region25: #{_lambda_.13} parent=23 // pred_check
        %p156 = pneg %p31
      $region26: #{_lambda_.13} parent=23 // pred_check_branch
        %158 = sbr.rel (%p156) target = $region28
      $region27: #{_lambda_.13} parent=23 // pred_region
        %p159 = scmp.lt.s32.totalorder %s11, 1
        %s160 = scalar_select %p159, %s11, 1
        %s161 = smul.addr %s160, 8
        %s162 = smul.addr %s161, 4
        %s163 = scalar_lea.vmem %s0, %s162
      $region28: #{_lambda_.13} parent=23 // pred_fallthru
        _
    $region24: #{_lambda_.13} parent=5 // pred_fallthru
      _
    %p164 = scmp.le.s32.totalorder 1, %s11
    %p165 = scmp.lt.s32.totalorder %s11, 3
    %p166 = pnand %p164, %p165
    %p167 = pneg %p166
    // Predicated region
    $region29: #{_lambda_.13} parent=5 // pred_check
      _
    $region30: #{_lambda_.13} parent=5 // pred_check_branch
      %169 = sbr.rel (%p166) target = $region32
    $region31: #{_lambda_.13} parent=5 // pred_region
      %s170 = ssub.s32 %s11, 1
      %p171 = scmp.lt.s32.totalorder %s16, 1
      %s172 = scalar_select %p171, %s16, 1
      %s173 = smul.addr %s172, 8
      %s174 = smul.addr %s173, 4
      %s175 = scalar_lea.vmem %s0, %s174
      %p176 = pneg %p37
      %p177 = pneg %p34
      %p178 = pneg %p58
      %p179 = pneg %p55
      %p180 = pneg %p79
      %p181 = pneg %p76
      %p182 = pneg %p105
      %p183 = pneg %p102
      %p184 = scmp.lt.s32.totalorder %s16, 1
      %s185 = scalar_select %p184, %s16, 1
      %s186 = smul.addr %s185, 4
      %s187 = smul.addr %s186, 8
      %s188 = scalar_lea.vmem %s3, %s187
      %p189 = pneg %p131
      %p190 = pneg %p128
      %p191 = scmp.lt.s32.totalorder %s16, 1
      %s192 = scalar_select %p191, %s16, 1
      %s193 = smul.addr %s192, 8
      %s194 = smul.addr %s193, 8
      %s195 = scalar_lea.vmem %s4, %s194
      %p196 = scmp.lt.s32.totalorder %s16, 1
      %s197 = scalar_select %p196, %s16, 1
      %s198 = smul.addr %s197, 8
      %s199 = smul.addr %s198, 4
      %s200 = scalar_lea.vmem %s0, %s199
      %p201 = scmp.lt.s32.totalorder %s16, 1
      %s202 = scalar_select %p201, %s16, 1
      %s203 = smul.addr %s202, 4
      %s204 = smul.addr %s203, 8
      %s205 = scalar_lea.vmem %s3, %s204
      %p206 = scmp.lt.s32.totalorder %s16, 1
      %s207 = scalar_select %p206, %s16, 1
      %s208 = smul.addr %s207, 8
      %s209 = smul.addr %s208, 8
      %s210 = scalar_lea.vmem %s4, %s209
      %v212 = vld [vmem:[%s200] sm:$0xf]
      %v213 = vld [vmem:[%s200 + $0x8] sm:$0xf]
      %v214 = vld [vmem:[%s200 + $0x10] sm:$0xf]
      %v215 = vld [vmem:[%s200 + $0x18] sm:$0xf]
      %v220 = vunpack.c.l.b16 %v212
      %v221 = vunpack.c.l.b16 %v213
      %v222 = vunpack.c.l.b16 %v214
      %v223 = vunpack.c.l.b16 %v215
      %v224 = vpack.c.b16 %v221, %v220
      %v225 = vpack.c.b16 %v223, %v222
      %228 = vst [vmem:[#allocation2] sm:$0xff] %v224
      %229 = vst [vmem:[#allocation2 + $0x8] sm:$0xff] %v225
      %v230 = vld [vmem:[%s200] sm:$0xff]
      %v231 = vld [vmem:[%s200 + $0x8] sm:$0xff]
      %v232 = vld [vmem:[%s200 + $0x10] sm:$0xff]
      %v233 = vld [vmem:[%s200 + $0x18] sm:$0xff]
      %v238 = vunpack.c.l.b16 %v230
      %v239 = vunpack.c.h.b16 %v230
      %v240 = vunpack.c.l.b16 %v231
      %v241 = vunpack.c.h.b16 %v231
      %v242 = vunpack.c.l.b16 %v232
      %v243 = vunpack.c.h.b16 %v232
      %v244 = vunpack.c.l.b16 %v233
      %v245 = vunpack.c.h.b16 %v233
      %v246 = vpack.c.b16 %v240, %v238
      %v247 = vpack.c.b16 %v241, %v239
      %v248 = vpack.c.b16 %v244, %v242
      %v249 = vpack.c.b16 %v245, %v243
      %250 = vrot.lane.b32.xlu0 %v246, 127
      %v251 = vpop.permute.xlu0 %250
      %252 = vrot.lane.b32.xlu0 %v247, 127
      %v253 = vpop.permute.xlu0 %252
      %254 = vrot.lane.b32.xlu0 %v248, 127
      %v255 = vpop.permute.xlu0 %254
      %256 = vrot.lane.b32.xlu0 %v249, 127
      %v257 = vpop.permute.xlu0 %256
      %vm258 = vcmask 1039360
      %v259 = vsel %vm258, %v251, %v253
      %v260 = vsel %vm258, %v255, %v257
      %263 = vst [vmem:[#allocation2 + $0x10] sm:$0xff] %v259
      %264 = vst [vmem:[#allocation2 + $0x18] sm:$0xff] %v260
      %v265 = vld [vmem:[%s200] sm:$0xff]
      %v266 = vld [vmem:[%s200 + $0x8] sm:$0xff]
      %v267 = vld [vmem:[%s200 + $0x10] sm:$0xff]
      %v268 = vld [vmem:[%s200 + $0x18] sm:$0xff]
      %v273 = vunpack.c.l.b16 %v265
      %v274 = vunpack.c.h.b16 %v265
      %v275 = vunpack.c.l.b16 %v266
      %v276 = vunpack.c.h.b16 %v266
      %v277 = vunpack.c.l.b16 %v267
      %v278 = vunpack.c.h.b16 %v267
      %v279 = vunpack.c.l.b16 %v268
      %v280 = vunpack.c.h.b16 %v268
      %v281 = vpack.c.b16 %v275, %v273
      %v282 = vpack.c.b16 %v276, %v274
      %v283 = vpack.c.b16 %v279, %v277
      %v284 = vpack.c.b16 %v280, %v278
      %285 = vrot.lane.b32.xlu0 %v281, 126
      %v286 = vpop.permute.xlu0 %285
      %287 = vrot.lane.b32.xlu0 %v282, 126
      %v288 = vpop.permute.xlu0 %287
      %289 = vrot.lane.b32.xlu0 %v283, 126
      %v290 = vpop.permute.xlu0 %289
      %291 = vrot.lane.b32.xlu0 %v284, 126
      %v292 = vpop.permute.xlu0 %291
      %vm293 = vcmask 1031168
      %v294 = vsel %vm293, %v286, %v288
      %v295 = vsel %vm293, %v290, %v292
      %298 = vst [vmem:[#allocation2 + $0x20] sm:$0xff] %v294
      %299 = vst [vmem:[#allocation2 + $0x28] sm:$0xff] %v295
      %v300 = vld [vmem:[%s200] sm:$0xff]
      %v301 = vld [vmem:[%s200 + $0x8] sm:$0xff]
      %v302 = vld [vmem:[%s200 + $0x10] sm:$0xff]
      %v303 = vld [vmem:[%s200 + $0x18] sm:$0xff]
      %v308 = vunpack.c.l.b16 %v300
      %v309 = vunpack.c.h.b16 %v300
      %v310 = vunpack.c.l.b16 %v301
      %v311 = vunpack.c.h.b16 %v301
      %v312 = vunpack.c.l.b16 %v302
      %v313 = vunpack.c.h.b16 %v302
      %v314 = vunpack.c.l.b16 %v303
      %v315 = vunpack.c.h.b16 %v303
      %v316 = vpack.c.b16 %v310, %v308
      %v317 = vpack.c.b16 %v311, %v309
      %v318 = vpack.c.b16 %v314, %v312
      %v319 = vpack.c.b16 %v315, %v313
      %320 = vrot.lane.b32.xlu0 %v316, 122
      %v321 = vpop.permute.xlu0 %320
      %322 = vrot.lane.b32.xlu0 %v317, 122
      %v323 = vpop.permute.xlu0 %322
      %324 = vrot.lane.b32.xlu0 %v318, 122
      %v325 = vpop.permute.xlu0 %324
      %326 = vrot.lane.b32.xlu0 %v319, 122
      %v327 = vpop.permute.xlu0 %326
      %vm328 = vcmask 998400
      %v329 = vsel %vm328, %v321, %v323
      %v330 = vsel %vm328, %v325, %v327
      %333 = vst [vmem:[#allocation2 + $0x30] sm:$0xff] %v329
      %334 = vst [vmem:[#allocation2 + $0x38] sm:$0xff] %v330
      %v335 = vld [vmem:[%s200] sm:$0xff]
      %v336 = vld [vmem:[%s200 + $0x8] sm:$0xff]
      %v337 = vld [vmem:[%s200 + $0x10] sm:$0xff]
      %v338 = vld [vmem:[%s200 + $0x18] sm:$0xff]
      %v343 = vunpack.c.l.b16 %v335
      %v344 = vunpack.c.h.b16 %v335
      %v345 = vunpack.c.l.b16 %v336
      %v346 = vunpack.c.h.b16 %v336
      %v347 = vunpack.c.l.b16 %v337
      %v348 = vunpack.c.h.b16 %v337
      %v349 = vunpack.c.l.b16 %v338
      %v350 = vunpack.c.h.b16 %v338
      %v351 = vpack.c.b16 %v345, %v343
      %v352 = vpack.c.b16 %v346, %v344
      %v353 = vpack.c.b16 %v349, %v347
      %v354 = vpack.c.b16 %v350, %v348
      %355 = vrot.lane.b32.xlu0 %v351, 121
      %v356 = vpop.permute.xlu0 %355
      %357 = vrot.lane.b32.xlu0 %v352, 121
      %v358 = vpop.permute.xlu0 %357
      %359 = vrot.lane.b32.xlu0 %v353, 121
      %v360 = vpop.permute.xlu0 %359
      %361 = vrot.lane.b32.xlu0 %v354, 121
      %v362 = vpop.permute.xlu0 %361
      %vm363 = vcmask 990208
      %v364 = vsel %vm363, %v356, %v358
      %v365 = vsel %vm363, %v360, %v362
      %368 = vst [vmem:[#allocation2 + $0x40] sm:$0xff] %v364
      %369 = vst [vmem:[#allocation2 + $0x48] sm:$0xff] %v365
      %v370 = vld [vmem:[%s200] sm:$0xff]
      %v371 = vld [vmem:[%s200 + $0x8] sm:$0xff]
      %v372 = vld [vmem:[%s200 + $0x10] sm:$0xff]
      %v373 = vld [vmem:[%s200 + $0x18] sm:$0xff]
      %v378 = vunpack.c.l.b16 %v370
      %v379 = vunpack.c.h.b16 %v370
      %v380 = vunpack.c.l.b16 %v371
      %v381 = vunpack.c.h.b16 %v371
      %v382 = vunpack.c.l.b16 %v372
      %v383 = vunpack.c.h.b16 %v372
      %v384 = vunpack.c.l.b16 %v373
      %v385 = vunpack.c.h.b16 %v373
      %v386 = vpack.c.b16 %v380, %v378
      %v387 = vpack.c.b16 %v381, %v379
      %v388 = vpack.c.b16 %v384, %v382
      %v389 = vpack.c.b16 %v385, %v383
      %390 = vrot.lane.b32.xlu0 %v386, 120
      %v391 = vpop.permute.xlu0 %390
      %392 = vrot.lane.b32.xlu0 %v387, 120
      %v393 = vpop.permute.xlu0 %392
      %394 = vrot.lane.b32.xlu0 %v388, 120
      %v395 = vpop.permute.xlu0 %394
      %396 = vrot.lane.b32.xlu0 %v389, 120
      %v397 = vpop.permute.xlu0 %396
      %vm398 = vcmask 982016
      %v399 = vsel %vm398, %v391, %v393
      %v400 = vsel %vm398, %v395, %v397
      %403 = vst [vmem:[#allocation2 + $0x50] sm:$0xff] %v399
      %404 = vst [vmem:[#allocation2 + $0x58] sm:$0xff] %v400
      %v405 = vld [vmem:[%s200] sm:$0xff]
      %v406 = vld [vmem:[%s200 + $0x8] sm:$0xff]
      %v407 = vld [vmem:[%s200 + $0x10] sm:$0xff]
      %v408 = vld [vmem:[%s200 + $0x18] sm:$0xff]
      %v413 = vunpack.c.l.b16 %v405
      %v414 = vunpack.c.h.b16 %v405
      %v415 = vunpack.c.l.b16 %v406
      %v416 = vunpack.c.h.b16 %v406
      %v417 = vunpack.c.l.b16 %v407
      %v418 = vunpack.c.h.b16 %v407
      %v419 = vunpack.c.l.b16 %v408
      %v420 = vunpack.c.h.b16 %v408
      %v421 = vpack.c.b16 %v415, %v413
      %v422 = vpack.c.b16 %v416, %v414
      %v423 = vpack.c.b16 %v419, %v417
      %v424 = vpack.c.b16 %v420, %v418
      %425 = vrot.lane.b32.xlu0 %v421, 116
      %v426 = vpop.permute.xlu0 %425
      %427 = vrot.lane.b32.xlu0 %v422, 116
      %v428 = vpop.permute.xlu0 %427
      %429 = vrot.lane.b32.xlu0 %v423, 116
      %v430 = vpop.permute.xlu0 %429
      %431 = vrot.lane.b32.xlu0 %v424, 116
      %v432 = vpop.permute.xlu0 %431
      %vm433 = vcmask 949248
      %v434 = vsel %vm433, %v426, %v428
      %v435 = vsel %vm433, %v430, %v432
      %438 = vst [vmem:[#allocation2 + $0x60] sm:$0xff] %v434
      %439 = vst [vmem:[#allocation2 + $0x68] sm:$0xff] %v435
      %v440 = vld [vmem:[%s200] sm:$0xff]
      %v441 = vld [vmem:[%s200 + $0x8] sm:$0xff]
      %v442 = vld [vmem:[%s200 + $0x10] sm:$0xff]
      %v443 = vld [vmem:[%s200 + $0x18] sm:$0xff]
      %v448 = vunpack.c.l.b16 %v440
      %v449 = vunpack.c.h.b16 %v440
      %v450 = vunpack.c.l.b16 %v441
      %v451 = vunpack.c.h.b16 %v441
      %v452 = vunpack.c.l.b16 %v442
      %v453 = vunpack.c.h.b16 %v442
      %v454 = vunpack.c.l.b16 %v443
      %v455 = vunpack.c.h.b16 %v443
      %v456 = vpack.c.b16 %v450, %v448
      %v457 = vpack.c.b16 %v451, %v449
      %v458 = vpack.c.b16 %v454, %v452
      %v459 = vpack.c.b16 %v455, %v453
      %460 = vrot.lane.b32.xlu0 %v456, 115
      %v461 = vpop.permute.xlu0 %460
      %462 = vrot.lane.b32.xlu0 %v457, 115
      %v463 = vpop.permute.xlu0 %462
      %464 = vrot.lane.b32.xlu0 %v458, 115
      %v465 = vpop.permute.xlu0 %464
      %466 = vrot.lane.b32.xlu0 %v459, 115
      %v467 = vpop.permute.xlu0 %466
      %vm468 = vcmask 941056
      %v469 = vsel %vm468, %v461, %v463
      %v470 = vsel %vm468, %v465, %v467
      %473 = vst [vmem:[#allocation2 + $0x70] sm:$0xff] %v469
      %474 = vst [vmem:[#allocation2 + $0x78] sm:$0xff] %v470
      %v475 = vld [vmem:[%s200] sm:$0xff]
      %v476 = vld [vmem:[%s200 + $0x8] sm:$0xff]
      %v477 = vld [vmem:[%s200 + $0x10] sm:$0xff]
      %v478 = vld [vmem:[%s200 + $0x18] sm:$0xff]
      %v483 = vunpack.c.l.b16 %v475
      %v484 = vunpack.c.h.b16 %v475
      %v485 = vunpack.c.l.b16 %v476
      %v486 = vunpack.c.h.b16 %v476
      %v487 = vunpack.c.l.b16 %v477
      %v488 = vunpack.c.h.b16 %v477
      %v489 = vunpack.c.l.b16 %v478
      %v490 = vunpack.c.h.b16 %v478
      %v491 = vpack.c.b16 %v485, %v483
      %v492 = vpack.c.b16 %v486, %v484
      %v493 = vpack.c.b16 %v489, %v487
      %v494 = vpack.c.b16 %v490, %v488
      %495 = vrot.lane.b32.xlu0 %v491, 114
      %v496 = vpop.permute.xlu0 %495
      %497 = vrot.lane.b32.xlu0 %v492, 114
      %v498 = vpop.permute.xlu0 %497
      %499 = vrot.lane.b32.xlu0 %v493, 114
      %v500 = vpop.permute.xlu0 %499
      %501 = vrot.lane.b32.xlu0 %v494, 114
      %v502 = vpop.permute.xlu0 %501
      %vm503 = vcmask 932864
      %v504 = vsel %vm503, %v496, %v498
      %v505 = vsel %vm503, %v500, %v502
      %508 = vst [vmem:[#allocation2 + $0x80] sm:$0xff] %v504
      %509 = vst [vmem:[#allocation2 + $0x88] sm:$0xff] %v505
      %v510 = vld [vmem:[%s1] sm:$0xff]
      %v511 = vld [vmem:[%s1 + $0x8] sm:$0xf]
      %v512 = vld [vmem:[%s1 + $0xc] sm:$0xff]
      %v513 = vld [vmem:[%s1 + $0x14] sm:$0xf]
      %v514 = vld [vmem:[%s1 + $0x18] sm:$0xff]
      %v515 = vld [vmem:[%s1 + $0x20] sm:$0xf]
      %v516 = vld [vmem:[%s1 + $0x24] sm:$0xff]
      %v517 = vld [vmem:[%s1 + $0x2c] sm:$0xf]
      %v518 = vld [vmem:[#allocation2] sm:$0xff]
      %v519 = vld [vmem:[#allocation2 + $0x8] sm:$0xff]
      %v520 = vld [vmem:[#allocation2 + $0x10] sm:$0xff]
      %v521 = vld [vmem:[#allocation2 + $0x18] sm:$0xff]
      %v522 = vld [vmem:[#allocation2 + $0x20] sm:$0xff]
      %v523 = vld [vmem:[#allocation2 + $0x28] sm:$0xff]
      %v524 = vld [vmem:[#allocation2 + $0x30] sm:$0xff]
      %v525 = vld [vmem:[#allocation2 + $0x38] sm:$0xff]
      %v526 = vld [vmem:[#allocation2 + $0x40] sm:$0xff]
      %v527 = vld [vmem:[#allocation2 + $0x48] sm:$0xff]
      %v528 = vld [vmem:[#allocation2 + $0x50] sm:$0xff]
      %v529 = vld [vmem:[#allocation2 + $0x58] sm:$0xff]
      %v530 = vld [vmem:[#allocation2 + $0x60] sm:$0xff]
      %v531 = vld [vmem:[#allocation2 + $0x68] sm:$0xff]
      %v532 = vld [vmem:[#allocation2 + $0x70] sm:$0xff]
      %v533 = vld [vmem:[#allocation2 + $0x78] sm:$0xff]
      %v534 = vld [vmem:[#allocation2 + $0x80] sm:$0xff]
      %v535 = vld [vmem:[#allocation2 + $0x88] sm:$0xff]
      %v544 = vunpack.c.l.b16 %v510
      %v545 = vunpack.c.h.b16 %v510
      %v546 = vunpack.c.l.b16 %v511
      %v547 = vunpack.c.l.b16 %v512
      %v548 = vunpack.c.h.b16 %v512
      %v549 = vunpack.c.l.b16 %v513
      %v550 = vunpack.c.l.b16 %v514
      %v551 = vunpack.c.h.b16 %v514
      %v552 = vunpack.c.l.b16 %v515
      %v553 = vunpack.c.l.b16 %v516
      %v554 = vunpack.c.h.b16 %v516
      %v555 = vunpack.c.l.b16 %v517
      %v556 = vpack.c.b16 %v547, %v544
      %v557 = vpack.c.b16 %v548, %v545
      %v558 = vpack.c.b16 %v549, %v546
      %v559 = vpack.c.b16 %v553, %v550
      %v560 = vpack.c.b16 %v554, %v551
      %v561 = vpack.c.b16 %v555, %v552
      %vm566 = vcmask 261120
      %v568 = vsel %vm566, %v558, 0
      %v571 = vsel %vm566, %v561, 0
      %573 = vmatprep.subr.bf16.mxu0 0
      %574 = vmatpush1.bf16.msra.mxu0 %v518
      %575 = vmatprep.subr.bf16.mxu0 0
      %576 = vmatpush1.bf16.msra.mxu0 %v519
      %577 = vmatprep.subr.bf16.mxu0 0
      %578 = vmatpush1.bf16.msra.mxu0 %v520
      %579 = vmatprep.subr.bf16.mxu0 0
      %580 = vmatpush1.bf16.msra.mxu0 %v521
      %581 = vmatprep.subr.bf16.mxu0 0
      %582 = vmatpush1.bf16.msra.mxu0 %v522
      %583 = vmatprep.subr.bf16.mxu0 0
      %584 = vmatpush1.bf16.msra.mxu0 %v523
      %585 = vmatprep.subr.bf16.mxu0 0
      %586 = vmatpush1.bf16.msra.mxu0 %v524
      %587 = vmatprep.subr.bf16.mxu0 0
      %588 = vmatpush1.bf16.msra.mxu0 %v525
      %589 = vmatprep.subr.bf16.mxu0 0
      %590 = vmatpush1.bf16.msra.mxu0 %v526
      %591 = vmatprep.subr.bf16.mxu0 0
      %592 = vmatpush1.bf16.msra.mxu0 %v527
      %593 = vmatprep.subr.bf16.mxu0 0
      %594 = vmatpush1.bf16.msra.mxu0 %v528
      %595 = vmatprep.subr.bf16.mxu0 0
      %596 = vmatpush1.bf16.msra.mxu0 %v529
      %597 = vmatprep.subr.bf16.mxu0 0
      %598 = vmatpush1.bf16.msra.mxu0 %v530
      %599 = vmatprep.subr.bf16.mxu0 0
      %600 = vmatpush1.bf16.msra.mxu0 %v531
      %601 = vmatprep.subr.bf16.mxu0 0
      %602 = vmatpush1.bf16.msra.mxu0 %v532
      %603 = vmatprep.subr.bf16.mxu0 0
      %604 = vmatpush1.bf16.msra.mxu0 %v533
      %605 = vmatprep.mubr.bf16.mxu0 %v557
      %606 = vmatmul.mubr.bf16.gmra.mrb[0].mxu0 %v556
      %v607 = vpop.f32.mrb[0].mxu0
      %v608 = vadd.f32 0.0, %v607
      %v609 = vpop.f32.mrb[0].mxu0
      %v610 = vpop.f32.mrb[0].mxu0
      %v611 = vadd.f32 0.0, %v610
      %v612 = vpop.f32.mrb[0].mxu0
      %613 = vmatprep.mubr.bf16.mxu0 %v560
      %614 = vmatmul.mubr.bf16.gmra.mrb[0].mxu0 %v559
      %v615 = vpop.f32.mrb[0].mxu0
      %v616 = vadd.f32 0.0, %v615
      %v617 = vpop.f32.mrb[0].mxu0
      %v618 = vpop.f32.mrb[0].mxu0
      %v619 = vadd.f32 0.0, %v618
      %v620 = vpop.f32.mrb[0].mxu0
      %621 = vdwg.mxu0
      %622 = vmatprep.subr.bf16.mxu0 0
      %623 = vmatpush1.bf16.msra.mxu0 %v534
      %624 = vmatprep.subr.bf16.mxu0 0
      %625 = vmatpush1.bf16.msra.mxu0 %v535
      %626 = vmatprep.subr.bf16.mxu0 0
      %627 = vmatpush1.bf16.msra.mxu0 0
      %628 = vmatprep.subr.bf16.mxu0 0
      %629 = vmatpush1.bf16.msra.mxu0 0
      %630 = vmatprep.subr.bf16.mxu0 0
      %631 = vmatpush1.bf16.msra.mxu0 0
      %632 = vmatprep.subr.bf16.mxu0 0
      %633 = vmatpush1.bf16.msra.mxu0 0
      %634 = vmatprep.subr.bf16.mxu0 0
      %635 = vmatpush1.bf16.msra.mxu0 0
      %636 = vmatprep.subr.bf16.mxu0 0
      %637 = vmatpush1.bf16.msra.mxu0 0
      %638 = vmatprep.subr.bf16.mxu0 0
      %639 = vmatpush1.bf16.msra.mxu0 0
      %640 = vmatprep.subr.bf16.mxu0 0
      %641 = vmatpush1.bf16.msra.mxu0 0
      %642 = vmatprep.subr.bf16.mxu0 0
      %643 = vmatpush1.bf16.msra.mxu0 0
      %644 = vmatprep.subr.bf16.mxu0 0
      %645 = vmatpush1.bf16.msra.mxu0 0
      %646 = vmatprep.subr.bf16.mxu0 0
      %647 = vmatpush1.bf16.msra.mxu0 0
      %648 = vmatprep.subr.bf16.mxu0 0
      %649 = vmatpush1.bf16.msra.mxu0 0
      %650 = vmatprep.subr.bf16.mxu0 0
      %651 = vmatpush1.bf16.msra.mxu0 0
      %652 = vmatprep.subr.bf16.mxu0 0
      %653 = vmatpush1.bf16.msra.mxu0 0
      %654 = vmatprep.mubr.bf16.mxu0 0
      %655 = vmatmul.mubr.bf16.gmra.mrb[0].mxu0 %v568
      %v656 = vpop.f32.mrb[0].mxu0
      %v657 = vadd.f32 %v608, %v656
      %v658 = vpop.f32.mrb[0].mxu0
      %v659 = vpop.f32.mrb[0].mxu0
      %v660 = vadd.f32 %v611, %v659
      %v661 = vpop.f32.mrb[0].mxu0
      %662 = vmatprep.mubr.bf16.mxu0 0
      %663 = vmatmul.mubr.bf16.gmra.mrb[0].mxu0 %v571
      %v664 = vpop.f32.mrb[0].mxu0
      %v665 = vadd.f32 %v616, %v664
      %v666 = vpop.f32.mrb[0].mxu0
      %v667 = vpop.f32.mrb[0].mxu0
      %v668 = vadd.f32 %v619, %v667
      %v669 = vpop.f32.mrb[0].mxu0
      %670 = vdwg.mxu0
      %671 = vst [vmem:[%s205] sm:$0xff] %v657
      %672 = vst [vmem:[%s205 + $0x8] sm:$0xff] %v660
      %673 = vst [vmem:[%s205 + $0x10] sm:$0xff] %v665
      %674 = vst [vmem:[%s205 + $0x18] sm:$0xff] %v668
      %v675 = vld [vmem:[%s2] sm:$0x1]
      %v677 = vlaneseq
      %v678 = vshrl.u32 %v677, 7
      %v679 = vsub.s32 0, %v678
      %v680 = vrot.slane %v675, %v679
      %v682 = vmul.f32 %v657, %v680
      %v683 = vmul.f32 %v660, %v680
      %v684 = vmul.f32 %v665, %v680
      %v685 = vmul.f32 %v668, %v680
      %686 = vadd.xlane.f32.xlu0 %v682
      %v687 = vpop.xlane.xlu0 %686
      %688 = vadd.xlane.f32.xlu0 %v683
      %v689 = vpop.xlane.xlu0 %688
      %690 = vadd.xlane.f32.xlu0 %v684
      %v691 = vpop.xlane.xlu0 %690
      %692 = vadd.xlane.f32.xlu0 %v685
      %v693 = vpop.xlane.xlu0 %692
      %vm694 = vcmask 7168
      %695 = vst.msk [vmem:[%s210] sm:$0xff] %vm694, %v687
      %696 = vst.msk [vmem:[%s210 + $0x8] sm:$0xff] %vm694, %v689
      %697 = vst.msk [vmem:[%s210 + $0x10] sm:$0xff] %vm694, %v691
      %698 = vst.msk [vmem:[%s210 + $0x18] sm:$0xff] %vm694, %v693
      %v699 = vmul.f32 %v682, %v682
      %v700 = vmul.f32 %v683, %v683
      %v701 = vmul.f32 %v684, %v684
      %v702 = vmul.f32 %v685, %v685
      %703 = vadd.xlane.f32.xlu0 %v699
      %v704 = vpop.xlane.xlu0 %703
      %705 = vadd.xlane.f32.xlu0 %v700
      %v706 = vpop.xlane.xlu0 %705
      %707 = vadd.xlane.f32.xlu0 %v701
      %v708 = vpop.xlane.xlu0 %707
      %709 = vadd.xlane.f32.xlu0 %v702
      %v710 = vpop.xlane.xlu0 %709
      %s711 = scalar_lea.vmem %s210, 32
      %712 = vst.msk [vmem:[%s711] sm:$0xff] %vm694, %v704
      %713 = vst.msk [vmem:[%s711 + $0x8] sm:$0xff] %vm694, %v706
      %714 = vst.msk [vmem:[%s711 + $0x10] sm:$0xff] %vm694, %v708
      %715 = vst.msk [vmem:[%s711 + $0x18] sm:$0xff] %vm694, %v710
      %p716 = scmp.lt.s32.totalorder %s16, 1
      %s717 = scalar_select %p716, %s16, 1
      %s718 = smul.addr %s717, 4
      %s719 = smul.addr %s718, 8
      %s720 = scalar_lea.vmem %s3, %s719
      %p721 = scmp.lt.s32.totalorder %s16, 1
      %s722 = scalar_select %p721, %s16, 1
      %s723 = smul.addr %s722, 8
      %s724 = smul.addr %s723, 8
      %s725 = scalar_lea.vmem %s4, %s724
      // Predicated region
      $region33: #{_lambda_.13} parent=31 // pred_check
        %p726 = pneg %p102
      $region34: #{_lambda_.13} parent=31 // pred_check_branch
        %728 = sbr.rel (%p726) target = $region36
      $region35: #{_lambda_.13} parent=31 // pred_region
        _
      $region36: #{_lambda_.13} parent=31 // pred_fallthru
        _
      // Predicated region
      $region37: #{_lambda_.13} parent=31 // pred_check
        %p729 = pneg %p128
      $region38: #{_lambda_.13} parent=31 // pred_check_branch
        %731 = sbr.rel (%p729) target = $region40
      $region39: #{_lambda_.13} parent=31 // pred_region
        _
      $region40: #{_lambda_.13} parent=31 // pred_fallthru
        _
    $region32: #{_lambda_.13} parent=5 // pred_fallthru
      _
    %p732 = scmp.le.s32.totalorder 2, %s11
    // Predicated region
    $region41: #{_lambda_.13} parent=5 // pred_check
      %p733 = pneg %p732
    $region42: #{_lambda_.13} parent=5 // pred_check_branch
      %735 = sbr.rel (%p733) target = $region44
    $region43: #{_lambda_.13} parent=5 // pred_region
      %s736 = ssub.s32 %s11, 2
      // Predicated region
      $region45: #{_lambda_.13} parent=43 // pred_check
        %p737 = pneg %p108
      $region46: #{_lambda_.13} parent=43 // pred_check_branch
        %739 = sbr.rel (%p737) target = $region48
      $region47: #{_lambda_.13} parent=43 // pred_region
        %p740 = scmp.lt.s32.totalorder %s17, 1
        %s741 = scalar_select %p740, %s17, 1
        %s742 = smul.addr %s741, 4
        %s743 = smul.addr %s742, 8
        %s744 = scalar_lea.vmem %s3, %s743
      $region48: #{_lambda_.13} parent=43 // pred_fallthru
        _
      // Predicated region
      $region49: #{_lambda_.13} parent=43 // pred_check
        %p745 = pneg %p134
      $region50: #{_lambda_.13} parent=43 // pred_check_branch
        %747 = sbr.rel (%p745) target = $region52
      $region51: #{_lambda_.13} parent=43 // pred_region
        %p748 = scmp.lt.s32.totalorder %s17, 1
        %s749 = scalar_select %p748, %s17, 1
        %s750 = smul.addr %s749, 8
        %s751 = smul.addr %s750, 8
        %s752 = scalar_lea.vmem %s4, %s751
      $region52: #{_lambda_.13} parent=43 // pred_fallthru
        _
    $region44: #{_lambda_.13} parent=5 // pred_fallthru
      _
  $region6: #{_lambda_.13} parent=0 // loop_footer
    %s15 = sadd.s32 1, %s11
  $region7: #{_lambda_.13} parent=0 // loop_footer_branch
    %10 = sbr.rel target = $region3
  $region8: #{_lambda_.13} parent=0 // loop_exit
    _

// kernel: _lambda_.17
$region0: #{_lambda_.17}
  #allocation0 [shape = 'u32[]', space=smem, size = 0x4, offset = 0x4, fixed_abs, tag = 'smem constant byte address 0x4 - core index']
  #allocation1 [shape = 'u32[144,128]{1,0:T(1,128)}', space=vmem, size = 0x12000, scoped, tag = 'internal scratch']
  #allocation2 [shape = 'bf16[288,128]{1,0:T(16,128)(2,1)}', space=vmem, size = 0x12000, scoped, tag = 'scratch operand']
  %s0 = inlined_call_operand.vmem [shape: bf16[2,1,32,150], index: 0, kind: input, shape index: {}]
  %s1 = inlined_call_operand.vmem [shape: bf16[16,288], index: 1, kind: input, shape index: {}]
  %s2 = inlined_call_operand.vmem [shape: f32[1,128], index: 2, kind: input, shape index: {}]
  %s3 = inlined_call_operand.vmem [shape: f32[2,16,128], index: 3, kind: output, shape index: {0}]
  %s4 = inlined_call_operand.vmem [shape: f32[2,2,16,1], index: 4, kind: output, shape index: {1}]
  %5 = xla_tuple %s3, %s4
  %s6 = sld [smem:[#allocation0]]
  $region53: #{_lambda_.17} parent=0
    _
  %s8 = ssub.s32 1, %s6
  %s9 = scalar_select 0, %s8, %s6
  loop: start=0, step=1, limit=4
  $region2: #{_lambda_.17} parent=0 // loop_pre_header
    _
  $region3: #{_lambda_.17} parent=0 // loop_header
    %s11 = sphi 0, %s15
    %p12 = scmp.ge.s32.totalorder %s11, 4
    %s21 = sphi 0, %s23
    %s24 = sphi 0, %s21
    %s25 = sphi 0, %s24
    %s41 = sphi 0, %s25
    %s45 = sphi 0, %s45
    %s47 = sphi 0, %s45
    %s48 = sphi 0, %s47
    %s62 = sphi 0, %s48
    %s66 = sphi 0, %s66
    %s68 = sphi 0, %s66
    %s69 = sphi 0, %s68
    %s83 = sphi 0, %s69
    %s89 = sphi 0, %s91
    %s92 = sphi 0, %s89
    %s93 = sphi 0, %s92
    %s109 = sphi 0, %s93
    %s115 = sphi 0, %s117
    %s118 = sphi 0, %s115
    %s119 = sphi 0, %s118
    %s135 = sphi 0, %s119
  $region4: #{_lambda_.17} parent=0 // loop_header_branch
    %14 = sbr.rel (%p12) target = $region8
  $region5: #{_lambda_.17} parent=0 // loop_body
    %s16 = ssub.s32 %s11, 1
    %s17 = ssub.s32 %s11, 2
    %s18 = sadd.s32 %s11, 1
    %s19 = ssub.s32 %s11, %s18
    %p20 = scmp.eq.s32.totalorder %s19, 0
    %s22 = sadd.s32 %s21, 1
    %s23 = scalar_select %p20, %s21, %s22
    %p26 = pneg %p20
    %p27 = scmp.eq.s32.totalorder %s11, 1
    %p28 = por %p26, %p27
    %p29 = scmp.ne.s32.totalorder %s21, %s24
    %p30 = scmp.eq.s32.totalorder %s11, 0
    %p31 = por %p29, %p30
    %p32 = scmp.ne.s32.totalorder %s21, %s24
    %p33 = scmp.eq.s32.totalorder %s16, 1
    %p34 = por %p32, %p33
    %p35 = scmp.ne.s32.totalorder %s24, %s25
    %p36 = scmp.eq.s32.totalorder %s16, 0
    %p37 = por %p35, %p36
    %p38 = scmp.ne.s32.totalorder %s24, %s25
    %p39 = scmp.eq.s32.totalorder %s17, 1
    %p40 = por %p38, %p39
    %p42 = scmp.ne.s32.totalorder %s25, %s41
    %p43 = scmp.eq.s32.totalorder %s17, 0
    %p44 = por %p42, %p43
    %s46 = sadd.s32 %s45, 1
    %p49 = scmp.eq.s32.totalorder %s11, 1
    %p50 = scmp.ne.s32.totalorder %s45, %s47
    %p51 = scmp.eq.s32.totalorder %s11, 0
    %p52 = por %p50, %p51
    %p53 = scmp.ne.s32.totalorder %s45, %s47
    %p54 = scmp.eq.s32.totalorder %s16, 1
    %p55 = por %p53, %p54
    %p56 = scmp.ne.s32.totalorder %s47, %s48
    %p57 = scmp.eq.s32.totalorder %s16, 0
    %p58 = por %p56, %p57
    %p59 = scmp.ne.s32.totalorder %s47, %s48
    %p60 = scmp.eq.s32.totalorder %s17, 1
    %p61 = por %p59, %p60
    %p63 = scmp.ne.s32.totalorder %s48, %s62
    %p64 = scmp.eq.s32.totalorder %s17, 0
    %p65 = por %p63, %p64
    %s67 = sadd.s32 %s66, 1
    %p70 = scmp.eq.s32.totalorder %s11, 1
    %p71 = scmp.ne.s32.totalorder %s66, %s68
    %p72 = scmp.eq.s32.totalorder %s11, 0
    %p73 = por %p71, %p72
    %p74 = scmp.ne.s32.totalorder %s66, %s68
    %p75 = scmp.eq.s32.totalorder %s16, 1
    %p76 = por %p74, %p75
    %p77 = scmp.ne.s32.totalorder %s68, %s69
    %p78 = scmp.eq.s32.totalorder %s16, 0
    %p79 = por %p77, %p78
    %p80 = scmp.ne.s32.totalorder %s68, %s69
    %p81 = scmp.eq.s32.totalorder %s17, 1
    %p82 = por %p80, %p81
    %p84 = scmp.ne.s32.totalorder %s69, %s83
    %p85 = scmp.eq.s32.totalorder %s17, 0
    %p86 = por %p84, %p85
    %s87 = ssub.s32 %s11, %s18
    %p88 = scmp.eq.s32.totalorder %s87, 0
    %s90 = sadd.s32 %s89, 1
    %s91 = scalar_select %p88, %s89, %s90
    %p94 = pneg %p88
    %p95 = scmp.eq.s32.totalorder %s11, 1
    %p96 = por %p94, %p95
    %p97 = scmp.ne.s32.totalorder %s89, %s92
    %p98 = scmp.eq.s32.totalorder %s11, 0
    %p99 = por %p97, %p98
    %p100 = scmp.ne.s32.totalorder %s89, %s92
    %p101 = scmp.eq.s32.totalorder %s16, 1
    %p102 = por %p100, %p101
    %p103 = scmp.ne.s32.totalorder %s92, %s93
    %p104 = scmp.eq.s32.totalorder %s16, 0
    %p105 = por %p103, %p104
    %p106 = scmp.ne.s32.totalorder %s92, %s93
    %p107 = scmp.eq.s32.totalorder %s17, 1
    %p108 = por %p106, %p107
    %p110 = scmp.ne.s32.totalorder %s93, %s109
    %p111 = scmp.eq.s32.totalorder %s17, 0
    %p112 = por %p110, %p111
    %s113 = ssub.s32 %s11, %s18
    %p114 = scmp.eq.s32.totalorder %s113, 0
    %s116 = sadd.s32 %s115, 1
    %s117 = scalar_select %p114, %s115, %s116
    %p120 = pneg %p114
    %p121 = scmp.eq.s32.totalorder %s11, 1
    %p122 = por %p120, %p121
    %p123 = scmp.ne.s32.totalorder %s115, %s118
    %p124 = scmp.eq.s32.totalorder %s11, 0
    %p125 = por %p123, %p124
    %p126 = scmp.ne.s32.totalorder %s115, %s118
    %p127 = scmp.eq.s32.totalorder %s16, 1
    %p128 = por %p126, %p127
    %p129 = scmp.ne.s32.totalorder %s118, %s119
    %p130 = scmp.eq.s32.totalorder %s16, 0
    %p131 = por %p129, %p130
    %p132 = scmp.ne.s32.totalorder %s118, %s119
    %p133 = scmp.eq.s32.totalorder %s17, 1
    %p134 = por %p132, %p133
    %p136 = scmp.ne.s32.totalorder %s119, %s135
    %p137 = scmp.eq.s32.totalorder %s17, 0
    %p138 = por %p136, %p137
    %p139 = scmp.le.s32.totalorder 1, %s11
    %p140 = scmp.lt.s32.totalorder %s11, 3
    %p141 = pnand %p139, %p140
    %p142 = pneg %p141
    // Predicated region
    $region9: #{_lambda_.17} parent=5 // pred_check
      _
    $region10: #{_lambda_.17} parent=5 // pred_check_branch
      %144 = sbr.rel (%p141) target = $region12
    $region11: #{_lambda_.17} parent=5 // pred_region
      %s145 = ssub.s32 %s11, 1
      // Predicated region
      $region13: #{_lambda_.17} parent=11 // pred_check
        %p146 = pneg %p58
      $region14: #{_lambda_.17} parent=11 // pred_check_branch
        %148 = sbr.rel (%p146) target = $region16
      $region15: #{_lambda_.17} parent=11 // pred_region
        _
      $region16: #{_lambda_.17} parent=11 // pred_fallthru
        _
      // Predicated region
      $region17: #{_lambda_.17} parent=11 // pred_check
        %p149 = pneg %p79
      $region18: #{_lambda_.17} parent=11 // pred_check_branch
        %151 = sbr.rel (%p149) target = $region20
      $region19: #{_lambda_.17} parent=11 // pred_region
        _
      $region20: #{_lambda_.17} parent=11 // pred_fallthru
        _
    $region12: #{_lambda_.17} parent=5 // pred_fallthru
      _
    %p152 = scmp.lt.s32.totalorder %s11, 2
    // Predicated region
    $region21: #{_lambda_.17} parent=5 // pred_check
      %p153 = pneg %p152
    $region22: #{_lambda_.17} parent=5 // pred_check_branch
      %155 = sbr.rel (%p153) target = $region24
    $region23: #{_lambda_.17} parent=5 // pred_region
      // Predicated region
      $region25: #{_lambda_.17} parent=23 // pred_check
        %p156 = pneg %p31
      $region26: #{_lambda_.17} parent=23 // pred_check_branch
        %158 = sbr.rel (%p156) target = $region28
      $region27: #{_lambda_.17} parent=23 // pred_region
        %p159 = scmp.lt.s32.totalorder %s11, 1
        %s160 = scalar_select %p159, %s11, 1
        %s161 = smul.addr %s160, 8
        %s162 = smul.addr %s161, 4
        %s163 = scalar_lea.vmem %s0, %s162
      $region28: #{_lambda_.17} parent=23 // pred_fallthru
        _
    $region24: #{_lambda_.17} parent=5 // pred_fallthru
      _
    %p164 = scmp.le.s32.totalorder 1, %s11
    %p165 = scmp.lt.s32.totalorder %s11, 3
    %p166 = pnand %p164, %p165
    %p167 = pneg %p166
    // Predicated region
    $region29: #{_lambda_.17} parent=5 // pred_check
      _
    $region30: #{_lambda_.17} parent=5 // pred_check_branch
      %169 = sbr.rel (%p166) target = $region32
    $region31: #{_lambda_.17} parent=5 // pred_region
      %s170 = ssub.s32 %s11, 1
      %p171 = scmp.lt.s32.totalorder %s16, 1
      %s172 = scalar_select %p171, %s16, 1
      %s173 = smul.addr %s172, 8
      %s174 = smul.addr %s173, 4
      %s175 = scalar_lea.vmem %s0, %s174
      %p176 = pneg %p37
      %p177 = pneg %p34
      %p178 = pneg %p58
      %p179 = pneg %p55
      %p180 = pneg %p79
      %p181 = pneg %p76
      %p182 = pneg %p105
      %p183 = pneg %p102
      %p184 = scmp.lt.s32.totalorder %s16, 1
      %s185 = scalar_select %p184, %s16, 1
      %s186 = smul.addr %s185, 2
      %s187 = smul.addr %s186, 8
      %s188 = scalar_lea.vmem %s3, %s187
      %p189 = pneg %p131
      %p190 = pneg %p128
      %p191 = scmp.lt.s32.totalorder %s16, 1
      %s192 = scalar_select %p191, %s16, 1
      %s193 = smul.addr %s192, 4
      %s194 = smul.addr %s193, 8
      %s195 = scalar_lea.vmem %s4, %s194
      %p196 = scmp.lt.s32.totalorder %s16, 1
      %s197 = scalar_select %p196, %s16, 1
      %s198 = smul.addr %s197, 8
      %s199 = smul.addr %s198, 4
      %s200 = scalar_lea.vmem %s0, %s199
      %p201 = scmp.lt.s32.totalorder %s16, 1
      %s202 = scalar_select %p201, %s16, 1
      %s203 = smul.addr %s202, 2
      %s204 = smul.addr %s203, 8
      %s205 = scalar_lea.vmem %s3, %s204
      %p206 = scmp.lt.s32.totalorder %s16, 1
      %s207 = scalar_select %p206, %s16, 1
      %s208 = smul.addr %s207, 4
      %s209 = smul.addr %s208, 8
      %s210 = scalar_lea.vmem %s4, %s209
      %v212 = vld [vmem:[%s200] sm:$0xf]
      %v213 = vld [vmem:[%s200 + $0x8] sm:$0xf]
      %v214 = vld [vmem:[%s200 + $0x10] sm:$0xf]
      %v215 = vld [vmem:[%s200 + $0x18] sm:$0xf]
      %v220 = vunpack.c.l.b16 %v212
      %v221 = vunpack.c.l.b16 %v213
      %v222 = vunpack.c.l.b16 %v214
      %v223 = vunpack.c.l.b16 %v215
      %v224 = vpack.c.b16 %v221, %v220
      %v225 = vpack.c.b16 %v223, %v222
      %228 = vst [vmem:[#allocation2] sm:$0xff] %v224
      %229 = vst [vmem:[#allocation2 + $0x8] sm:$0xff] %v225
      %v230 = vld [vmem:[%s200] sm:$0xff]
      %v231 = vld [vmem:[%s200 + $0x8] sm:$0xff]
      %v232 = vld [vmem:[%s200 + $0x10] sm:$0xff]
      %v233 = vld [vmem:[%s200 + $0x18] sm:$0xff]
      %v238 = vunpack.c.l.b16 %v230
      %v239 = vunpack.c.h.b16 %v230
      %v240 = vunpack.c.l.b16 %v231
      %v241 = vunpack.c.h.b16 %v231
      %v242 = vunpack.c.l.b16 %v232
      %v243 = vunpack.c.h.b16 %v232
      %v244 = vunpack.c.l.b16 %v233
      %v245 = vunpack.c.h.b16 %v233
      %v246 = vpack.c.b16 %v240, %v238
      %v247 = vpack.c.b16 %v241, %v239
      %v248 = vpack.c.b16 %v244, %v242
      %v249 = vpack.c.b16 %v245, %v243
      %250 = vrot.lane.b32.xlu0 %v246, 127
      %v251 = vpop.permute.xlu0 %250
      %252 = vrot.lane.b32.xlu0 %v247, 127
      %v253 = vpop.permute.xlu0 %252
      %254 = vrot.lane.b32.xlu0 %v248, 127
      %v255 = vpop.permute.xlu0 %254
      %256 = vrot.lane.b32.xlu0 %v249, 127
      %v257 = vpop.permute.xlu0 %256
      %vm258 = vcmask 1039360
      %v259 = vsel %vm258, %v251, %v253
      %v260 = vsel %vm258, %v255, %v257
      %263 = vst [vmem:[#allocation2 + $0x10] sm:$0xff] %v259
      %264 = vst [vmem:[#allocation2 + $0x18] sm:$0xff] %v260
      %v265 = vld [vmem:[%s200] sm:$0xff]
      %v266 = vld [vmem:[%s200 + $0x8] sm:$0xff]
      %v267 = vld [vmem:[%s200 + $0x10] sm:$0xff]
      %v268 = vld [vmem:[%s200 + $0x18] sm:$0xff]
      %v273 = vunpack.c.l.b16 %v265
      %v274 = vunpack.c.h.b16 %v265
      %v275 = vunpack.c.l.b16 %v266
      %v276 = vunpack.c.h.b16 %v266
      %v277 = vunpack.c.l.b16 %v267
      %v278 = vunpack.c.h.b16 %v267
      %v279 = vunpack.c.l.b16 %v268
      %v280 = vunpack.c.h.b16 %v268
      %v281 = vpack.c.b16 %v275, %v273
      %v282 = vpack.c.b16 %v276, %v274
      %v283 = vpack.c.b16 %v279, %v277
      %v284 = vpack.c.b16 %v280, %v278
      %285 = vrot.lane.b32.xlu0 %v281, 126
      %v286 = vpop.permute.xlu0 %285
      %287 = vrot.lane.b32.xlu0 %v282, 126
      %v288 = vpop.permute.xlu0 %287
      %289 = vrot.lane.b32.xlu0 %v283, 126
      %v290 = vpop.permute.xlu0 %289
      %291 = vrot.lane.b32.xlu0 %v284, 126
      %v292 = vpop.permute.xlu0 %291
      %vm293 = vcmask 1031168
      %v294 = vsel %vm293, %v286, %v288
      %v295 = vsel %vm293, %v290, %v292
      %298 = vst [vmem:[#allocation2 + $0x20] sm:$0xff] %v294
      %299 = vst [vmem:[#allocation2 + $0x28] sm:$0xff] %v295
      %v300 = vld [vmem:[%s200] sm:$0xff]
      %v301 = vld [vmem:[%s200 + $0x8] sm:$0xff]
      %v302 = vld [vmem:[%s200 + $0x10] sm:$0xff]
      %v303 = vld [vmem:[%s200 + $0x18] sm:$0xff]
      %v308 = vunpack.c.l.b16 %v300
      %v309 = vunpack.c.h.b16 %v300
      %v310 = vunpack.c.l.b16 %v301
      %v311 = vunpack.c.h.b16 %v301
      %v312 = vunpack.c.l.b16 %v302
      %v313 = vunpack.c.h.b16 %v302
      %v314 = vunpack.c.l.b16 %v303
      %v315 = vunpack.c.h.b16 %v303
      %v316 = vpack.c.b16 %v310, %v308
      %v317 = vpack.c.b16 %v311, %v309
      %v318 = vpack.c.b16 %v314, %v312
      %v319 = vpack.c.b16 %v315, %v313
      %320 = vrot.lane.b32.xlu0 %v316, 118
      %v321 = vpop.permute.xlu0 %320
      %322 = vrot.lane.b32.xlu0 %v317, 118
      %v323 = vpop.permute.xlu0 %322
      %324 = vrot.lane.b32.xlu0 %v318, 118
      %v325 = vpop.permute.xlu0 %324
      %326 = vrot.lane.b32.xlu0 %v319, 118
      %v327 = vpop.permute.xlu0 %326
      %vm328 = vcmask 965632
      %v329 = vsel %vm328, %v321, %v323
      %v330 = vsel %vm328, %v325, %v327
      %333 = vst [vmem:[#allocation2 + $0x30] sm:$0xff] %v329
      %334 = vst [vmem:[#allocation2 + $0x38] sm:$0xff] %v330
      %v335 = vld [vmem:[%s200] sm:$0xff]
      %v336 = vld [vmem:[%s200 + $0x8] sm:$0xff]
      %v337 = vld [vmem:[%s200 + $0x10] sm:$0xff]
      %v338 = vld [vmem:[%s200 + $0x18] sm:$0xff]
      %v343 = vunpack.c.l.b16 %v335
      %v344 = vunpack.c.h.b16 %v335
      %v345 = vunpack.c.l.b16 %v336
      %v346 = vunpack.c.h.b16 %v336
      %v347 = vunpack.c.l.b16 %v337
      %v348 = vunpack.c.h.b16 %v337
      %v349 = vunpack.c.l.b16 %v338
      %v350 = vunpack.c.h.b16 %v338
      %v351 = vpack.c.b16 %v345, %v343
      %v352 = vpack.c.b16 %v346, %v344
      %v353 = vpack.c.b16 %v349, %v347
      %v354 = vpack.c.b16 %v350, %v348
      %355 = vrot.lane.b32.xlu0 %v351, 117
      %v356 = vpop.permute.xlu0 %355
      %357 = vrot.lane.b32.xlu0 %v352, 117
      %v358 = vpop.permute.xlu0 %357
      %359 = vrot.lane.b32.xlu0 %v353, 117
      %v360 = vpop.permute.xlu0 %359
      %361 = vrot.lane.b32.xlu0 %v354, 117
      %v362 = vpop.permute.xlu0 %361
      %vm363 = vcmask 957440
      %v364 = vsel %vm363, %v356, %v358
      %v365 = vsel %vm363, %v360, %v362
      %368 = vst [vmem:[#allocation2 + $0x40] sm:$0xff] %v364
      %369 = vst [vmem:[#allocation2 + $0x48] sm:$0xff] %v365
      %v370 = vld [vmem:[%s200] sm:$0xff]
      %v371 = vld [vmem:[%s200 + $0x8] sm:$0xff]
      %v372 = vld [vmem:[%s200 + $0x10] sm:$0xff]
      %v373 = vld [vmem:[%s200 + $0x18] sm:$0xff]
      %v378 = vunpack.c.l.b16 %v370
      %v379 = vunpack.c.h.b16 %v370
      %v380 = vunpack.c.l.b16 %v371
      %v381 = vunpack.c.h.b16 %v371
      %v382 = vunpack.c.l.b16 %v372
      %v383 = vunpack.c.h.b16 %v372
      %v384 = vunpack.c.l.b16 %v373
      %v385 = vunpack.c.h.b16 %v373
      %v386 = vpack.c.b16 %v380, %v378
      %v387 = vpack.c.b16 %v381, %v379
      %v388 = vpack.c.b16 %v384, %v382
      %v389 = vpack.c.b16 %v385, %v383
      %390 = vrot.lane.b32.xlu0 %v386, 116
      %v391 = vpop.permute.xlu0 %390
      %392 = vrot.lane.b32.xlu0 %v387, 116
      %v393 = vpop.permute.xlu0 %392
      %394 = vrot.lane.b32.xlu0 %v388, 116
      %v395 = vpop.permute.xlu0 %394
      %396 = vrot.lane.b32.xlu0 %v389, 116
      %v397 = vpop.permute.xlu0 %396
      %vm398 = vcmask 949248
      %v399 = vsel %vm398, %v391, %v393
      %v400 = vsel %vm398, %v395, %v397
      %403 = vst [vmem:[#allocation2 + $0x50] sm:$0xff] %v399
      %404 = vst [vmem:[#allocation2 + $0x58] sm:$0xff] %v400
      %v405 = vld [vmem:[%s200] sm:$0xff]
      %v406 = vld [vmem:[%s200 + $0x8] sm:$0xff]
      %v407 = vld [vmem:[%s200 + $0x10] sm:$0xff]
      %v408 = vld [vmem:[%s200 + $0x18] sm:$0xff]
      %v413 = vunpack.c.l.b16 %v405
      %v414 = vunpack.c.h.b16 %v405
      %v415 = vunpack.c.l.b16 %v406
      %v416 = vunpack.c.h.b16 %v406
      %v417 = vunpack.c.l.b16 %v407
      %v418 = vunpack.c.h.b16 %v407
      %v419 = vunpack.c.l.b16 %v408
      %v420 = vunpack.c.h.b16 %v408
      %v421 = vpack.c.b16 %v415, %v413
      %v422 = vpack.c.b16 %v416, %v414
      %v423 = vpack.c.b16 %v419, %v417
      %v424 = vpack.c.b16 %v420, %v418
      %425 = vrot.lane.b32.xlu0 %v421, 108
      %v426 = vpop.permute.xlu0 %425
      %427 = vrot.lane.b32.xlu0 %v422, 108
      %v428 = vpop.permute.xlu0 %427
      %429 = vrot.lane.b32.xlu0 %v423, 108
      %v430 = vpop.permute.xlu0 %429
      %431 = vrot.lane.b32.xlu0 %v424, 108
      %v432 = vpop.permute.xlu0 %431
      %vm433 = vcmask 883712
      %v434 = vsel %vm433, %v426, %v428
      %v435 = vsel %vm433, %v430, %v432
      %438 = vst [vmem:[#allocation2 + $0x60] sm:$0xff] %v434
      %439 = vst [vmem:[#allocation2 + $0x68] sm:$0xff] %v435
      %v440 = vld [vmem:[%s200] sm:$0xff]
      %v441 = vld [vmem:[%s200 + $0x8] sm:$0xff]
      %v442 = vld [vmem:[%s200 + $0x10] sm:$0xff]
      %v443 = vld [vmem:[%s200 + $0x18] sm:$0xff]
      %v448 = vunpack.c.l.b16 %v440
      %v449 = vunpack.c.h.b16 %v440
      %v450 = vunpack.c.l.b16 %v441
      %v451 = vunpack.c.h.b16 %v441
      %v452 = vunpack.c.l.b16 %v442
      %v453 = vunpack.c.h.b16 %v442
      %v454 = vunpack.c.l.b16 %v443
      %v455 = vunpack.c.h.b16 %v443
      %v456 = vpack.c.b16 %v450, %v448
      %v457 = vpack.c.b16 %v451, %v449
      %v458 = vpack.c.b16 %v454, %v452
      %v459 = vpack.c.b16 %v455, %v453
      %460 = vrot.lane.b32.xlu0 %v456, 107
      %v461 = vpop.permute.xlu0 %460
      %462 = vrot.lane.b32.xlu0 %v457, 107
      %v463 = vpop.permute.xlu0 %462
      %464 = vrot.lane.b32.xlu0 %v458, 107
      %v465 = vpop.permute.xlu0 %464
      %466 = vrot.lane.b32.xlu0 %v459, 107
      %v467 = vpop.permute.xlu0 %466
      %vm468 = vcmask 875520
      %v469 = vsel %vm468, %v461, %v463
      %v470 = vsel %vm468, %v465, %v467
      %473 = vst [vmem:[#allocation2 + $0x70] sm:$0xff] %v469
      %474 = vst [vmem:[#allocation2 + $0x78] sm:$0xff] %v470
      %v475 = vld [vmem:[%s200] sm:$0xff]
      %v476 = vld [vmem:[%s200 + $0x8] sm:$0xff]
      %v477 = vld [vmem:[%s200 + $0x10] sm:$0xff]
      %v478 = vld [vmem:[%s200 + $0x18] sm:$0xff]
      %v483 = vunpack.c.l.b16 %v475
      %v484 = vunpack.c.h.b16 %v475
      %v485 = vunpack.c.l.b16 %v476
      %v486 = vunpack.c.h.b16 %v476
      %v487 = vunpack.c.l.b16 %v477
      %v488 = vunpack.c.h.b16 %v477
      %v489 = vunpack.c.l.b16 %v478
      %v490 = vunpack.c.h.b16 %v478
      %v491 = vpack.c.b16 %v485, %v483
      %v492 = vpack.c.b16 %v486, %v484
      %v493 = vpack.c.b16 %v489, %v487
      %v494 = vpack.c.b16 %v490, %v488
      %495 = vrot.lane.b32.xlu0 %v491, 106
      %v496 = vpop.permute.xlu0 %495
      %497 = vrot.lane.b32.xlu0 %v492, 106
      %v498 = vpop.permute.xlu0 %497
      %499 = vrot.lane.b32.xlu0 %v493, 106
      %v500 = vpop.permute.xlu0 %499
      %501 = vrot.lane.b32.xlu0 %v494, 106
      %v502 = vpop.permute.xlu0 %501
      %vm503 = vcmask 867328
      %v504 = vsel %vm503, %v496, %v498
      %v505 = vsel %vm503, %v500, %v502
      %508 = vst [vmem:[#allocation2 + $0x80] sm:$0xff] %v504
      %509 = vst [vmem:[#allocation2 + $0x88] sm:$0xff] %v505
      %v510 = vld [vmem:[%s1] sm:$0xff]
      %v511 = vld [vmem:[%s1 + $0x8] sm:$0xf]
      %v512 = vld [vmem:[%s1 + $0xc] sm:$0xff]
      %v513 = vld [vmem:[%s1 + $0x14] sm:$0xf]
      %v514 = vld [vmem:[#allocation2] sm:$0xff]
      %v515 = vld [vmem:[#allocation2 + $0x8] sm:$0xff]
      %v516 = vld [vmem:[#allocation2 + $0x10] sm:$0xff]
      %v517 = vld [vmem:[#allocation2 + $0x18] sm:$0xff]
      %v518 = vld [vmem:[#allocation2 + $0x20] sm:$0xff]
      %v519 = vld [vmem:[#allocation2 + $0x28] sm:$0xff]
      %v520 = vld [vmem:[#allocation2 + $0x30] sm:$0xff]
      %v521 = vld [vmem:[#allocation2 + $0x38] sm:$0xff]
      %v522 = vld [vmem:[#allocation2 + $0x40] sm:$0xff]
      %v523 = vld [vmem:[#allocation2 + $0x48] sm:$0xff]
      %v524 = vld [vmem:[#allocation2 + $0x50] sm:$0xff]
      %v525 = vld [vmem:[#allocation2 + $0x58] sm:$0xff]
      %v526 = vld [vmem:[#allocation2 + $0x60] sm:$0xff]
      %v527 = vld [vmem:[#allocation2 + $0x68] sm:$0xff]
      %v528 = vld [vmem:[#allocation2 + $0x70] sm:$0xff]
      %v529 = vld [vmem:[#allocation2 + $0x78] sm:$0xff]
      %v530 = vld [vmem:[#allocation2 + $0x80] sm:$0xff]
      %v531 = vld [vmem:[#allocation2 + $0x88] sm:$0xff]
      %v536 = vunpack.c.l.b16 %v510
      %v537 = vunpack.c.h.b16 %v510
      %v538 = vunpack.c.l.b16 %v511
      %v539 = vunpack.c.l.b16 %v512
      %v540 = vunpack.c.h.b16 %v512
      %v541 = vunpack.c.l.b16 %v513
      %v542 = vpack.c.b16 %v539, %v536
      %v543 = vpack.c.b16 %v540, %v537
      %v544 = vpack.c.b16 %v541, %v538
      %vm547 = vcmask 261120
      %v549 = vsel %vm547, %v544, 0
      %551 = vmatprep.subr.bf16.mxu0 0
      %552 = vmatpush1.bf16.msra.mxu0 %v514
      %553 = vmatprep.subr.bf16.mxu0 0
      %554 = vmatpush1.bf16.msra.mxu0 %v515
      %555 = vmatprep.subr.bf16.mxu0 0
      %556 = vmatpush1.bf16.msra.mxu0 %v516
      %557 = vmatprep.subr.bf16.mxu0 0
      %558 = vmatpush1.bf16.msra.mxu0 %v517
      %559 = vmatprep.subr.bf16.mxu0 0
      %560 = vmatpush1.bf16.msra.mxu0 %v518
      %561 = vmatprep.subr.bf16.mxu0 0
      %562 = vmatpush1.bf16.msra.mxu0 %v519
      %563 = vmatprep.subr.bf16.mxu0 0
      %564 = vmatpush1.bf16.msra.mxu0 %v520
      %565 = vmatprep.subr.bf16.mxu0 0
      %566 = vmatpush1.bf16.msra.mxu0 %v521
      %567 = vmatprep.subr.bf16.mxu0 0
      %568 = vmatpush1.bf16.msra.mxu0 %v522
      %569 = vmatprep.subr.bf16.mxu0 0
      %570 = vmatpush1.bf16.msra.mxu0 %v523
      %571 = vmatprep.subr.bf16.mxu0 0
      %572 = vmatpush1.bf16.msra.mxu0 %v524
      %573 = vmatprep.subr.bf16.mxu0 0
      %574 = vmatpush1.bf16.msra.mxu0 %v525
      %575 = vmatprep.subr.bf16.mxu0 0
      %576 = vmatpush1.bf16.msra.mxu0 %v526
      %577 = vmatprep.subr.bf16.mxu0 0
      %578 = vmatpush1.bf16.msra.mxu0 %v527
      %579 = vmatprep.subr.bf16.mxu0 0
      %580 = vmatpush1.bf16.msra.mxu0 %v528
      %581 = vmatprep.subr.bf16.mxu0 0
      %582 = vmatpush1.bf16.msra.mxu0 %v529
      %583 = vmatprep.mubr.bf16.mxu0 %v543
      %584 = vmatmul.mubr.bf16.gmra.mrb[0].mxu0 %v542
      %v585 = vpop.f32.mrb[0].mxu0
      %v586 = vadd.f32 0.0, %v585
      %v587 = vpop.f32.mrb[0].mxu0
      %v588 = vpop.f32.mrb[0].mxu0
      %v589 = vadd.f32 0.0, %v588
      %v590 = vpop.f32.mrb[0].mxu0
      %591 = vdwg.mxu0
      %592 = vmatprep.subr.bf16.mxu0 0
      %593 = vmatpush1.bf16.msra.mxu0 %v530
      %594 = vmatprep.subr.bf16.mxu0 0
      %595 = vmatpush1.bf16.msra.mxu0 %v531
      %596 = vmatprep.subr.bf16.mxu0 0
      %597 = vmatpush1.bf16.msra.mxu0 0
      %598 = vmatprep.subr.bf16.mxu0 0
      %599 = vmatpush1.bf16.msra.mxu0 0
      %600 = vmatprep.subr.bf16.mxu0 0
      %601 = vmatpush1.bf16.msra.mxu0 0
      %602 = vmatprep.subr.bf16.mxu0 0
      %603 = vmatpush1.bf16.msra.mxu0 0
      %604 = vmatprep.subr.bf16.mxu0 0
      %605 = vmatpush1.bf16.msra.mxu0 0
      %606 = vmatprep.subr.bf16.mxu0 0
      %607 = vmatpush1.bf16.msra.mxu0 0
      %608 = vmatprep.subr.bf16.mxu0 0
      %609 = vmatpush1.bf16.msra.mxu0 0
      %610 = vmatprep.subr.bf16.mxu0 0
      %611 = vmatpush1.bf16.msra.mxu0 0
      %612 = vmatprep.subr.bf16.mxu0 0
      %613 = vmatpush1.bf16.msra.mxu0 0
      %614 = vmatprep.subr.bf16.mxu0 0
      %615 = vmatpush1.bf16.msra.mxu0 0
      %616 = vmatprep.subr.bf16.mxu0 0
      %617 = vmatpush1.bf16.msra.mxu0 0
      %618 = vmatprep.subr.bf16.mxu0 0
      %619 = vmatpush1.bf16.msra.mxu0 0
      %620 = vmatprep.subr.bf16.mxu0 0
      %621 = vmatpush1.bf16.msra.mxu0 0
      %622 = vmatprep.subr.bf16.mxu0 0
      %623 = vmatpush1.bf16.msra.mxu0 0
      %624 = vmatprep.mubr.bf16.mxu0 0
      %625 = vmatmul.mubr.bf16.gmra.mrb[0].mxu0 %v549
      %v626 = vpop.f32.mrb[0].mxu0
      %v627 = vadd.f32 %v586, %v626
      %v628 = vpop.f32.mrb[0].mxu0
      %v629 = vpop.f32.mrb[0].mxu0
      %v630 = vadd.f32 %v589, %v629
      %v631 = vpop.f32.mrb[0].mxu0
      %632 = vdwg.mxu0
      %633 = vst [vmem:[%s205] sm:$0xff] %v627
      %634 = vst [vmem:[%s205 + $0x8] sm:$0xff] %v630
      %v635 = vld [vmem:[%s2] sm:$0x1]
      %v637 = vlaneseq
      %v638 = vshrl.u32 %v637, 7
      %v639 = vsub.s32 0, %v638
      %v640 = vrot.slane %v635, %v639
      %v642 = vmul.f32 %v627, %v640
      %v643 = vmul.f32 %v630, %v640
      %644 = vadd.xlane.f32.xlu0 %v642
      %v645 = vpop.xlane.xlu0 %644
      %646 = vadd.xlane.f32.xlu0 %v643
      %v647 = vpop.xlane.xlu0 %646
      %vm648 = vcmask 7168
      %649 = vst.msk [vmem:[%s210] sm:$0xff] %vm648, %v645
      %650 = vst.msk [vmem:[%s210 + $0x8] sm:$0xff] %vm648, %v647
      %v651 = vmul.f32 %v642, %v642
      %v652 = vmul.f32 %v643, %v643
      %653 = vadd.xlane.f32.xlu0 %v651
      %v654 = vpop.xlane.xlu0 %653
      %655 = vadd.xlane.f32.xlu0 %v652
      %v656 = vpop.xlane.xlu0 %655
      %s657 = scalar_lea.vmem %s210, 16
      %658 = vst.msk [vmem:[%s657] sm:$0xff] %vm648, %v654
      %659 = vst.msk [vmem:[%s657 + $0x8] sm:$0xff] %vm648, %v656
      %p660 = scmp.lt.s32.totalorder %s16, 1
      %s661 = scalar_select %p660, %s16, 1
      %s662 = smul.addr %s661, 2
      %s663 = smul.addr %s662, 8
      %s664 = scalar_lea.vmem %s3, %s663
      %p665 = scmp.lt.s32.totalorder %s16, 1
      %s666 = scalar_select %p665, %s16, 1
      %s667 = smul.addr %s666, 4
      %s668 = smul.addr %s667, 8
      %s669 = scalar_lea.vmem %s4, %s668
      // Predicated region
      $region33: #{_lambda_.17} parent=31 // pred_check
        %p670 = pneg %p102
      $region34: #{_lambda_.17} parent=31 // pred_check_branch
        %672 = sbr.rel (%p670) target = $region36
      $region35: #{_lambda_.17} parent=31 // pred_region
        _
      $region36: #{_lambda_.17} parent=31 // pred_fallthru
        _
      // Predicated region
      $region37: #{_lambda_.17} parent=31 // pred_check
        %p673 = pneg %p128
      $region38: #{_lambda_.17} parent=31 // pred_check_branch
        %675 = sbr.rel (%p673) target = $region40
      $region39: #{_lambda_.17} parent=31 // pred_region
        _
      $region40: #{_lambda_.17} parent=31 // pred_fallthru
        _
    $region32: #{_lambda_.17} parent=5 // pred_fallthru
      _
    %p676 = scmp.le.s32.totalorder 2, %s11
    // Predicated region
    $region41: #{_lambda_.17} parent=5 // pred_check
      %p677 = pneg %p676
    $region42: #{_lambda_.17} parent=5 // pred_check_branch
      %679 = sbr.rel (%p677) target = $region44
    $region43: #{_lambda_.17} parent=5 // pred_region
      %s680 = ssub.s32 %s11, 2
      // Predicated region
      $region45: #{_lambda_.17} parent=43 // pred_check
        %p681 = pneg %p108
      $region46: #{_lambda_.17} parent=43 // pred_check_branch
        %683 = sbr.rel (%p681) target = $region48
      $region47: #{_lambda_.17} parent=43 // pred_region
        %p684 = scmp.lt.s32.totalorder %s17, 1
        %s685 = scalar_select %p684, %s17, 1
        %s686 = smul.addr %s685, 2
        %s687 = smul.addr %s686, 8
        %s688 = scalar_lea.vmem %s3, %s687
      $region48: #{_lambda_.17} parent=43 // pred_fallthru
        _
      // Predicated region
      $region49: #{_lambda_.17} parent=43 // pred_check
        %p689 = pneg %p134
      $region50: #{_lambda_.17} parent=43 // pred_check_branch
        %691 = sbr.rel (%p689) target = $region52
      $region51: #{_lambda_.17} parent=43 // pred_region
        %p692 = scmp.lt.s32.totalorder %s17, 1
        %s693 = scalar_select %p692, %s17, 1
        %s694 = smul.addr %s693, 4
        %s695 = smul.addr %s694, 8
        %s696 = scalar_lea.vmem %s4, %s695
      $region52: #{_lambda_.17} parent=43 // pred_fallthru
        _
    $region44: #{_lambda_.17} parent=5 // pred_fallthru
      _
  $region6: #{_lambda_.17} parent=0 // loop_footer
    %s15 = sadd.s32 1, %s11
  $region7: #{_lambda_.17} parent=0 // loop_footer_branch
    %10 = sbr.rel target = $region3
  $region8: #{_lambda_.17} parent=0 // loop_exit
    _

// kernel: _lambda_.18
$region0: #{_lambda_.18}
  #allocation0 [shape = 'u32[]', space=smem, size = 0x4, offset = 0x4, fixed_abs, tag = 'smem constant byte address 0x4 - core index']
  #allocation1 [shape = 'u32[144,128]{1,0:T(1,128)}', space=vmem, size = 0x12000, scoped, tag = 'internal scratch']
  #allocation2 [shape = 'bf16[144,384]{1,0:T(16,128)(2,1)}', space=vmem, size = 0x1b000, scoped, tag = 'scratch operand']
  %s0 = inlined_call_operand.vmem [shape: bf16[2,1,16,422], index: 0, kind: input, shape index: {}]
  %s1 = inlined_call_operand.vmem [shape: bf16[8,144], index: 1, kind: input, shape index: {}]
  %s2 = inlined_call_operand.vmem [shape: f32[1,384], index: 2, kind: input, shape index: {}]
  %s3 = inlined_call_operand.vmem [shape: f32[2,8,384], index: 3, kind: output, shape index: {0}]
  %s4 = inlined_call_operand.vmem [shape: f32[2,2,8,1], index: 4, kind: output, shape index: {1}]
  %5 = xla_tuple %s3, %s4
  %s6 = sld [smem:[#allocation0]]
  $region53: #{_lambda_.18} parent=0
    _
  %s8 = ssub.s32 1, %s6
  %s9 = scalar_select 0, %s8, %s6
  loop: start=0, step=1, limit=4
  $region2: #{_lambda_.18} parent=0 // loop_pre_header
    _
  $region3: #{_lambda_.18} parent=0 // loop_header
    %s11 = sphi 0, %s15
    %p12 = scmp.ge.s32.totalorder %s11, 4
    %s21 = sphi 0, %s23
    %s24 = sphi 0, %s21
    %s25 = sphi 0, %s24
    %s41 = sphi 0, %s25
    %s45 = sphi 0, %s45
    %s47 = sphi 0, %s45
    %s48 = sphi 0, %s47
    %s62 = sphi 0, %s48
    %s66 = sphi 0, %s66
    %s68 = sphi 0, %s66
    %s69 = sphi 0, %s68
    %s83 = sphi 0, %s69
    %s89 = sphi 0, %s91
    %s92 = sphi 0, %s89
    %s93 = sphi 0, %s92
    %s109 = sphi 0, %s93
    %s115 = sphi 0, %s117
    %s118 = sphi 0, %s115
    %s119 = sphi 0, %s118
    %s135 = sphi 0, %s119
  $region4: #{_lambda_.18} parent=0 // loop_header_branch
    %14 = sbr.rel (%p12) target = $region8
  $region5: #{_lambda_.18} parent=0 // loop_body
    %s16 = ssub.s32 %s11, 1
    %s17 = ssub.s32 %s11, 2
    %s18 = sadd.s32 %s11, 1
    %s19 = ssub.s32 %s11, %s18
    %p20 = scmp.eq.s32.totalorder %s19, 0
    %s22 = sadd.s32 %s21, 1
    %s23 = scalar_select %p20, %s21, %s22
    %p26 = pneg %p20
    %p27 = scmp.eq.s32.totalorder %s11, 1
    %p28 = por %p26, %p27
    %p29 = scmp.ne.s32.totalorder %s21, %s24
    %p30 = scmp.eq.s32.totalorder %s11, 0
    %p31 = por %p29, %p30
    %p32 = scmp.ne.s32.totalorder %s21, %s24
    %p33 = scmp.eq.s32.totalorder %s16, 1
    %p34 = por %p32, %p33
    %p35 = scmp.ne.s32.totalorder %s24, %s25
    %p36 = scmp.eq.s32.totalorder %s16, 0
    %p37 = por %p35, %p36
    %p38 = scmp.ne.s32.totalorder %s24, %s25
    %p39 = scmp.eq.s32.totalorder %s17, 1
    %p40 = por %p38, %p39
    %p42 = scmp.ne.s32.totalorder %s25, %s41
    %p43 = scmp.eq.s32.totalorder %s17, 0
    %p44 = por %p42, %p43
    %s46 = sadd.s32 %s45, 1
    %p49 = scmp.eq.s32.totalorder %s11, 1
    %p50 = scmp.ne.s32.totalorder %s45, %s47
    %p51 = scmp.eq.s32.totalorder %s11, 0
    %p52 = por %p50, %p51
    %p53 = scmp.ne.s32.totalorder %s45, %s47
    %p54 = scmp.eq.s32.totalorder %s16, 1
    %p55 = por %p53, %p54
    %p56 = scmp.ne.s32.totalorder %s47, %s48
    %p57 = scmp.eq.s32.totalorder %s16, 0
    %p58 = por %p56, %p57
    %p59 = scmp.ne.s32.totalorder %s47, %s48
    %p60 = scmp.eq.s32.totalorder %s17, 1
    %p61 = por %p59, %p60
    %p63 = scmp.ne.s32.totalorder %s48, %s62
    %p64 = scmp.eq.s32.totalorder %s17, 0
    %p65 = por %p63, %p64
    %s67 = sadd.s32 %s66, 1
    %p70 = scmp.eq.s32.totalorder %s11, 1
    %p71 = scmp.ne.s32.totalorder %s66, %s68
    %p72 = scmp.eq.s32.totalorder %s11, 0
    %p73 = por %p71, %p72
    %p74 = scmp.ne.s32.totalorder %s66, %s68
    %p75 = scmp.eq.s32.totalorder %s16, 1
    %p76 = por %p74, %p75
    %p77 = scmp.ne.s32.totalorder %s68, %s69
    %p78 = scmp.eq.s32.totalorder %s16, 0
    %p79 = por %p77, %p78
    %p80 = scmp.ne.s32.totalorder %s68, %s69
    %p81 = scmp.eq.s32.totalorder %s17, 1
    %p82 = por %p80, %p81
    %p84 = scmp.ne.s32.totalorder %s69, %s83
    %p85 = scmp.eq.s32.totalorder %s17, 0
    %p86 = por %p84, %p85
    %s87 = ssub.s32 %s11, %s18
    %p88 = scmp.eq.s32.totalorder %s87, 0
    %s90 = sadd.s32 %s89, 1
    %s91 = scalar_select %p88, %s89, %s90
    %p94 = pneg %p88
    %p95 = scmp.eq.s32.totalorder %s11, 1
    %p96 = por %p94, %p95
    %p97 = scmp.ne.s32.totalorder %s89, %s92
    %p98 = scmp.eq.s32.totalorder %s11, 0
    %p99 = por %p97, %p98
    %p100 = scmp.ne.s32.totalorder %s89, %s92
    %p101 = scmp.eq.s32.totalorder %s16, 1
    %p102 = por %p100, %p101
    %p103 = scmp.ne.s32.totalorder %s92, %s93
    %p104 = scmp.eq.s32.totalorder %s16, 0
    %p105 = por %p103, %p104
    %p106 = scmp.ne.s32.totalorder %s92, %s93
    %p107 = scmp.eq.s32.totalorder %s17, 1
    %p108 = por %p106, %p107
    %p110 = scmp.ne.s32.totalorder %s93, %s109
    %p111 = scmp.eq.s32.totalorder %s17, 0
    %p112 = por %p110, %p111
    %s113 = ssub.s32 %s11, %s18
    %p114 = scmp.eq.s32.totalorder %s113, 0
    %s116 = sadd.s32 %s115, 1
    %s117 = scalar_select %p114, %s115, %s116
    %p120 = pneg %p114
    %p121 = scmp.eq.s32.totalorder %s11, 1
    %p122 = por %p120, %p121
    %p123 = scmp.ne.s32.totalorder %s115, %s118
    %p124 = scmp.eq.s32.totalorder %s11, 0
    %p125 = por %p123, %p124
    %p126 = scmp.ne.s32.totalorder %s115, %s118
    %p127 = scmp.eq.s32.totalorder %s16, 1
    %p128 = por %p126, %p127
    %p129 = scmp.ne.s32.totalorder %s118, %s119
    %p130 = scmp.eq.s32.totalorder %s16, 0
    %p131 = por %p129, %p130
    %p132 = scmp.ne.s32.totalorder %s118, %s119
    %p133 = scmp.eq.s32.totalorder %s17, 1
    %p134 = por %p132, %p133
    %p136 = scmp.ne.s32.totalorder %s119, %s135
    %p137 = scmp.eq.s32.totalorder %s17, 0
    %p138 = por %p136, %p137
    %p139 = scmp.le.s32.totalorder 1, %s11
    %p140 = scmp.lt.s32.totalorder %s11, 3
    %p141 = pnand %p139, %p140
    %p142 = pneg %p141
    // Predicated region
    $region9: #{_lambda_.18} parent=5 // pred_check
      _
    $region10: #{_lambda_.18} parent=5 // pred_check_branch
      %144 = sbr.rel (%p141) target = $region12
    $region11: #{_lambda_.18} parent=5 // pred_region
      %s145 = ssub.s32 %s11, 1
      // Predicated region
      $region13: #{_lambda_.18} parent=11 // pred_check
        %p146 = pneg %p58
      $region14: #{_lambda_.18} parent=11 // pred_check_branch
        %148 = sbr.rel (%p146) target = $region16
      $region15: #{_lambda_.18} parent=11 // pred_region
        _
      $region16: #{_lambda_.18} parent=11 // pred_fallthru
        _
      // Predicated region
      $region17: #{_lambda_.18} parent=11 // pred_check
        %p149 = pneg %p79
      $region18: #{_lambda_.18} parent=11 // pred_check_branch
        %151 = sbr.rel (%p149) target = $region20
      $region19: #{_lambda_.18} parent=11 // pred_region
        _
      $region20: #{_lambda_.18} parent=11 // pred_fallthru
        _
    $region12: #{_lambda_.18} parent=5 // pred_fallthru
      _
    %p152 = scmp.lt.s32.totalorder %s11, 2
    // Predicated region
    $region21: #{_lambda_.18} parent=5 // pred_check
      %p153 = pneg %p152
    $region22: #{_lambda_.18} parent=5 // pred_check_branch
      %155 = sbr.rel (%p153) target = $region24
    $region23: #{_lambda_.18} parent=5 // pred_region
      // Predicated region
      $region25: #{_lambda_.18} parent=23 // pred_check
        %p156 = pneg %p31
      $region26: #{_lambda_.18} parent=23 // pred_check_branch
        %158 = sbr.rel (%p156) target = $region28
      $region27: #{_lambda_.18} parent=23 // pred_region
        %p159 = scmp.lt.s32.totalorder %s11, 1
        %s160 = scalar_select %p159, %s11, 1
        %s161 = smul.addr %s160, 8
        %s162 = smul.addr %s161, 4
        %s163 = scalar_lea.vmem %s0, %s162
      $region28: #{_lambda_.18} parent=23 // pred_fallthru
        _
    $region24: #{_lambda_.18} parent=5 // pred_fallthru
      _
    %p164 = scmp.le.s32.totalorder 1, %s11
    %p165 = scmp.lt.s32.totalorder %s11, 3
    %p166 = pnand %p164, %p165
    %p167 = pneg %p166
    // Predicated region
    $region29: #{_lambda_.18} parent=5 // pred_check
      _
    $region30: #{_lambda_.18} parent=5 // pred_check_branch
      %169 = sbr.rel (%p166) target = $region32
    $region31: #{_lambda_.18} parent=5 // pred_region
      %s170 = ssub.s32 %s11, 1
      %p171 = scmp.lt.s32.totalorder %s16, 1
      %s172 = scalar_select %p171, %s16, 1
      %s173 = smul.addr %s172, 8
      %s174 = smul.addr %s173, 4
      %s175 = scalar_lea.vmem %s0, %s174
      %p176 = pneg %p37
      %p177 = pneg %p34
      %p178 = pneg %p58
      %p179 = pneg %p55
      %p180 = pneg %p79
      %p181 = pneg %p76
      %p182 = pneg %p105
      %p183 = pneg %p102
      %p184 = scmp.lt.s32.totalorder %s16, 1
      %s185 = scalar_select %p184, %s16, 1
      %s186 = smul.addr %s185, 3
      %s187 = smul.addr %s186, 8
      %s188 = scalar_lea.vmem %s3, %s187
      %p189 = pneg %p131
      %p190 = pneg %p128
      %p191 = scmp.lt.s32.totalorder %s16, 1
      %s192 = scalar_select %p191, %s16, 1
      %s193 = smul.addr %s192, 2
      %s194 = smul.addr %s193, 8
      %s195 = scalar_lea.vmem %s4, %s194
      %p196 = scmp.lt.s32.totalorder %s16, 1
      %s197 = scalar_select %p196, %s16, 1
      %s198 = smul.addr %s197, 8
      %s199 = smul.addr %s198, 4
      %s200 = scalar_lea.vmem %s0, %s199
      %p201 = scmp.lt.s32.totalorder %s16, 1
      %s202 = scalar_select %p201, %s16, 1
      %s203 = smul.addr %s202, 3
      %s204 = smul.addr %s203, 8
      %s205 = scalar_lea.vmem %s3, %s204
      %p206 = scmp.lt.s32.totalorder %s16, 1
      %s207 = scalar_select %p206, %s16, 1
      %s208 = smul.addr %s207, 2
      %s209 = smul.addr %s208, 8
      %s210 = scalar_lea.vmem %s4, %s209
      %v212 = vld [vmem:[%s200] sm:$0xff]
      %v213 = vld [vmem:[%s200 + $0x8] sm:$0xf]
      %v214 = vld [vmem:[%s200 + $0x10] sm:$0xff]
      %v215 = vld [vmem:[%s200 + $0x18] sm:$0xf]
      %v220 = vunpack.c.l.b16 %v212
      %v221 = vunpack.c.h.b16 %v212
      %v222 = vunpack.c.l.b16 %v213
      %v223 = vunpack.c.l.b16 %v214
      %v224 = vunpack.c.h.b16 %v214
      %v225 = vunpack.c.l.b16 %v215
      %v226 = vpack.c.b16 %v223, %v220
      %v227 = vpack.c.b16 %v224, %v221
      %v228 = vpack.c.b16 %v225, %v222
      %232 = vst [vmem:[#allocation2] sm:$0xff] %v226
      %233 = vst [vmem:[#allocation2 + $0x8] sm:$0xff] %v227
      %234 = vst [vmem:[#allocation2 + $0x10] sm:$0xff] %v228
      %v235 = vld [vmem:[%s200] sm:$0xff]
      %v236 = vld [vmem:[%s200 + $0x8] sm:$0xff]
      %v237 = vld [vmem:[%s200 + $0x10] sm:$0xff]
      %v238 = vld [vmem:[%s200 + $0x18] sm:$0xff]
      %v243 = vunpack.c.l.b16 %v235
      %v244 = vunpack.c.h.b16 %v235
      %v245 = vunpack.c.l.b16 %v236
      %v246 = vunpack.c.h.b16 %v236
      %v247 = vunpack.c.l.b16 %v237
      %v248 = vunpack.c.h.b16 %v237
      %v249 = vunpack.c.l.b16 %v238
      %v250 = vunpack.c.h.b16 %v238
      %v251 = vpack.c.b16 %v247, %v243
      %v252 = vpack.c.b16 %v248, %v244
      %v253 = vpack.c.b16 %v249, %v245
      %v254 = vpack.c.b16 %v250, %v246
      %255 = vrot.lane.b32.xlu0 %v251, 127
      %v256 = vpop.permute.xlu0 %255
      %257 = vrot.lane.b32.xlu0 %v252, 127
      %v258 = vpop.permute.xlu0 %257
      %259 = vrot.lane.b32.xlu0 %v253, 127
      %v260 = vpop.permute.xlu0 %259
      %261 = vrot.lane.b32.xlu0 %v254, 127
      %v262 = vpop.permute.xlu0 %261
      %vm263 = vcmask 1039360
      %v264 = vsel %vm263, %v256, %v258
      %v265 = vsel %vm263, %v258, %v260
      %v266 = vsel %vm263, %v260, %v262
      %270 = vst [vmem:[#allocation2 + $0x18] sm:$0xff] %v264
      %271 = vst [vmem:[#allocation2 + $0x20] sm:$0xff] %v265
      %272 = vst [vmem:[#allocation2 + $0x28] sm:$0xff] %v266
      %v273 = vld [vmem:[%s200] sm:$0xff]
      %v274 = vld [vmem:[%s200 + $0x8] sm:$0xff]
      %v275 = vld [vmem:[%s200 + $0x10] sm:$0xff]
      %v276 = vld [vmem:[%s200 + $0x18] sm:$0xff]
      %v281 = vunpack.c.l.b16 %v273
      %v282 = vunpack.c.h.b16 %v273
      %v283 = vunpack.c.l.b16 %v274
      %v284 = vunpack.c.h.b16 %v274
      %v285 = vunpack.c.l.b16 %v275
      %v286 = vunpack.c.h.b16 %v275
      %v287 = vunpack.c.l.b16 %v276
      %v288 = vunpack.c.h.b16 %v276
      %v289 = vpack.c.b16 %v285, %v281
      %v290 = vpack.c.b16 %v286, %v282
      %v291 = vpack.c.b16 %v287, %v283
      %v292 = vpack.c.b16 %v288, %v284
      %293 = vrot.lane.b32.xlu0 %v289, 126
      %v294 = vpop.permute.xlu0 %293
      %295 = vrot.lane.b32.xlu0 %v290, 126
      %v296 = vpop.permute.xlu0 %295
      %297 = vrot.lane.b32.xlu0 %v291, 126
      %v298 = vpop.permute.xlu0 %297
      %299 = vrot.lane.b32.xlu0 %v292, 126
      %v300 = vpop.permute.xlu0 %299
      %vm301 = vcmask 1031168
      %v302 = vsel %vm301, %v294, %v296
      %v303 = vsel %vm301, %v296, %v298
      %v304 = vsel %vm301, %v298, %v300
      %308 = vst [vmem:[#allocation2 + $0x30] sm:$0xff] %v302
      %309 = vst [vmem:[#allocation2 + $0x38] sm:$0xff] %v303
      %310 = vst [vmem:[#allocation2 + $0x40] sm:$0xff] %v304
      %v311 = vld [vmem:[%s200] sm:$0xff]
      %v312 = vld [vmem:[%s200 + $0x8] sm:$0xff]
      %v313 = vld [vmem:[%s200 + $0x10] sm:$0xff]
      %v314 = vld [vmem:[%s200 + $0x18] sm:$0xff]
      %v319 = vunpack.c.l.b16 %v311
      %v320 = vunpack.c.h.b16 %v311
      %v321 = vunpack.c.l.b16 %v312
      %v322 = vunpack.c.h.b16 %v312
      %v323 = vunpack.c.l.b16 %v313
      %v324 = vunpack.c.h.b16 %v313
      %v325 = vunpack.c.l.b16 %v314
      %v326 = vunpack.c.h.b16 %v314
      %v327 = vpack.c.b16 %v323, %v319
      %v328 = vpack.c.b16 %v324, %v320
      %v329 = vpack.c.b16 %v325, %v321
      %v330 = vpack.c.b16 %v326, %v322
      %331 = vrot.lane.b32.xlu0 %v327, 110
      %v332 = vpop.permute.xlu0 %331
      %333 = vrot.lane.b32.xlu0 %v328, 110
      %v334 = vpop.permute.xlu0 %333
      %335 = vrot.lane.b32.xlu0 %v329, 110
      %v336 = vpop.permute.xlu0 %335
      %337 = vrot.lane.b32.xlu0 %v330, 110
      %v338 = vpop.permute.xlu0 %337
      %vm339 = vcmask 900096
      %v340 = vsel %vm339, %v332, %v334
      %v341 = vsel %vm339, %v334, %v336
      %v342 = vsel %vm339, %v336, %v338
      %346 = vst [vmem:[#allocation2 + $0x48] sm:$0xff] %v340
      %347 = vst [vmem:[#allocation2 + $0x50] sm:$0xff] %v341
      %348 = vst [vmem:[#allocation2 + $0x58] sm:$0xff] %v342
      %v349 = vld [vmem:[%s200] sm:$0xff]
      %v350 = vld [vmem:[%s200 + $0x8] sm:$0xff]
      %v351 = vld [vmem:[%s200 + $0x10] sm:$0xff]
      %v352 = vld [vmem:[%s200 + $0x18] sm:$0xff]
      %v357 = vunpack.c.l.b16 %v349
      %v358 = vunpack.c.h.b16 %v349
      %v359 = vunpack.c.l.b16 %v350
      %v360 = vunpack.c.h.b16 %v350
      %v361 = vunpack.c.l.b16 %v351
      %v362 = vunpack.c.h.b16 %v351
      %v363 = vunpack.c.l.b16 %v352
      %v364 = vunpack.c.h.b16 %v352
      %v365 = vpack.c.b16 %v361, %v357
      %v366 = vpack.c.b16 %v362, %v358
      %v367 = vpack.c.b16 %v363, %v359
      %v368 = vpack.c.b16 %v364, %v360
      %369 = vrot.lane.b32.xlu0 %v365, 109
      %v370 = vpop.permute.xlu0 %369
      %371 = vrot.lane.b32.xlu0 %v366, 109
      %v372 = vpop.permute.xlu0 %371
      %373 = vrot.lane.b32.xlu0 %v367, 109
      %v374 = vpop.permute.xlu0 %373
      %375 = vrot.lane.b32.xlu0 %v368, 109
      %v376 = vpop.permute.xlu0 %375
      %vm377 = vcmask 891904
      %v378 = vsel %vm377, %v370, %v372
      %v379 = vsel %vm377, %v372, %v374
      %v380 = vsel %vm377, %v374, %v376
      %384 = vst [vmem:[#allocation2 + $0x60] sm:$0xff] %v378
      %385 = vst [vmem:[#allocation2 + $0x68] sm:$0xff] %v379
      %386 = vst [vmem:[#allocation2 + $0x70] sm:$0xff] %v380
      %v387 = vld [vmem:[%s200] sm:$0xff]
      %v388 = vld [vmem:[%s200 + $0x8] sm:$0xff]
      %v389 = vld [vmem:[%s200 + $0x10] sm:$0xff]
      %v390 = vld [vmem:[%s200 + $0x18] sm:$0xff]
      %v395 = vunpack.c.l.b16 %v387
      %v396 = vunpack.c.h.b16 %v387
      %v397 = vunpack.c.l.b16 %v388
      %v398 = vunpack.c.h.b16 %v388
      %v399 = vunpack.c.l.b16 %v389
      %v400 = vunpack.c.h.b16 %v389
      %v401 = vunpack.c.l.b16 %v390
      %v402 = vunpack.c.h.b16 %v390
      %v403 = vpack.c.b16 %v399, %v395
      %v404 = vpack.c.b16 %v400, %v396
      %v405 = vpack.c.b16 %v401, %v397
      %v406 = vpack.c.b16 %v402, %v398
      %407 = vrot.lane.b32.xlu0 %v403, 108
      %v408 = vpop.permute.xlu0 %407
      %409 = vrot.lane.b32.xlu0 %v404, 108
      %v410 = vpop.permute.xlu0 %409
      %411 = vrot.lane.b32.xlu0 %v405, 108
      %v412 = vpop.permute.xlu0 %411
      %413 = vrot.lane.b32.xlu0 %v406, 108
      %v414 = vpop.permute.xlu0 %413
      %vm415 = vcmask 883712
      %v416 = vsel %vm415, %v408, %v410
      %v417 = vsel %vm415, %v410, %v412
      %v418 = vsel %vm415, %v412, %v414
      %422 = vst [vmem:[#allocation2 + $0x78] sm:$0xff] %v416
      %423 = vst [vmem:[#allocation2 + $0x80] sm:$0xff] %v417
      %424 = vst [vmem:[#allocation2 + $0x88] sm:$0xff] %v418
      %v425 = vld [vmem:[%s200] sm:$0xff]
      %v426 = vld [vmem:[%s200 + $0x8] sm:$0xff]
      %v427 = vld [vmem:[%s200 + $0x10] sm:$0xff]
      %v428 = vld [vmem:[%s200 + $0x18] sm:$0xff]
      %v433 = vunpack.c.l.b16 %v425
      %v434 = vunpack.c.h.b16 %v425
      %v435 = vunpack.c.l.b16 %v426
      %v436 = vunpack.c.h.b16 %v426
      %v437 = vunpack.c.l.b16 %v427
      %v438 = vunpack.c.h.b16 %v427
      %v439 = vunpack.c.l.b16 %v428
      %v440 = vunpack.c.h.b16 %v428
      %v441 = vpack.c.b16 %v437, %v433
      %v442 = vpack.c.b16 %v438, %v434
      %v443 = vpack.c.b16 %v439, %v435
      %v444 = vpack.c.b16 %v440, %v436
      %445 = vrot.lane.b32.xlu0 %v441, 92
      %v446 = vpop.permute.xlu0 %445
      %447 = vrot.lane.b32.xlu0 %v442, 92
      %v448 = vpop.permute.xlu0 %447
      %449 = vrot.lane.b32.xlu0 %v443, 92
      %v450 = vpop.permute.xlu0 %449
      %451 = vrot.lane.b32.xlu0 %v444, 92
      %v452 = vpop.permute.xlu0 %451
      %vm453 = vcmask 752640
      %v454 = vsel %vm453, %v446, %v448
      %v455 = vsel %vm453, %v448, %v450
      %v456 = vsel %vm453, %v450, %v452
      %460 = vst [vmem:[#allocation2 + $0x90] sm:$0xff] %v454
      %461 = vst [vmem:[#allocation2 + $0x98] sm:$0xff] %v455
      %462 = vst [vmem:[#allocation2 + $0xa0] sm:$0xff] %v456
      %v463 = vld [vmem:[%s200] sm:$0xff]
      %v464 = vld [vmem:[%s200 + $0x8] sm:$0xff]
      %v465 = vld [vmem:[%s200 + $0x10] sm:$0xff]
      %v466 = vld [vmem:[%s200 + $0x18] sm:$0xff]
      %v471 = vunpack.c.l.b16 %v463
      %v472 = vunpack.c.h.b16 %v463
      %v473 = vunpack.c.l.b16 %v464
      %v474 = vunpack.c.h.b16 %v464
      %v475 = vunpack.c.l.b16 %v465
      %v476 = vunpack.c.h.b16 %v465
      %v477 = vunpack.c.l.b16 %v466
      %v478 = vunpack.c.h.b16 %v466
      %v479 = vpack.c.b16 %v475, %v471
      %v480 = vpack.c.b16 %v476, %v472
      %v481 = vpack.c.b16 %v477, %v473
      %v482 = vpack.c.b16 %v478, %v474
      %483 = vrot.lane.b32.xlu0 %v479, 91
      %v484 = vpop.permute.xlu0 %483
      %485 = vrot.lane.b32.xlu0 %v480, 91
      %v486 = vpop.permute.xlu0 %485
      %487 = vrot.lane.b32.xlu0 %v481, 91
      %v488 = vpop.permute.xlu0 %487
      %489 = vrot.lane.b32.xlu0 %v482, 91
      %v490 = vpop.permute.xlu0 %489
      %vm491 = vcmask 744448
      %v492 = vsel %vm491, %v484, %v486
      %v493 = vsel %vm491, %v486, %v488
      %v494 = vsel %vm491, %v488, %v490
      %498 = vst [vmem:[#allocation2 + $0xa8] sm:$0xff] %v492
      %499 = vst [vmem:[#allocation2 + $0xb0] sm:$0xff] %v493
      %500 = vst [vmem:[#allocation2 + $0xb8] sm:$0xff] %v494
      %v501 = vld [vmem:[%s200] sm:$0xff]
      %v502 = vld [vmem:[%s200 + $0x8] sm:$0xff]
      %v503 = vld [vmem:[%s200 + $0x10] sm:$0xff]
      %v504 = vld [vmem:[%s200 + $0x18] sm:$0xff]
      %v509 = vunpack.c.l.b16 %v501
      %v510 = vunpack.c.h.b16 %v501
      %v511 = vunpack.c.l.b16 %v502
      %v512 = vunpack.c.h.b16 %v502
      %v513 = vunpack.c.l.b16 %v503
      %v514 = vunpack.c.h.b16 %v503
      %v515 = vunpack.c.l.b16 %v504
      %v516 = vunpack.c.h.b16 %v504
      %v517 = vpack.c.b16 %v513, %v509
      %v518 = vpack.c.b16 %v514, %v510
      %v519 = vpack.c.b16 %v515, %v511
      %v520 = vpack.c.b16 %v516, %v512
      %521 = vrot.lane.b32.xlu0 %v517, 90
      %v522 = vpop.permute.xlu0 %521
      %523 = vrot.lane.b32.xlu0 %v518, 90
      %v524 = vpop.permute.xlu0 %523
      %525 = vrot.lane.b32.xlu0 %v519, 90
      %v526 = vpop.permute.xlu0 %525
      %527 = vrot.lane.b32.xlu0 %v520, 90
      %v528 = vpop.permute.xlu0 %527
      %vm529 = vcmask 736256
      %v530 = vsel %vm529, %v522, %v524
      %v531 = vsel %vm529, %v524, %v526
      %v532 = vsel %vm529, %v526, %v528
      %536 = vst [vmem:[#allocation2 + $0xc0] sm:$0xff] %v530
      %537 = vst [vmem:[#allocation2 + $0xc8] sm:$0xff] %v531
      %538 = vst [vmem:[#allocation2 + $0xd0] sm:$0xff] %v532
      %v539 = vld [vmem:[%s1] sm:$0xff]
      %v540 = vld [vmem:[#allocation2] sm:$0xff]
      %v541 = vld [vmem:[#allocation2 + $0x8] sm:$0xff]
      %v542 = vld [vmem:[#allocation2 + $0x10] sm:$0xff]
      %v543 = vld [vmem:[#allocation2 + $0x18] sm:$0xff]
      %v544 = vld [vmem:[#allocation2 + $0x20] sm:$0xff]
      %v545 = vld [vmem:[#allocation2 + $0x28] sm:$0xff]
      %v546 = vld [vmem:[#allocation2 + $0x30] sm:$0xff]
      %v547 = vld [vmem:[#allocation2 + $0x38] sm:$0xff]
      %v548 = vld [vmem:[#allocation2 + $0x40] sm:$0xff]
      %v549 = vld [vmem:[#allocation2 + $0x48] sm:$0xff]
      %v550 = vld [vmem:[#allocation2 + $0x50] sm:$0xff]
      %v551 = vld [vmem:[#allocation2 + $0x58] sm:$0xff]
      %v552 = vld [vmem:[#allocation2 + $0x60] sm:$0xff]
      %v553 = vld [vmem:[#allocation2 + $0x68] sm:$0xff]
      %v554 = vld [vmem:[#allocation2 + $0x70] sm:$0xff]
      %v555 = vld [vmem:[#allocation2 + $0x78] sm:$0xff]
      %v556 = vld [vmem:[#allocation2 + $0x80] sm:$0xff]
      %v557 = vld [vmem:[#allocation2 + $0x88] sm:$0xff]
      %v558 = vld [vmem:[#allocation2 + $0x90] sm:$0xff]
      %v559 = vld [vmem:[#allocation2 + $0x98] sm:$0xff]
      %v560 = vld [vmem:[#allocation2 + $0xa0] sm:$0xff]
      %v561 = vld [vmem:[#allocation2 + $0xa8] sm:$0xff]
      %v562 = vld [vmem:[#allocation2 + $0xb0] sm:$0xff]
      %v563 = vld [vmem:[#allocation2 + $0xb8] sm:$0xff]
      %v564 = vld [vmem:[#allocation2 + $0xc0] sm:$0xff]
      %v565 = vld [vmem:[#allocation2 + $0xc8] sm:$0xff]
      %v566 = vld [vmem:[#allocation2 + $0xd0] sm:$0xff]
      %v568 = vunpack.c.l.b16 %v539
      %v569 = vunpack.c.h.b16 %v539
      %v570 = vpack.c.b16 %v568, %v568
      %v571 = vpack.c.b16 %v569, %v569
      %vm573 = vcmask 130048
      %v575 = vsel %vm573, %v571, 0
      %577 = vmatprep.subr.bf16.mxu0 %v541
      %578 = vmatpush1.bf16.msra.mxu0 %v540
      %579 = vmatprep.subr.bf16.mxu0 %v544
      %580 = vmatpush1.bf16.msra.mxu0 %v543
      %581 = vmatprep.subr.bf16.mxu0 %v547
      %582 = vmatpush1.bf16.msra.mxu0 %v546
      %583 = vmatprep.subr.bf16.mxu0 %v550
      %584 = vmatpush1.bf16.msra.mxu0 %v549
      %585 = vmatprep.subr.bf16.mxu0 %v553
      %586 = vmatpush1.bf16.msra.mxu0 %v552
      %587 = vmatprep.subr.bf16.mxu0 %v556
      %588 = vmatpush1.bf16.msra.mxu0 %v555
      %589 = vmatprep.subr.bf16.mxu0 %v559
      %590 = vmatpush1.bf16.msra.mxu0 %v558
      %591 = vmatprep.subr.bf16.mxu0 %v562
      %592 = vmatpush1.bf16.msra.mxu0 %v561
      %593 = vmatprep.subr.bf16.mxu0 %v565
      %594 = vmatpush1.bf16.msra.mxu0 %v564
      %595 = vmatprep.subr.bf16.mxu0 0
      %596 = vmatpush1.bf16.msra.mxu0 0
      %597 = vmatprep.subr.bf16.mxu0 0
      %598 = vmatpush1.bf16.msra.mxu0 0
      %599 = vmatprep.subr.bf16.mxu0 0
      %600 = vmatpush1.bf16.msra.mxu0 0
      %601 = vmatprep.subr.bf16.mxu0 0
      %602 = vmatpush1.bf16.msra.mxu0 0
      %603 = vmatprep.subr.bf16.mxu0 0
      %604 = vmatpush1.bf16.msra.mxu0 0
      %605 = vmatprep.subr.bf16.mxu0 0
      %606 = vmatpush1.bf16.msra.mxu0 0
      %607 = vmatprep.subr.bf16.mxu0 0
      %608 = vmatpush1.bf16.msra.mxu0 0
      %609 = vmatprep.mubr.bf16.mxu0 %v575
      %610 = vmatmul.mubr.bf16.gmra.mrb[0].mxu0 %v570
      %v611 = vpop.f32.mrb[0].mxu0
      %v612 = vadd.f32 0.0, %v611
      %v613 = vpop.f32.mrb[0].mxu0
      %v614 = vadd.f32 0.0, %v613
      %v615 = vpop.f32.mrb[0].mxu0
      %v616 = vpop.f32.mrb[0].mxu0
      %617 = vdwg.mxu0
      %618 = vmatprep.subr.bf16.mxu0 0
      %619 = vmatpush1.bf16.msra.mxu0 %v542
      %620 = vmatprep.subr.bf16.mxu0 0
      %621 = vmatpush1.bf16.msra.mxu0 %v545
      %622 = vmatprep.subr.bf16.mxu0 0
      %623 = vmatpush1.bf16.msra.mxu0 %v548
      %624 = vmatprep.subr.bf16.mxu0 0
      %625 = vmatpush1.bf16.msra.mxu0 %v551
      %626 = vmatprep.subr.bf16.mxu0 0
      %627 = vmatpush1.bf16.msra.mxu0 %v554
      %628 = vmatprep.subr.bf16.mxu0 0
      %629 = vmatpush1.bf16.msra.mxu0 %v557
      %630 = vmatprep.subr.bf16.mxu0 0
      %631 = vmatpush1.bf16.msra.mxu0 %v560
      %632 = vmatprep.subr.bf16.mxu0 0
      %633 = vmatpush1.bf16.msra.mxu0 %v563
      %634 = vmatprep.subr.bf16.mxu0 0
      %635 = vmatpush1.bf16.msra.mxu0 %v566
      %636 = vmatprep.subr.bf16.mxu0 0
      %637 = vmatpush1.bf16.msra.mxu0 0
      %638 = vmatprep.subr.bf16.mxu0 0
      %639 = vmatpush1.bf16.msra.mxu0 0
      %640 = vmatprep.subr.bf16.mxu0 0
      %641 = vmatpush1.bf16.msra.mxu0 0
      %642 = vmatprep.subr.bf16.mxu0 0
      %643 = vmatpush1.bf16.msra.mxu0 0
      %644 = vmatprep.subr.bf16.mxu0 0
      %645 = vmatpush1.bf16.msra.mxu0 0
      %646 = vmatprep.subr.bf16.mxu0 0
      %647 = vmatpush1.bf16.msra.mxu0 0
      %648 = vmatprep.subr.bf16.mxu0 0
      %649 = vmatpush1.bf16.msra.mxu0 0
      %650 = vmatprep.mubr.bf16.mxu0 %v575
      %651 = vmatmul.mubr.bf16.gmra.mrb[0].mxu0 %v570
      %v652 = vpop.f32.mrb[0].mxu0
      %v653 = vadd.f32 0.0, %v652
      %v654 = vpop.f32.mrb[0].mxu0
      %v655 = vpop.f32.mrb[0].mxu0
      %v656 = vpop.f32.mrb[0].mxu0
      %657 = vdwg.mxu0
      %658 = vst [vmem:[%s205] sm:$0xff] %v612
      %659 = vst [vmem:[%s205 + $0x8] sm:$0xff] %v614
      %660 = vst [vmem:[%s205 + $0x10] sm:$0xff] %v653
      %v661 = vld [vmem:[%s2] sm:$0x7]
      %v663 = vlaneseq
      %v664 = vshrl.u32 %v663, 7
      %v665 = vsub.s32 0, %v664
      %v666 = vrot.slane %v661, %v665
      %v667 = vlaneseq
      %v668 = vshrl.u32 %v667, 7
      %v669 = vsub.s32 1, %v668
      %v670 = vrot.slane %v661, %v669
      %v671 = vlaneseq
      %v672 = vshrl.u32 %v671, 7
      %v673 = vsub.s32 2, %v672
      %v674 = vrot.slane %v661, %v673
      %v678 = vmul.f32 %v612, %v666
      %v679 = vmul.f32 %v614, %v670
      %v680 = vmul.f32 %v653, %v674
      %v681 = vadd.f32 %v678, %v679
      %v682 = vadd.f32 %v681, %v680
      %683 = vadd.xlane.f32.xlu0 %v682
      %v684 = vpop.xlane.xlu0 %683
      %vm685 = vcmask 7168
      %686 = vst.msk [vmem:[%s210] sm:$0xff] %vm685, %v684
      %v687 = vmul.f32 %v678, %v678
      %v688 = vmul.f32 %v679, %v679
      %v689 = vmul.f32 %v680, %v680
      %v690 = vadd.f32 %v687, %v688
      %v691 = vadd.f32 %v690, %v689
      %692 = vadd.xlane.f32.xlu0 %v691
      %v693 = vpop.xlane.xlu0 %692
      %s694 = scalar_lea.vmem %s210, 8
      %695 = vst.msk [vmem:[%s694] sm:$0xff] %vm685, %v693
      %p696 = scmp.lt.s32.totalorder %s16, 1
      %s697 = scalar_select %p696, %s16, 1
      %s698 = smul.addr %s697, 3
      %s699 = smul.addr %s698, 8
      %s700 = scalar_lea.vmem %s3, %s699
      %p701 = scmp.lt.s32.totalorder %s16, 1
      %s702 = scalar_select %p701, %s16, 1
      %s703 = smul.addr %s702, 2
      %s704 = smul.addr %s703, 8
      %s705 = scalar_lea.vmem %s4, %s704
      // Predicated region
      $region33: #{_lambda_.18} parent=31 // pred_check
        %p706 = pneg %p102
      $region34: #{_lambda_.18} parent=31 // pred_check_branch
        %708 = sbr.rel (%p706) target = $region36
      $region35: #{_lambda_.18} parent=31 // pred_region
        _
      $region36: #{_lambda_.18} parent=31 // pred_fallthru
        _
      // Predicated region
      $region37: #{_lambda_.18} parent=31 // pred_check
        %p709 = pneg %p128
      $region38: #{_lambda_.18} parent=31 // pred_check_branch
        %711 = sbr.rel (%p709) target = $region40
      $region39: #{_lambda_.18} parent=31 // pred_region
        _
      $region40: #{_lambda_.18} parent=31 // pred_fallthru
        _
    $region32: #{_lambda_.18} parent=5 // pred_fallthru
      _
    %p712 = scmp.le.s32.totalorder 2, %s11
    // Predicated region
    $region41: #{_lambda_.18} parent=5 // pred_check
      %p713 = pneg %p712
    $region42: #{_lambda_.18} parent=5 // pred_check_branch
      %715 = sbr.rel (%p713) target = $region44
    $region43: #{_lambda_.18} parent=5 // pred_region
      %s716 = ssub.s32 %s11, 2
      // Predicated region
      $region45: #{_lambda_.18} parent=43 // pred_check
        %p717 = pneg %p108
      $region46: #{_lambda_.18} parent=43 // pred_check_branch
        %719 = sbr.rel (%p717) target = $region48
      $region47: #{_lambda_.18} parent=43 // pred_region
        %p720 = scmp.lt.s32.totalorder %s17, 1
        %s721 = scalar_select %p720, %s17, 1
        %s722 = smul.addr %s721, 3
        %s723 = smul.addr %s722, 8
        %s724 = scalar_lea.vmem %s3, %s723
      $region48: #{_lambda_.18} parent=43 // pred_fallthru
        _
      // Predicated region
      $region49: #{_lambda_.18} parent=43 // pred_check
        %p725 = pneg %p134
      $region50: #{_lambda_.18} parent=43 // pred_check_branch
        %727 = sbr.rel (%p725) target = $region52
      $region51: #{_lambda_.18} parent=43 // pred_region
        %p728 = scmp.lt.s32.totalorder %s17, 1
        %s729 = scalar_select %p728, %s17, 1
        %s730 = smul.addr %s729, 2
        %s731 = smul.addr %s730, 8
        %s732 = scalar_lea.vmem %s4, %s731
      $region52: #{_lambda_.18} parent=43 // pred_fallthru
        _
    $region44: #{_lambda_.18} parent=5 // pred_fallthru
      _
  $region6: #{_lambda_.18} parent=0 // loop_footer
    %s15 = sadd.s32 1, %s11
  $region7: #{_lambda_.18} parent=0 // loop_footer_branch
    %10 = sbr.rel target = $region3
  $region8: #{_lambda_.18} parent=0 // loop_exit
    _

// kernel: _lambda_.19
$region0: #{_lambda_.19}
  #allocation0 [shape = 'u32[]', space=smem, size = 0x4, offset = 0x4, fixed_abs, tag = 'smem constant byte address 0x4 - core index']
  #allocation1 [shape = 'u32[144,128]{1,0:T(1,128)}', space=vmem, size = 0x12000, scoped, tag = 'internal scratch']
  #allocation2 [shape = 'bf16[392,384]{1,0:T(8,128)(2,1)}', space=vmem, size = 0x49800, scoped, tag = 'scratch operand']
  %s0 = inlined_call_operand.vmem [shape: bf16[2,1,8,522], index: 0, kind: input, shape index: {}]
  %s1 = inlined_call_operand.vmem [shape: bf16[8,392], index: 1, kind: input, shape index: {}]
  %s2 = inlined_call_operand.vmem [shape: f32[1,384], index: 2, kind: input, shape index: {}]
  %s3 = inlined_call_operand.vmem [shape: f32[8,1], index: 3, kind: input, shape index: {}]
  %s4 = inlined_call_operand.vmem [shape: f32[2,8,384], index: 4, kind: output, shape index: {0}]
  %s5 = inlined_call_operand.hbm [shape: f32[2,2,8,1], index: 5, kind: output, shape index: {1}]
  %6 = xla_tuple %s4, %s5
  %s7 = sld [smem:[#allocation0]]
  $region57: #{_lambda_.19} parent=0
    _
  %s9 = ssub.s32 1, %s7
  %s10 = scalar_select 0, %s9, %s7
  $region1: #{_lambda_.19} parent=0
    #allocation3 [shape = 'u8[16384]{0}', space=vmem, size = 0x4000, scoped, tag = 'output window, operand 1']
    #allocation4 [shape = 's32[2]{0}', space=sflag, size = 0x8, scoped, tag = 'scoped memory for _lambda_.19']
    %11 = vsyncpa [#allocation4], 0
    %s12 = scalar_lea.sflag [#allocation4], 1
    %13 = vsyncpa %s12, 0
    loop: start=0, step=1, limit=4
    $region2: #{_lambda_.19} parent=1 // loop_pre_header
      _
    $region3: #{_lambda_.19} parent=1 // loop_header
      %s15 = sphi 0, %s19
      %p16 = scmp.ge.s32.totalorder %s15, 4
      %s25 = sphi 0, %s27
      %s28 = sphi 0, %s25
      %s29 = sphi 0, %s28
      %s45 = sphi 0, %s29
      %s49 = sphi 0, %s49
      %s51 = sphi 0, %s49
      %s52 = sphi 0, %s51
      %s66 = sphi 0, %s52
      %s70 = sphi 0, %s70
      %s72 = sphi 0, %s70
      %s73 = sphi 0, %s72
      %s87 = sphi 0, %s73
      %s91 = sphi 0, %s91
      %s93 = sphi 0, %s91
      %s94 = sphi 0, %s93
      %s108 = sphi 0, %s94
      %s114 = sphi 0, %s116
      %s117 = sphi 0, %s114
      %s118 = sphi 0, %s117
      %s134 = sphi 0, %s118
      %s140 = sphi 0, %s142
      %s143 = sphi 0, %s140
      %s144 = sphi 0, %s143
      %s160 = sphi 0, %s144
    $region4: #{_lambda_.19} parent=1 // loop_header_branch
      %18 = sbr.rel (%p16) target = $region8
    $region5: #{_lambda_.19} parent=1 // loop_body
      %s20 = ssub.s32 %s15, 1
      %s21 = ssub.s32 %s15, 2
      %s22 = sadd.s32 %s15, 1
      %s23 = ssub.s32 %s15, %s22
      %p24 = scmp.eq.s32.totalorder %s23, 0
      %s26 = sadd.s32 %s25, 1
      %s27 = scalar_select %p24, %s25, %s26
      %p30 = pneg %p24
      %p31 = scmp.eq.s32.totalorder %s15, 1
      %p32 = por %p30, %p31
      %p33 = scmp.ne.s32.totalorder %s25, %s28
      %p34 = scmp.eq.s32.totalorder %s15, 0
      %p35 = por %p33, %p34
      %p36 = scmp.ne.s32.totalorder %s25, %s28
      %p37 = scmp.eq.s32.totalorder %s20, 1
      %p38 = por %p36, %p37
      %p39 = scmp.ne.s32.totalorder %s28, %s29
      %p40 = scmp.eq.s32.totalorder %s20, 0
      %p41 = por %p39, %p40
      %p42 = scmp.ne.s32.totalorder %s28, %s29
      %p43 = scmp.eq.s32.totalorder %s21, 1
      %p44 = por %p42, %p43
      %p46 = scmp.ne.s32.totalorder %s29, %s45
      %p47 = scmp.eq.s32.totalorder %s21, 0
      %p48 = por %p46, %p47
      %s50 = sadd.s32 %s49, 1
      %p53 = scmp.eq.s32.totalorder %s15, 1
      %p54 = scmp.ne.s32.totalorder %s49, %s51
      %p55 = scmp.eq.s32.totalorder %s15, 0
      %p56 = por %p54, %p55
      %p57 = scmp.ne.s32.totalorder %s49, %s51
      %p58 = scmp.eq.s32.totalorder %s20, 1
      %p59 = por %p57, %p58
      %p60 = scmp.ne.s32.totalorder %s51, %s52
      %p61 = scmp.eq.s32.totalorder %s20, 0
      %p62 = por %p60, %p61
      %p63 = scmp.ne.s32.totalorder %s51, %s52
      %p64 = scmp.eq.s32.totalorder %s21, 1
      %p65 = por %p63, %p64
      %p67 = scmp.ne.s32.totalorder %s52, %s66
      %p68 = scmp.eq.s32.totalorder %s21, 0
      %p69 = por %p67, %p68
      %s71 = sadd.s32 %s70, 1
      %p74 = scmp.eq.s32.totalorder %s15, 1
      %p75 = scmp.ne.s32.totalorder %s70, %s72
      %p76 = scmp.eq.s32.totalorder %s15, 0
      %p77 = por %p75, %p76
      %p78 = scmp.ne.s32.totalorder %s70, %s72
      %p79 = scmp.eq.s32.totalorder %s20, 1
      %p80 = por %p78, %p79
      %p81 = scmp.ne.s32.totalorder %s72, %s73
      %p82 = scmp.eq.s32.totalorder %s20, 0
      %p83 = por %p81, %p82
      %p84 = scmp.ne.s32.totalorder %s72, %s73
      %p85 = scmp.eq.s32.totalorder %s21, 1
      %p86 = por %p84, %p85
      %p88 = scmp.ne.s32.totalorder %s73, %s87
      %p89 = scmp.eq.s32.totalorder %s21, 0
      %p90 = por %p88, %p89
      %s92 = sadd.s32 %s91, 1
      %p95 = scmp.eq.s32.totalorder %s15, 1
      %p96 = scmp.ne.s32.totalorder %s91, %s93
      %p97 = scmp.eq.s32.totalorder %s15, 0
      %p98 = por %p96, %p97
      %p99 = scmp.ne.s32.totalorder %s91, %s93
      %p100 = scmp.eq.s32.totalorder %s20, 1
      %p101 = por %p99, %p100
      %p102 = scmp.ne.s32.totalorder %s93, %s94
      %p103 = scmp.eq.s32.totalorder %s20, 0
      %p104 = por %p102, %p103
      %p105 = scmp.ne.s32.totalorder %s93, %s94
      %p106 = scmp.eq.s32.totalorder %s21, 1
      %p107 = por %p105, %p106
      %p109 = scmp.ne.s32.totalorder %s94, %s108
      %p110 = scmp.eq.s32.totalorder %s21, 0
      %p111 = por %p109, %p110
      %s112 = ssub.s32 %s15, %s22
      %p113 = scmp.eq.s32.totalorder %s112, 0
      %s115 = sadd.s32 %s114, 1
      %s116 = scalar_select %p113, %s114, %s115
      %p119 = pneg %p113
      %p120 = scmp.eq.s32.totalorder %s15, 1
      %p121 = por %p119, %p120
      %p122 = scmp.ne.s32.totalorder %s114, %s117
      %p123 = scmp.eq.s32.totalorder %s15, 0
      %p124 = por %p122, %p123
      %p125 = scmp.ne.s32.totalorder %s114, %s117
      %p126 = scmp.eq.s32.totalorder %s20, 1
      %p127 = por %p125, %p126
      %p128 = scmp.ne.s32.totalorder %s117, %s118
      %p129 = scmp.eq.s32.totalorder %s20, 0
      %p130 = por %p128, %p129
      %p131 = scmp.ne.s32.totalorder %s117, %s118
      %p132 = scmp.eq.s32.totalorder %s21, 1
      %p133 = por %p131, %p132
      %p135 = scmp.ne.s32.totalorder %s118, %s134
      %p136 = scmp.eq.s32.totalorder %s21, 0
      %p137 = por %p135, %p136
      %s138 = ssub.s32 %s15, %s22
      %p139 = scmp.eq.s32.totalorder %s138, 0
      %s141 = sadd.s32 %s140, 1
      %s142 = scalar_select %p139, %s140, %s141
      %p145 = pneg %p139
      %p146 = scmp.eq.s32.totalorder %s15, 1
      %p147 = por %p145, %p146
      %p148 = scmp.ne.s32.totalorder %s140, %s143
      %p149 = scmp.eq.s32.totalorder %s15, 0
      %p150 = por %p148, %p149
      %p151 = scmp.ne.s32.totalorder %s140, %s143
      %p152 = scmp.eq.s32.totalorder %s20, 1
      %p153 = por %p151, %p152
      %p154 = scmp.ne.s32.totalorder %s143, %s144
      %p155 = scmp.eq.s32.totalorder %s20, 0
      %p156 = por %p154, %p155
      %p157 = scmp.ne.s32.totalorder %s143, %s144
      %p158 = scmp.eq.s32.totalorder %s21, 1
      %p159 = por %p157, %p158
      %p161 = scmp.ne.s32.totalorder %s144, %s160
      %p162 = scmp.eq.s32.totalorder %s21, 0
      %p163 = por %p161, %p162
      %p164 = scmp.le.s32.totalorder 1, %s15
      %p165 = scmp.lt.s32.totalorder %s15, 3
      %p166 = pnand %p164, %p165
      %p167 = pneg %p166
      // Predicated region
      $region9: #{_lambda_.19} parent=5 // pred_check
        _
      $region10: #{_lambda_.19} parent=5 // pred_check_branch
        %169 = sbr.rel (%p166) target = $region12
      $region11: #{_lambda_.19} parent=5 // pred_region
        %s170 = ssub.s32 %s15, 1
        // Predicated region
        $region13: #{_lambda_.19} parent=11 // pred_check
          %p171 = pneg %p62
        $region14: #{_lambda_.19} parent=11 // pred_check_branch
          %173 = sbr.rel (%p171) target = $region16
        $region15: #{_lambda_.19} parent=11 // pred_region
          _
        $region16: #{_lambda_.19} parent=11 // pred_fallthru
          _
        // Predicated region
        $region17: #{_lambda_.19} parent=11 // pred_check
          %p174 = pneg %p83
        $region18: #{_lambda_.19} parent=11 // pred_check_branch
          %176 = sbr.rel (%p174) target = $region20
        $region19: #{_lambda_.19} parent=11 // pred_region
          _
        $region20: #{_lambda_.19} parent=11 // pred_fallthru
          _
        // Predicated region
        $region21: #{_lambda_.19} parent=11 // pred_check
          %p177 = pneg %p104
        $region22: #{_lambda_.19} parent=11 // pred_check_branch
          %179 = sbr.rel (%p177) target = $region24
        $region23: #{_lambda_.19} parent=11 // pred_region
          _
        $region24: #{_lambda_.19} parent=11 // pred_fallthru
          _
      $region12: #{_lambda_.19} parent=5 // pred_fallthru
        _
      %p180 = scmp.lt.s32.totalorder %s15, 2
      // Predicated region
      $region25: #{_lambda_.19} parent=5 // pred_check
        %p181 = pneg %p180
      $region26: #{_lambda_.19} parent=5 // pred_check_branch
        %183 = sbr.rel (%p181) target = $region28
      $region27: #{_lambda_.19} parent=5 // pred_region
        // Predicated region
        $region29: #{_lambda_.19} parent=27 // pred_check
          %p184 = pneg %p35
        $region30: #{_lambda_.19} parent=27 // pred_check_branch
          %186 = sbr.rel (%p184) target = $region32
        $region31: #{_lambda_.19} parent=27 // pred_region
          %p187 = scmp.lt.s32.totalorder %s15, 1
          %s188 = scalar_select %p187, %s15, 1
          %s189 = smul.addr %s188, 5
          %s190 = smul.addr %s189, 4
          %s191 = scalar_lea.vmem %s0, %s190
        $region32: #{_lambda_.19} parent=27 // pred_fallthru
          _
      $region28: #{_lambda_.19} parent=5 // pred_fallthru
        _
      %p192 = scmp.le.s32.totalorder 1, %s15
      %p193 = scmp.lt.s32.totalorder %s15, 3
      %p194 = pnand %p192, %p193
      %p195 = pneg %p194
      // Predicated region
      $region33: #{_lambda_.19} parent=5 // pred_check
        _
      $region34: #{_lambda_.19} parent=5 // pred_check_branch
        %197 = sbr.rel (%p194) target = $region36
      $region35: #{_lambda_.19} parent=5 // pred_region
        %s198 = ssub.s32 %s15, 1
        %p199 = scmp.lt.s32.totalorder %s20, 1
        %s200 = scalar_select %p199, %s20, 1
        %s201 = smul.addr %s200, 5
        %s202 = smul.addr %s201, 4
        %s203 = scalar_lea.vmem %s0, %s202
        %p204 = pneg %p41
        %p205 = pneg %p38
        %p206 = pneg %p62
        %p207 = pneg %p59
        %p208 = pneg %p83
        %p209 = pneg %p80
        %p210 = pneg %p104
        %p211 = pneg %p101
        %p212 = pneg %p130
        %p213 = pneg %p127
        %p214 = scmp.lt.s32.totalorder %s20, 1
        %s215 = scalar_select %p214, %s20, 1
        %s216 = smul.addr %s215, 3
        %s217 = smul.addr %s216, 8
        %s218 = scalar_lea.vmem %s4, %s217
        %p219 = pneg %p156
        %p220 = pneg %p153
        %s221 = sand.u32 %s143, 1
        %s222 = scalar_lea.sflag [#allocation4], %s221
        %s223 = sand.u32 %s143, 1
        %s224 = smul.addr %s223, 16
        %s225 = scalar_lea.vmem [#allocation3], %s224
        %p226 = scmp.lt.s32.totalorder %s20, 1
        %s227 = scalar_select %p226, %s20, 1
        %s228 = smul.addr %s227, 5
        %s229 = smul.addr %s228, 4
        %s230 = scalar_lea.vmem %s0, %s229
        %p231 = scmp.lt.s32.totalorder %s20, 1
        %s232 = scalar_select %p231, %s20, 1
        %s233 = smul.addr %s232, 3
        %s234 = smul.addr %s233, 8
        %s235 = scalar_lea.vmem %s4, %s234
        %v237 = vld [vmem:[%s230] sm:$0xff]
        %v238 = vld [vmem:[%s230 + $0x8] sm:$0xf]
        %239 = vst [vmem:[#allocation2] sm:$0xff] %v237
        %240 = vst [vmem:[#allocation2 + $0x8] sm:$0xf] %v238
        %v241 = vld [vmem:[%s230] sm:$0xff]
        %v242 = vld [vmem:[%s230 + $0x8] sm:$0xff]
        %245 = vrot.lane.b32.xlu0 %v241, 127
        %v246 = vpop.permute.xlu0 %245
        %247 = vrot.lane.b32.xlu0 %v242, 127
        %v248 = vpop.permute.xlu0 %247
        %v249 = vrot.slane %v246, 4
        %v250 = vrot.slane %v248, 4
        %vm251 = vcmask 1043456
        %v252 = vsel %vm251, %v249, %v250
        %vm253 = vcmask 1039360
        %v254 = vsel %vm253, %v246, %v252
        %v255 = vsel %vm253, %v248, %v250
        %258 = vst [vmem:[#allocation2 + $0xc] sm:$0xff] %v254
        %259 = vst [vmem:[#allocation2 + $0x14] sm:$0xf] %v255
        %v260 = vld [vmem:[%s230] sm:$0xff]
        %v261 = vld [vmem:[%s230 + $0x8] sm:$0xff]
        %264 = vrot.lane.b32.xlu0 %v260, 126
        %v265 = vpop.permute.xlu0 %264
        %266 = vrot.lane.b32.xlu0 %v261, 126
        %v267 = vpop.permute.xlu0 %266
        %v268 = vrot.slane %v265, 4
        %v269 = vrot.slane %v267, 4
        %v270 = vsel %vm251, %v268, %v269
        %vm271 = vcmask 1031168
        %v272 = vsel %vm271, %v265, %v270
        %v273 = vsel %vm271, %v267, %v269
        %276 = vst [vmem:[#allocation2 + $0x18] sm:$0xff] %v272
        %277 = vst [vmem:[#allocation2 + $0x20] sm:$0xf] %v273
        %v278 = vld [vmem:[%s230] sm:$0xff]
        %v279 = vld [vmem:[%s230 + $0x8] sm:$0xff]
        %282 = vrot.lane.b32.xlu0 %v278, 125
        %v283 = vpop.permute.xlu0 %282
        %284 = vrot.lane.b32.xlu0 %v279, 125
        %v285 = vpop.permute.xlu0 %284
        %v286 = vrot.slane %v283, 4
        %v287 = vrot.slane %v285, 4
        %v288 = vsel %vm251, %v286, %v287
        %vm289 = vcmask 1022976
        %v290 = vsel %vm289, %v283, %v288
        %v291 = vsel %vm289, %v285, %v287
        %294 = vst [vmem:[#allocation2 + $0x24] sm:$0xff] %v290
        %295 = vst [vmem:[#allocation2 + $0x2c] sm:$0xf] %v291
        %v296 = vld [vmem:[%s230] sm:$0xff]
        %v297 = vld [vmem:[%s230 + $0x8] sm:$0xff]
        %300 = vrot.lane.b32.xlu0 %v296, 124
        %v301 = vpop.permute.xlu0 %300
        %302 = vrot.lane.b32.xlu0 %v297, 124
        %v303 = vpop.permute.xlu0 %302
        %v304 = vrot.slane %v301, 4
        %v305 = vrot.slane %v303, 4
        %v306 = vsel %vm251, %v304, %v305
        %vm307 = vcmask 1014784
        %v308 = vsel %vm307, %v301, %v306
        %v309 = vsel %vm307, %v303, %v305
        %312 = vst [vmem:[#allocation2 + $0x30] sm:$0xff] %v308
        %313 = vst [vmem:[#allocation2 + $0x38] sm:$0xf] %v309
        %v314 = vld [vmem:[%s230] sm:$0xff]
        %v315 = vld [vmem:[%s230 + $0x8] sm:$0xff]
        %318 = vrot.lane.b32.xlu0 %v314, 123
        %v319 = vpop.permute.xlu0 %318
        %320 = vrot.lane.b32.xlu0 %v315, 123
        %v321 = vpop.permute.xlu0 %320
        %v322 = vrot.slane %v319, 4
        %v323 = vrot.slane %v321, 4
        %v324 = vsel %vm251, %v322, %v323
        %vm325 = vcmask 1006592
        %v326 = vsel %vm325, %v319, %v324
        %v327 = vsel %vm325, %v321, %v323
        %330 = vst [vmem:[#allocation2 + $0x3c] sm:$0xff] %v326
        %331 = vst [vmem:[#allocation2 + $0x44] sm:$0xf] %v327
        %v332 = vld [vmem:[%s230] sm:$0xff]
        %v333 = vld [vmem:[%s230 + $0x8] sm:$0xff]
        %336 = vrot.lane.b32.xlu0 %v332, 122
        %v337 = vpop.permute.xlu0 %336
        %338 = vrot.lane.b32.xlu0 %v333, 122
        %v339 = vpop.permute.xlu0 %338
        %v340 = vrot.slane %v337, 4
        %v341 = vrot.slane %v339, 4
        %v342 = vsel %vm251, %v340, %v341
        %vm343 = vcmask 998400
        %v344 = vsel %vm343, %v337, %v342
        %v345 = vsel %vm343, %v339, %v341
        %348 = vst [vmem:[#allocation2 + $0x48] sm:$0xff] %v344
        %349 = vst [vmem:[#allocation2 + $0x50] sm:$0xf] %v345
        %v350 = vld [vmem:[%s230] sm:$0xff]
        %v351 = vld [vmem:[%s230 + $0x8] sm:$0xff]
        %354 = vrot.lane.b32.xlu0 %v350, 106
        %v355 = vpop.permute.xlu0 %354
        %356 = vrot.lane.b32.xlu0 %v351, 106
        %v357 = vpop.permute.xlu0 %356
        %v358 = vrot.slane %v355, 4
        %v359 = vrot.slane %v357, 4
        %v360 = vsel %vm251, %v358, %v359
        %vm361 = vcmask 867328
        %v362 = vsel %vm361, %v355, %v360
        %v363 = vsel %vm361, %v357, %v359
        %366 = vst [vmem:[#allocation2 + $0x54] sm:$0xff] %v362
        %367 = vst [vmem:[#allocation2 + $0x5c] sm:$0xf] %v363
        %v368 = vld [vmem:[%s230] sm:$0xff]
        %v369 = vld [vmem:[%s230 + $0x8] sm:$0xff]
        %372 = vrot.lane.b32.xlu0 %v368, 105
        %v373 = vpop.permute.xlu0 %372
        %374 = vrot.lane.b32.xlu0 %v369, 105
        %v375 = vpop.permute.xlu0 %374
        %v376 = vrot.slane %v373, 4
        %v377 = vrot.slane %v375, 4
        %v378 = vsel %vm251, %v376, %v377
        %vm379 = vcmask 859136
        %v380 = vsel %vm379, %v373, %v378
        %v381 = vsel %vm379, %v375, %v377
        %384 = vst [vmem:[#allocation2 + $0x60] sm:$0xff] %v380
        %385 = vst [vmem:[#allocation2 + $0x68] sm:$0xf] %v381
        %v386 = vld [vmem:[%s230] sm:$0xff]
        %v387 = vld [vmem:[%s230 + $0x8] sm:$0xff]
        %390 = vrot.lane.b32.xlu0 %v386, 104
        %v391 = vpop.permute.xlu0 %390
        %392 = vrot.lane.b32.xlu0 %v387, 104
        %v393 = vpop.permute.xlu0 %392
        %v394 = vrot.slane %v391, 4
        %v395 = vrot.slane %v393, 4
        %v396 = vsel %vm251, %v394, %v395
        %vm397 = vcmask 850944
        %v398 = vsel %vm397, %v391, %v396
        %v399 = vsel %vm397, %v393, %v395
        %402 = vst [vmem:[#allocation2 + $0x6c] sm:$0xff] %v398
        %403 = vst [vmem:[#allocation2 + $0x74] sm:$0xf] %v399
        %v404 = vld [vmem:[%s230] sm:$0xff]
        %v405 = vld [vmem:[%s230 + $0x8] sm:$0xff]
        %408 = vrot.lane.b32.xlu0 %v404, 103
        %v409 = vpop.permute.xlu0 %408
        %410 = vrot.lane.b32.xlu0 %v405, 103
        %v411 = vpop.permute.xlu0 %410
        %v412 = vrot.slane %v409, 4
        %v413 = vrot.slane %v411, 4
        %v414 = vsel %vm251, %v412, %v413
        %vm415 = vcmask 842752
        %v416 = vsel %vm415, %v409, %v414
        %v417 = vsel %vm415, %v411, %v413
        %420 = vst [vmem:[#allocation2 + $0x78] sm:$0xff] %v416
        %421 = vst [vmem:[#allocation2 + $0x80] sm:$0xf] %v417
        %v422 = vld [vmem:[%s230] sm:$0xff]
        %v423 = vld [vmem:[%s230 + $0x8] sm:$0xff]
        %426 = vrot.lane.b32.xlu0 %v422, 102
        %v427 = vpop.permute.xlu0 %426
        %428 = vrot.lane.b32.xlu0 %v423, 102
        %v429 = vpop.permute.xlu0 %428
        %v430 = vrot.slane %v427, 4
        %v431 = vrot.slane %v429, 4
        %v432 = vsel %vm251, %v430, %v431
        %vm433 = vcmask 834560
        %v434 = vsel %vm433, %v427, %v432
        %v435 = vsel %vm433, %v429, %v431
        %438 = vst [vmem:[#allocation2 + $0x84] sm:$0xff] %v434
        %439 = vst [vmem:[#allocation2 + $0x8c] sm:$0xf] %v435
        %v440 = vld [vmem:[%s230] sm:$0xff]
        %v441 = vld [vmem:[%s230 + $0x8] sm:$0xff]
        %444 = vrot.lane.b32.xlu0 %v440, 101
        %v445 = vpop.permute.xlu0 %444
        %446 = vrot.lane.b32.xlu0 %v441, 101
        %v447 = vpop.permute.xlu0 %446
        %v448 = vrot.slane %v445, 4
        %v449 = vrot.slane %v447, 4
        %v450 = vsel %vm251, %v448, %v449
        %vm451 = vcmask 826368
        %v452 = vsel %vm451, %v445, %v450
        %v453 = vsel %vm451, %v447, %v449
        %456 = vst [vmem:[#allocation2 + $0x90] sm:$0xff] %v452
        %457 = vst [vmem:[#allocation2 + $0x98] sm:$0xf] %v453
        %v458 = vld [vmem:[%s230] sm:$0xff]
        %v459 = vld [vmem:[%s230 + $0x8] sm:$0xff]
        %462 = vrot.lane.b32.xlu0 %v458, 100
        %v463 = vpop.permute.xlu0 %462
        %464 = vrot.lane.b32.xlu0 %v459, 100
        %v465 = vpop.permute.xlu0 %464
        %v466 = vrot.slane %v463, 4
        %v467 = vrot.slane %v465, 4
        %v468 = vsel %vm251, %v466, %v467
        %vm469 = vcmask 818176
        %v470 = vsel %vm469, %v463, %v468
        %v471 = vsel %vm469, %v465, %v467
        %474 = vst [vmem:[#allocation2 + $0x9c] sm:$0xff] %v470
        %475 = vst [vmem:[#allocation2 + $0xa4] sm:$0xf] %v471
        %v476 = vld [vmem:[%s230] sm:$0xff]
        %v477 = vld [vmem:[%s230 + $0x8] sm:$0xff]
        %480 = vrot.lane.b32.xlu0 %v476, 84
        %v481 = vpop.permute.xlu0 %480
        %482 = vrot.lane.b32.xlu0 %v477, 84
        %v483 = vpop.permute.xlu0 %482
        %v484 = vrot.slane %v481, 4
        %v485 = vrot.slane %v483, 4
        %v486 = vsel %vm251, %v484, %v485
        %vm487 = vcmask 687104
        %v488 = vsel %vm487, %v481, %v486
        %v489 = vsel %vm487, %v483, %v485
        %492 = vst [vmem:[#allocation2 + $0xa8] sm:$0xff] %v488
        %493 = vst [vmem:[#allocation2 + $0xb0] sm:$0xf] %v489
        %v494 = vld [vmem:[%s230] sm:$0xff]
        %v495 = vld [vmem:[%s230 + $0x8] sm:$0xff]
        %498 = vrot.lane.b32.xlu0 %v494, 83
        %v499 = vpop.permute.xlu0 %498
        %500 = vrot.lane.b32.xlu0 %v495, 83
        %v501 = vpop.permute.xlu0 %500
        %v502 = vrot.slane %v499, 4
        %v503 = vrot.slane %v501, 4
        %v504 = vsel %vm251, %v502, %v503
        %vm505 = vcmask 678912
        %v506 = vsel %vm505, %v499, %v504
        %v507 = vsel %vm505, %v501, %v503
        %510 = vst [vmem:[#allocation2 + $0xb4] sm:$0xff] %v506
        %511 = vst [vmem:[#allocation2 + $0xbc] sm:$0xf] %v507
        %v512 = vld [vmem:[%s230] sm:$0xff]
        %v513 = vld [vmem:[%s230 + $0x8] sm:$0xff]
        %516 = vrot.lane.b32.xlu0 %v512, 82
        %v517 = vpop.permute.xlu0 %516
        %518 = vrot.lane.b32.xlu0 %v513, 82
        %v519 = vpop.permute.xlu0 %518
        %v520 = vrot.slane %v517, 4
        %v521 = vrot.slane %v519, 4
        %v522 = vsel %vm251, %v520, %v521
        %vm523 = vcmask 670720
        %v524 = vsel %vm523, %v517, %v522
        %v525 = vsel %vm523, %v519, %v521
        %528 = vst [vmem:[#allocation2 + $0xc0] sm:$0xff] %v524
        %529 = vst [vmem:[#allocation2 + $0xc8] sm:$0xf] %v525
        %v530 = vld [vmem:[%s230] sm:$0xff]
        %v531 = vld [vmem:[%s230 + $0x8] sm:$0xff]
        %534 = vrot.lane.b32.xlu0 %v530, 81
        %v535 = vpop.permute.xlu0 %534
        %536 = vrot.lane.b32.xlu0 %v531, 81
        %v537 = vpop.permute.xlu0 %536
        %v538 = vrot.slane %v535, 4
        %v539 = vrot.slane %v537, 4
        %v540 = vsel %vm251, %v538, %v539
        %vm541 = vcmask 662528
        %v542 = vsel %vm541, %v535, %v540
        %v543 = vsel %vm541, %v537, %v539
        %546 = vst [vmem:[#allocation2 + $0xcc] sm:$0xff] %v542
        %547 = vst [vmem:[#allocation2 + $0xd4] sm:$0xf] %v543
        %v548 = vld [vmem:[%s230] sm:$0xff]
        %v549 = vld [vmem:[%s230 + $0x8] sm:$0xff]
        %552 = vrot.lane.b32.xlu0 %v548, 80
        %v553 = vpop.permute.xlu0 %552
        %554 = vrot.lane.b32.xlu0 %v549, 80
        %v555 = vpop.permute.xlu0 %554
        %v556 = vrot.slane %v553, 4
        %v557 = vrot.slane %v555, 4
        %v558 = vsel %vm251, %v556, %v557
        %vm559 = vcmask 654336
        %v560 = vsel %vm559, %v553, %v558
        %v561 = vsel %vm559, %v555, %v557
        %564 = vst [vmem:[#allocation2 + $0xd8] sm:$0xff] %v560
        %565 = vst [vmem:[#allocation2 + $0xe0] sm:$0xf] %v561
        %v566 = vld [vmem:[%s230] sm:$0xff]
        %v567 = vld [vmem:[%s230 + $0x8] sm:$0xff]
        %570 = vrot.lane.b32.xlu0 %v566, 79
        %v571 = vpop.permute.xlu0 %570
        %572 = vrot.lane.b32.xlu0 %v567, 79
        %v573 = vpop.permute.xlu0 %572
        %v574 = vrot.slane %v571, 4
        %v575 = vrot.slane %v573, 4
        %v576 = vsel %vm251, %v574, %v575
        %vm577 = vcmask 646144
        %v578 = vsel %vm577, %v571, %v576
        %v579 = vsel %vm577, %v573, %v575
        %582 = vst [vmem:[#allocation2 + $0xe4] sm:$0xff] %v578
        %583 = vst [vmem:[#allocation2 + $0xec] sm:$0xf] %v579
        %v584 = vld [vmem:[%s230] sm:$0xff]
        %v585 = vld [vmem:[%s230 + $0x8] sm:$0xff]
        %588 = vrot.lane.b32.xlu0 %v584, 78
        %v589 = vpop.permute.xlu0 %588
        %590 = vrot.lane.b32.xlu0 %v585, 78
        %v591 = vpop.permute.xlu0 %590
        %v592 = vrot.slane %v589, 4
        %v593 = vrot.slane %v591, 4
        %v594 = vsel %vm251, %v592, %v593
        %vm595 = vcmask 637952
        %v596 = vsel %vm595, %v589, %v594
        %v597 = vsel %vm595, %v591, %v593
        %600 = vst [vmem:[#allocation2 + $0xf0] sm:$0xff] %v596
        %601 = vst [vmem:[#allocation2 + $0xf8] sm:$0xf] %v597
        %v602 = vld [vmem:[%s230] sm:$0xff]
        %v603 = vld [vmem:[%s230 + $0x8] sm:$0xff]
        %606 = vrot.lane.b32.xlu0 %v602, 62
        %v607 = vpop.permute.xlu0 %606
        %608 = vrot.lane.b32.xlu0 %v603, 62
        %v609 = vpop.permute.xlu0 %608
        %v610 = vrot.slane %v607, 4
        %v611 = vrot.slane %v609, 4
        %v612 = vsel %vm251, %v610, %v611
        %vm613 = vcmask 506880
        %v614 = vsel %vm613, %v607, %v612
        %v615 = vsel %vm613, %v609, %v611
        %618 = vst [vmem:[#allocation2 + $0xfc] sm:$0xff] %v614
        %619 = vst [vmem:[#allocation2 + $0x104] sm:$0xf] %v615
        %v620 = vld [vmem:[%s230] sm:$0xff]
        %v621 = vld [vmem:[%s230 + $0x8] sm:$0xff]
        %624 = vrot.lane.b32.xlu0 %v620, 61
        %v625 = vpop.permute.xlu0 %624
        %626 = vrot.lane.b32.xlu0 %v621, 61
        %v627 = vpop.permute.xlu0 %626
        %v628 = vrot.slane %v625, 4
        %v629 = vrot.slane %v627, 4
        %v630 = vsel %vm251, %v628, %v629
        %vm631 = vcmask 498688
        %v632 = vsel %vm631, %v625, %v630
        %v633 = vsel %vm631, %v627, %v629
        %636 = vst [vmem:[#allocation2 + $0x108] sm:$0xff] %v632
        %637 = vst [vmem:[#allocation2 + $0x110] sm:$0xf] %v633
        %v638 = vld [vmem:[%s230] sm:$0xff]
        %v639 = vld [vmem:[%s230 + $0x8] sm:$0xff]
        %642 = vrot.lane.b32.xlu0 %v638, 60
        %v643 = vpop.permute.xlu0 %642
        %644 = vrot.lane.b32.xlu0 %v639, 60
        %v645 = vpop.permute.xlu0 %644
        %v646 = vrot.slane %v643, 4
        %v647 = vrot.slane %v645, 4
        %v648 = vsel %vm251, %v646, %v647
        %vm649 = vcmask 490496
        %v650 = vsel %vm649, %v643, %v648
        %v651 = vsel %vm649, %v645, %v647
        %654 = vst [vmem:[#allocation2 + $0x114] sm:$0xff] %v650
        %655 = vst [vmem:[#allocation2 + $0x11c] sm:$0xf] %v651
        %v656 = vld [vmem:[%s230] sm:$0xff]
        %v657 = vld [vmem:[%s230 + $0x8] sm:$0xff]
        %660 = vrot.lane.b32.xlu0 %v656, 59
        %v661 = vpop.permute.xlu0 %660
        %662 = vrot.lane.b32.xlu0 %v657, 59
        %v663 = vpop.permute.xlu0 %662
        %v664 = vrot.slane %v661, 4
        %v665 = vrot.slane %v663, 4
        %v666 = vsel %vm251, %v664, %v665
        %vm667 = vcmask 482304
        %v668 = vsel %vm667, %v661, %v666
        %v669 = vsel %vm667, %v663, %v665
        %672 = vst [vmem:[#allocation2 + $0x120] sm:$0xff] %v668
        %673 = vst [vmem:[#allocation2 + $0x128] sm:$0xf] %v669
        %v674 = vld [vmem:[%s230] sm:$0xff]
        %v675 = vld [vmem:[%s230 + $0x8] sm:$0xff]
        %678 = vrot.lane.b32.xlu0 %v674, 58
        %v679 = vpop.permute.xlu0 %678
        %680 = vrot.lane.b32.xlu0 %v675, 58
        %v681 = vpop.permute.xlu0 %680
        %v682 = vrot.slane %v679, 4
        %v683 = vrot.slane %v681, 4
        %v684 = vsel %vm251, %v682, %v683
        %vm685 = vcmask 474112
        %v686 = vsel %vm685, %v679, %v684
        %v687 = vsel %vm685, %v681, %v683
        %690 = vst [vmem:[#allocation2 + $0x12c] sm:$0xff] %v686
        %691 = vst [vmem:[#allocation2 + $0x134] sm:$0xf] %v687
        %v692 = vld [vmem:[%s230] sm:$0xff]
        %v693 = vld [vmem:[%s230 + $0x8] sm:$0xff]
        %696 = vrot.lane.b32.xlu0 %v692, 57
        %v697 = vpop.permute.xlu0 %696
        %698 = vrot.lane.b32.xlu0 %v693, 57
        %v699 = vpop.permute.xlu0 %698
        %v700 = vrot.slane %v697, 4
        %v701 = vrot.slane %v699, 4
        %v702 = vsel %vm251, %v700, %v701
        %vm703 = vcmask 465920
        %v704 = vsel %vm703, %v697, %v702
        %v705 = vsel %vm703, %v699, %v701
        %708 = vst [vmem:[#allocation2 + $0x138] sm:$0xff] %v704
        %709 = vst [vmem:[#allocation2 + $0x140] sm:$0xf] %v705
        %v710 = vld [vmem:[%s230] sm:$0xff]
        %v711 = vld [vmem:[%s230 + $0x8] sm:$0xff]
        %714 = vrot.lane.b32.xlu0 %v710, 56
        %v715 = vpop.permute.xlu0 %714
        %716 = vrot.lane.b32.xlu0 %v711, 56
        %v717 = vpop.permute.xlu0 %716
        %v718 = vrot.slane %v715, 4
        %v719 = vrot.slane %v717, 4
        %v720 = vsel %vm251, %v718, %v719
        %vm721 = vcmask 457728
        %v722 = vsel %vm721, %v715, %v720
        %v723 = vsel %vm721, %v717, %v719
        %726 = vst [vmem:[#allocation2 + $0x144] sm:$0xff] %v722
        %727 = vst [vmem:[#allocation2 + $0x14c] sm:$0xf] %v723
        %v728 = vld [vmem:[%s230] sm:$0xff]
        %v729 = vld [vmem:[%s230 + $0x8] sm:$0xff]
        %732 = vrot.lane.b32.xlu0 %v728, 40
        %v733 = vpop.permute.xlu0 %732
        %734 = vrot.lane.b32.xlu0 %v729, 40
        %v735 = vpop.permute.xlu0 %734
        %v736 = vrot.slane %v733, 4
        %v737 = vrot.slane %v735, 4
        %v738 = vsel %vm251, %v736, %v737
        %vm739 = vcmask 326656
        %v740 = vsel %vm739, %v733, %v738
        %v741 = vsel %vm739, %v735, %v737
        %744 = vst [vmem:[#allocation2 + $0x150] sm:$0xff] %v740
        %745 = vst [vmem:[#allocation2 + $0x158] sm:$0xf] %v741
        %v746 = vld [vmem:[%s230] sm:$0xff]
        %v747 = vld [vmem:[%s230 + $0x8] sm:$0xff]
        %750 = vrot.lane.b32.xlu0 %v746, 39
        %v751 = vpop.permute.xlu0 %750
        %752 = vrot.lane.b32.xlu0 %v747, 39
        %v753 = vpop.permute.xlu0 %752
        %v754 = vrot.slane %v751, 4
        %v755 = vrot.slane %v753, 4
        %v756 = vsel %vm251, %v754, %v755
        %vm757 = vcmask 318464
        %v758 = vsel %vm757, %v751, %v756
        %v759 = vsel %vm757, %v753, %v755
        %762 = vst [vmem:[#allocation2 + $0x15c] sm:$0xff] %v758
        %763 = vst [vmem:[#allocation2 + $0x164] sm:$0xf] %v759
        %v764 = vld [vmem:[%s230] sm:$0xff]
        %v765 = vld [vmem:[%s230 + $0x8] sm:$0xff]
        %768 = vrot.lane.b32.xlu0 %v764, 38
        %v769 = vpop.permute.xlu0 %768
        %770 = vrot.lane.b32.xlu0 %v765, 38
        %v771 = vpop.permute.xlu0 %770
        %v772 = vrot.slane %v769, 4
        %v773 = vrot.slane %v771, 4
        %v774 = vsel %vm251, %v772, %v773
        %vm775 = vcmask 310272
        %v776 = vsel %vm775, %v769, %v774
        %v777 = vsel %vm775, %v771, %v773
        %780 = vst [vmem:[#allocation2 + $0x168] sm:$0xff] %v776
        %781 = vst [vmem:[#allocation2 + $0x170] sm:$0xf] %v777
        %v782 = vld [vmem:[%s230] sm:$0xff]
        %v783 = vld [vmem:[%s230 + $0x8] sm:$0xff]
        %786 = vrot.lane.b32.xlu0 %v782, 37
        %v787 = vpop.permute.xlu0 %786
        %788 = vrot.lane.b32.xlu0 %v783, 37
        %v789 = vpop.permute.xlu0 %788
        %v790 = vrot.slane %v787, 4
        %v791 = vrot.slane %v789, 4
        %v792 = vsel %vm251, %v790, %v791
        %vm793 = vcmask 302080
        %v794 = vsel %vm793, %v787, %v792
        %v795 = vsel %vm793, %v789, %v791
        %798 = vst [vmem:[#allocation2 + $0x174] sm:$0xff] %v794
        %799 = vst [vmem:[#allocation2 + $0x17c] sm:$0xf] %v795
        %v800 = vld [vmem:[%s230] sm:$0xff]
        %v801 = vld [vmem:[%s230 + $0x8] sm:$0xff]
        %804 = vrot.lane.b32.xlu0 %v800, 36
        %v805 = vpop.permute.xlu0 %804
        %806 = vrot.lane.b32.xlu0 %v801, 36
        %v807 = vpop.permute.xlu0 %806
        %v808 = vrot.slane %v805, 4
        %v809 = vrot.slane %v807, 4
        %v810 = vsel %vm251, %v808, %v809
        %vm811 = vcmask 293888
        %v812 = vsel %vm811, %v805, %v810
        %v813 = vsel %vm811, %v807, %v809
        %816 = vst [vmem:[#allocation2 + $0x180] sm:$0xff] %v812
        %817 = vst [vmem:[#allocation2 + $0x188] sm:$0xf] %v813
        %v818 = vld [vmem:[%s230] sm:$0xff]
        %v819 = vld [vmem:[%s230 + $0x8] sm:$0xff]
        %822 = vrot.lane.b32.xlu0 %v818, 35
        %v823 = vpop.permute.xlu0 %822
        %824 = vrot.lane.b32.xlu0 %v819, 35
        %v825 = vpop.permute.xlu0 %824
        %v826 = vrot.slane %v823, 4
        %v827 = vrot.slane %v825, 4
        %v828 = vsel %vm251, %v826, %v827
        %vm829 = vcmask 285696
        %v830 = vsel %vm829, %v823, %v828
        %v831 = vsel %vm829, %v825, %v827
        %834 = vst [vmem:[#allocation2 + $0x18c] sm:$0xff] %v830
        %835 = vst [vmem:[#allocation2 + $0x194] sm:$0xf] %v831
        %v836 = vld [vmem:[%s230] sm:$0xff]
        %v837 = vld [vmem:[%s230 + $0x8] sm:$0xff]
        %840 = vrot.lane.b32.xlu0 %v836, 34
        %v841 = vpop.permute.xlu0 %840
        %842 = vrot.lane.b32.xlu0 %v837, 34
        %v843 = vpop.permute.xlu0 %842
        %v844 = vrot.slane %v841, 4
        %v845 = vrot.slane %v843, 4
        %v846 = vsel %vm251, %v844, %v845
        %vm847 = vcmask 277504
        %v848 = vsel %vm847, %v841, %v846
        %v849 = vsel %vm847, %v843, %v845
        %852 = vst [vmem:[#allocation2 + $0x198] sm:$0xff] %v848
        %853 = vst [vmem:[#allocation2 + $0x1a0] sm:$0xf] %v849
        %v854 = vld [vmem:[%s230] sm:$0xff]
        %v855 = vld [vmem:[%s230 + $0x8] sm:$0xff]
        %858 = vrot.lane.b32.xlu0 %v854, 18
        %v859 = vpop.permute.xlu0 %858
        %860 = vrot.lane.b32.xlu0 %v855, 18
        %v861 = vpop.permute.xlu0 %860
        %v862 = vrot.slane %v859, 4
        %v863 = vrot.slane %v861, 4
        %v864 = vsel %vm251, %v862, %v863
        %vm865 = vcmask 146432
        %v866 = vsel %vm865, %v859, %v864
        %v867 = vsel %vm865, %v861, %v863
        %870 = vst [vmem:[#allocation2 + $0x1a4] sm:$0xff] %v866
        %871 = vst [vmem:[#allocation2 + $0x1ac] sm:$0xf] %v867
        %v872 = vld [vmem:[%s230] sm:$0xff]
        %v873 = vld [vmem:[%s230 + $0x8] sm:$0xff]
        %876 = vrot.lane.b32.xlu0 %v872, 17
        %v877 = vpop.permute.xlu0 %876
        %878 = vrot.lane.b32.xlu0 %v873, 17
        %v879 = vpop.permute.xlu0 %878
        %v880 = vrot.slane %v877, 4
        %v881 = vrot.slane %v879, 4
        %v882 = vsel %vm251, %v880, %v881
        %vm883 = vcmask 138240
        %v884 = vsel %vm883, %v877, %v882
        %v885 = vsel %vm883, %v879, %v881
        %888 = vst [vmem:[#allocation2 + $0x1b0] sm:$0xff] %v884
        %889 = vst [vmem:[#allocation2 + $0x1b8] sm:$0xf] %v885
        %v890 = vld [vmem:[%s230] sm:$0xff]
        %v891 = vld [vmem:[%s230 + $0x8] sm:$0xff]
        %894 = vrot.lane.b32.xlu0 %v890, 16
        %v895 = vpop.permute.xlu0 %894
        %896 = vrot.lane.b32.xlu0 %v891, 16
        %v897 = vpop.permute.xlu0 %896
        %v898 = vrot.slane %v895, 4
        %v899 = vrot.slane %v897, 4
        %v900 = vsel %vm251, %v898, %v899
        %vm901 = vcmask 130048
        %v902 = vsel %vm901, %v895, %v900
        %v903 = vsel %vm901, %v897, %v899
        %906 = vst [vmem:[#allocation2 + $0x1bc] sm:$0xff] %v902
        %907 = vst [vmem:[#allocation2 + $0x1c4] sm:$0xf] %v903
        %v908 = vld [vmem:[%s230] sm:$0xff]
        %v909 = vld [vmem:[%s230 + $0x8] sm:$0xff]
        %912 = vrot.lane.b32.xlu0 %v908, 15
        %v913 = vpop.permute.xlu0 %912
        %914 = vrot.lane.b32.xlu0 %v909, 15
        %v915 = vpop.permute.xlu0 %914
        %v916 = vrot.slane %v913, 4
        %v917 = vrot.slane %v915, 4
        %v918 = vsel %vm251, %v916, %v917
        %vm919 = vcmask 121856
        %v920 = vsel %vm919, %v913, %v918
        %v921 = vsel %vm919, %v915, %v917
        %924 = vst [vmem:[#allocation2 + $0x1c8] sm:$0xff] %v920
        %925 = vst [vmem:[#allocation2 + $0x1d0] sm:$0xf] %v921
        %v926 = vld [vmem:[%s230] sm:$0xff]
        %v927 = vld [vmem:[%s230 + $0x8] sm:$0xff]
        %930 = vrot.lane.b32.xlu0 %v926, 14
        %v931 = vpop.permute.xlu0 %930
        %932 = vrot.lane.b32.xlu0 %v927, 14
        %v933 = vpop.permute.xlu0 %932
        %v934 = vrot.slane %v931, 4
        %v935 = vrot.slane %v933, 4
        %v936 = vsel %vm251, %v934, %v935
        %vm937 = vcmask 113664
        %v938 = vsel %vm937, %v931, %v936
        %v939 = vsel %vm937, %v933, %v935
        %942 = vst [vmem:[#allocation2 + $0x1d4] sm:$0xff] %v938
        %943 = vst [vmem:[#allocation2 + $0x1dc] sm:$0xf] %v939
        %v944 = vld [vmem:[%s230] sm:$0xff]
        %v945 = vld [vmem:[%s230 + $0x8] sm:$0xff]
        %948 = vrot.lane.b32.xlu0 %v944, 13
        %v949 = vpop.permute.xlu0 %948
        %950 = vrot.lane.b32.xlu0 %v945, 13
        %v951 = vpop.permute.xlu0 %950
        %v952 = vrot.slane %v949, 4
        %v953 = vrot.slane %v951, 4
        %v954 = vsel %vm251, %v952, %v953
        %vm955 = vcmask 105472
        %v956 = vsel %vm955, %v949, %v954
        %v957 = vsel %vm955, %v951, %v953
        %960 = vst [vmem:[#allocation2 + $0x1e0] sm:$0xff] %v956
        %961 = vst [vmem:[#allocation2 + $0x1e8] sm:$0xf] %v957
        %v962 = vld [vmem:[%s230] sm:$0xff]
        %v963 = vld [vmem:[%s230 + $0x8] sm:$0xff]
        %966 = vrot.lane.b32.xlu0 %v962, 12
        %v967 = vpop.permute.xlu0 %966
        %968 = vrot.lane.b32.xlu0 %v963, 12
        %v969 = vpop.permute.xlu0 %968
        %v970 = vrot.slane %v967, 4
        %v971 = vrot.slane %v969, 4
        %v972 = vsel %vm251, %v970, %v971
        %vm973 = vcmask 97280
        %v974 = vsel %vm973, %v967, %v972
        %v975 = vsel %vm973, %v969, %v971
        %978 = vst [vmem:[#allocation2 + $0x1ec] sm:$0xff] %v974
        %979 = vst [vmem:[#allocation2 + $0x1f4] sm:$0xf] %v975
        %v980 = vld [vmem:[%s230 + $0x4] sm:$0xff]
        %v981 = vld [vmem:[%s230 + $0xc] sm:$0xff]
        %984 = vrot.lane.b32.xlu0 %v980, 124
        %v985 = vpop.permute.xlu0 %984
        %986 = vrot.lane.b32.xlu0 %v981, 124
        %v987 = vpop.permute.xlu0 %986
        %v988 = vrot.slane %v985, 4
        %v989 = vrot.slane %v987, 4
        %v990 = vsel %vm251, %v988, %v989
        %v991 = vsel %vm307, %v985, %v990
        %v992 = vsel %vm307, %v987, %v989
        %995 = vst [vmem:[#allocation2 + $0x1f8] sm:$0xff] %v991
        %996 = vst [vmem:[#allocation2 + $0x200] sm:$0xf] %v992
        %v997 = vld [vmem:[%s230 + $0x4] sm:$0xff]
        %v998 = vld [vmem:[%s230 + $0xc] sm:$0xff]
        %1001 = vrot.lane.b32.xlu0 %v997, 123
        %v1002 = vpop.permute.xlu0 %1001
        %1003 = vrot.lane.b32.xlu0 %v998, 123
        %v1004 = vpop.permute.xlu0 %1003
        %v1005 = vrot.slane %v1002, 4
        %v1006 = vrot.slane %v1004, 4
        %v1007 = vsel %vm251, %v1005, %v1006
        %v1008 = vsel %vm325, %v1002, %v1007
        %v1009 = vsel %vm325, %v1004, %v1006
        %1012 = vst [vmem:[#allocation2 + $0x204] sm:$0xff] %v1008
        %1013 = vst [vmem:[#allocation2 + $0x20c] sm:$0xf] %v1009
        %v1014 = vld [vmem:[%s230 + $0x4] sm:$0xff]
        %v1015 = vld [vmem:[%s230 + $0xc] sm:$0xff]
        %1018 = vrot.lane.b32.xlu0 %v1014, 122
        %v1019 = vpop.permute.xlu0 %1018
        %1020 = vrot.lane.b32.xlu0 %v1015, 122
        %v1021 = vpop.permute.xlu0 %1020
        %v1022 = vrot.slane %v1019, 4
        %v1023 = vrot.slane %v1021, 4
        %v1024 = vsel %vm251, %v1022, %v1023
        %v1025 = vsel %vm343, %v1019, %v1024
        %v1026 = vsel %vm343, %v1021, %v1023
        %1029 = vst [vmem:[#allocation2 + $0x210] sm:$0xff] %v1025
        %1030 = vst [vmem:[#allocation2 + $0x218] sm:$0xf] %v1026
        %v1031 = vld [vmem:[%s230 + $0x4] sm:$0xff]
        %v1032 = vld [vmem:[%s230 + $0xc] sm:$0xff]
        %1035 = vrot.lane.b32.xlu0 %v1031, 121
        %v1036 = vpop.permute.xlu0 %1035
        %1037 = vrot.lane.b32.xlu0 %v1032, 121
        %v1038 = vpop.permute.xlu0 %1037
        %v1039 = vrot.slane %v1036, 4
        %v1040 = vrot.slane %v1038, 4
        %v1041 = vsel %vm251, %v1039, %v1040
        %vm1042 = vcmask 990208
        %v1043 = vsel %vm1042, %v1036, %v1041
        %v1044 = vsel %vm1042, %v1038, %v1040
        %1047 = vst [vmem:[#allocation2 + $0x21c] sm:$0xff] %v1043
        %1048 = vst [vmem:[#allocation2 + $0x224] sm:$0xf] %v1044
        %v1049 = vld [vmem:[%s230 + $0x4] sm:$0xff]
        %v1050 = vld [vmem:[%s230 + $0xc] sm:$0xff]
        %1053 = vrot.lane.b32.xlu0 %v1049, 120
        %v1054 = vpop.permute.xlu0 %1053
        %1055 = vrot.lane.b32.xlu0 %v1050, 120
        %v1056 = vpop.permute.xlu0 %1055
        %v1057 = vrot.slane %v1054, 4
        %v1058 = vrot.slane %v1056, 4
        %v1059 = vsel %vm251, %v1057, %v1058
        %vm1060 = vcmask 982016
        %v1061 = vsel %vm1060, %v1054, %v1059
        %v1062 = vsel %vm1060, %v1056, %v1058
        %1065 = vst [vmem:[#allocation2 + $0x228] sm:$0xff] %v1061
        %1066 = vst [vmem:[#allocation2 + $0x230] sm:$0xf] %v1062
        %v1067 = vld [vmem:[%s230 + $0x4] sm:$0xff]
        %v1068 = vld [vmem:[%s230 + $0xc] sm:$0xff]
        %1071 = vrot.lane.b32.xlu0 %v1067, 119
        %v1072 = vpop.permute.xlu0 %1071
        %1073 = vrot.lane.b32.xlu0 %v1068, 119
        %v1074 = vpop.permute.xlu0 %1073
        %v1075 = vrot.slane %v1072, 4
        %v1076 = vrot.slane %v1074, 4
        %v1077 = vsel %vm251, %v1075, %v1076
        %vm1078 = vcmask 973824
        %v1079 = vsel %vm1078, %v1072, %v1077
        %v1080 = vsel %vm1078, %v1074, %v1076
        %1083 = vst [vmem:[#allocation2 + $0x234] sm:$0xff] %v1079
        %1084 = vst [vmem:[#allocation2 + $0x23c] sm:$0xf] %v1080
        %v1085 = vld [vmem:[%s230 + $0x4] sm:$0xff]
        %v1086 = vld [vmem:[%s230 + $0xc] sm:$0xff]
        %1089 = vrot.lane.b32.xlu0 %v1085, 118
        %v1090 = vpop.permute.xlu0 %1089
        %1091 = vrot.lane.b32.xlu0 %v1086, 118
        %v1092 = vpop.permute.xlu0 %1091
        %v1093 = vrot.slane %v1090, 4
        %v1094 = vrot.slane %v1092, 4
        %v1095 = vsel %vm251, %v1093, %v1094
        %vm1096 = vcmask 965632
        %v1097 = vsel %vm1096, %v1090, %v1095
        %v1098 = vsel %vm1096, %v1092, %v1094
        %1101 = vst [vmem:[#allocation2 + $0x240] sm:$0xff] %v1097
        %1102 = vst [vmem:[#allocation2 + $0x248] sm:$0xf] %v1098
        %v1103 = vld [vmem:[%s1] sm:$0xff]
        %v1104 = vld [vmem:[%s1 + $0x8] sm:$0xff]
        %v1105 = vld [vmem:[#allocation2] sm:$0xff]
        %v1106 = vld [vmem:[#allocation2 + $0x8] sm:$0xf]
        %v1107 = vld [vmem:[#allocation2 + $0xc] sm:$0xff]
        %v1108 = vld [vmem:[#allocation2 + $0x14] sm:$0xf]
        %v1109 = vld [vmem:[#allocation2 + $0x18] sm:$0xff]
        %v1110 = vld [vmem:[#allocation2 + $0x20] sm:$0xf]
        %v1111 = vld [vmem:[#allocation2 + $0x24] sm:$0xff]
        %v1112 = vld [vmem:[#allocation2 + $0x2c] sm:$0xf]
        %v1113 = vld [vmem:[#allocation2 + $0x30] sm:$0xff]
        %v1114 = vld [vmem:[#allocation2 + $0x38] sm:$0xf]
        %v1115 = vld [vmem:[#allocation2 + $0x3c] sm:$0xff]
        %v1116 = vld [vmem:[#allocation2 + $0x44] sm:$0xf]
        %v1117 = vld [vmem:[#allocation2 + $0x48] sm:$0xff]
        %v1118 = vld [vmem:[#allocation2 + $0x50] sm:$0xf]
        %v1119 = vld [vmem:[#allocation2 + $0x54] sm:$0xff]
        %v1120 = vld [vmem:[#allocation2 + $0x5c] sm:$0xf]
        %v1121 = vld [vmem:[#allocation2 + $0x60] sm:$0xff]
        %v1122 = vld [vmem:[#allocation2 + $0x68] sm:$0xf]
        %v1123 = vld [vmem:[#allocation2 + $0x6c] sm:$0xff]
        %v1124 = vld [vmem:[#allocation2 + $0x74] sm:$0xf]
        %v1125 = vld [vmem:[#allocation2 + $0x78] sm:$0xff]
        %v1126 = vld [vmem:[#allocation2 + $0x80] sm:$0xf]
        %v1127 = vld [vmem:[#allocation2 + $0x84] sm:$0xff]
        %v1128 = vld [vmem:[#allocation2 + $0x8c] sm:$0xf]
        %v1129 = vld [vmem:[#allocation2 + $0x90] sm:$0xff]
        %v1130 = vld [vmem:[#allocation2 + $0x98] sm:$0xf]
        %v1131 = vld [vmem:[#allocation2 + $0x9c] sm:$0xff]
        %v1132 = vld [vmem:[#allocation2 + $0xa4] sm:$0xf]
        %v1133 = vld [vmem:[#allocation2 + $0xa8] sm:$0xff]
        %v1134 = vld [vmem:[#allocation2 + $0xb0] sm:$0xf]
        %v1135 = vld [vmem:[#allocation2 + $0xb4] sm:$0xff]
        %v1136 = vld [vmem:[#allocation2 + $0xbc] sm:$0xf]
        %v1137 = vld [vmem:[#allocation2 + $0xc0] sm:$0xff]
        %v1138 = vld [vmem:[#allocation2 + $0xc8] sm:$0xf]
        %v1139 = vld [vmem:[#allocation2 + $0xcc] sm:$0xff]
        %v1140 = vld [vmem:[#allocation2 + $0xd4] sm:$0xf]
        %v1141 = vld [vmem:[#allocation2 + $0xd8] sm:$0xff]
        %v1142 = vld [vmem:[#allocation2 + $0xe0] sm:$0xf]
        %v1143 = vld [vmem:[#allocation2 + $0xe4] sm:$0xff]
        %v1144 = vld [vmem:[#allocation2 + $0xec] sm:$0xf]
        %v1145 = vld [vmem:[#allocation2 + $0xf0] sm:$0xff]
        %v1146 = vld [vmem:[#allocation2 + $0xf8] sm:$0xf]
        %v1147 = vld [vmem:[#allocation2 + $0xfc] sm:$0xff]
        %v1148 = vld [vmem:[#allocation2 + $0x104] sm:$0xf]
        %v1149 = vld [vmem:[#allocation2 + $0x108] sm:$0xff]
        %v1150 = vld [vmem:[#allocation2 + $0x110] sm:$0xf]
        %v1151 = vld [vmem:[#allocation2 + $0x114] sm:$0xff]
        %v1152 = vld [vmem:[#allocation2 + $0x11c] sm:$0xf]
        %v1153 = vld [vmem:[#allocation2 + $0x120] sm:$0xff]
        %v1154 = vld [vmem:[#allocation2 + $0x128] sm:$0xf]
        %v1155 = vld [vmem:[#allocation2 + $0x12c] sm:$0xff]
        %v1156 = vld [vmem:[#allocation2 + $0x134] sm:$0xf]
        %v1157 = vld [vmem:[#allocation2 + $0x138] sm:$0xff]
        %v1158 = vld [vmem:[#allocation2 + $0x140] sm:$0xf]
        %v1159 = vld [vmem:[#allocation2 + $0x144] sm:$0xff]
        %v1160 = vld [vmem:[#allocation2 + $0x14c] sm:$0xf]
        %v1161 = vld [vmem:[#allocation2 + $0x150] sm:$0xff]
        %v1162 = vld [vmem:[#allocation2 + $0x158] sm:$0xf]
        %v1163 = vld [vmem:[#allocation2 + $0x15c] sm:$0xff]
        %v1164 = vld [vmem:[#allocation2 + $0x164] sm:$0xf]
        %v1165 = vld [vmem:[#allocation2 + $0x168] sm:$0xff]
        %v1166 = vld [vmem:[#allocation2 + $0x170] sm:$0xf]
        %v1167 = vld [vmem:[#allocation2 + $0x174] sm:$0xff]
        %v1168 = vld [vmem:[#allocation2 + $0x17c] sm:$0xf]
        %v1169 = vld [vmem:[#allocation2 + $0x180] sm:$0xff]
        %v1170 = vld [vmem:[#allocation2 + $0x188] sm:$0xf]
        %v1171 = vld [vmem:[#allocation2 + $0x18c] sm:$0xff]
        %v1172 = vld [vmem:[#allocation2 + $0x194] sm:$0xf]
        %v1173 = vld [vmem:[#allocation2 + $0x198] sm:$0xff]
        %v1174 = vld [vmem:[#allocation2 + $0x1a0] sm:$0xf]
        %v1175 = vld [vmem:[#allocation2 + $0x1a4] sm:$0xff]
        %v1176 = vld [vmem:[#allocation2 + $0x1ac] sm:$0xf]
        %v1177 = vld [vmem:[#allocation2 + $0x1b0] sm:$0xff]
        %v1178 = vld [vmem:[#allocation2 + $0x1b8] sm:$0xf]
        %v1179 = vld [vmem:[#allocation2 + $0x1bc] sm:$0xff]
        %v1180 = vld [vmem:[#allocation2 + $0x1c4] sm:$0xf]
        %v1181 = vld [vmem:[#allocation2 + $0x1c8] sm:$0xff]
        %v1182 = vld [vmem:[#allocation2 + $0x1d0] sm:$0xf]
        %v1183 = vld [vmem:[#allocation2 + $0x1d4] sm:$0xff]
        %v1184 = vld [vmem:[#allocation2 + $0x1dc] sm:$0xf]
        %v1185 = vld [vmem:[#allocation2 + $0x1e0] sm:$0xff]
        %v1186 = vld [vmem:[#allocation2 + $0x1e8] sm:$0xf]
        %v1187 = vld [vmem:[#allocation2 + $0x1ec] sm:$0xff]
        %v1188 = vld [vmem:[#allocation2 + $0x1f4] sm:$0xf]
        %v1189 = vld [vmem:[#allocation2 + $0x1f8] sm:$0xff]
        %v1190 = vld [vmem:[#allocation2 + $0x200] sm:$0xf]
        %v1191 = vld [vmem:[#allocation2 + $0x204] sm:$0xff]
        %v1192 = vld [vmem:[#allocation2 + $0x20c] sm:$0xf]
        %v1193 = vld [vmem:[#allocation2 + $0x210] sm:$0xff]
        %v1194 = vld [vmem:[#allocation2 + $0x218] sm:$0xf]
        %v1195 = vld [vmem:[#allocation2 + $0x21c] sm:$0xff]
        %v1196 = vld [vmem:[#allocation2 + $0x224] sm:$0xf]
        %v1197 = vld [vmem:[#allocation2 + $0x228] sm:$0xff]
        %v1198 = vld [vmem:[#allocation2 + $0x230] sm:$0xf]
        %v1199 = vld [vmem:[#allocation2 + $0x234] sm:$0xff]
        %v1200 = vld [vmem:[#allocation2 + $0x23c] sm:$0xf]
        %v1201 = vld [vmem:[#allocation2 + $0x240] sm:$0xff]
        %v1202 = vld [vmem:[#allocation2 + $0x248] sm:$0xf]
        %v1203 = vld [vmem:[%s3] sm:$0xff]
        %1205 = vset.pattern.permute.xlu0 0
        %1206 = vperm.xlu0 %1205, %v1203
        %v1207 = vpop.permute.xlu0 %1206
        %v1211 = vunpack.c.l.b16 %v1103
        %v1212 = vunpack.c.h.b16 %v1103
        %v1213 = vunpack.c.l.b16 %v1104
        %v1214 = vunpack.c.h.b16 %v1104
        %v1215 = vpack.c.b16 %v1211, %v1211
        %v1216 = vpack.c.b16 %v1212, %v1212
        %v1217 = vpack.c.b16 %v1213, %v1213
        %v1218 = vpack.c.b16 %v1214, %v1214
        %v1320 = vunpack.c.l.b16 %v1105
        %v1321 = vunpack.c.h.b16 %v1105
        %v1322 = vunpack.c.l.b16 %v1106
        %v1323 = vunpack.c.l.b16 %v1107
        %v1324 = vunpack.c.h.b16 %v1107
        %v1325 = vunpack.c.l.b16 %v1108
        %v1326 = vunpack.c.l.b16 %v1109
        %v1327 = vunpack.c.h.b16 %v1109
        %v1328 = vunpack.c.l.b16 %v1110
        %v1329 = vunpack.c.l.b16 %v1111
        %v1330 = vunpack.c.h.b16 %v1111
        %v1331 = vunpack.c.l.b16 %v1112
        %v1332 = vunpack.c.l.b16 %v1113
        %v1333 = vunpack.c.h.b16 %v1113
        %v1334 = vunpack.c.l.b16 %v1114
        %v1335 = vunpack.c.l.b16 %v1115
        %v1336 = vunpack.c.h.b16 %v1115
        %v1337 = vunpack.c.l.b16 %v1116
        %v1338 = vunpack.c.l.b16 %v1117
        %v1339 = vunpack.c.h.b16 %v1117
        %v1340 = vunpack.c.l.b16 %v1118
        %v1341 = vunpack.c.l.b16 %v1119
        %v1342 = vunpack.c.h.b16 %v1119
        %v1343 = vunpack.c.l.b16 %v1120
        %v1344 = vunpack.c.l.b16 %v1121
        %v1345 = vunpack.c.h.b16 %v1121
        %v1346 = vunpack.c.l.b16 %v1122
        %v1347 = vunpack.c.l.b16 %v1123
        %v1348 = vunpack.c.h.b16 %v1123
        %v1349 = vunpack.c.l.b16 %v1124
        %v1350 = vunpack.c.l.b16 %v1125
        %v1351 = vunpack.c.h.b16 %v1125
        %v1352 = vunpack.c.l.b16 %v1126
        %v1353 = vunpack.c.l.b16 %v1127
        %v1354 = vunpack.c.h.b16 %v1127
        %v1355 = vunpack.c.l.b16 %v1128
        %v1356 = vunpack.c.l.b16 %v1129
        %v1357 = vunpack.c.h.b16 %v1129
        %v1358 = vunpack.c.l.b16 %v1130
        %v1359 = vunpack.c.l.b16 %v1131
        %v1360 = vunpack.c.h.b16 %v1131
        %v1361 = vunpack.c.l.b16 %v1132
        %v1362 = vunpack.c.l.b16 %v1133
        %v1363 = vunpack.c.h.b16 %v1133
        %v1364 = vunpack.c.l.b16 %v1134
        %v1365 = vunpack.c.l.b16 %v1135
        %v1366 = vunpack.c.h.b16 %v1135
        %v1367 = vunpack.c.l.b16 %v1136
        %v1368 = vunpack.c.l.b16 %v1137
        %v1369 = vunpack.c.h.b16 %v1137
        %v1370 = vunpack.c.l.b16 %v1138
        %v1371 = vunpack.c.l.b16 %v1139
        %v1372 = vunpack.c.h.b16 %v1139
        %v1373 = vunpack.c.l.b16 %v1140
        %v1374 = vunpack.c.l.b16 %v1141
        %v1375 = vunpack.c.h.b16 %v1141
        %v1376 = vunpack.c.l.b16 %v1142
        %v1377 = vunpack.c.l.b16 %v1143
        %v1378 = vunpack.c.h.b16 %v1143
        %v1379 = vunpack.c.l.b16 %v1144
        %v1380 = vunpack.c.l.b16 %v1145
        %v1381 = vunpack.c.h.b16 %v1145
        %v1382 = vunpack.c.l.b16 %v1146
        %v1383 = vunpack.c.l.b16 %v1147
        %v1384 = vunpack.c.h.b16 %v1147
        %v1385 = vunpack.c.l.b16 %v1148
        %v1386 = vunpack.c.l.b16 %v1149
        %v1387 = vunpack.c.h.b16 %v1149
        %v1388 = vunpack.c.l.b16 %v1150
        %v1389 = vunpack.c.l.b16 %v1151
        %v1390 = vunpack.c.h.b16 %v1151
        %v1391 = vunpack.c.l.b16 %v1152
        %v1392 = vunpack.c.l.b16 %v1153
        %v1393 = vunpack.c.h.b16 %v1153
        %v1394 = vunpack.c.l.b16 %v1154
        %v1395 = vunpack.c.l.b16 %v1155
        %v1396 = vunpack.c.h.b16 %v1155
        %v1397 = vunpack.c.l.b16 %v1156
        %v1398 = vunpack.c.l.b16 %v1157
        %v1399 = vunpack.c.h.b16 %v1157
        %v1400 = vunpack.c.l.b16 %v1158
        %v1401 = vunpack.c.l.b16 %v1159
        %v1402 = vunpack.c.h.b16 %v1159
        %v1403 = vunpack.c.l.b16 %v1160
        %v1404 = vunpack.c.l.b16 %v1161
        %v1405 = vunpack.c.h.b16 %v1161
        %v1406 = vunpack.c.l.b16 %v1162
        %v1407 = vunpack.c.l.b16 %v1163
        %v1408 = vunpack.c.h.b16 %v1163
        %v1409 = vunpack.c.l.b16 %v1164
        %v1410 = vunpack.c.l.b16 %v1165
        %v1411 = vunpack.c.h.b16 %v1165
        %v1412 = vunpack.c.l.b16 %v1166
        %v1413 = vunpack.c.l.b16 %v1167
        %v1414 = vunpack.c.h.b16 %v1167
        %v1415 = vunpack.c.l.b16 %v1168
        %v1416 = vunpack.c.l.b16 %v1169
        %v1417 = vunpack.c.h.b16 %v1169
        %v1418 = vunpack.c.l.b16 %v1170
        %v1419 = vunpack.c.l.b16 %v1171
        %v1420 = vunpack.c.h.b16 %v1171
        %v1421 = vunpack.c.l.b16 %v1172
        %v1422 = vunpack.c.l.b16 %v1173
        %v1423 = vunpack.c.h.b16 %v1173
        %v1424 = vunpack.c.l.b16 %v1174
        %v1425 = vunpack.c.l.b16 %v1175
        %v1426 = vunpack.c.h.b16 %v1175
        %v1427 = vunpack.c.l.b16 %v1176
        %v1428 = vunpack.c.l.b16 %v1177
        %v1429 = vunpack.c.h.b16 %v1177
        %v1430 = vunpack.c.l.b16 %v1178
        %v1431 = vunpack.c.l.b16 %v1179
        %v1432 = vunpack.c.h.b16 %v1179
        %v1433 = vunpack.c.l.b16 %v1180
        %v1434 = vunpack.c.l.b16 %v1181
        %v1435 = vunpack.c.h.b16 %v1181
        %v1436 = vunpack.c.l.b16 %v1182
        %v1437 = vunpack.c.l.b16 %v1183
        %v1438 = vunpack.c.h.b16 %v1183
        %v1439 = vunpack.c.l.b16 %v1184
        %v1440 = vunpack.c.l.b16 %v1185
        %v1441 = vunpack.c.h.b16 %v1185
        %v1442 = vunpack.c.l.b16 %v1186
        %v1443 = vunpack.c.l.b16 %v1187
        %v1444 = vunpack.c.h.b16 %v1187
        %v1445 = vunpack.c.l.b16 %v1188
        %v1446 = vunpack.c.l.b16 %v1189
        %v1447 = vunpack.c.h.b16 %v1189
        %v1448 = vunpack.c.l.b16 %v1190
        %v1449 = vunpack.c.l.b16 %v1191
        %v1450 = vunpack.c.h.b16 %v1191
        %v1451 = vunpack.c.l.b16 %v1192
        %v1452 = vunpack.c.l.b16 %v1193
        %v1453 = vunpack.c.h.b16 %v1193
        %v1454 = vunpack.c.l.b16 %v1194
        %v1455 = vunpack.c.l.b16 %v1195
        %v1456 = vunpack.c.h.b16 %v1195
        %v1457 = vunpack.c.l.b16 %v1196
        %v1458 = vunpack.c.l.b16 %v1197
        %v1459 = vunpack.c.h.b16 %v1197
        %v1460 = vunpack.c.l.b16 %v1198
        %v1461 = vunpack.c.l.b16 %v1199
        %v1462 = vunpack.c.h.b16 %v1199
        %v1463 = vunpack.c.l.b16 %v1200
        %v1464 = vunpack.c.l.b16 %v1201
        %v1465 = vunpack.c.h.b16 %v1201
        %v1466 = vunpack.c.l.b16 %v1202
        %v1467 = vpack.c.b16 %v1323, %v1320
        %v1468 = vpack.c.b16 %v1324, %v1321
        %v1469 = vpack.c.b16 %v1325, %v1322
        %v1470 = vpack.c.b16 %v1329, %v1326
        %v1471 = vpack.c.b16 %v1330, %v1327
        %v1472 = vpack.c.b16 %v1331, %v1328
        %v1473 = vpack.c.b16 %v1335, %v1332
        %v1474 = vpack.c.b16 %v1336, %v1333
        %v1475 = vpack.c.b16 %v1337, %v1334
        %v1476 = vpack.c.b16 %v1341, %v1338
        %v1477 = vpack.c.b16 %v1342, %v1339
        %v1478 = vpack.c.b16 %v1343, %v1340
        %v1479 = vpack.c.b16 %v1347, %v1344
        %v1480 = vpack.c.b16 %v1348, %v1345
        %v1481 = vpack.c.b16 %v1349, %v1346
        %v1482 = vpack.c.b16 %v1353, %v1350
        %v1483 = vpack.c.b16 %v1354, %v1351
        %v1484 = vpack.c.b16 %v1355, %v1352
        %v1485 = vpack.c.b16 %v1359, %v1356
        %v1486 = vpack.c.b16 %v1360, %v1357
        %v1487 = vpack.c.b16 %v1361, %v1358
        %v1488 = vpack.c.b16 %v1365, %v1362
        %v1489 = vpack.c.b16 %v1366, %v1363
        %v1490 = vpack.c.b16 %v1367, %v1364
        %v1491 = vpack.c.b16 %v1371, %v1368
        %v1492 = vpack.c.b16 %v1372, %v1369
        %v1493 = vpack.c.b16 %v1373, %v1370
        %v1494 = vpack.c.b16 %v1377, %v1374
        %v1495 = vpack.c.b16 %v1378, %v1375
        %v1496 = vpack.c.b16 %v1379, %v1376
        %v1497 = vpack.c.b16 %v1383, %v1380
        %v1498 = vpack.c.b16 %v1384, %v1381
        %v1499 = vpack.c.b16 %v1385, %v1382
        %v1500 = vpack.c.b16 %v1389, %v1386
        %v1501 = vpack.c.b16 %v1390, %v1387
        %v1502 = vpack.c.b16 %v1391, %v1388
        %v1503 = vpack.c.b16 %v1395, %v1392
        %v1504 = vpack.c.b16 %v1396, %v1393
        %v1505 = vpack.c.b16 %v1397, %v1394
        %v1506 = vpack.c.b16 %v1401, %v1398
        %v1507 = vpack.c.b16 %v1402, %v1399
        %v1508 = vpack.c.b16 %v1403, %v1400
        %v1509 = vpack.c.b16 %v1407, %v1404
        %v1510 = vpack.c.b16 %v1408, %v1405
        %v1511 = vpack.c.b16 %v1409, %v1406
        %v1512 = vpack.c.b16 %v1413, %v1410
        %v1513 = vpack.c.b16 %v1414, %v1411
        %v1514 = vpack.c.b16 %v1415, %v1412
        %v1515 = vpack.c.b16 %v1419, %v1416
        %v1516 = vpack.c.b16 %v1420, %v1417
        %v1517 = vpack.c.b16 %v1421, %v1418
        %v1518 = vpack.c.b16 %v1425, %v1422
        %v1519 = vpack.c.b16 %v1426, %v1423
        %v1520 = vpack.c.b16 %v1427, %v1424
        %v1521 = vpack.c.b16 %v1431, %v1428
        %v1522 = vpack.c.b16 %v1432, %v1429
        %v1523 = vpack.c.b16 %v1433, %v1430
        %v1524 = vpack.c.b16 %v1437, %v1434
        %v1525 = vpack.c.b16 %v1438, %v1435
        %v1526 = vpack.c.b16 %v1439, %v1436
        %v1527 = vpack.c.b16 %v1443, %v1440
        %v1528 = vpack.c.b16 %v1444, %v1441
        %v1529 = vpack.c.b16 %v1445, %v1442
        %v1530 = vpack.c.b16 %v1449, %v1446
        %v1531 = vpack.c.b16 %v1450, %v1447
        %v1532 = vpack.c.b16 %v1451, %v1448
        %v1533 = vpack.c.b16 %v1455, %v1452
        %v1534 = vpack.c.b16 %v1456, %v1453
        %v1535 = vpack.c.b16 %v1457, %v1454
        %v1536 = vpack.c.b16 %v1461, %v1458
        %v1537 = vpack.c.b16 %v1462, %v1459
        %v1538 = vpack.c.b16 %v1463, %v1460
        %v1539 = vpack.c.b16 %v1464, %v1464
        %v1540 = vpack.c.b16 %v1465, %v1465
        %v1541 = vpack.c.b16 %v1466, %v1466
        %vm1614 = vcmask 64512
        %v1616 = vsel %vm1614, %v1218, 0
        %vm1618 = vcmask 1043456
        %v1620 = vsel %vm1618, %v1539, 0
        %v1623 = vsel %vm1618, %v1540, 0
        %v1626 = vsel %vm1618, %v1541, 0
        %1628 = vmatprep.subr.bf16.mxu0 %v1468
        %1629 = vmatpush1.bf16.msra.mxu0 %v1467
        %1630 = vmatprep.subr.bf16.mxu0 %v1471
        %1631 = vmatpush1.bf16.msra.mxu0 %v1470
        %1632 = vmatprep.subr.bf16.mxu0 %v1474
        %1633 = vmatpush1.bf16.msra.mxu0 %v1473
        %1634 = vmatprep.subr.bf16.mxu0 %v1477
        %1635 = vmatpush1.bf16.msra.mxu0 %v1476
        %1636 = vmatprep.subr.bf16.mxu0 %v1480
        %1637 = vmatpush1.bf16.msra.mxu0 %v1479
        %1638 = vmatprep.subr.bf16.mxu0 %v1483
        %1639 = vmatpush1.bf16.msra.mxu0 %v1482
        %1640 = vmatprep.subr.bf16.mxu0 %v1486
        %1641 = vmatpush1.bf16.msra.mxu0 %v1485
        %1642 = vmatprep.subr.bf16.mxu0 %v1489
        %1643 = vmatpush1.bf16.msra.mxu0 %v1488
        %1644 = vmatprep.subr.bf16.mxu0 %v1492
        %1645 = vmatpush1.bf16.msra.mxu0 %v1491
        %1646 = vmatprep.subr.bf16.mxu0 %v1495
        %1647 = vmatpush1.bf16.msra.mxu0 %v1494
        %1648 = vmatprep.subr.bf16.mxu0 %v1498
        %1649 = vmatpush1.bf16.msra.mxu0 %v1497
        %1650 = vmatprep.subr.bf16.mxu0 %v1501
        %1651 = vmatpush1.bf16.msra.mxu0 %v1500
        %1652 = vmatprep.subr.bf16.mxu0 %v1504
        %1653 = vmatpush1.bf16.msra.mxu0 %v1503
        %1654 = vmatprep.subr.bf16.mxu0 %v1507
        %1655 = vmatpush1.bf16.msra.mxu0 %v1506
        %1656 = vmatprep.subr.bf16.mxu0 %v1510
        %1657 = vmatpush1.bf16.msra.mxu0 %v1509
        %1658 = vmatprep.subr.bf16.mxu0 %v1513
        %1659 = vmatpush1.bf16.msra.mxu0 %v1512
        %1660 = vmatprep.mubr.bf16.mxu0 %v1216
        %1661 = vmatmul.mubr.bf16.gmra.mrb[0].mxu0 %v1215
        %v1662 = vpop.f32.mrb[0].mxu0
        %v1663 = vadd.f32 %v1207, %v1662
        %v1664 = vpop.f32.mrb[0].mxu0
        %v1665 = vadd.f32 %v1207, %v1664
        %v1666 = vpop.f32.mrb[0].mxu0
        %v1667 = vpop.f32.mrb[0].mxu0
        %1668 = vdwg.mxu0
        %1669 = vmatprep.subr.bf16.mxu0 %v1516
        %1670 = vmatpush1.bf16.msra.mxu0 %v1515
        %1671 = vmatprep.subr.bf16.mxu0 %v1519
        %1672 = vmatpush1.bf16.msra.mxu0 %v1518
        %1673 = vmatprep.subr.bf16.mxu0 %v1522
        %1674 = vmatpush1.bf16.msra.mxu0 %v1521
        %1675 = vmatprep.subr.bf16.mxu0 %v1525
        %1676 = vmatpush1.bf16.msra.mxu0 %v1524
        %1677 = vmatprep.subr.bf16.mxu0 %v1528
        %1678 = vmatpush1.bf16.msra.mxu0 %v1527
        %1679 = vmatprep.subr.bf16.mxu0 %v1531
        %1680 = vmatpush1.bf16.msra.mxu0 %v1530
        %1681 = vmatprep.subr.bf16.mxu0 %v1534
        %1682 = vmatpush1.bf16.msra.mxu0 %v1533
        %1683 = vmatprep.subr.bf16.mxu0 %v1537
        %1684 = vmatpush1.bf16.msra.mxu0 %v1536
        %1685 = vmatprep.subr.bf16.mxu0 %v1623
        %1686 = vmatpush1.bf16.msra.mxu0 %v1620
        %1687 = vmatprep.subr.bf16.mxu0 0
        %1688 = vmatpush1.bf16.msra.mxu0 0
        %1689 = vmatprep.subr.bf16.mxu0 0
        %1690 = vmatpush1.bf16.msra.mxu0 0
        %1691 = vmatprep.subr.bf16.mxu0 0
        %1692 = vmatpush1.bf16.msra.mxu0 0
        %1693 = vmatprep.subr.bf16.mxu0 0
        %1694 = vmatpush1.bf16.msra.mxu0 0
        %1695 = vmatprep.subr.bf16.mxu0 0
        %1696 = vmatpush1.bf16.msra.mxu0 0
        %1697 = vmatprep.subr.bf16.mxu0 0
        %1698 = vmatpush1.bf16.msra.mxu0 0
        %1699 = vmatprep.subr.bf16.mxu0 0
        %1700 = vmatpush1.bf16.msra.mxu0 0
        %1701 = vmatprep.mubr.bf16.mxu0 %v1616
        %1702 = vmatmul.mubr.bf16.gmra.mrb[0].mxu0 %v1217
        %v1703 = vpop.f32.mrb[0].mxu0
        %v1704 = vadd.f32 %v1663, %v1703
        %v1705 = vpop.f32.mrb[0].mxu0
        %v1706 = vadd.f32 %v1665, %v1705
        %v1707 = vpop.f32.mrb[0].mxu0
        %v1708 = vpop.f32.mrb[0].mxu0
        %1709 = vdwg.mxu0
        %1710 = vmatprep.subr.bf16.mxu0 0
        %1711 = vmatpush1.bf16.msra.mxu0 %v1469
        %1712 = vmatprep.subr.bf16.mxu0 0
        %1713 = vmatpush1.bf16.msra.mxu0 %v1472
        %1714 = vmatprep.subr.bf16.mxu0 0
        %1715 = vmatpush1.bf16.msra.mxu0 %v1475
        %1716 = vmatprep.subr.bf16.mxu0 0
        %1717 = vmatpush1.bf16.msra.mxu0 %v1478
        %1718 = vmatprep.subr.bf16.mxu0 0
        %1719 = vmatpush1.bf16.msra.mxu0 %v1481
        %1720 = vmatprep.subr.bf16.mxu0 0
        %1721 = vmatpush1.bf16.msra.mxu0 %v1484
        %1722 = vmatprep.subr.bf16.mxu0 0
        %1723 = vmatpush1.bf16.msra.mxu0 %v1487
        %1724 = vmatprep.subr.bf16.mxu0 0
        %1725 = vmatpush1.bf16.msra.mxu0 %v1490
        %1726 = vmatprep.subr.bf16.mxu0 0
        %1727 = vmatpush1.bf16.msra.mxu0 %v1493
        %1728 = vmatprep.subr.bf16.mxu0 0
        %1729 = vmatpush1.bf16.msra.mxu0 %v1496
        %1730 = vmatprep.subr.bf16.mxu0 0
        %1731 = vmatpush1.bf16.msra.mxu0 %v1499
        %1732 = vmatprep.subr.bf16.mxu0 0
        %1733 = vmatpush1.bf16.msra.mxu0 %v1502
        %1734 = vmatprep.subr.bf16.mxu0 0
        %1735 = vmatpush1.bf16.msra.mxu0 %v1505
        %1736 = vmatprep.subr.bf16.mxu0 0
        %1737 = vmatpush1.bf16.msra.mxu0 %v1508
        %1738 = vmatprep.subr.bf16.mxu0 0
        %1739 = vmatpush1.bf16.msra.mxu0 %v1511
        %1740 = vmatprep.subr.bf16.mxu0 0
        %1741 = vmatpush1.bf16.msra.mxu0 %v1514
        %1742 = vmatprep.mubr.bf16.mxu0 %v1216
        %1743 = vmatmul.mubr.bf16.gmra.mrb[0].mxu0 %v1215
        %v1744 = vpop.f32.mrb[0].mxu0
        %v1745 = vadd.f32 %v1207, %v1744
        %v1746 = vpop.f32.mrb[0].mxu0
        %v1747 = vpop.f32.mrb[0].mxu0
        %v1748 = vpop.f32.mrb[0].mxu0
        %1749 = vdwg.mxu0
        %1750 = vmatprep.subr.bf16.mxu0 0
        %1751 = vmatpush1.bf16.msra.mxu0 %v1517
        %1752 = vmatprep.subr.bf16.mxu0 0
        %1753 = vmatpush1.bf16.msra.mxu0 %v1520
        %1754 = vmatprep.subr.bf16.mxu0 0
        %1755 = vmatpush1.bf16.msra.mxu0 %v1523
        %1756 = vmatprep.subr.bf16.mxu0 0
        %1757 = vmatpush1.bf16.msra.mxu0 %v1526
        %1758 = vmatprep.subr.bf16.mxu0 0
        %1759 = vmatpush1.bf16.msra.mxu0 %v1529
        %1760 = vmatprep.subr.bf16.mxu0 0
        %1761 = vmatpush1.bf16.msra.mxu0 %v1532
        %1762 = vmatprep.subr.bf16.mxu0 0
        %1763 = vmatpush1.bf16.msra.mxu0 %v1535
        %1764 = vmatprep.subr.bf16.mxu0 0
        %1765 = vmatpush1.bf16.msra.mxu0 %v1538
        %1766 = vmatprep.subr.bf16.mxu0 0
        %1767 = vmatpush1.bf16.msra.mxu0 %v1626
        %1768 = vmatprep.subr.bf16.mxu0 0
        %1769 = vmatpush1.bf16.msra.mxu0 0
        %1770 = vmatprep.subr.bf16.mxu0 0
        %1771 = vmatpush1.bf16.msra.mxu0 0
        %1772 = vmatprep.subr.bf16.mxu0 0
        %1773 = vmatpush1.bf16.msra.mxu0 0
        %1774 = vmatprep.subr.bf16.mxu0 0
        %1775 = vmatpush1.bf16.msra.mxu0 0
        %1776 = vmatprep.subr.bf16.mxu0 0
        %1777 = vmatpush1.bf16.msra.mxu0 0
        %1778 = vmatprep.subr.bf16.mxu0 0
        %1779 = vmatpush1.bf16.msra.mxu0 0
        %1780 = vmatprep.subr.bf16.mxu0 0
        %1781 = vmatpush1.bf16.msra.mxu0 0
        %1782 = vmatprep.mubr.bf16.mxu0 %v1616
        %1783 = vmatmul.mubr.bf16.gmra.mrb[0].mxu0 %v1217
        %v1784 = vpop.f32.mrb[0].mxu0
        %v1785 = vadd.f32 %v1745, %v1784
        %v1786 = vpop.f32.mrb[0].mxu0
        %v1787 = vpop.f32.mrb[0].mxu0
        %v1788 = vpop.f32.mrb[0].mxu0
        %1789 = vdwg.mxu0
        %1790 = vst [vmem:[%s235] sm:$0xff] %v1704
        %1791 = vst [vmem:[%s235 + $0x8] sm:$0xff] %v1706
        %1792 = vst [vmem:[%s235 + $0x10] sm:$0xff] %v1785
        %v1793 = vld [vmem:[%s2] sm:$0x7]
        %v1795 = vlaneseq
        %v1796 = vshrl.u32 %v1795, 7
        %v1797 = vsub.s32 0, %v1796
        %v1798 = vrot.slane %v1793, %v1797
        %v1799 = vlaneseq
        %v1800 = vshrl.u32 %v1799, 7
        %v1801 = vsub.s32 1, %v1800
        %v1802 = vrot.slane %v1793, %v1801
        %v1803 = vlaneseq
        %v1804 = vshrl.u32 %v1803, 7
        %v1805 = vsub.s32 2, %v1804
        %v1806 = vrot.slane %v1793, %v1805
        %v1810 = vmul.f32 %v1704, %v1798
        %v1811 = vmul.f32 %v1706, %v1802
        %v1812 = vmul.f32 %v1785, %v1806
        %v1813 = vadd.f32 %v1810, %v1811
        %v1814 = vadd.f32 %v1813, %v1812
        %1815 = vadd.xlane.f32.xlu0 %v1814
        %v1816 = vpop.xlane.xlu0 %1815
        %vm1817 = vcmask 7168
        %1818 = vst.msk [vmem:[%s225] sm:$0xff] %vm1817, %v1816
        %v1819 = vmul.f32 %v1810, %v1810
        %v1820 = vmul.f32 %v1811, %v1811
        %v1821 = vmul.f32 %v1812, %v1812
        %v1822 = vadd.f32 %v1819, %v1820
        %v1823 = vadd.f32 %v1822, %v1821
        %1824 = vadd.xlane.f32.xlu0 %v1823
        %v1825 = vpop.xlane.xlu0 %1824
        %s1826 = scalar_lea.vmem %s225, 8 [#allocation3]
        %1827 = vst.msk [vmem:[%s1826] sm:$0xff] %vm1817, %v1825
        %p1828 = scmp.lt.s32.totalorder %s20, 1
        %s1829 = scalar_select %p1828, %s20, 1
        %s1830 = smul.addr %s1829, 3
        %s1831 = smul.addr %s1830, 8
        %s1832 = scalar_lea.vmem %s4, %s1831
        %s1833 = sand.u32 %s143, 1
        %s1834 = scalar_lea.sflag [#allocation4], %s1833
        %s1835 = sand.u32 %s143, 1
        %s1836 = smul.addr %s1835, 16
        %s1837 = scalar_lea.vmem [#allocation3], %s1836
        // Predicated region
        $region37: #{_lambda_.19} parent=35 // pred_check
          %p1838 = pneg %p127
        $region38: #{_lambda_.19} parent=35 // pred_check_branch
          %1840 = sbr.rel (%p1838) target = $region40
        $region39: #{_lambda_.19} parent=35 // pred_region
          _
        $region40: #{_lambda_.19} parent=35 // pred_fallthru
          _
        // Predicated region
        $region41: #{_lambda_.19} parent=35 // pred_check
          %p1841 = pneg %p153
        $region42: #{_lambda_.19} parent=35 // pred_check_branch
          %1843 = sbr.rel (%p1841) target = $region44
        $region43: #{_lambda_.19} parent=35 // pred_region
          %s1845 = ssub.s32 256, 256
          %1846 = vsyncadd %s1834, %s1845
          %s1847 = smul.addr %s20, 2
          %s1848 = smul.addr %s1847, 128
          %s1849 = scalar_lea.hbm %s5, %s1848
          %s1850 = sshll.u32 %s1837, 4
          %s1851 = int_to_ptr.vmem [resolvable:$true] %s1850
          %1856 = dma.vmem_to_hbm [thread:$0]  %s1851, 256, %s1849, %s1834, 128, 128, 8
        $region44: #{_lambda_.19} parent=35 // pred_fallthru
          _
      $region36: #{_lambda_.19} parent=5 // pred_fallthru
        _
      %p1857 = scmp.le.s32.totalorder 2, %s15
      // Predicated region
      $region45: #{_lambda_.19} parent=5 // pred_check
        %p1858 = pneg %p1857
      $region46: #{_lambda_.19} parent=5 // pred_check_branch
        %1860 = sbr.rel (%p1858) target = $region48
      $region47: #{_lambda_.19} parent=5 // pred_region
        %s1861 = ssub.s32 %s15, 2
        // Predicated region
        $region49: #{_lambda_.19} parent=47 // pred_check
          %p1862 = pneg %p133
        $region50: #{_lambda_.19} parent=47 // pred_check_branch
          %1864 = sbr.rel (%p1862) target = $region52
        $region51: #{_lambda_.19} parent=47 // pred_region
          %p1865 = scmp.lt.s32.totalorder %s21, 1
          %s1866 = scalar_select %p1865, %s21, 1
          %s1867 = smul.addr %s1866, 3
          %s1868 = smul.addr %s1867, 8
          %s1869 = scalar_lea.vmem %s4, %s1868
        $region52: #{_lambda_.19} parent=47 // pred_fallthru
          _
        // Predicated region
        $region53: #{_lambda_.19} parent=47 // pred_check
          %p1870 = pneg %p159
        $region54: #{_lambda_.19} parent=47 // pred_check_branch
          %1872 = sbr.rel (%p1870) target = $region56
        $region55: #{_lambda_.19} parent=47 // pred_region
          %s1873 = sand.u32 %s144, 1
          %s1874 = scalar_lea.sflag [#allocation4], %s1873
          %s1875 = sand.u32 %s144, 1
          %s1876 = smul.addr %s1875, 16
          %s1877 = scalar_lea.vmem [#allocation3], %s1876
          %1878 = dma.done %s1874, 256
        $region56: #{_lambda_.19} parent=47 // pred_fallthru
          _
      $region48: #{_lambda_.19} parent=5 // pred_fallthru
        _
    $region6: #{_lambda_.19} parent=1 // loop_footer
      %s19 = sadd.s32 1, %s15
    $region7: #{_lambda_.19} parent=1 // loop_footer_branch
      %14 = sbr.rel target = $region3
    $region8: #{_lambda_.19} parent=1 // loop_exit
      _
    %1879 = vsyncpa [#allocation4], 1
    %s1880 = scalar_lea.sflag [#allocation4], 1
    %1881 = vsyncpa %s1880, 1

</llo_original>
